<compile_context>
chip_gen: v7x
topology: tpu7x:2x2x1
jax: 0.10.0
libtpu: 0.0.40
codegen_flags: <defaults>
</compile_context>

<pallas_src>
import functools

import jax
import jax.numpy as jnp
from jax.experimental import pallas as pl
from jax.experimental.pallas import tpu as pltpu

_LANE = 128
_SUBLANE = 8
_HIDDEN = (128, 256, 1024, 1024, 256, 128)
_TILE_B = 128          # MXU-sized batch tile; the batch grid axis is "parallel"


def _round_up(x, m):
    return m * ((x + m - 1) // m)


def _mlp_fused_kernel(*refs, out_dims):
    # refs = (x_ref, w1_ref, ..., wL_ref, bias_slab_ref, o_ref); all VMEM blocks.
    # All 7 layers run back-to-back out of VMEM for one batch tile.
    x_ref = refs[0]
    bias_ref = refs[-2]
    o_ref = refs[-1]
    w_refs = refs[1:-2]
    n_layers = len(w_refs)

    h = x_ref[...].astype(jnp.float32)                      # (TILE_B, K0) f32
    for l, w_ref in enumerate(w_refs):
        n_out = out_dims[l]
        # bf16 x bf16 -> f32 accumulation on the MXU.
        h = jnp.dot(h.astype(w_ref.dtype), w_ref[...],
                    preferred_element_type=jnp.float32)
        h = h + bias_ref[l:l + 1, :n_out]                   # (1, n_out) f32 broadcast
        if l < n_layers - 1:
            h = jnp.maximum(h, 0.0)                         # f32 ReLU on the VPU
    o_ref[...] = h.astype(o_ref.dtype)


def init_mlp_params(key, input_size, num_classes, *, weight_dtype=jnp.bfloat16):
    """Synthetic params. Layer l: W [in, out] (weight_dtype), b [out] (f32).

    The first layer's fan-in and the last layer's fan-out are zero-padded up to a
    multiple of 128 lanes so the first matmul and the final store are lane-dense;
    the wrapper pads x / slices logits to match.
    """
    dims = [input_size, *_HIDDEN, num_classes]
    n = len(dims) - 1
    params = []
    for l in range(n):
        fan_in, fan_out = dims[l], dims[l + 1]
        key, kw, kb = jax.random.split(key, 3)
        bound = float(fan_in) ** -0.5          # matches nn.Linear default init range
        w = jax.random.uniform(kw, (fan_in, fan_out), jnp.float32, -bound, bound)
        b = jax.random.uniform(kb, (fan_out,), jnp.float32, -bound, bound)
        if l == 0 and fan_in % _LANE != 0:
            w = jnp.pad(w, ((0, _round_up(fan_in, _LANE) - fan_in), (0, 0)))
        if l == n - 1 and fan_out % _LANE != 0:
            pad = _round_up(fan_out, _LANE) - fan_out
            w = jnp.pad(w, ((0, 0), (0, pad)))
            b = jnp.pad(b, (0, pad))
        params.append((w.astype(weight_dtype), b.astype(jnp.float32)))
    return params


def mlp_forward(x, params, num_classes, *, tile_b=_TILE_B):
    """Fused 7-layer MLP forward in a single Pallas kernel call."""
    B, D = x.shape
    n_layers = len(params)
    k_pad = params[0][0].shape[0]              # first-layer fan-in, lane-padded
    out_dims = tuple(w.shape[1] for w, _ in params)
    out_cols = out_dims[-1]                    # logits dim, lane-padded

    # Pad features to the lane-aligned first-layer fan-in, and the batch to a
    # whole number of MXU-sized tiles.  Zero padding is numerically benign.
    b_pad = _round_up(max(B, 1), tile_b)
    x = jnp.pad(x.astype(jnp.float32), ((0, b_pad - B), (0, k_pad - D)))

    # Coalesce all biases into one f32 slab -> a single parameter DMA.
    slab_rows = _round_up(n_layers, _SUBLANE)
    slab_cols = _round_up(max(out_dims), _LANE)
    bias_slab = jnp.zeros((slab_rows, slab_cols), jnp.float32)
    for l, (_, b) in enumerate(params):
        bias_slab = bias_slab.at[l, : b.shape[0]].set(b)

    weights = [w for w, _ in params]
    flat_args = [x, *weights, bias_slab]

    num_tiles = b_pad // tile_b
    # x / out are tiled along the batch; weights & biases are grid-invariant
    # (index_map always (0, 0)) so Pallas fetches them once and keeps them
    # VMEM-resident across all batch tiles.
    in_specs = [pl.BlockSpec((tile_b, k_pad), lambda i: (i, 0))]
    in_specs += [pl.BlockSpec(w.shape, lambda i: (0, 0)) for w in weights]
    in_specs += [pl.BlockSpec(bias_slab.shape, lambda i: (0, 0))]
    out_spec = pl.BlockSpec((tile_b, out_cols), lambda i: (i, 0))

    flops = 2 * b_pad * sum(int(w.shape[0]) * int(w.shape[1]) for w in weights)
    bytes_accessed = (sum(int(a.size) * a.dtype.itemsize for a in flat_args)
                      + b_pad * out_cols * 4)

    out = pl.pallas_call(
        functools.partial(_mlp_fused_kernel, out_dims=out_dims),
        out_shape=jax.ShapeDtypeStruct((b_pad, out_cols), jnp.float32),
        grid_spec=pltpu.PrefetchScalarGridSpec(
            num_scalar_prefetch=0,
            grid=(num_tiles,),
            in_specs=in_specs,
            out_specs=out_spec,
        ),
        compiler_params=pltpu.CompilerParams(
            dimension_semantics=("parallel",),
            vmem_limit_bytes=32 * 1024 * 1024,
        ),
        cost_estimate=pl.CostEstimate(
            flops=flops, transcendentals=0, bytes_accessed=bytes_accessed),
    )(*flat_args)

    return out[:B, :num_classes]


def mlp_reference(x, params, num_classes):
    """Pure-JAX reference doing the identical bf16-weight / f32-accumulate math."""
    k_pad = params[0][0].shape[0]
    h = jnp.pad(x.astype(jnp.float32), ((0, 0), (0, k_pad - x.shape[1])))
    n_layers = len(params)
    for l, (w, b) in enumerate(params):
        h = jnp.dot(h.astype(w.dtype), w, preferred_element_type=jnp.float32)
        h = h + b.astype(jnp.float32)
        if l < n_layers - 1:
            h = jnp.maximum(h, 0.0)
    return h[:, :num_classes]


if __name__ == "__main__":
    key = jax.random.PRNGKey(0)
    batch, input_size, num_classes = 8, 32, 10

    kx, kp, kx2 = jax.random.split(key, 3)
    params = init_mlp_params(kp, input_size, num_classes)

    # Small batch (single batch tile).
    x = jax.random.normal(kx, (batch, input_size), dtype=jnp.float32)
    out = jax.block_until_ready(mlp_forward(x, params, num_classes))
    ref = jax.block_until_ready(mlp_reference(x, params, num_classes))
    assert out.shape == (batch, num_classes), out.shape
    assert jnp.allclose(out, ref, atol=1e-3, rtol=1e-3), "mismatch (small batch)"

    # Larger, non-multiple batch: exercises the "parallel" batch grid axis
    # (3 tiles of 128) — the path that engages v7x's second TensorCore.
    x2 = jax.random.normal(kx2, (300, input_size), dtype=jnp.float32)
    out2 = jax.block_until_ready(mlp_forward(x2, params, num_classes))
    ref2 = jax.block_until_ready(mlp_reference(x2, params, num_classes))
    assert out2.shape == (300, num_classes), out2.shape
    assert jnp.allclose(out2, ref2, atol=1e-3, rtol=1e-3), "mismatch (batch tiles)"

    print("KERNEL_OK")
</pallas_src>

<mosaic_0001>
module attributes {stable_mosaic.version = 11 : i64} {
  func.func @_mlp_fused_kernel(%arg0: i32, %arg1: memref<128x128xf32, #tpu.memory_space<vmem>>, %arg2: memref<128x128xbf16, #tpu.memory_space<vmem>>, %arg3: memref<128x256xbf16, #tpu.memory_space<vmem>>, %arg4: memref<256x1024xbf16, #tpu.memory_space<vmem>>, %arg5: memref<1024x1024xbf16, #tpu.memory_space<vmem>>, %arg6: memref<1024x256xbf16, #tpu.memory_space<vmem>>, %arg7: memref<256x128xbf16, #tpu.memory_space<vmem>>, %arg8: memref<128x128xbf16, #tpu.memory_space<vmem>>, %arg9: memref<8x1024xf32, #tpu.memory_space<vmem>>, %arg10: memref<128x128xf32, #tpu.memory_space<vmem>>) attributes {dimension_semantics = [#tpu.dimension_semantics<parallel>], iteration_bounds = array<i64: 1>, scalar_prefetch = 0 : i64, scratch_operands = 0 : i64, tpu.core_type = #tpu.core_type<tc>, window_params = [{transform_indices = @transform_0, window_bounds = array<i64: 128, 128>}, {pipeline_mode = #tpu.pipeline_mode<synchronous>, transform_indices = @transform_1, window_bounds = array<i64: 128, 128>}, {pipeline_mode = #tpu.pipeline_mode<synchronous>, transform_indices = @transform_2, window_bounds = array<i64: 128, 256>}, {pipeline_mode = #tpu.pipeline_mode<synchronous>, transform_indices = @transform_3, window_bounds = array<i64: 256, 1024>}, {pipeline_mode = #tpu.pipeline_mode<synchronous>, transform_indices = @transform_4, window_bounds = array<i64: 1024, 1024>}, {pipeline_mode = #tpu.pipeline_mode<synchronous>, transform_indices = @transform_5, window_bounds = array<i64: 1024, 256>}, {pipeline_mode = #tpu.pipeline_mode<synchronous>, transform_indices = @transform_6, window_bounds = array<i64: 256, 128>}, {pipeline_mode = #tpu.pipeline_mode<synchronous>, transform_indices = @transform_7, window_bounds = array<i64: 128, 128>}, {pipeline_mode = #tpu.pipeline_mode<synchronous>, transform_indices = @transform_8, window_bounds = array<i64: 8, 1024>}, {transform_indices = @transform_9, window_bounds = array<i64: 128, 128>}]} {
    %c0 = arith.constant 0 : index
    %c0_0 = arith.constant 0 : index
    %0 = vector.load %arg1[%c0, %c0_0] : memref<128x128xf32, #tpu.memory_space<vmem>>, vector<128x128xf32>
    %1 = arith.truncf %0 : vector<128x128xf32> to vector<128x128xbf16>
    %c0_1 = arith.constant 0 : index
    %c0_2 = arith.constant 0 : index
    %2 = vector.load %arg2[%c0_1, %c0_2] : memref<128x128xbf16, #tpu.memory_space<vmem>>, vector<128x128xbf16>
    %cst = arith.constant dense<0.000000e+00> : vector<128x128xf32>
    %3 = tpu.matmul %1, %2, %cst {dimension_numbers = #tpu.dot_dimension_numbers<[1], [0], [0], [1], [0, 0, 1, 1], [], []>} : vector<128x128xbf16>, vector<128x128xbf16>, vector<128x128xf32> -> vector<128x128xf32>
    %c0_3 = arith.constant 0 : index
    %c0_4 = arith.constant 0 : index
    %4 = vector.load %arg9[%c0_3, %c0_4] : memref<8x1024xf32, #tpu.memory_space<vmem>>, vector<1x128xf32>
    %5 = vector.broadcast %4 : vector<1x128xf32> to vector<128x128xf32>
    %6 = arith.addf %3, %5 : vector<128x128xf32>
    %cst_5 = arith.constant 0.000000e+00 : f32
    %7 = vector.broadcast %cst_5 : f32 to vector<128x128xf32>
    %8 = arith.maximumf %6, %7 : vector<128x128xf32>
    %9 = arith.truncf %8 : vector<128x128xf32> to vector<128x128xbf16>
    %c0_6 = arith.constant 0 : index
    %c0_7 = arith.constant 0 : index
    %10 = vector.load %arg3[%c0_6, %c0_7] : memref<128x256xbf16, #tpu.memory_space<vmem>>, vector<128x256xbf16>
    %cst_8 = arith.constant dense<0.000000e+00> : vector<128x256xf32>
    %11 = tpu.matmul %9, %10, %cst_8 {dimension_numbers = #tpu.dot_dimension_numbers<[1], [0], [0], [1], [0, 0, 1, 1], [], []>} : vector<128x128xbf16>, vector<128x256xbf16>, vector<128x256xf32> -> vector<128x256xf32>
    %c1 = arith.constant 1 : index
    %c0_9 = arith.constant 0 : index
    %12 = vector.load %arg9[%c1, %c0_9] : memref<8x1024xf32, #tpu.memory_space<vmem>>, vector<1x256xf32>
    %13 = vector.broadcast %12 : vector<1x256xf32> to vector<128x256xf32>
    %14 = arith.addf %11, %13 : vector<128x256xf32>
    %cst_10 = arith.constant 0.000000e+00 : f32
    %15 = vector.broadcast %cst_10 : f32 to vector<128x256xf32>
    %16 = arith.maximumf %14, %15 : vector<128x256xf32>
    %17 = arith.truncf %16 : vector<128x256xf32> to vector<128x256xbf16>
    %c0_11 = arith.constant 0 : index
    %c0_12 = arith.constant 0 : index
    %18 = vector.load %arg4[%c0_11, %c0_12] : memref<256x1024xbf16, #tpu.memory_space<vmem>>, vector<256x1024xbf16>
    %cst_13 = arith.constant dense<0.000000e+00> : vector<128x1024xf32>
    %19 = tpu.matmul %17, %18, %cst_13 {dimension_numbers = #tpu.dot_dimension_numbers<[1], [0], [0], [1], [0, 0, 1, 1], [], []>} : vector<128x256xbf16>, vector<256x1024xbf16>, vector<128x1024xf32> -> vector<128x1024xf32>
    %c2 = arith.constant 2 : index
    %c0_14 = arith.constant 0 : index
    %20 = vector.load %arg9[%c2, %c0_14] : memref<8x1024xf32, #tpu.memory_space<vmem>>, vector<1x1024xf32>
    %21 = vector.broadcast %20 : vector<1x1024xf32> to vector<128x1024xf32>
    %22 = arith.addf %19, %21 : vector<128x1024xf32>
    %cst_15 = arith.constant 0.000000e+00 : f32
    %23 = vector.broadcast %cst_15 : f32 to vector<128x1024xf32>
    %24 = arith.maximumf %22, %23 : vector<128x1024xf32>
    %25 = arith.truncf %24 : vector<128x1024xf32> to vector<128x1024xbf16>
    %c0_16 = arith.constant 0 : index
    %c0_17 = arith.constant 0 : index
    %26 = vector.load %arg5[%c0_16, %c0_17] : memref<1024x1024xbf16, #tpu.memory_space<vmem>>, vector<1024x1024xbf16>
    %cst_18 = arith.constant dense<0.000000e+00> : vector<128x1024xf32>
    %27 = tpu.matmul %25, %26, %cst_18 {dimension_numbers = #tpu.dot_dimension_numbers<[1], [0], [0], [1], [0, 0, 1, 1], [], []>} : vector<128x1024xbf16>, vector<1024x1024xbf16>, vector<128x1024xf32> -> vector<128x1024xf32>
    %c3 = arith.constant 3 : index
    %c0_19 = arith.constant 0 : index
    %28 = vector.load %arg9[%c3, %c0_19] : memref<8x1024xf32, #tpu.memory_space<vmem>>, vector<1x1024xf32>
    %29 = vector.broadcast %28 : vector<1x1024xf32> to vector<128x1024xf32>
    %30 = arith.addf %27, %29 : vector<128x1024xf32>
    %cst_20 = arith.constant 0.000000e+00 : f32
    %31 = vector.broadcast %cst_20 : f32 to vector<128x1024xf32>
    %32 = arith.maximumf %30, %31 : vector<128x1024xf32>
    %33 = arith.truncf %32 : vector<128x1024xf32> to vector<128x1024xbf16>
    %c0_21 = arith.constant 0 : index
    %c0_22 = arith.constant 0 : index
    %34 = vector.load %arg6[%c0_21, %c0_22] : memref<1024x256xbf16, #tpu.memory_space<vmem>>, vector<1024x256xbf16>
    %cst_23 = arith.constant dense<0.000000e+00> : vector<128x256xf32>
    %35 = tpu.matmul %33, %34, %cst_23 {dimension_numbers = #tpu.dot_dimension_numbers<[1], [0], [0], [1], [0, 0, 1, 1], [], []>} : vector<128x1024xbf16>, vector<1024x256xbf16>, vector<128x256xf32> -> vector<128x256xf32>
    %c4 = arith.constant 4 : index
    %c0_24 = arith.constant 0 : index
    %36 = vector.load %arg9[%c4, %c0_24] : memref<8x1024xf32, #tpu.memory_space<vmem>>, vector<1x256xf32>
    %37 = vector.broadcast %36 : vector<1x256xf32> to vector<128x256xf32>
    %38 = arith.addf %35, %37 : vector<128x256xf32>
    %cst_25 = arith.constant 0.000000e+00 : f32
    %39 = vector.broadcast %cst_25 : f32 to vector<128x256xf32>
    %40 = arith.maximumf %38, %39 : vector<128x256xf32>
    %41 = arith.truncf %40 : vector<128x256xf32> to vector<128x256xbf16>
    %c0_26 = arith.constant 0 : index
    %c0_27 = arith.constant 0 : index
    %42 = vector.load %arg7[%c0_26, %c0_27] : memref<256x128xbf16, #tpu.memory_space<vmem>>, vector<256x128xbf16>
    %cst_28 = arith.constant dense<0.000000e+00> : vector<128x128xf32>
    %43 = tpu.matmul %41, %42, %cst_28 {dimension_numbers = #tpu.dot_dimension_numbers<[1], [0], [0], [1], [0, 0, 1, 1], [], []>} : vector<128x256xbf16>, vector<256x128xbf16>, vector<128x128xf32> -> vector<128x128xf32>
    %c5 = arith.constant 5 : index
    %c0_29 = arith.constant 0 : index
    %44 = vector.load %arg9[%c5, %c0_29] : memref<8x1024xf32, #tpu.memory_space<vmem>>, vector<1x128xf32>
    %45 = vector.broadcast %44 : vector<1x128xf32> to vector<128x128xf32>
    %46 = arith.addf %43, %45 : vector<128x128xf32>
    %cst_30 = arith.constant 0.000000e+00 : f32
    %47 = vector.broadcast %cst_30 : f32 to vector<128x128xf32>
    %48 = arith.maximumf %46, %47 : vector<128x128xf32>
    %49 = arith.truncf %48 : vector<128x128xf32> to vector<128x128xbf16>
    %c0_31 = arith.constant 0 : index
    %c0_32 = arith.constant 0 : index
    %50 = vector.load %arg8[%c0_31, %c0_32] : memref<128x128xbf16, #tpu.memory_space<vmem>>, vector<128x128xbf16>
    %cst_33 = arith.constant dense<0.000000e+00> : vector<128x128xf32>
    %51 = tpu.matmul %49, %50, %cst_33 {dimension_numbers = #tpu.dot_dimension_numbers<[1], [0], [0], [1], [0, 0, 1, 1], [], []>} : vector<128x128xbf16>, vector<128x128xbf16>, vector<128x128xf32> -> vector<128x128xf32>
    %c6 = arith.constant 6 : index
    %c0_34 = arith.constant 0 : index
    %52 = vector.load %arg9[%c6, %c0_34] : memref<8x1024xf32, #tpu.memory_space<vmem>>, vector<1x128xf32>
    %53 = vector.broadcast %52 : vector<1x128xf32> to vector<128x128xf32>
    %54 = arith.addf %51, %53 : vector<128x128xf32>
    %c0_35 = arith.constant 0 : index
    %c0_36 = arith.constant 0 : index
    %55 = vector.load %arg10[%c0_35, %c0_36] : memref<128x128xf32, #tpu.memory_space<vmem>>, vector<128x128xf32>
    tpu.vector_store %arg10[%c0_35, %c0_36], %54 {strides = array<i32>} : memref<128x128xf32, #tpu.memory_space<vmem>>, vector<128x128xf32>,
    return
  }
  func.func @transform_0(%arg0: i32) -> (i32, i32) {
    %c0_i32 = arith.constant 0 : i32
    %c0_i32_0 = arith.constant 0 : i32
    return %arg0, %c0_i32 : i32, i32
  }
  func.func @transform_1(%arg0: i32) -> (i32, i32) {
    %c0_i32 = arith.constant 0 : i32
    %c0_i32_0 = arith.constant 0 : i32
    %c0_i32_1 = arith.constant 0 : i32
    return %c0_i32, %c0_i32_0 : i32, i32
  }
  func.func @transform_2(%arg0: i32) -> (i32, i32) {
    %c0_i32 = arith.constant 0 : i32
    %c0_i32_0 = arith.constant 0 : i32
    %c0_i32_1 = arith.constant 0 : i32
    return %c0_i32, %c0_i32_0 : i32, i32
  }
  func.func @transform_3(%arg0: i32) -> (i32, i32) {
    %c0_i32 = arith.constant 0 : i32
    %c0_i32_0 = arith.constant 0 : i32
    %c0_i32_1 = arith.constant 0 : i32
    return %c0_i32, %c0_i32_0 : i32, i32
  }
  func.func @transform_4(%arg0: i32) -> (i32, i32) {
    %c0_i32 = arith.constant 0 : i32
    %c0_i32_0 = arith.constant 0 : i32
    %c0_i32_1 = arith.constant 0 : i32
    return %c0_i32, %c0_i32_0 : i32, i32
  }
  func.func @transform_5(%arg0: i32) -> (i32, i32) {
    %c0_i32 = arith.constant 0 : i32
    %c0_i32_0 = arith.constant 0 : i32
    %c0_i32_1 = arith.constant 0 : i32
    return %c0_i32, %c0_i32_0 : i32, i32
  }
  func.func @transform_6(%arg0: i32) -> (i32, i32) {
    %c0_i32 = arith.constant 0 : i32
    %c0_i32_0 = arith.constant 0 : i32
    %c0_i32_1 = arith.constant 0 : i32
    return %c0_i32, %c0_i32_0 : i32, i32
  }
  func.func @transform_7(%arg0: i32) -> (i32, i32) {
    %c0_i32 = arith.constant 0 : i32
    %c0_i32_0 = arith.constant 0 : i32
    %c0_i32_1 = arith.constant 0 : i32
    return %c0_i32, %c0_i32_0 : i32, i32
  }
  func.func @transform_8(%arg0: i32) -> (i32, i32) {
    %c0_i32 = arith.constant 0 : i32
    %c0_i32_0 = arith.constant 0 : i32
    %c0_i32_1 = arith.constant 0 : i32
    return %c0_i32, %c0_i32_0 : i32, i32
  }
  func.func @transform_9(%arg0: i32) -> (i32, i32) {
    %c0_i32 = arith.constant 0 : i32
    %c0_i32_0 = arith.constant 0 : i32
    return %arg0, %c0_i32 : i32, i32
  }
}

</mosaic_0001>

<llo_original>
// kernel: tpu_custom_call.1
$region0: #{tpu_custom_call.1}
  #allocation0 [shape = 'u32[]', space=smem, size = 0x4, offset = 0x4, fixed_abs, tag = 'smem constant byte address 0x4 - core index']
  #allocation1 [shape = 'u32[144,128]{1,0:T(1,128)}', space=vmem, size = 0x12000, scoped, tag = 'internal scratch']
  %s0 = inlined_call_operand.hbm [shape: f32[128,128], index: 0, kind: input, shape index: {}]
  %s1 = inlined_call_operand.hbm [shape: bf16[128,128], index: 1, kind: input, shape index: {}]
  %s2 = inlined_call_operand.hbm [shape: bf16[128,256], index: 2, kind: input, shape index: {}]
  %s3 = inlined_call_operand.hbm [shape: bf16[256,1024], index: 3, kind: input, shape index: {}]
  %s4 = inlined_call_operand.hbm [shape: bf16[1024,1024], index: 4, kind: input, shape index: {}]
  %s5 = inlined_call_operand.hbm [shape: bf16[1024,256], index: 5, kind: input, shape index: {}]
  %s6 = inlined_call_operand.hbm [shape: bf16[256,128], index: 6, kind: input, shape index: {}]
  %s7 = inlined_call_operand.hbm [shape: bf16[128,128], index: 7, kind: input, shape index: {}]
  %s8 = inlined_call_operand.hbm [shape: f32[8,1024], index: 8, kind: input, shape index: {}]
  %s9 = inlined_call_operand.hbm [shape: f32[128,128], index: 9, kind: output, shape index: {}]
  %s10 = sld [smem:[#allocation0]]
  $region82: #{tpu_custom_call.1} parent=0
    _
  %s12 = ssub.s32 1, %s10
  %s13 = scalar_select 0, %s12, %s10
  $region1: #{tpu_custom_call.1} parent=0
    #allocation2 [shape = 'u8[65536]{0}', space=vmem, size = 0x10000, scoped, tag = 'input window, operand 0, single buffered']
    #allocation3 [shape = 's32[1]{0}', space=sflag, size = 0x4, scoped, tag = 'scoped memory for tpu_custom_call.1']
    #allocation4 [shape = 's32[1]{0}', space=sflag, size = 0x4, scoped, tag = 'scoped memory for tpu_custom_call.1']
    #allocation5 [shape = 'u8[32768]{0}', space=vmem, size = 0x8000, scoped, tag = 'input window, operand 1, single buffered']
    #allocation6 [shape = 's32[1]{0}', space=sflag, size = 0x4, scoped, tag = 'scoped memory for tpu_custom_call.1']
    #allocation7 [shape = 'u8[65536]{0}', space=vmem, size = 0x10000, scoped, tag = 'input window, operand 2, single buffered']
    #allocation8 [shape = 'u8[524288]{0}', space=vmem, size = 0x80000, scoped, tag = 'input window, operand 3, single buffered']
    #allocation9 [shape = 's32[1]{0}', space=sflag, size = 0x4, scoped, tag = 'scoped memory for tpu_custom_call.1']
    #allocation10 [shape = 'u8[2097152]{0}', space=vmem, size = 0x200000, scoped, tag = 'input window, operand 4, single buffered']
    #allocation11 [shape = 'u8[524288]{0}', space=vmem, size = 0x80000, scoped, tag = 'input window, operand 5, single buffered']
    #allocation12 [shape = 's32[1]{0}', space=sflag, size = 0x4, scoped, tag = 'scoped memory for tpu_custom_call.1']
    #allocation13 [shape = 'u8[65536]{0}', space=vmem, size = 0x10000, scoped, tag = 'input window, operand 6, single buffered']
    #allocation14 [shape = 'u8[32768]{0}', space=vmem, size = 0x8000, scoped, tag = 'input window, operand 7, single buffered']
    #allocation15 [shape = 's32[1]{0}', space=sflag, size = 0x4, scoped, tag = 'scoped memory for tpu_custom_call.1']
    #allocation16 [shape = 'u8[32768]{0}', space=vmem, size = 0x8000, scoped, tag = 'input window, operand 8, single buffered']
    #allocation17 [shape = 'u8[65536]{0}', space=vmem, size = 0x10000, scoped, tag = 'output window, operand 0, single buffered']
    %14 = vsyncpa [#allocation3], 0
    %15 = vsyncpa [#allocation6], 0
    %16 = vsyncpa [#allocation9], 0
    %17 = vsyncpa [#allocation12], 0
    %18 = vsyncpa [#allocation15], 0
    %19 = vsyncpa [#allocation4], 0
    // Predicated region
    $region2: #{tpu_custom_call.1} parent=1 // pred_check
      _
    $region3: #{tpu_custom_call.1} parent=1 // pred_check_branch
      %21 = sbr.rel (0) target = $region5
    $region4: #{tpu_custom_call.1} parent=1 // pred_region
      %s23 = ssub.s32 2048, 2048
      %24 = vsyncadd [#allocation3], %s23
      %s25 = sshll.u32 [#allocation2], 4
      %s26 = int_to_ptr.vmem [resolvable:$true] %s25
      %31 = dma.hbm_to_vmem [thread:$0]  %s0, 2048, %s26, [#allocation3], 128, 128, 8
    $region5: #{tpu_custom_call.1} parent=1 // pred_fallthru
      _
    // Predicated region
    $region6: #{tpu_custom_call.1} parent=1 // pred_check
      _
    $region7: #{tpu_custom_call.1} parent=1 // pred_check_branch
      %33 = sbr.rel (0) target = $region9
    $region8: #{tpu_custom_call.1} parent=1 // pred_region
      %s35 = ssub.s32 1024, 1024
      %36 = vsyncadd [#allocation6], %s35
      %s37 = sshll.u32 [#allocation5], 4
      %s38 = int_to_ptr.vmem [resolvable:$true] %s37
      %43 = dma.hbm_to_vmem [thread:$0]  %s1, 1024, %s38, [#allocation6], 64, 64, 4
    $region9: #{tpu_custom_call.1} parent=1 // pred_fallthru
      _
    // Predicated region
    $region10: #{tpu_custom_call.1} parent=1 // pred_check
      _
    $region11: #{tpu_custom_call.1} parent=1 // pred_check_branch
      %45 = sbr.rel (0) target = $region13
    $region12: #{tpu_custom_call.1} parent=1 // pred_region
      %s47 = ssub.s32 2048, 2048
      %48 = vsyncadd [#allocation6], %s47
      %s49 = sshll.u32 [#allocation7], 4
      %s50 = int_to_ptr.vmem [resolvable:$true] %s49
      %55 = dma.hbm_to_vmem [thread:$0]  %s2, 2048, %s50, [#allocation6], 128, 128, 8
    $region13: #{tpu_custom_call.1} parent=1 // pred_fallthru
      _
    // Predicated region
    $region14: #{tpu_custom_call.1} parent=1 // pred_check
      _
    $region15: #{tpu_custom_call.1} parent=1 // pred_check_branch
      %57 = sbr.rel (0) target = $region17
    $region16: #{tpu_custom_call.1} parent=1 // pred_region
      %s59 = ssub.s32 16384, 16384
      %60 = vsyncadd [#allocation9], %s59
      %s61 = sshll.u32 [#allocation8], 4
      %s62 = int_to_ptr.vmem [resolvable:$true] %s61
      %67 = dma.hbm_to_vmem [thread:$0]  %s3, 16384, %s62, [#allocation9], 512, 512, 32
    $region17: #{tpu_custom_call.1} parent=1 // pred_fallthru
      _
    // Predicated region
    $region18: #{tpu_custom_call.1} parent=1 // pred_check
      _
    $region19: #{tpu_custom_call.1} parent=1 // pred_check_branch
      %69 = sbr.rel (0) target = $region21
    $region20: #{tpu_custom_call.1} parent=1 // pred_region
      %s71 = ssub.s32 65536, 65536
      %72 = vsyncadd [#allocation9], %s71
      %s73 = sshll.u32 [#allocation10], 4
      %s74 = int_to_ptr.vmem [resolvable:$true] %s73
      %79 = dma.hbm_to_vmem [thread:$0]  %s4, 65536, %s74, [#allocation9], 512, 512, 32
    $region21: #{tpu_custom_call.1} parent=1 // pred_fallthru
      _
    // Predicated region
    $region22: #{tpu_custom_call.1} parent=1 // pred_check
      _
    $region23: #{tpu_custom_call.1} parent=1 // pred_check_branch
      %81 = sbr.rel (0) target = $region25
    $region24: #{tpu_custom_call.1} parent=1 // pred_region
      %s83 = ssub.s32 16384, 16384
      %84 = vsyncadd [#allocation12], %s83
      %s85 = sshll.u32 [#allocation11], 4
      %s86 = int_to_ptr.vmem [resolvable:$true] %s85
      %91 = dma.hbm_to_vmem [thread:$0]  %s5, 16384, %s86, [#allocation12], 128, 128, 8
    $region25: #{tpu_custom_call.1} parent=1 // pred_fallthru
      _
    // Predicated region
    $region26: #{tpu_custom_call.1} parent=1 // pred_check
      _
    $region27: #{tpu_custom_call.1} parent=1 // pred_check_branch
      %93 = sbr.rel (0) target = $region29
    $region28: #{tpu_custom_call.1} parent=1 // pred_region
      %s95 = ssub.s32 2048, 2048
      %96 = vsyncadd [#allocation12], %s95
      %s97 = sshll.u32 [#allocation13], 4
      %s98 = int_to_ptr.vmem [resolvable:$true] %s97
      %103 = dma.hbm_to_vmem [thread:$0]  %s6, 2048, %s98, [#allocation12], 64, 64, 4
    $region29: #{tpu_custom_call.1} parent=1 // pred_fallthru
      _
    // Predicated region
    $region30: #{tpu_custom_call.1} parent=1 // pred_check
      _
    $region31: #{tpu_custom_call.1} parent=1 // pred_check_branch
      %105 = sbr.rel (0) target = $region33
    $region32: #{tpu_custom_call.1} parent=1 // pred_region
      %s107 = ssub.s32 1024, 1024
      %108 = vsyncadd [#allocation15], %s107
      %s109 = sshll.u32 [#allocation14], 4
      %s110 = int_to_ptr.vmem [resolvable:$true] %s109
      %115 = dma.hbm_to_vmem [thread:$0]  %s7, 1024, %s110, [#allocation15], 64, 64, 4
    $region33: #{tpu_custom_call.1} parent=1 // pred_fallthru
      _
    // Predicated region
    $region34: #{tpu_custom_call.1} parent=1 // pred_check
      _
    $region35: #{tpu_custom_call.1} parent=1 // pred_check_branch
      %117 = sbr.rel (0) target = $region37
    $region36: #{tpu_custom_call.1} parent=1 // pred_region
      %s119 = ssub.s32 1024, 1024
      %120 = vsyncadd [#allocation15], %s119
      %s122 = sshll.u32 [#allocation16], 4
      %s123 = int_to_ptr.vmem [resolvable:$true] %s122
      %125 = dma.hbm_to_vmem [thread:$0]  %s8, 1024, %s123, [#allocation15]
    $region37: #{tpu_custom_call.1} parent=1 // pred_fallthru
      _
    // Predicated region
    $region38: #{tpu_custom_call.1} parent=1 // pred_check
      _
    $region39: #{tpu_custom_call.1} parent=1 // pred_check_branch
      %127 = sbr.rel (0) target = $region41
    $region40: #{tpu_custom_call.1} parent=1 // pred_region
      %128 = dma.done [#allocation3], 2048
    $region41: #{tpu_custom_call.1} parent=1 // pred_fallthru
      _
    // Predicated region
    $region42: #{tpu_custom_call.1} parent=1 // pred_check
      _
    $region43: #{tpu_custom_call.1} parent=1 // pred_check_branch
      %130 = sbr.rel (0) target = $region45
    $region44: #{tpu_custom_call.1} parent=1 // pred_region
      %131 = dma.done [#allocation6], 1024
    $region45: #{tpu_custom_call.1} parent=1 // pred_fallthru
      _
    // Predicated region
    $region46: #{tpu_custom_call.1} parent=1 // pred_check
      _
    $region47: #{tpu_custom_call.1} parent=1 // pred_check_branch
      %133 = sbr.rel (0) target = $region49
    $region48: #{tpu_custom_call.1} parent=1 // pred_region
      %134 = dma.done [#allocation6], 2048
    $region49: #{tpu_custom_call.1} parent=1 // pred_fallthru
      _
    // Predicated region
    $region50: #{tpu_custom_call.1} parent=1 // pred_check
      _
    $region51: #{tpu_custom_call.1} parent=1 // pred_check_branch
      %136 = sbr.rel (0) target = $region53
    $region52: #{tpu_custom_call.1} parent=1 // pred_region
      %137 = dma.done [#allocation9], 16384
    $region53: #{tpu_custom_call.1} parent=1 // pred_fallthru
      _
    // Predicated region
    $region54: #{tpu_custom_call.1} parent=1 // pred_check
      _
    $region55: #{tpu_custom_call.1} parent=1 // pred_check_branch
      %139 = sbr.rel (0) target = $region57
    $region56: #{tpu_custom_call.1} parent=1 // pred_region
      %140 = dma.done [#allocation9], 65536
    $region57: #{tpu_custom_call.1} parent=1 // pred_fallthru
      _
    // Predicated region
    $region58: #{tpu_custom_call.1} parent=1 // pred_check
      _
    $region59: #{tpu_custom_call.1} parent=1 // pred_check_branch
      %142 = sbr.rel (0) target = $region61
    $region60: #{tpu_custom_call.1} parent=1 // pred_region
      %143 = dma.done [#allocation12], 16384
    $region61: #{tpu_custom_call.1} parent=1 // pred_fallthru
      _
    // Predicated region
    $region62: #{tpu_custom_call.1} parent=1 // pred_check
      _
    $region63: #{tpu_custom_call.1} parent=1 // pred_check_branch
      %145 = sbr.rel (0) target = $region65
    $region64: #{tpu_custom_call.1} parent=1 // pred_region
      %146 = dma.done [#allocation12], 2048
    $region65: #{tpu_custom_call.1} parent=1 // pred_fallthru
      _
    // Predicated region
    $region66: #{tpu_custom_call.1} parent=1 // pred_check
      _
    $region67: #{tpu_custom_call.1} parent=1 // pred_check_branch
      %148 = sbr.rel (0) target = $region69
    $region68: #{tpu_custom_call.1} parent=1 // pred_region
      %149 = dma.done [#allocation15], 1024
    $region69: #{tpu_custom_call.1} parent=1 // pred_fallthru
      _
    // Predicated region
    $region70: #{tpu_custom_call.1} parent=1 // pred_check
      _
    $region71: #{tpu_custom_call.1} parent=1 // pred_check_branch
      %151 = sbr.rel (0) target = $region73
    $region72: #{tpu_custom_call.1} parent=1 // pred_region
      %152 = dma.done [#allocation15], 1024
    $region73: #{tpu_custom_call.1} parent=1 // pred_fallthru
      _
    %v154 = vld [vmem:[#allocation2] sm:$0xff]
    %v155 = vld [vmem:[#allocation2 + $0x8] sm:$0xff]
    %v156 = vld [vmem:[#allocation2 + $0x10] sm:$0xff]
    %v157 = vld [vmem:[#allocation2 + $0x18] sm:$0xff]
    %v158 = vld [vmem:[#allocation2 + $0x20] sm:$0xff]
    %v159 = vld [vmem:[#allocation2 + $0x28] sm:$0xff]
    %v160 = vld [vmem:[#allocation2 + $0x30] sm:$0xff]
    %v161 = vld [vmem:[#allocation2 + $0x38] sm:$0xff]
    %v162 = vld [vmem:[#allocation2 + $0x40] sm:$0xff]
    %v163 = vld [vmem:[#allocation2 + $0x48] sm:$0xff]
    %v164 = vld [vmem:[#allocation2 + $0x50] sm:$0xff]
    %v165 = vld [vmem:[#allocation2 + $0x58] sm:$0xff]
    %v166 = vld [vmem:[#allocation2 + $0x60] sm:$0xff]
    %v167 = vld [vmem:[#allocation2 + $0x68] sm:$0xff]
    %v168 = vld [vmem:[#allocation2 + $0x70] sm:$0xff]
    %v169 = vld [vmem:[#allocation2 + $0x78] sm:$0xff]
    %v170 = vpack.c.bf16 %v155, %v154
    %v171 = vpack.c.bf16 %v157, %v156
    %v172 = vpack.c.bf16 %v159, %v158
    %v173 = vpack.c.bf16 %v161, %v160
    %v174 = vpack.c.bf16 %v163, %v162
    %v175 = vpack.c.bf16 %v165, %v164
    %v176 = vpack.c.bf16 %v167, %v166
    %v177 = vpack.c.bf16 %v169, %v168
    %v178 = vld [vmem:[#allocation5] sm:$0xf]
    %v179 = vld [vmem:[#allocation5 + $0x4] sm:$0xf]
    %v180 = vld [vmem:[#allocation5 + $0x8] sm:$0xf]
    %v181 = vld [vmem:[#allocation5 + $0xc] sm:$0xf]
    %v182 = vld [vmem:[#allocation5 + $0x10] sm:$0xf]
    %v183 = vld [vmem:[#allocation5 + $0x14] sm:$0xf]
    %v184 = vld [vmem:[#allocation5 + $0x18] sm:$0xf]
    %v185 = vld [vmem:[#allocation5 + $0x1c] sm:$0xf]
    %v186 = vld [vmem:[#allocation5 + $0x20] sm:$0xf]
    %v187 = vld [vmem:[#allocation5 + $0x24] sm:$0xf]
    %v188 = vld [vmem:[#allocation5 + $0x28] sm:$0xf]
    %v189 = vld [vmem:[#allocation5 + $0x2c] sm:$0xf]
    %v190 = vld [vmem:[#allocation5 + $0x30] sm:$0xf]
    %v191 = vld [vmem:[#allocation5 + $0x34] sm:$0xf]
    %v192 = vld [vmem:[#allocation5 + $0x38] sm:$0xf]
    %v193 = vld [vmem:[#allocation5 + $0x3c] sm:$0xf]
    %v194 = vld [vmem:[#allocation16] ss:$0 sm:$0xff]
    %v211 = vunpack.c.l.b16 %v178
    %v212 = vunpack.c.l.b16 %v179
    %v213 = vunpack.c.l.b16 %v180
    %v214 = vunpack.c.l.b16 %v181
    %v215 = vunpack.c.l.b16 %v182
    %v216 = vunpack.c.l.b16 %v183
    %v217 = vunpack.c.l.b16 %v184
    %v218 = vunpack.c.l.b16 %v185
    %v219 = vunpack.c.l.b16 %v186
    %v220 = vunpack.c.l.b16 %v187
    %v221 = vunpack.c.l.b16 %v188
    %v222 = vunpack.c.l.b16 %v189
    %v223 = vunpack.c.l.b16 %v190
    %v224 = vunpack.c.l.b16 %v191
    %v225 = vunpack.c.l.b16 %v192
    %v226 = vunpack.c.l.b16 %v193
    %v227 = vpack.c.b16 %v212, %v211
    %v228 = vpack.c.b16 %v214, %v213
    %v229 = vpack.c.b16 %v216, %v215
    %v230 = vpack.c.b16 %v218, %v217
    %v231 = vpack.c.b16 %v220, %v219
    %v232 = vpack.c.b16 %v222, %v221
    %v233 = vpack.c.b16 %v224, %v223
    %v234 = vpack.c.b16 %v226, %v225
    %243 = vmatprep.subr.bf16.mxu0 0
    %244 = vmatpush1.bf16.msra.mxu0 %v227
    %245 = vmatprep.subr.bf16.mxu0 0
    %246 = vmatpush1.bf16.msra.mxu0 %v228
    %247 = vmatprep.subr.bf16.mxu0 0
    %248 = vmatpush1.bf16.msra.mxu0 %v229
    %249 = vmatprep.subr.bf16.mxu0 0
    %250 = vmatpush1.bf16.msra.mxu0 %v230
    %251 = vmatprep.subr.bf16.mxu0 0
    %252 = vmatpush1.bf16.msra.mxu0 %v231
    %253 = vmatprep.subr.bf16.mxu0 0
    %254 = vmatpush1.bf16.msra.mxu0 %v232
    %255 = vmatprep.subr.bf16.mxu0 0
    %256 = vmatpush1.bf16.msra.mxu0 %v233
    %257 = vmatprep.subr.bf16.mxu0 0
    %258 = vmatpush1.bf16.msra.mxu0 %v234
    %259 = vmatprep.subr.bf16.mxu0 0
    %260 = vmatpush1.bf16.msra.mxu0 0
    %261 = vmatprep.subr.bf16.mxu0 0
    %262 = vmatpush1.bf16.msra.mxu0 0
    %263 = vmatprep.subr.bf16.mxu0 0
    %264 = vmatpush1.bf16.msra.mxu0 0
    %265 = vmatprep.subr.bf16.mxu0 0
    %266 = vmatpush1.bf16.msra.mxu0 0
    %267 = vmatprep.subr.bf16.mxu0 0
    %268 = vmatpush1.bf16.msra.mxu0 0
    %269 = vmatprep.subr.bf16.mxu0 0
    %270 = vmatpush1.bf16.msra.mxu0 0
    %271 = vmatprep.subr.bf16.mxu0 0
    %272 = vmatpush1.bf16.msra.mxu0 0
    %273 = vmatprep.subr.bf16.mxu0 0
    %274 = vmatpush1.bf16.msra.mxu0 0
    %275 = vmatprep.mubr.bf16.mxu0 0
    %276 = vmatmul.mubr.bf16.gmra.mrb[0].mxu0 %v170
    %v277 = vpop.f32.mrb[0].mxu0
    %v278 = vadd.f32 %v194, %v277
    %v279 = vpop.f32.mrb[0].mxu0
    %v280 = vpop.f32.mrb[0].mxu0
    %v281 = vadd.f32 %v194, %v280
    %v282 = vpop.f32.mrb[0].mxu0
    %283 = vmatprep.mubr.bf16.mxu0 0
    %284 = vmatmul.mubr.bf16.gmra.mrb[0].mxu0 %v171
    %v285 = vpop.f32.mrb[0].mxu0
    %v286 = vadd.f32 %v194, %v285
    %v287 = vpop.f32.mrb[0].mxu0
    %v288 = vpop.f32.mrb[0].mxu0
    %v289 = vadd.f32 %v194, %v288
    %v290 = vpop.f32.mrb[0].mxu0
    %291 = vmatprep.mubr.bf16.mxu0 0
    %292 = vmatmul.mubr.bf16.gmra.mrb[0].mxu0 %v172
    %v293 = vpop.f32.mrb[0].mxu0
    %v294 = vadd.f32 %v194, %v293
    %v295 = vpop.f32.mrb[0].mxu0
    %v296 = vpop.f32.mrb[0].mxu0
    %v297 = vadd.f32 %v194, %v296
    %v298 = vpop.f32.mrb[0].mxu0
    %299 = vmatprep.mubr.bf16.mxu0 0
    %300 = vmatmul.mubr.bf16.gmra.mrb[0].mxu0 %v173
    %v301 = vpop.f32.mrb[0].mxu0
    %v302 = vadd.f32 %v194, %v301
    %v303 = vpop.f32.mrb[0].mxu0
    %v304 = vpop.f32.mrb[0].mxu0
    %v305 = vadd.f32 %v194, %v304
    %v306 = vpop.f32.mrb[0].mxu0
    %307 = vmatprep.mubr.bf16.mxu0 0
    %308 = vmatmul.mubr.bf16.gmra.mrb[0].mxu0 %v174
    %v309 = vpop.f32.mrb[0].mxu0
    %v310 = vadd.f32 %v194, %v309
    %v311 = vpop.f32.mrb[0].mxu0
    %v312 = vpop.f32.mrb[0].mxu0
    %v313 = vadd.f32 %v194, %v312
    %v314 = vpop.f32.mrb[0].mxu0
    %315 = vmatprep.mubr.bf16.mxu0 0
    %316 = vmatmul.mubr.bf16.gmra.mrb[0].mxu0 %v175
    %v317 = vpop.f32.mrb[0].mxu0
    %v318 = vadd.f32 %v194, %v317
    %v319 = vpop.f32.mrb[0].mxu0
    %v320 = vpop.f32.mrb[0].mxu0
    %v321 = vadd.f32 %v194, %v320
    %v322 = vpop.f32.mrb[0].mxu0
    %323 = vmatprep.mubr.bf16.mxu0 0
    %324 = vmatmul.mubr.bf16.gmra.mrb[0].mxu0 %v176
    %v325 = vpop.f32.mrb[0].mxu0
    %v326 = vadd.f32 %v194, %v325
    %v327 = vpop.f32.mrb[0].mxu0
    %v328 = vpop.f32.mrb[0].mxu0
    %v329 = vadd.f32 %v194, %v328
    %v330 = vpop.f32.mrb[0].mxu0
    %331 = vmatprep.mubr.bf16.mxu0 0
    %332 = vmatmul.mubr.bf16.gmra.mrb[0].mxu0 %v177
    %v333 = vpop.f32.mrb[0].mxu0
    %v334 = vadd.f32 %v194, %v333
    %v335 = vpop.f32.mrb[0].mxu0
    %v336 = vpop.f32.mrb[0].mxu0
    %v337 = vadd.f32 %v194, %v336
    %v338 = vpop.f32.mrb[0].mxu0
    %339 = vdwg.mxu0
    %v340 = vmax.f32 %v278, 0.0
    %v341 = vmax.f32 %v281, 0.0
    %v342 = vmax.f32 %v286, 0.0
    %v343 = vmax.f32 %v289, 0.0
    %v344 = vmax.f32 %v294, 0.0
    %v345 = vmax.f32 %v297, 0.0
    %v346 = vmax.f32 %v302, 0.0
    %v347 = vmax.f32 %v305, 0.0
    %v348 = vmax.f32 %v310, 0.0
    %v349 = vmax.f32 %v313, 0.0
    %v350 = vmax.f32 %v318, 0.0
    %v351 = vmax.f32 %v321, 0.0
    %v352 = vmax.f32 %v326, 0.0
    %v353 = vmax.f32 %v329, 0.0
    %v354 = vmax.f32 %v334, 0.0
    %v355 = vmax.f32 %v337, 0.0
    %v356 = vpack.c.bf16 %v341, %v340
    %v357 = vpack.c.bf16 %v343, %v342
    %v358 = vpack.c.bf16 %v345, %v344
    %v359 = vpack.c.bf16 %v347, %v346
    %v360 = vpack.c.bf16 %v349, %v348
    %v361 = vpack.c.bf16 %v351, %v350
    %v362 = vpack.c.bf16 %v353, %v352
    %v363 = vpack.c.bf16 %v355, %v354
    %v364 = vld [vmem:[#allocation7] sm:$0xff]
    %v365 = vld [vmem:[#allocation7 + $0x8] sm:$0xff]
    %v366 = vld [vmem:[#allocation7 + $0x10] sm:$0xff]
    %v367 = vld [vmem:[#allocation7 + $0x18] sm:$0xff]
    %v368 = vld [vmem:[#allocation7 + $0x20] sm:$0xff]
    %v369 = vld [vmem:[#allocation7 + $0x28] sm:$0xff]
    %v370 = vld [vmem:[#allocation7 + $0x30] sm:$0xff]
    %v371 = vld [vmem:[#allocation7 + $0x38] sm:$0xff]
    %v372 = vld [vmem:[#allocation7 + $0x40] sm:$0xff]
    %v373 = vld [vmem:[#allocation7 + $0x48] sm:$0xff]
    %v374 = vld [vmem:[#allocation7 + $0x50] sm:$0xff]
    %v375 = vld [vmem:[#allocation7 + $0x58] sm:$0xff]
    %v376 = vld [vmem:[#allocation7 + $0x60] sm:$0xff]
    %v377 = vld [vmem:[#allocation7 + $0x68] sm:$0xff]
    %v378 = vld [vmem:[#allocation7 + $0x70] sm:$0xff]
    %v379 = vld [vmem:[#allocation7 + $0x78] sm:$0xff]
    %s380 = scalar_lea.vmem [#allocation16], 1
    %v381 = vld [vmem:[%s380] ss:$8 sm:$0x3]
    %v383 = vlaneseq
    %v384 = vshrl.u32 %v383, 7
    %v385 = vsub.s32 0, %v384
    %v386 = vrot.slane %v381, %v385
    %v387 = vlaneseq
    %v388 = vshrl.u32 %v387, 7
    %v389 = vsub.s32 1, %v388
    %v390 = vrot.slane %v381, %v389
    %v409 = vunpack.c.l.b16 %v364
    %v410 = vunpack.c.h.b16 %v364
    %v411 = vunpack.c.l.b16 %v365
    %v412 = vunpack.c.h.b16 %v365
    %v413 = vunpack.c.l.b16 %v366
    %v414 = vunpack.c.h.b16 %v366
    %v415 = vunpack.c.l.b16 %v367
    %v416 = vunpack.c.h.b16 %v367
    %v417 = vunpack.c.l.b16 %v368
    %v418 = vunpack.c.h.b16 %v368
    %v419 = vunpack.c.l.b16 %v369
    %v420 = vunpack.c.h.b16 %v369
    %v421 = vunpack.c.l.b16 %v370
    %v422 = vunpack.c.h.b16 %v370
    %v423 = vunpack.c.l.b16 %v371
    %v424 = vunpack.c.h.b16 %v371
    %v425 = vunpack.c.l.b16 %v372
    %v426 = vunpack.c.h.b16 %v372
    %v427 = vunpack.c.l.b16 %v373
    %v428 = vunpack.c.h.b16 %v373
    %v429 = vunpack.c.l.b16 %v374
    %v430 = vunpack.c.h.b16 %v374
    %v431 = vunpack.c.l.b16 %v375
    %v432 = vunpack.c.h.b16 %v375
    %v433 = vunpack.c.l.b16 %v376
    %v434 = vunpack.c.h.b16 %v376
    %v435 = vunpack.c.l.b16 %v377
    %v436 = vunpack.c.h.b16 %v377
    %v437 = vunpack.c.l.b16 %v378
    %v438 = vunpack.c.h.b16 %v378
    %v439 = vunpack.c.l.b16 %v379
    %v440 = vunpack.c.h.b16 %v379
    %v441 = vpack.c.b16 %v411, %v409
    %v442 = vpack.c.b16 %v412, %v410
    %v443 = vpack.c.b16 %v415, %v413
    %v444 = vpack.c.b16 %v416, %v414
    %v445 = vpack.c.b16 %v419, %v417
    %v446 = vpack.c.b16 %v420, %v418
    %v447 = vpack.c.b16 %v423, %v421
    %v448 = vpack.c.b16 %v424, %v422
    %v449 = vpack.c.b16 %v427, %v425
    %v450 = vpack.c.b16 %v428, %v426
    %v451 = vpack.c.b16 %v431, %v429
    %v452 = vpack.c.b16 %v432, %v430
    %v453 = vpack.c.b16 %v435, %v433
    %v454 = vpack.c.b16 %v436, %v434
    %v455 = vpack.c.b16 %v439, %v437
    %v456 = vpack.c.b16 %v440, %v438
    %473 = vmatprep.subr.bf16.mxu0 %v442
    %474 = vmatpush1.bf16.msra.mxu0 %v441
    %475 = vmatprep.subr.bf16.mxu0 %v444
    %476 = vmatpush1.bf16.msra.mxu0 %v443
    %477 = vmatprep.subr.bf16.mxu0 %v446
    %478 = vmatpush1.bf16.msra.mxu0 %v445
    %479 = vmatprep.subr.bf16.mxu0 %v448
    %480 = vmatpush1.bf16.msra.mxu0 %v447
    %481 = vmatprep.subr.bf16.mxu0 %v450
    %482 = vmatpush1.bf16.msra.mxu0 %v449
    %483 = vmatprep.subr.bf16.mxu0 %v452
    %484 = vmatpush1.bf16.msra.mxu0 %v451
    %485 = vmatprep.subr.bf16.mxu0 %v454
    %486 = vmatpush1.bf16.msra.mxu0 %v453
    %487 = vmatprep.subr.bf16.mxu0 %v456
    %488 = vmatpush1.bf16.msra.mxu0 %v455
    %489 = vmatprep.subr.bf16.mxu0 0
    %490 = vmatpush1.bf16.msra.mxu0 0
    %491 = vmatprep.subr.bf16.mxu0 0
    %492 = vmatpush1.bf16.msra.mxu0 0
    %493 = vmatprep.subr.bf16.mxu0 0
    %494 = vmatpush1.bf16.msra.mxu0 0
    %495 = vmatprep.subr.bf16.mxu0 0
    %496 = vmatpush1.bf16.msra.mxu0 0
    %497 = vmatprep.subr.bf16.mxu0 0
    %498 = vmatpush1.bf16.msra.mxu0 0
    %499 = vmatprep.subr.bf16.mxu0 0
    %500 = vmatpush1.bf16.msra.mxu0 0
    %501 = vmatprep.subr.bf16.mxu0 0
    %502 = vmatpush1.bf16.msra.mxu0 0
    %503 = vmatprep.subr.bf16.mxu0 0
    %504 = vmatpush1.bf16.msra.mxu0 0
    %505 = vmatprep.mubr.bf16.mxu0 0
    %506 = vmatmul.mubr.bf16.gmra.mrb[0].mxu0 %v356
    %v507 = vpop.f32.mrb[0].mxu0
    %v508 = vadd.f32 %v386, %v507
    %v509 = vpop.f32.mrb[0].mxu0
    %v510 = vadd.f32 %v390, %v509
    %v511 = vpop.f32.mrb[0].mxu0
    %v512 = vadd.f32 %v386, %v511
    %v513 = vpop.f32.mrb[0].mxu0
    %v514 = vadd.f32 %v390, %v513
    %515 = vmatprep.mubr.bf16.mxu0 0
    %516 = vmatmul.mubr.bf16.gmra.mrb[0].mxu0 %v357
    %v517 = vpop.f32.mrb[0].mxu0
    %v518 = vadd.f32 %v386, %v517
    %v519 = vpop.f32.mrb[0].mxu0
    %v520 = vadd.f32 %v390, %v519
    %v521 = vpop.f32.mrb[0].mxu0
    %v522 = vadd.f32 %v386, %v521
    %v523 = vpop.f32.mrb[0].mxu0
    %v524 = vadd.f32 %v390, %v523
    %525 = vmatprep.mubr.bf16.mxu0 0
    %526 = vmatmul.mubr.bf16.gmra.mrb[0].mxu0 %v358
    %v527 = vpop.f32.mrb[0].mxu0
    %v528 = vadd.f32 %v386, %v527
    %v529 = vpop.f32.mrb[0].mxu0
    %v530 = vadd.f32 %v390, %v529
    %v531 = vpop.f32.mrb[0].mxu0
    %v532 = vadd.f32 %v386, %v531
    %v533 = vpop.f32.mrb[0].mxu0
    %v534 = vadd.f32 %v390, %v533
    %535 = vmatprep.mubr.bf16.mxu0 0
    %536 = vmatmul.mubr.bf16.gmra.mrb[0].mxu0 %v359
    %v537 = vpop.f32.mrb[0].mxu0
    %v538 = vadd.f32 %v386, %v537
    %v539 = vpop.f32.mrb[0].mxu0
    %v540 = vadd.f32 %v390, %v539
    %v541 = vpop.f32.mrb[0].mxu0
    %v542 = vadd.f32 %v386, %v541
    %v543 = vpop.f32.mrb[0].mxu0
    %v544 = vadd.f32 %v390, %v543
    %545 = vmatprep.mubr.bf16.mxu0 0
    %546 = vmatmul.mubr.bf16.gmra.mrb[0].mxu0 %v360
    %v547 = vpop.f32.mrb[0].mxu0
    %v548 = vadd.f32 %v386, %v547
    %v549 = vpop.f32.mrb[0].mxu0
    %v550 = vadd.f32 %v390, %v549
    %v551 = vpop.f32.mrb[0].mxu0
    %v552 = vadd.f32 %v386, %v551
    %v553 = vpop.f32.mrb[0].mxu0
    %v554 = vadd.f32 %v390, %v553
    %555 = vmatprep.mubr.bf16.mxu0 0
    %556 = vmatmul.mubr.bf16.gmra.mrb[0].mxu0 %v361
    %v557 = vpop.f32.mrb[0].mxu0
    %v558 = vadd.f32 %v386, %v557
    %v559 = vpop.f32.mrb[0].mxu0
    %v560 = vadd.f32 %v390, %v559
    %v561 = vpop.f32.mrb[0].mxu0
    %v562 = vadd.f32 %v386, %v561
    %v563 = vpop.f32.mrb[0].mxu0
    %v564 = vadd.f32 %v390, %v563
    %565 = vmatprep.mubr.bf16.mxu0 0
    %566 = vmatmul.mubr.bf16.gmra.mrb[0].mxu0 %v362
    %v567 = vpop.f32.mrb[0].mxu0
    %v568 = vadd.f32 %v386, %v567
    %v569 = vpop.f32.mrb[0].mxu0
    %v570 = vadd.f32 %v390, %v569
    %v571 = vpop.f32.mrb[0].mxu0
    %v572 = vadd.f32 %v386, %v571
    %v573 = vpop.f32.mrb[0].mxu0
    %v574 = vadd.f32 %v390, %v573
    %575 = vmatprep.mubr.bf16.mxu0 0
    %576 = vmatmul.mubr.bf16.gmra.mrb[0].mxu0 %v363
    %v577 = vpop.f32.mrb[0].mxu0
    %v578 = vadd.f32 %v386, %v577
    %v579 = vpop.f32.mrb[0].mxu0
    %v580 = vadd.f32 %v390, %v579
    %v581 = vpop.f32.mrb[0].mxu0
    %v582 = vadd.f32 %v386, %v581
    %v583 = vpop.f32.mrb[0].mxu0
    %v584 = vadd.f32 %v390, %v583
    %585 = vdwg.mxu0
    %v586 = vmax.f32 %v508, 0.0
    %v587 = vmax.f32 %v510, 0.0
    %v588 = vmax.f32 %v512, 0.0
    %v589 = vmax.f32 %v514, 0.0
    %v590 = vmax.f32 %v518, 0.0
    %v591 = vmax.f32 %v520, 0.0
    %v592 = vmax.f32 %v522, 0.0
    %v593 = vmax.f32 %v524, 0.0
    %v594 = vmax.f32 %v528, 0.0
    %v595 = vmax.f32 %v530, 0.0
    %v596 = vmax.f32 %v532, 0.0
    %v597 = vmax.f32 %v534, 0.0
    %v598 = vmax.f32 %v538, 0.0
    %v599 = vmax.f32 %v540, 0.0
    %v600 = vmax.f32 %v542, 0.0
    %v601 = vmax.f32 %v544, 0.0
    %v602 = vmax.f32 %v548, 0.0
    %v603 = vmax.f32 %v550, 0.0
    %v604 = vmax.f32 %v552, 0.0
    %v605 = vmax.f32 %v554, 0.0
    %v606 = vmax.f32 %v558, 0.0
    %v607 = vmax.f32 %v560, 0.0
    %v608 = vmax.f32 %v562, 0.0
    %v609 = vmax.f32 %v564, 0.0
    %v610 = vmax.f32 %v568, 0.0
    %v611 = vmax.f32 %v570, 0.0
    %v612 = vmax.f32 %v572, 0.0
    %v613 = vmax.f32 %v574, 0.0
    %v614 = vmax.f32 %v578, 0.0
    %v615 = vmax.f32 %v580, 0.0
    %v616 = vmax.f32 %v582, 0.0
    %v617 = vmax.f32 %v584, 0.0
    %v618 = vpack.c.bf16 %v588, %v586
    %v619 = vpack.c.bf16 %v589, %v587
    %v620 = vpack.c.bf16 %v592, %v590
    %v621 = vpack.c.bf16 %v593, %v591
    %v622 = vpack.c.bf16 %v596, %v594
    %v623 = vpack.c.bf16 %v597, %v595
    %v624 = vpack.c.bf16 %v600, %v598
    %v625 = vpack.c.bf16 %v601, %v599
    %v626 = vpack.c.bf16 %v604, %v602
    %v627 = vpack.c.bf16 %v605, %v603
    %v628 = vpack.c.bf16 %v608, %v606
    %v629 = vpack.c.bf16 %v609, %v607
    %v630 = vpack.c.bf16 %v612, %v610
    %v631 = vpack.c.bf16 %v613, %v611
    %v632 = vpack.c.bf16 %v616, %v614
    %v633 = vpack.c.bf16 %v617, %v615
    %v634 = vld [vmem:[#allocation8] sm:$0xff]
    %v635 = vld [vmem:[#allocation8 + $0x8] sm:$0xff]
    %v636 = vld [vmem:[#allocation8 + $0x10] sm:$0xff]
    %v637 = vld [vmem:[#allocation8 + $0x18] sm:$0xff]
    %v638 = vld [vmem:[#allocation8 + $0x20] sm:$0xff]
    %v639 = vld [vmem:[#allocation8 + $0x28] sm:$0xff]
    %v640 = vld [vmem:[#allocation8 + $0x30] sm:$0xff]
    %v641 = vld [vmem:[#allocation8 + $0x38] sm:$0xff]
    %v642 = vld [vmem:[#allocation8 + $0x40] sm:$0xff]
    %v643 = vld [vmem:[#allocation8 + $0x48] sm:$0xff]
    %v644 = vld [vmem:[#allocation8 + $0x50] sm:$0xff]
    %v645 = vld [vmem:[#allocation8 + $0x58] sm:$0xff]
    %v646 = vld [vmem:[#allocation8 + $0x60] sm:$0xff]
    %v647 = vld [vmem:[#allocation8 + $0x68] sm:$0xff]
    %v648 = vld [vmem:[#allocation8 + $0x70] sm:$0xff]
    %v649 = vld [vmem:[#allocation8 + $0x78] sm:$0xff]
    %v650 = vld [vmem:[#allocation8 + $0x80] sm:$0xff]
    %v651 = vld [vmem:[#allocation8 + $0x88] sm:$0xff]
    %v652 = vld [vmem:[#allocation8 + $0x90] sm:$0xff]
    %v653 = vld [vmem:[#allocation8 + $0x98] sm:$0xff]
    %v654 = vld [vmem:[#allocation8 + $0xa0] sm:$0xff]
    %v655 = vld [vmem:[#allocation8 + $0xa8] sm:$0xff]
    %v656 = vld [vmem:[#allocation8 + $0xb0] sm:$0xff]
    %v657 = vld [vmem:[#allocation8 + $0xb8] sm:$0xff]
    %v658 = vld [vmem:[#allocation8 + $0xc0] sm:$0xff]
    %v659 = vld [vmem:[#allocation8 + $0xc8] sm:$0xff]
    %v660 = vld [vmem:[#allocation8 + $0xd0] sm:$0xff]
    %v661 = vld [vmem:[#allocation8 + $0xd8] sm:$0xff]
    %v662 = vld [vmem:[#allocation8 + $0xe0] sm:$0xff]
    %v663 = vld [vmem:[#allocation8 + $0xe8] sm:$0xff]
    %v664 = vld [vmem:[#allocation8 + $0xf0] sm:$0xff]
    %v665 = vld [vmem:[#allocation8 + $0xf8] sm:$0xff]
    %v666 = vld [vmem:[#allocation8 + $0x100] sm:$0xff]
    %v667 = vld [vmem:[#allocation8 + $0x108] sm:$0xff]
    %v668 = vld [vmem:[#allocation8 + $0x110] sm:$0xff]
    %v669 = vld [vmem:[#allocation8 + $0x118] sm:$0xff]
    %v670 = vld [vmem:[#allocation8 + $0x120] sm:$0xff]
    %v671 = vld [vmem:[#allocation8 + $0x128] sm:$0xff]
    %v672 = vld [vmem:[#allocation8 + $0x130] sm:$0xff]
    %v673 = vld [vmem:[#allocation8 + $0x138] sm:$0xff]
    %v674 = vld [vmem:[#allocation8 + $0x140] sm:$0xff]
    %v675 = vld [vmem:[#allocation8 + $0x148] sm:$0xff]
    %v676 = vld [vmem:[#allocation8 + $0x150] sm:$0xff]
    %v677 = vld [vmem:[#allocation8 + $0x158] sm:$0xff]
    %v678 = vld [vmem:[#allocation8 + $0x160] sm:$0xff]
    %v679 = vld [vmem:[#allocation8 + $0x168] sm:$0xff]
    %v680 = vld [vmem:[#allocation8 + $0x170] sm:$0xff]
    %v681 = vld [vmem:[#allocation8 + $0x178] sm:$0xff]
    %v682 = vld [vmem:[#allocation8 + $0x180] sm:$0xff]
    %v683 = vld [vmem:[#allocation8 + $0x188] sm:$0xff]
    %v684 = vld [vmem:[#allocation8 + $0x190] sm:$0xff]
    %v685 = vld [vmem:[#allocation8 + $0x198] sm:$0xff]
    %v686 = vld [vmem:[#allocation8 + $0x1a0] sm:$0xff]
    %v687 = vld [vmem:[#allocation8 + $0x1a8] sm:$0xff]
    %v688 = vld [vmem:[#allocation8 + $0x1b0] sm:$0xff]
    %v689 = vld [vmem:[#allocation8 + $0x1b8] sm:$0xff]
    %v690 = vld [vmem:[#allocation8 + $0x1c0] sm:$0xff]
    %v691 = vld [vmem:[#allocation8 + $0x1c8] sm:$0xff]
    %v692 = vld [vmem:[#allocation8 + $0x1d0] sm:$0xff]
    %v693 = vld [vmem:[#allocation8 + $0x1d8] sm:$0xff]
    %v694 = vld [vmem:[#allocation8 + $0x1e0] sm:$0xff]
    %v695 = vld [vmem:[#allocation8 + $0x1e8] sm:$0xff]
    %v696 = vld [vmem:[#allocation8 + $0x1f0] sm:$0xff]
    %v697 = vld [vmem:[#allocation8 + $0x1f8] sm:$0xff]
    %v698 = vld [vmem:[#allocation8 + $0x200] sm:$0xff]
    %v699 = vld [vmem:[#allocation8 + $0x208] sm:$0xff]
    %v700 = vld [vmem:[#allocation8 + $0x210] sm:$0xff]
    %v701 = vld [vmem:[#allocation8 + $0x218] sm:$0xff]
    %v702 = vld [vmem:[#allocation8 + $0x220] sm:$0xff]
    %v703 = vld [vmem:[#allocation8 + $0x228] sm:$0xff]
    %v704 = vld [vmem:[#allocation8 + $0x230] sm:$0xff]
    %v705 = vld [vmem:[#allocation8 + $0x238] sm:$0xff]
    %v706 = vld [vmem:[#allocation8 + $0x240] sm:$0xff]
    %v707 = vld [vmem:[#allocation8 + $0x248] sm:$0xff]
    %v708 = vld [vmem:[#allocation8 + $0x250] sm:$0xff]
    %v709 = vld [vmem:[#allocation8 + $0x258] sm:$0xff]
    %v710 = vld [vmem:[#allocation8 + $0x260] sm:$0xff]
    %v711 = vld [vmem:[#allocation8 + $0x268] sm:$0xff]
    %v712 = vld [vmem:[#allocation8 + $0x270] sm:$0xff]
    %v713 = vld [vmem:[#allocation8 + $0x278] sm:$0xff]
    %v714 = vld [vmem:[#allocation8 + $0x280] sm:$0xff]
    %v715 = vld [vmem:[#allocation8 + $0x288] sm:$0xff]
    %v716 = vld [vmem:[#allocation8 + $0x290] sm:$0xff]
    %v717 = vld [vmem:[#allocation8 + $0x298] sm:$0xff]
    %v718 = vld [vmem:[#allocation8 + $0x2a0] sm:$0xff]
    %v719 = vld [vmem:[#allocation8 + $0x2a8] sm:$0xff]
    %v720 = vld [vmem:[#allocation8 + $0x2b0] sm:$0xff]
    %v721 = vld [vmem:[#allocation8 + $0x2b8] sm:$0xff]
    %v722 = vld [vmem:[#allocation8 + $0x2c0] sm:$0xff]
    %v723 = vld [vmem:[#allocation8 + $0x2c8] sm:$0xff]
    %v724 = vld [vmem:[#allocation8 + $0x2d0] sm:$0xff]
    %v725 = vld [vmem:[#allocation8 + $0x2d8] sm:$0xff]
    %v726 = vld [vmem:[#allocation8 + $0x2e0] sm:$0xff]
    %v727 = vld [vmem:[#allocation8 + $0x2e8] sm:$0xff]
    %v728 = vld [vmem:[#allocation8 + $0x2f0] sm:$0xff]
    %v729 = vld [vmem:[#allocation8 + $0x2f8] sm:$0xff]
    %v730 = vld [vmem:[#allocation8 + $0x300] sm:$0xff]
    %v731 = vld [vmem:[#allocation8 + $0x308] sm:$0xff]
    %v732 = vld [vmem:[#allocation8 + $0x310] sm:$0xff]
    %v733 = vld [vmem:[#allocation8 + $0x318] sm:$0xff]
    %v734 = vld [vmem:[#allocation8 + $0x320] sm:$0xff]
    %v735 = vld [vmem:[#allocation8 + $0x328] sm:$0xff]
    %v736 = vld [vmem:[#allocation8 + $0x330] sm:$0xff]
    %v737 = vld [vmem:[#allocation8 + $0x338] sm:$0xff]
    %v738 = vld [vmem:[#allocation8 + $0x340] sm:$0xff]
    %v739 = vld [vmem:[#allocation8 + $0x348] sm:$0xff]
    %v740 = vld [vmem:[#allocation8 + $0x350] sm:$0xff]
    %v741 = vld [vmem:[#allocation8 + $0x358] sm:$0xff]
    %v742 = vld [vmem:[#allocation8 + $0x360] sm:$0xff]
    %v743 = vld [vmem:[#allocation8 + $0x368] sm:$0xff]
    %v744 = vld [vmem:[#allocation8 + $0x370] sm:$0xff]
    %v745 = vld [vmem:[#allocation8 + $0x378] sm:$0xff]
    %v746 = vld [vmem:[#allocation8 + $0x380] sm:$0xff]
    %v747 = vld [vmem:[#allocation8 + $0x388] sm:$0xff]
    %v748 = vld [vmem:[#allocation8 + $0x390] sm:$0xff]
    %v749 = vld [vmem:[#allocation8 + $0x398] sm:$0xff]
    %v750 = vld [vmem:[#allocation8 + $0x3a0] sm:$0xff]
    %v751 = vld [vmem:[#allocation8 + $0x3a8] sm:$0xff]
    %v752 = vld [vmem:[#allocation8 + $0x3b0] sm:$0xff]
    %v753 = vld [vmem:[#allocation8 + $0x3b8] sm:$0xff]
    %v754 = vld [vmem:[#allocation8 + $0x3c0] sm:$0xff]
    %v755 = vld [vmem:[#allocation8 + $0x3c8] sm:$0xff]
    %v756 = vld [vmem:[#allocation8 + $0x3d0] sm:$0xff]
    %v757 = vld [vmem:[#allocation8 + $0x3d8] sm:$0xff]
    %v758 = vld [vmem:[#allocation8 + $0x3e0] sm:$0xff]
    %v759 = vld [vmem:[#allocation8 + $0x3e8] sm:$0xff]
    %v760 = vld [vmem:[#allocation8 + $0x3f0] sm:$0xff]
    %v761 = vld [vmem:[#allocation8 + $0x3f8] sm:$0xff]
    %s762 = scalar_lea.vmem [#allocation16], 2
    %v763 = vld [vmem:[%s762] ss:$8 sm:$0xf]
    %v764 = vld [vmem:[%s762] ss:$8 sm:$0xf0]
    %v765 = vor.u32 %v763, %v764
    %v767 = vlaneseq
    %v768 = vshrl.u32 %v767, 7
    %v769 = vsub.s32 0, %v768
    %v770 = vrot.slane %v765, %v769
    %v771 = vlaneseq
    %v772 = vshrl.u32 %v771, 7
    %v773 = vsub.s32 1, %v772
    %v774 = vrot.slane %v765, %v773
    %v775 = vlaneseq
    %v776 = vshrl.u32 %v775, 7
    %v777 = vsub.s32 2, %v776
    %v778 = vrot.slane %v765, %v777
    %v779 = vlaneseq
    %v780 = vshrl.u32 %v779, 7
    %v781 = vsub.s32 3, %v780
    %v782 = vrot.slane %v765, %v781
    %v783 = vlaneseq
    %v784 = vshrl.u32 %v783, 7
    %v785 = vsub.s32 4, %v784
    %v786 = vrot.slane %v765, %v785
    %v787 = vlaneseq
    %v788 = vshrl.u32 %v787, 7
    %v789 = vsub.s32 5, %v788
    %v790 = vrot.slane %v765, %v789
    %v791 = vlaneseq
    %v792 = vshrl.u32 %v791, 7
    %v793 = vsub.s32 6, %v792
    %v794 = vrot.slane %v765, %v793
    %v795 = vlaneseq
    %v796 = vshrl.u32 %v795, 7
    %v797 = vsub.s32 7, %v796
    %v798 = vrot.slane %v765, %v797
    %v935 = vunpack.c.l.b16 %v634
    %v936 = vunpack.c.h.b16 %v634
    %v937 = vunpack.c.l.b16 %v635
    %v938 = vunpack.c.h.b16 %v635
    %v939 = vunpack.c.l.b16 %v636
    %v940 = vunpack.c.h.b16 %v636
    %v941 = vunpack.c.l.b16 %v637
    %v942 = vunpack.c.h.b16 %v637
    %v943 = vunpack.c.l.b16 %v638
    %v944 = vunpack.c.h.b16 %v638
    %v945 = vunpack.c.l.b16 %v639
    %v946 = vunpack.c.h.b16 %v639
    %v947 = vunpack.c.l.b16 %v640
    %v948 = vunpack.c.h.b16 %v640
    %v949 = vunpack.c.l.b16 %v641
    %v950 = vunpack.c.h.b16 %v641
    %v951 = vunpack.c.l.b16 %v642
    %v952 = vunpack.c.h.b16 %v642
    %v953 = vunpack.c.l.b16 %v643
    %v954 = vunpack.c.h.b16 %v643
    %v955 = vunpack.c.l.b16 %v644
    %v956 = vunpack.c.h.b16 %v644
    %v957 = vunpack.c.l.b16 %v645
    %v958 = vunpack.c.h.b16 %v645
    %v959 = vunpack.c.l.b16 %v646
    %v960 = vunpack.c.h.b16 %v646
    %v961 = vunpack.c.l.b16 %v647
    %v962 = vunpack.c.h.b16 %v647
    %v963 = vunpack.c.l.b16 %v648
    %v964 = vunpack.c.h.b16 %v648
    %v965 = vunpack.c.l.b16 %v649
    %v966 = vunpack.c.h.b16 %v649
    %v967 = vunpack.c.l.b16 %v650
    %v968 = vunpack.c.h.b16 %v650
    %v969 = vunpack.c.l.b16 %v651
    %v970 = vunpack.c.h.b16 %v651
    %v971 = vunpack.c.l.b16 %v652
    %v972 = vunpack.c.h.b16 %v652
    %v973 = vunpack.c.l.b16 %v653
    %v974 = vunpack.c.h.b16 %v653
    %v975 = vunpack.c.l.b16 %v654
    %v976 = vunpack.c.h.b16 %v654
    %v977 = vunpack.c.l.b16 %v655
    %v978 = vunpack.c.h.b16 %v655
    %v979 = vunpack.c.l.b16 %v656
    %v980 = vunpack.c.h.b16 %v656
    %v981 = vunpack.c.l.b16 %v657
    %v982 = vunpack.c.h.b16 %v657
    %v983 = vunpack.c.l.b16 %v658
    %v984 = vunpack.c.h.b16 %v658
    %v985 = vunpack.c.l.b16 %v659
    %v986 = vunpack.c.h.b16 %v659
    %v987 = vunpack.c.l.b16 %v660
    %v988 = vunpack.c.h.b16 %v660
    %v989 = vunpack.c.l.b16 %v661
    %v990 = vunpack.c.h.b16 %v661
    %v991 = vunpack.c.l.b16 %v662
    %v992 = vunpack.c.h.b16 %v662
    %v993 = vunpack.c.l.b16 %v663
    %v994 = vunpack.c.h.b16 %v663
    %v995 = vunpack.c.l.b16 %v664
    %v996 = vunpack.c.h.b16 %v664
    %v997 = vunpack.c.l.b16 %v665
    %v998 = vunpack.c.h.b16 %v665
    %v999 = vunpack.c.l.b16 %v666
    %v1000 = vunpack.c.h.b16 %v666
    %v1001 = vunpack.c.l.b16 %v667
    %v1002 = vunpack.c.h.b16 %v667
    %v1003 = vunpack.c.l.b16 %v668
    %v1004 = vunpack.c.h.b16 %v668
    %v1005 = vunpack.c.l.b16 %v669
    %v1006 = vunpack.c.h.b16 %v669
    %v1007 = vunpack.c.l.b16 %v670
    %v1008 = vunpack.c.h.b16 %v670
    %v1009 = vunpack.c.l.b16 %v671
    %v1010 = vunpack.c.h.b16 %v671
    %v1011 = vunpack.c.l.b16 %v672
    %v1012 = vunpack.c.h.b16 %v672
    %v1013 = vunpack.c.l.b16 %v673
    %v1014 = vunpack.c.h.b16 %v673
    %v1015 = vunpack.c.l.b16 %v674
    %v1016 = vunpack.c.h.b16 %v674
    %v1017 = vunpack.c.l.b16 %v675
    %v1018 = vunpack.c.h.b16 %v675
    %v1019 = vunpack.c.l.b16 %v676
    %v1020 = vunpack.c.h.b16 %v676
    %v1021 = vunpack.c.l.b16 %v677
    %v1022 = vunpack.c.h.b16 %v677
    %v1023 = vunpack.c.l.b16 %v678
    %v1024 = vunpack.c.h.b16 %v678
    %v1025 = vunpack.c.l.b16 %v679
    %v1026 = vunpack.c.h.b16 %v679
    %v1027 = vunpack.c.l.b16 %v680
    %v1028 = vunpack.c.h.b16 %v680
    %v1029 = vunpack.c.l.b16 %v681
    %v1030 = vunpack.c.h.b16 %v681
    %v1031 = vunpack.c.l.b16 %v682
    %v1032 = vunpack.c.h.b16 %v682
    %v1033 = vunpack.c.l.b16 %v683
    %v1034 = vunpack.c.h.b16 %v683
    %v1035 = vunpack.c.l.b16 %v684
    %v1036 = vunpack.c.h.b16 %v684
    %v1037 = vunpack.c.l.b16 %v685
    %v1038 = vunpack.c.h.b16 %v685
    %v1039 = vunpack.c.l.b16 %v686
    %v1040 = vunpack.c.h.b16 %v686
    %v1041 = vunpack.c.l.b16 %v687
    %v1042 = vunpack.c.h.b16 %v687
    %v1043 = vunpack.c.l.b16 %v688
    %v1044 = vunpack.c.h.b16 %v688
    %v1045 = vunpack.c.l.b16 %v689
    %v1046 = vunpack.c.h.b16 %v689
    %v1047 = vunpack.c.l.b16 %v690
    %v1048 = vunpack.c.h.b16 %v690
    %v1049 = vunpack.c.l.b16 %v691
    %v1050 = vunpack.c.h.b16 %v691
    %v1051 = vunpack.c.l.b16 %v692
    %v1052 = vunpack.c.h.b16 %v692
    %v1053 = vunpack.c.l.b16 %v693
    %v1054 = vunpack.c.h.b16 %v693
    %v1055 = vunpack.c.l.b16 %v694
    %v1056 = vunpack.c.h.b16 %v694
    %v1057 = vunpack.c.l.b16 %v695
    %v1058 = vunpack.c.h.b16 %v695
    %v1059 = vunpack.c.l.b16 %v696
    %v1060 = vunpack.c.h.b16 %v696
    %v1061 = vunpack.c.l.b16 %v697
    %v1062 = vunpack.c.h.b16 %v697
    %v1063 = vunpack.c.l.b16 %v698
    %v1064 = vunpack.c.h.b16 %v698
    %v1065 = vunpack.c.l.b16 %v699
    %v1066 = vunpack.c.h.b16 %v699
    %v1067 = vunpack.c.l.b16 %v700
    %v1068 = vunpack.c.h.b16 %v700
    %v1069 = vunpack.c.l.b16 %v701
    %v1070 = vunpack.c.h.b16 %v701
    %v1071 = vunpack.c.l.b16 %v702
    %v1072 = vunpack.c.h.b16 %v702
    %v1073 = vunpack.c.l.b16 %v703
    %v1074 = vunpack.c.h.b16 %v703
    %v1075 = vunpack.c.l.b16 %v704
    %v1076 = vunpack.c.h.b16 %v704
    %v1077 = vunpack.c.l.b16 %v705
    %v1078 = vunpack.c.h.b16 %v705
    %v1079 = vunpack.c.l.b16 %v706
    %v1080 = vunpack.c.h.b16 %v706
    %v1081 = vunpack.c.l.b16 %v707
    %v1082 = vunpack.c.h.b16 %v707
    %v1083 = vunpack.c.l.b16 %v708
    %v1084 = vunpack.c.h.b16 %v708
    %v1085 = vunpack.c.l.b16 %v709
    %v1086 = vunpack.c.h.b16 %v709
    %v1087 = vunpack.c.l.b16 %v710
    %v1088 = vunpack.c.h.b16 %v710
    %v1089 = vunpack.c.l.b16 %v711
    %v1090 = vunpack.c.h.b16 %v711
    %v1091 = vunpack.c.l.b16 %v712
    %v1092 = vunpack.c.h.b16 %v712
    %v1093 = vunpack.c.l.b16 %v713
    %v1094 = vunpack.c.h.b16 %v713
    %v1095 = vunpack.c.l.b16 %v714
    %v1096 = vunpack.c.h.b16 %v714
    %v1097 = vunpack.c.l.b16 %v715
    %v1098 = vunpack.c.h.b16 %v715
    %v1099 = vunpack.c.l.b16 %v716
    %v1100 = vunpack.c.h.b16 %v716
    %v1101 = vunpack.c.l.b16 %v717
    %v1102 = vunpack.c.h.b16 %v717
    %v1103 = vunpack.c.l.b16 %v718
    %v1104 = vunpack.c.h.b16 %v718
    %v1105 = vunpack.c.l.b16 %v719
    %v1106 = vunpack.c.h.b16 %v719
    %v1107 = vunpack.c.l.b16 %v720
    %v1108 = vunpack.c.h.b16 %v720
    %v1109 = vunpack.c.l.b16 %v721
    %v1110 = vunpack.c.h.b16 %v721
    %v1111 = vunpack.c.l.b16 %v722
    %v1112 = vunpack.c.h.b16 %v722
    %v1113 = vunpack.c.l.b16 %v723
    %v1114 = vunpack.c.h.b16 %v723
    %v1115 = vunpack.c.l.b16 %v724
    %v1116 = vunpack.c.h.b16 %v724
    %v1117 = vunpack.c.l.b16 %v725
    %v1118 = vunpack.c.h.b16 %v725
    %v1119 = vunpack.c.l.b16 %v726
    %v1120 = vunpack.c.h.b16 %v726
    %v1121 = vunpack.c.l.b16 %v727
    %v1122 = vunpack.c.h.b16 %v727
    %v1123 = vunpack.c.l.b16 %v728
    %v1124 = vunpack.c.h.b16 %v728
    %v1125 = vunpack.c.l.b16 %v729
    %v1126 = vunpack.c.h.b16 %v729
    %v1127 = vunpack.c.l.b16 %v730
    %v1128 = vunpack.c.h.b16 %v730
    %v1129 = vunpack.c.l.b16 %v731
    %v1130 = vunpack.c.h.b16 %v731
    %v1131 = vunpack.c.l.b16 %v732
    %v1132 = vunpack.c.h.b16 %v732
    %v1133 = vunpack.c.l.b16 %v733
    %v1134 = vunpack.c.h.b16 %v733
    %v1135 = vunpack.c.l.b16 %v734
    %v1136 = vunpack.c.h.b16 %v734
    %v1137 = vunpack.c.l.b16 %v735
    %v1138 = vunpack.c.h.b16 %v735
    %v1139 = vunpack.c.l.b16 %v736
    %v1140 = vunpack.c.h.b16 %v736
    %v1141 = vunpack.c.l.b16 %v737
    %v1142 = vunpack.c.h.b16 %v737
    %v1143 = vunpack.c.l.b16 %v738
    %v1144 = vunpack.c.h.b16 %v738
    %v1145 = vunpack.c.l.b16 %v739
    %v1146 = vunpack.c.h.b16 %v739
    %v1147 = vunpack.c.l.b16 %v740
    %v1148 = vunpack.c.h.b16 %v740
    %v1149 = vunpack.c.l.b16 %v741
    %v1150 = vunpack.c.h.b16 %v741
    %v1151 = vunpack.c.l.b16 %v742
    %v1152 = vunpack.c.h.b16 %v742
    %v1153 = vunpack.c.l.b16 %v743
    %v1154 = vunpack.c.h.b16 %v743
    %v1155 = vunpack.c.l.b16 %v744
    %v1156 = vunpack.c.h.b16 %v744
    %v1157 = vunpack.c.l.b16 %v745
    %v1158 = vunpack.c.h.b16 %v745
    %v1159 = vunpack.c.l.b16 %v746
    %v1160 = vunpack.c.h.b16 %v746
    %v1161 = vunpack.c.l.b16 %v747
    %v1162 = vunpack.c.h.b16 %v747
    %v1163 = vunpack.c.l.b16 %v748
    %v1164 = vunpack.c.h.b16 %v748
    %v1165 = vunpack.c.l.b16 %v749
    %v1166 = vunpack.c.h.b16 %v749
    %v1167 = vunpack.c.l.b16 %v750
    %v1168 = vunpack.c.h.b16 %v750
    %v1169 = vunpack.c.l.b16 %v751
    %v1170 = vunpack.c.h.b16 %v751
    %v1171 = vunpack.c.l.b16 %v752
    %v1172 = vunpack.c.h.b16 %v752
    %v1173 = vunpack.c.l.b16 %v753
    %v1174 = vunpack.c.h.b16 %v753
    %v1175 = vunpack.c.l.b16 %v754
    %v1176 = vunpack.c.h.b16 %v754
    %v1177 = vunpack.c.l.b16 %v755
    %v1178 = vunpack.c.h.b16 %v755
    %v1179 = vunpack.c.l.b16 %v756
    %v1180 = vunpack.c.h.b16 %v756
    %v1181 = vunpack.c.l.b16 %v757
    %v1182 = vunpack.c.h.b16 %v757
    %v1183 = vunpack.c.l.b16 %v758
    %v1184 = vunpack.c.h.b16 %v758
    %v1185 = vunpack.c.l.b16 %v759
    %v1186 = vunpack.c.h.b16 %v759
    %v1187 = vunpack.c.l.b16 %v760
    %v1188 = vunpack.c.h.b16 %v760
    %v1189 = vunpack.c.l.b16 %v761
    %v1190 = vunpack.c.h.b16 %v761
    %v1191 = vpack.c.b16 %v943, %v935
    %v1192 = vpack.c.b16 %v944, %v936
    %v1193 = vpack.c.b16 %v945, %v937
    %v1194 = vpack.c.b16 %v946, %v938
    %v1195 = vpack.c.b16 %v947, %v939
    %v1196 = vpack.c.b16 %v948, %v940
    %v1197 = vpack.c.b16 %v949, %v941
    %v1198 = vpack.c.b16 %v950, %v942
    %v1199 = vpack.c.b16 %v959, %v951
    %v1200 = vpack.c.b16 %v960, %v952
    %v1201 = vpack.c.b16 %v961, %v953
    %v1202 = vpack.c.b16 %v962, %v954
    %v1203 = vpack.c.b16 %v963, %v955
    %v1204 = vpack.c.b16 %v964, %v956
    %v1205 = vpack.c.b16 %v965, %v957
    %v1206 = vpack.c.b16 %v966, %v958
    %v1207 = vpack.c.b16 %v975, %v967
    %v1208 = vpack.c.b16 %v976, %v968
    %v1209 = vpack.c.b16 %v977, %v969
    %v1210 = vpack.c.b16 %v978, %v970
    %v1211 = vpack.c.b16 %v979, %v971
    %v1212 = vpack.c.b16 %v980, %v972
    %v1213 = vpack.c.b16 %v981, %v973
    %v1214 = vpack.c.b16 %v982, %v974
    %v1215 = vpack.c.b16 %v991, %v983
    %v1216 = vpack.c.b16 %v992, %v984
    %v1217 = vpack.c.b16 %v993, %v985
    %v1218 = vpack.c.b16 %v994, %v986
    %v1219 = vpack.c.b16 %v995, %v987
    %v1220 = vpack.c.b16 %v996, %v988
    %v1221 = vpack.c.b16 %v997, %v989
    %v1222 = vpack.c.b16 %v998, %v990
    %v1223 = vpack.c.b16 %v1007, %v999
    %v1224 = vpack.c.b16 %v1008, %v1000
    %v1225 = vpack.c.b16 %v1009, %v1001
    %v1226 = vpack.c.b16 %v1010, %v1002
    %v1227 = vpack.c.b16 %v1011, %v1003
    %v1228 = vpack.c.b16 %v1012, %v1004
    %v1229 = vpack.c.b16 %v1013, %v1005
    %v1230 = vpack.c.b16 %v1014, %v1006
    %v1231 = vpack.c.b16 %v1023, %v1015
    %v1232 = vpack.c.b16 %v1024, %v1016
    %v1233 = vpack.c.b16 %v1025, %v1017
    %v1234 = vpack.c.b16 %v1026, %v1018
    %v1235 = vpack.c.b16 %v1027, %v1019
    %v1236 = vpack.c.b16 %v1028, %v1020
    %v1237 = vpack.c.b16 %v1029, %v1021
    %v1238 = vpack.c.b16 %v1030, %v1022
    %v1239 = vpack.c.b16 %v1039, %v1031
    %v1240 = vpack.c.b16 %v1040, %v1032
    %v1241 = vpack.c.b16 %v1041, %v1033
    %v1242 = vpack.c.b16 %v1042, %v1034
    %v1243 = vpack.c.b16 %v1043, %v1035
    %v1244 = vpack.c.b16 %v1044, %v1036
    %v1245 = vpack.c.b16 %v1045, %v1037
    %v1246 = vpack.c.b16 %v1046, %v1038
    %v1247 = vpack.c.b16 %v1055, %v1047
    %v1248 = vpack.c.b16 %v1056, %v1048
    %v1249 = vpack.c.b16 %v1057, %v1049
    %v1250 = vpack.c.b16 %v1058, %v1050
    %v1251 = vpack.c.b16 %v1059, %v1051
    %v1252 = vpack.c.b16 %v1060, %v1052
    %v1253 = vpack.c.b16 %v1061, %v1053
    %v1254 = vpack.c.b16 %v1062, %v1054
    %v1255 = vpack.c.b16 %v1071, %v1063
    %v1256 = vpack.c.b16 %v1072, %v1064
    %v1257 = vpack.c.b16 %v1073, %v1065
    %v1258 = vpack.c.b16 %v1074, %v1066
    %v1259 = vpack.c.b16 %v1075, %v1067
    %v1260 = vpack.c.b16 %v1076, %v1068
    %v1261 = vpack.c.b16 %v1077, %v1069
    %v1262 = vpack.c.b16 %v1078, %v1070
    %v1263 = vpack.c.b16 %v1087, %v1079
    %v1264 = vpack.c.b16 %v1088, %v1080
    %v1265 = vpack.c.b16 %v1089, %v1081
    %v1266 = vpack.c.b16 %v1090, %v1082
    %v1267 = vpack.c.b16 %v1091, %v1083
    %v1268 = vpack.c.b16 %v1092, %v1084
    %v1269 = vpack.c.b16 %v1093, %v1085
    %v1270 = vpack.c.b16 %v1094, %v1086
    %v1271 = vpack.c.b16 %v1103, %v1095
    %v1272 = vpack.c.b16 %v1104, %v1096
    %v1273 = vpack.c.b16 %v1105, %v1097
    %v1274 = vpack.c.b16 %v1106, %v1098
    %v1275 = vpack.c.b16 %v1107, %v1099
    %v1276 = vpack.c.b16 %v1108, %v1100
    %v1277 = vpack.c.b16 %v1109, %v1101
    %v1278 = vpack.c.b16 %v1110, %v1102
    %v1279 = vpack.c.b16 %v1119, %v1111
    %v1280 = vpack.c.b16 %v1120, %v1112
    %v1281 = vpack.c.b16 %v1121, %v1113
    %v1282 = vpack.c.b16 %v1122, %v1114
    %v1283 = vpack.c.b16 %v1123, %v1115
    %v1284 = vpack.c.b16 %v1124, %v1116
    %v1285 = vpack.c.b16 %v1125, %v1117
    %v1286 = vpack.c.b16 %v1126, %v1118
    %v1287 = vpack.c.b16 %v1135, %v1127
    %v1288 = vpack.c.b16 %v1136, %v1128
    %v1289 = vpack.c.b16 %v1137, %v1129
    %v1290 = vpack.c.b16 %v1138, %v1130
    %v1291 = vpack.c.b16 %v1139, %v1131
    %v1292 = vpack.c.b16 %v1140, %v1132
    %v1293 = vpack.c.b16 %v1141, %v1133
    %v1294 = vpack.c.b16 %v1142, %v1134
    %v1295 = vpack.c.b16 %v1151, %v1143
    %v1296 = vpack.c.b16 %v1152, %v1144
    %v1297 = vpack.c.b16 %v1153, %v1145
    %v1298 = vpack.c.b16 %v1154, %v1146
    %v1299 = vpack.c.b16 %v1155, %v1147
    %v1300 = vpack.c.b16 %v1156, %v1148
    %v1301 = vpack.c.b16 %v1157, %v1149
    %v1302 = vpack.c.b16 %v1158, %v1150
    %v1303 = vpack.c.b16 %v1167, %v1159
    %v1304 = vpack.c.b16 %v1168, %v1160
    %v1305 = vpack.c.b16 %v1169, %v1161
    %v1306 = vpack.c.b16 %v1170, %v1162
    %v1307 = vpack.c.b16 %v1171, %v1163
    %v1308 = vpack.c.b16 %v1172, %v1164
    %v1309 = vpack.c.b16 %v1173, %v1165
    %v1310 = vpack.c.b16 %v1174, %v1166
    %v1311 = vpack.c.b16 %v1183, %v1175
    %v1312 = vpack.c.b16 %v1184, %v1176
    %v1313 = vpack.c.b16 %v1185, %v1177
    %v1314 = vpack.c.b16 %v1186, %v1178
    %v1315 = vpack.c.b16 %v1187, %v1179
    %v1316 = vpack.c.b16 %v1188, %v1180
    %v1317 = vpack.c.b16 %v1189, %v1181
    %v1318 = vpack.c.b16 %v1190, %v1182
    %1447 = vmatprep.subr.bf16.mxu0 %v1192
    %1448 = vmatpush1.bf16.msra.mxu0 %v1191
    %1449 = vmatprep.subr.bf16.mxu0 %v1200
    %1450 = vmatpush1.bf16.msra.mxu0 %v1199
    %1451 = vmatprep.subr.bf16.mxu0 %v1208
    %1452 = vmatpush1.bf16.msra.mxu0 %v1207
    %1453 = vmatprep.subr.bf16.mxu0 %v1216
    %1454 = vmatpush1.bf16.msra.mxu0 %v1215
    %1455 = vmatprep.subr.bf16.mxu0 %v1224
    %1456 = vmatpush1.bf16.msra.mxu0 %v1223
    %1457 = vmatprep.subr.bf16.mxu0 %v1232
    %1458 = vmatpush1.bf16.msra.mxu0 %v1231
    %1459 = vmatprep.subr.bf16.mxu0 %v1240
    %1460 = vmatpush1.bf16.msra.mxu0 %v1239
    %1461 = vmatprep.subr.bf16.mxu0 %v1248
    %1462 = vmatpush1.bf16.msra.mxu0 %v1247
    %1463 = vmatprep.subr.bf16.mxu0 %v1256
    %1464 = vmatpush1.bf16.msra.mxu0 %v1255
    %1465 = vmatprep.subr.bf16.mxu0 %v1264
    %1466 = vmatpush1.bf16.msra.mxu0 %v1263
    %1467 = vmatprep.subr.bf16.mxu0 %v1272
    %1468 = vmatpush1.bf16.msra.mxu0 %v1271
    %1469 = vmatprep.subr.bf16.mxu0 %v1280
    %1470 = vmatpush1.bf16.msra.mxu0 %v1279
    %1471 = vmatprep.subr.bf16.mxu0 %v1288
    %1472 = vmatpush1.bf16.msra.mxu0 %v1287
    %1473 = vmatprep.subr.bf16.mxu0 %v1296
    %1474 = vmatpush1.bf16.msra.mxu0 %v1295
    %1475 = vmatprep.subr.bf16.mxu0 %v1304
    %1476 = vmatpush1.bf16.msra.mxu0 %v1303
    %1477 = vmatprep.subr.bf16.mxu0 %v1312
    %1478 = vmatpush1.bf16.msra.mxu0 %v1311
    %1479 = vmatprep.mubr.bf16.mxu0 %v619
    %1480 = vmatmul.mubr.bf16.gmra.mrb[0].mxu0 %v618
    %v1481 = vpop.f32.mrb[0].mxu0
    %v1482 = vadd.f32 %v770, %v1481
    %v1483 = vpop.f32.mrb[0].mxu0
    %v1484 = vadd.f32 %v774, %v1483
    %v1485 = vpop.f32.mrb[0].mxu0
    %v1486 = vadd.f32 %v770, %v1485
    %v1487 = vpop.f32.mrb[0].mxu0
    %v1488 = vadd.f32 %v774, %v1487
    %1489 = vmatprep.mubr.bf16.mxu0 %v621
    %1490 = vmatmul.mubr.bf16.gmra.mrb[0].mxu0 %v620
    %v1491 = vpop.f32.mrb[0].mxu0
    %v1492 = vadd.f32 %v770, %v1491
    %v1493 = vpop.f32.mrb[0].mxu0
    %v1494 = vadd.f32 %v774, %v1493
    %v1495 = vpop.f32.mrb[0].mxu0
    %v1496 = vadd.f32 %v770, %v1495
    %v1497 = vpop.f32.mrb[0].mxu0
    %v1498 = vadd.f32 %v774, %v1497
    %1499 = vmatprep.mubr.bf16.mxu0 %v623
    %1500 = vmatmul.mubr.bf16.gmra.mrb[0].mxu0 %v622
    %v1501 = vpop.f32.mrb[0].mxu0
    %v1502 = vadd.f32 %v770, %v1501
    %v1503 = vpop.f32.mrb[0].mxu0
    %v1504 = vadd.f32 %v774, %v1503
    %v1505 = vpop.f32.mrb[0].mxu0
    %v1506 = vadd.f32 %v770, %v1505
    %v1507 = vpop.f32.mrb[0].mxu0
    %v1508 = vadd.f32 %v774, %v1507
    %1509 = vmatprep.mubr.bf16.mxu0 %v625
    %1510 = vmatmul.mubr.bf16.gmra.mrb[0].mxu0 %v624
    %v1511 = vpop.f32.mrb[0].mxu0
    %v1512 = vadd.f32 %v770, %v1511
    %v1513 = vpop.f32.mrb[0].mxu0
    %v1514 = vadd.f32 %v774, %v1513
    %v1515 = vpop.f32.mrb[0].mxu0
    %v1516 = vadd.f32 %v770, %v1515
    %v1517 = vpop.f32.mrb[0].mxu0
    %v1518 = vadd.f32 %v774, %v1517
    %1519 = vmatprep.mubr.bf16.mxu0 %v627
    %1520 = vmatmul.mubr.bf16.gmra.mrb[0].mxu0 %v626
    %v1521 = vpop.f32.mrb[0].mxu0
    %v1522 = vadd.f32 %v770, %v1521
    %v1523 = vpop.f32.mrb[0].mxu0
    %v1524 = vadd.f32 %v774, %v1523
    %v1525 = vpop.f32.mrb[0].mxu0
    %v1526 = vadd.f32 %v770, %v1525
    %v1527 = vpop.f32.mrb[0].mxu0
    %v1528 = vadd.f32 %v774, %v1527
    %1529 = vmatprep.mubr.bf16.mxu0 %v629
    %1530 = vmatmul.mubr.bf16.gmra.mrb[0].mxu0 %v628
    %v1531 = vpop.f32.mrb[0].mxu0
    %v1532 = vadd.f32 %v770, %v1531
    %v1533 = vpop.f32.mrb[0].mxu0
    %v1534 = vadd.f32 %v774, %v1533
    %v1535 = vpop.f32.mrb[0].mxu0
    %v1536 = vadd.f32 %v770, %v1535
    %v1537 = vpop.f32.mrb[0].mxu0
    %v1538 = vadd.f32 %v774, %v1537
    %1539 = vmatprep.mubr.bf16.mxu0 %v631
    %1540 = vmatmul.mubr.bf16.gmra.mrb[0].mxu0 %v630
    %v1541 = vpop.f32.mrb[0].mxu0
    %v1542 = vadd.f32 %v770, %v1541
    %v1543 = vpop.f32.mrb[0].mxu0
    %v1544 = vadd.f32 %v774, %v1543
    %v1545 = vpop.f32.mrb[0].mxu0
    %v1546 = vadd.f32 %v770, %v1545
    %v1547 = vpop.f32.mrb[0].mxu0
    %v1548 = vadd.f32 %v774, %v1547
    %1549 = vmatprep.mubr.bf16.mxu0 %v633
    %1550 = vmatmul.mubr.bf16.gmra.mrb[0].mxu0 %v632
    %v1551 = vpop.f32.mrb[0].mxu0
    %v1552 = vadd.f32 %v770, %v1551
    %v1553 = vpop.f32.mrb[0].mxu0
    %v1554 = vadd.f32 %v774, %v1553
    %v1555 = vpop.f32.mrb[0].mxu0
    %v1556 = vadd.f32 %v770, %v1555
    %v1557 = vpop.f32.mrb[0].mxu0
    %v1558 = vadd.f32 %v774, %v1557
    %1559 = vdwg.mxu0
    %1560 = vmatprep.subr.bf16.mxu0 %v1194
    %1561 = vmatpush1.bf16.msra.mxu0 %v1193
    %1562 = vmatprep.subr.bf16.mxu0 %v1202
    %1563 = vmatpush1.bf16.msra.mxu0 %v1201
    %1564 = vmatprep.subr.bf16.mxu0 %v1210
    %1565 = vmatpush1.bf16.msra.mxu0 %v1209
    %1566 = vmatprep.subr.bf16.mxu0 %v1218
    %1567 = vmatpush1.bf16.msra.mxu0 %v1217
    %1568 = vmatprep.subr.bf16.mxu0 %v1226
    %1569 = vmatpush1.bf16.msra.mxu0 %v1225
    %1570 = vmatprep.subr.bf16.mxu0 %v1234
    %1571 = vmatpush1.bf16.msra.mxu0 %v1233
    %1572 = vmatprep.subr.bf16.mxu0 %v1242
    %1573 = vmatpush1.bf16.msra.mxu0 %v1241
    %1574 = vmatprep.subr.bf16.mxu0 %v1250
    %1575 = vmatpush1.bf16.msra.mxu0 %v1249
    %1576 = vmatprep.subr.bf16.mxu0 %v1258
    %1577 = vmatpush1.bf16.msra.mxu0 %v1257
    %1578 = vmatprep.subr.bf16.mxu0 %v1266
    %1579 = vmatpush1.bf16.msra.mxu0 %v1265
    %1580 = vmatprep.subr.bf16.mxu0 %v1274
    %1581 = vmatpush1.bf16.msra.mxu0 %v1273
    %1582 = vmatprep.subr.bf16.mxu0 %v1282
    %1583 = vmatpush1.bf16.msra.mxu0 %v1281
    %1584 = vmatprep.subr.bf16.mxu0 %v1290
    %1585 = vmatpush1.bf16.msra.mxu0 %v1289
    %1586 = vmatprep.subr.bf16.mxu0 %v1298
    %1587 = vmatpush1.bf16.msra.mxu0 %v1297
    %1588 = vmatprep.subr.bf16.mxu0 %v1306
    %1589 = vmatpush1.bf16.msra.mxu0 %v1305
    %1590 = vmatprep.subr.bf16.mxu0 %v1314
    %1591 = vmatpush1.bf16.msra.mxu0 %v1313
    %1592 = vmatprep.mubr.bf16.mxu0 %v619
    %1593 = vmatmul.mubr.bf16.gmra.mrb[0].mxu0 %v618
    %v1594 = vpop.f32.mrb[0].mxu0
    %v1595 = vadd.f32 %v778, %v1594
    %v1596 = vpop.f32.mrb[0].mxu0
    %v1597 = vadd.f32 %v782, %v1596
    %v1598 = vpop.f32.mrb[0].mxu0
    %v1599 = vadd.f32 %v778, %v1598
    %v1600 = vpop.f32.mrb[0].mxu0
    %v1601 = vadd.f32 %v782, %v1600
    %1602 = vmatprep.mubr.bf16.mxu0 %v621
    %1603 = vmatmul.mubr.bf16.gmra.mrb[0].mxu0 %v620
    %v1604 = vpop.f32.mrb[0].mxu0
    %v1605 = vadd.f32 %v778, %v1604
    %v1606 = vpop.f32.mrb[0].mxu0
    %v1607 = vadd.f32 %v782, %v1606
    %v1608 = vpop.f32.mrb[0].mxu0
    %v1609 = vadd.f32 %v778, %v1608
    %v1610 = vpop.f32.mrb[0].mxu0
    %v1611 = vadd.f32 %v782, %v1610
    %1612 = vmatprep.mubr.bf16.mxu0 %v623
    %1613 = vmatmul.mubr.bf16.gmra.mrb[0].mxu0 %v622
    %v1614 = vpop.f32.mrb[0].mxu0
    %v1615 = vadd.f32 %v778, %v1614
    %v1616 = vpop.f32.mrb[0].mxu0
    %v1617 = vadd.f32 %v782, %v1616
    %v1618 = vpop.f32.mrb[0].mxu0
    %v1619 = vadd.f32 %v778, %v1618
    %v1620 = vpop.f32.mrb[0].mxu0
    %v1621 = vadd.f32 %v782, %v1620
    %1622 = vmatprep.mubr.bf16.mxu0 %v625
    %1623 = vmatmul.mubr.bf16.gmra.mrb[0].mxu0 %v624
    %v1624 = vpop.f32.mrb[0].mxu0
    %v1625 = vadd.f32 %v778, %v1624
    %v1626 = vpop.f32.mrb[0].mxu0
    %v1627 = vadd.f32 %v782, %v1626
    %v1628 = vpop.f32.mrb[0].mxu0
    %v1629 = vadd.f32 %v778, %v1628
    %v1630 = vpop.f32.mrb[0].mxu0
    %v1631 = vadd.f32 %v782, %v1630
    %1632 = vmatprep.mubr.bf16.mxu0 %v627
    %1633 = vmatmul.mubr.bf16.gmra.mrb[0].mxu0 %v626
    %v1634 = vpop.f32.mrb[0].mxu0
    %v1635 = vadd.f32 %v778, %v1634
    %v1636 = vpop.f32.mrb[0].mxu0
    %v1637 = vadd.f32 %v782, %v1636
    %v1638 = vpop.f32.mrb[0].mxu0
    %v1639 = vadd.f32 %v778, %v1638
    %v1640 = vpop.f32.mrb[0].mxu0
    %v1641 = vadd.f32 %v782, %v1640
    %1642 = vmatprep.mubr.bf16.mxu0 %v629
    %1643 = vmatmul.mubr.bf16.gmra.mrb[0].mxu0 %v628
    %v1644 = vpop.f32.mrb[0].mxu0
    %v1645 = vadd.f32 %v778, %v1644
    %v1646 = vpop.f32.mrb[0].mxu0
    %v1647 = vadd.f32 %v782, %v1646
    %v1648 = vpop.f32.mrb[0].mxu0
    %v1649 = vadd.f32 %v778, %v1648
    %v1650 = vpop.f32.mrb[0].mxu0
    %v1651 = vadd.f32 %v782, %v1650
    %1652 = vmatprep.mubr.bf16.mxu0 %v631
    %1653 = vmatmul.mubr.bf16.gmra.mrb[0].mxu0 %v630
    %v1654 = vpop.f32.mrb[0].mxu0
    %v1655 = vadd.f32 %v778, %v1654
    %v1656 = vpop.f32.mrb[0].mxu0
    %v1657 = vadd.f32 %v782, %v1656
    %v1658 = vpop.f32.mrb[0].mxu0
    %v1659 = vadd.f32 %v778, %v1658
    %v1660 = vpop.f32.mrb[0].mxu0
    %v1661 = vadd.f32 %v782, %v1660
    %1662 = vmatprep.mubr.bf16.mxu0 %v633
    %1663 = vmatmul.mubr.bf16.gmra.mrb[0].mxu0 %v632
    %v1664 = vpop.f32.mrb[0].mxu0
    %v1665 = vadd.f32 %v778, %v1664
    %v1666 = vpop.f32.mrb[0].mxu0
    %v1667 = vadd.f32 %v782, %v1666
    %v1668 = vpop.f32.mrb[0].mxu0
    %v1669 = vadd.f32 %v778, %v1668
    %v1670 = vpop.f32.mrb[0].mxu0
    %v1671 = vadd.f32 %v782, %v1670
    %1672 = vdwg.mxu0
    %1673 = vmatprep.subr.bf16.mxu0 %v1196
    %1674 = vmatpush1.bf16.msra.mxu0 %v1195
    %1675 = vmatprep.subr.bf16.mxu0 %v1204
    %1676 = vmatpush1.bf16.msra.mxu0 %v1203
    %1677 = vmatprep.subr.bf16.mxu0 %v1212
    %1678 = vmatpush1.bf16.msra.mxu0 %v1211
    %1679 = vmatprep.subr.bf16.mxu0 %v1220
    %1680 = vmatpush1.bf16.msra.mxu0 %v1219
    %1681 = vmatprep.subr.bf16.mxu0 %v1228
    %1682 = vmatpush1.bf16.msra.mxu0 %v1227
    %1683 = vmatprep.subr.bf16.mxu0 %v1236
    %1684 = vmatpush1.bf16.msra.mxu0 %v1235
    %1685 = vmatprep.subr.bf16.mxu0 %v1244
    %1686 = vmatpush1.bf16.msra.mxu0 %v1243
    %1687 = vmatprep.subr.bf16.mxu0 %v1252
    %1688 = vmatpush1.bf16.msra.mxu0 %v1251
    %1689 = vmatprep.subr.bf16.mxu0 %v1260
    %1690 = vmatpush1.bf16.msra.mxu0 %v1259
    %1691 = vmatprep.subr.bf16.mxu0 %v1268
    %1692 = vmatpush1.bf16.msra.mxu0 %v1267
    %1693 = vmatprep.subr.bf16.mxu0 %v1276
    %1694 = vmatpush1.bf16.msra.mxu0 %v1275
    %1695 = vmatprep.subr.bf16.mxu0 %v1284
    %1696 = vmatpush1.bf16.msra.mxu0 %v1283
    %1697 = vmatprep.subr.bf16.mxu0 %v1292
    %1698 = vmatpush1.bf16.msra.mxu0 %v1291
    %1699 = vmatprep.subr.bf16.mxu0 %v1300
    %1700 = vmatpush1.bf16.msra.mxu0 %v1299
    %1701 = vmatprep.subr.bf16.mxu0 %v1308
    %1702 = vmatpush1.bf16.msra.mxu0 %v1307
    %1703 = vmatprep.subr.bf16.mxu0 %v1316
    %1704 = vmatpush1.bf16.msra.mxu0 %v1315
    %1705 = vmatprep.mubr.bf16.mxu0 %v619
    %1706 = vmatmul.mubr.bf16.gmra.mrb[0].mxu0 %v618
    %v1707 = vpop.f32.mrb[0].mxu0
    %v1708 = vadd.f32 %v786, %v1707
    %v1709 = vpop.f32.mrb[0].mxu0
    %v1710 = vadd.f32 %v790, %v1709
    %v1711 = vpop.f32.mrb[0].mxu0
    %v1712 = vadd.f32 %v786, %v1711
    %v1713 = vpop.f32.mrb[0].mxu0
    %v1714 = vadd.f32 %v790, %v1713
    %1715 = vmatprep.mubr.bf16.mxu0 %v621
    %1716 = vmatmul.mubr.bf16.gmra.mrb[0].mxu0 %v620
    %v1717 = vpop.f32.mrb[0].mxu0
    %v1718 = vadd.f32 %v786, %v1717
    %v1719 = vpop.f32.mrb[0].mxu0
    %v1720 = vadd.f32 %v790, %v1719
    %v1721 = vpop.f32.mrb[0].mxu0
    %v1722 = vadd.f32 %v786, %v1721
    %v1723 = vpop.f32.mrb[0].mxu0
    %v1724 = vadd.f32 %v790, %v1723
    %1725 = vmatprep.mubr.bf16.mxu0 %v623
    %1726 = vmatmul.mubr.bf16.gmra.mrb[0].mxu0 %v622
    %v1727 = vpop.f32.mrb[0].mxu0
    %v1728 = vadd.f32 %v786, %v1727
    %v1729 = vpop.f32.mrb[0].mxu0
    %v1730 = vadd.f32 %v790, %v1729
    %v1731 = vpop.f32.mrb[0].mxu0
    %v1732 = vadd.f32 %v786, %v1731
    %v1733 = vpop.f32.mrb[0].mxu0
    %v1734 = vadd.f32 %v790, %v1733
    %1735 = vmatprep.mubr.bf16.mxu0 %v625
    %1736 = vmatmul.mubr.bf16.gmra.mrb[0].mxu0 %v624
    %v1737 = vpop.f32.mrb[0].mxu0
    %v1738 = vadd.f32 %v786, %v1737
    %v1739 = vpop.f32.mrb[0].mxu0
    %v1740 = vadd.f32 %v790, %v1739
    %v1741 = vpop.f32.mrb[0].mxu0
    %v1742 = vadd.f32 %v786, %v1741
    %v1743 = vpop.f32.mrb[0].mxu0
    %v1744 = vadd.f32 %v790, %v1743
    %1745 = vmatprep.mubr.bf16.mxu0 %v627
    %1746 = vmatmul.mubr.bf16.gmra.mrb[0].mxu0 %v626
    %v1747 = vpop.f32.mrb[0].mxu0
    %v1748 = vadd.f32 %v786, %v1747
    %v1749 = vpop.f32.mrb[0].mxu0
    %v1750 = vadd.f32 %v790, %v1749
    %v1751 = vpop.f32.mrb[0].mxu0
    %v1752 = vadd.f32 %v786, %v1751
    %v1753 = vpop.f32.mrb[0].mxu0
    %v1754 = vadd.f32 %v790, %v1753
    %1755 = vmatprep.mubr.bf16.mxu0 %v629
    %1756 = vmatmul.mubr.bf16.gmra.mrb[0].mxu0 %v628
    %v1757 = vpop.f32.mrb[0].mxu0
    %v1758 = vadd.f32 %v786, %v1757
    %v1759 = vpop.f32.mrb[0].mxu0
    %v1760 = vadd.f32 %v790, %v1759
    %v1761 = vpop.f32.mrb[0].mxu0
    %v1762 = vadd.f32 %v786, %v1761
    %v1763 = vpop.f32.mrb[0].mxu0
    %v1764 = vadd.f32 %v790, %v1763
    %1765 = vmatprep.mubr.bf16.mxu0 %v631
    %1766 = vmatmul.mubr.bf16.gmra.mrb[0].mxu0 %v630
    %v1767 = vpop.f32.mrb[0].mxu0
    %v1768 = vadd.f32 %v786, %v1767
    %v1769 = vpop.f32.mrb[0].mxu0
    %v1770 = vadd.f32 %v790, %v1769
    %v1771 = vpop.f32.mrb[0].mxu0
    %v1772 = vadd.f32 %v786, %v1771
    %v1773 = vpop.f32.mrb[0].mxu0
    %v1774 = vadd.f32 %v790, %v1773
    %1775 = vmatprep.mubr.bf16.mxu0 %v633
    %1776 = vmatmul.mubr.bf16.gmra.mrb[0].mxu0 %v632
    %v1777 = vpop.f32.mrb[0].mxu0
    %v1778 = vadd.f32 %v786, %v1777
    %v1779 = vpop.f32.mrb[0].mxu0
    %v1780 = vadd.f32 %v790, %v1779
    %v1781 = vpop.f32.mrb[0].mxu0
    %v1782 = vadd.f32 %v786, %v1781
    %v1783 = vpop.f32.mrb[0].mxu0
    %v1784 = vadd.f32 %v790, %v1783
    %1785 = vdwg.mxu0
    %1786 = vmatprep.subr.bf16.mxu0 %v1198
    %1787 = vmatpush1.bf16.msra.mxu0 %v1197
    %1788 = vmatprep.subr.bf16.mxu0 %v1206
    %1789 = vmatpush1.bf16.msra.mxu0 %v1205
    %1790 = vmatprep.subr.bf16.mxu0 %v1214
    %1791 = vmatpush1.bf16.msra.mxu0 %v1213
    %1792 = vmatprep.subr.bf16.mxu0 %v1222
    %1793 = vmatpush1.bf16.msra.mxu0 %v1221
    %1794 = vmatprep.subr.bf16.mxu0 %v1230
    %1795 = vmatpush1.bf16.msra.mxu0 %v1229
    %1796 = vmatprep.subr.bf16.mxu0 %v1238
    %1797 = vmatpush1.bf16.msra.mxu0 %v1237
    %1798 = vmatprep.subr.bf16.mxu0 %v1246
    %1799 = vmatpush1.bf16.msra.mxu0 %v1245
    %1800 = vmatprep.subr.bf16.mxu0 %v1254
    %1801 = vmatpush1.bf16.msra.mxu0 %v1253
    %1802 = vmatprep.subr.bf16.mxu0 %v1262
    %1803 = vmatpush1.bf16.msra.mxu0 %v1261
    %1804 = vmatprep.subr.bf16.mxu0 %v1270
    %1805 = vmatpush1.bf16.msra.mxu0 %v1269
    %1806 = vmatprep.subr.bf16.mxu0 %v1278
    %1807 = vmatpush1.bf16.msra.mxu0 %v1277
    %1808 = vmatprep.subr.bf16.mxu0 %v1286
    %1809 = vmatpush1.bf16.msra.mxu0 %v1285
    %1810 = vmatprep.subr.bf16.mxu0 %v1294
    %1811 = vmatpush1.bf16.msra.mxu0 %v1293
    %1812 = vmatprep.subr.bf16.mxu0 %v1302
    %1813 = vmatpush1.bf16.msra.mxu0 %v1301
    %1814 = vmatprep.subr.bf16.mxu0 %v1310
    %1815 = vmatpush1.bf16.msra.mxu0 %v1309
    %1816 = vmatprep.subr.bf16.mxu0 %v1318
    %1817 = vmatpush1.bf16.msra.mxu0 %v1317
    %1818 = vmatprep.mubr.bf16.mxu0 %v619
    %1819 = vmatmul.mubr.bf16.gmra.mrb[0].mxu0 %v618
    %v1820 = vpop.f32.mrb[0].mxu0
    %v1821 = vadd.f32 %v794, %v1820
    %v1822 = vpop.f32.mrb[0].mxu0
    %v1823 = vadd.f32 %v798, %v1822
    %v1824 = vpop.f32.mrb[0].mxu0
    %v1825 = vadd.f32 %v794, %v1824
    %v1826 = vpop.f32.mrb[0].mxu0
    %v1827 = vadd.f32 %v798, %v1826
    %1828 = vmatprep.mubr.bf16.mxu0 %v621
    %1829 = vmatmul.mubr.bf16.gmra.mrb[0].mxu0 %v620
    %v1830 = vpop.f32.mrb[0].mxu0
    %v1831 = vadd.f32 %v794, %v1830
    %v1832 = vpop.f32.mrb[0].mxu0
    %v1833 = vadd.f32 %v798, %v1832
    %v1834 = vpop.f32.mrb[0].mxu0
    %v1835 = vadd.f32 %v794, %v1834
    %v1836 = vpop.f32.mrb[0].mxu0
    %v1837 = vadd.f32 %v798, %v1836
    %1838 = vmatprep.mubr.bf16.mxu0 %v623
    %1839 = vmatmul.mubr.bf16.gmra.mrb[0].mxu0 %v622
    %v1840 = vpop.f32.mrb[0].mxu0
    %v1841 = vadd.f32 %v794, %v1840
    %v1842 = vpop.f32.mrb[0].mxu0
    %v1843 = vadd.f32 %v798, %v1842
    %v1844 = vpop.f32.mrb[0].mxu0
    %v1845 = vadd.f32 %v794, %v1844
    %v1846 = vpop.f32.mrb[0].mxu0
    %v1847 = vadd.f32 %v798, %v1846
    %1848 = vmatprep.mubr.bf16.mxu0 %v625
    %1849 = vmatmul.mubr.bf16.gmra.mrb[0].mxu0 %v624
    %v1850 = vpop.f32.mrb[0].mxu0
    %v1851 = vadd.f32 %v794, %v1850
    %v1852 = vpop.f32.mrb[0].mxu0
    %v1853 = vadd.f32 %v798, %v1852
    %v1854 = vpop.f32.mrb[0].mxu0
    %v1855 = vadd.f32 %v794, %v1854
    %v1856 = vpop.f32.mrb[0].mxu0
    %v1857 = vadd.f32 %v798, %v1856
    %1858 = vmatprep.mubr.bf16.mxu0 %v627
    %1859 = vmatmul.mubr.bf16.gmra.mrb[0].mxu0 %v626
    %v1860 = vpop.f32.mrb[0].mxu0
    %v1861 = vadd.f32 %v794, %v1860
    %v1862 = vpop.f32.mrb[0].mxu0
    %v1863 = vadd.f32 %v798, %v1862
    %v1864 = vpop.f32.mrb[0].mxu0
    %v1865 = vadd.f32 %v794, %v1864
    %v1866 = vpop.f32.mrb[0].mxu0
    %v1867 = vadd.f32 %v798, %v1866
    %1868 = vmatprep.mubr.bf16.mxu0 %v629
    %1869 = vmatmul.mubr.bf16.gmra.mrb[0].mxu0 %v628
    %v1870 = vpop.f32.mrb[0].mxu0
    %v1871 = vadd.f32 %v794, %v1870
    %v1872 = vpop.f32.mrb[0].mxu0
    %v1873 = vadd.f32 %v798, %v1872
    %v1874 = vpop.f32.mrb[0].mxu0
    %v1875 = vadd.f32 %v794, %v1874
    %v1876 = vpop.f32.mrb[0].mxu0
    %v1877 = vadd.f32 %v798, %v1876
    %1878 = vmatprep.mubr.bf16.mxu0 %v631
    %1879 = vmatmul.mubr.bf16.gmra.mrb[0].mxu0 %v630
    %v1880 = vpop.f32.mrb[0].mxu0
    %v1881 = vadd.f32 %v794, %v1880
    %v1882 = vpop.f32.mrb[0].mxu0
    %v1883 = vadd.f32 %v798, %v1882
    %v1884 = vpop.f32.mrb[0].mxu0
    %v1885 = vadd.f32 %v794, %v1884
    %v1886 = vpop.f32.mrb[0].mxu0
    %v1887 = vadd.f32 %v798, %v1886
    %1888 = vmatprep.mubr.bf16.mxu0 %v633
    %1889 = vmatmul.mubr.bf16.gmra.mrb[0].mxu0 %v632
    %v1890 = vpop.f32.mrb[0].mxu0
    %v1891 = vadd.f32 %v794, %v1890
    %v1892 = vpop.f32.mrb[0].mxu0
    %v1893 = vadd.f32 %v798, %v1892
    %v1894 = vpop.f32.mrb[0].mxu0
    %v1895 = vadd.f32 %v794, %v1894
    %v1896 = vpop.f32.mrb[0].mxu0
    %v1897 = vadd.f32 %v798, %v1896
    %1898 = vdwg.mxu0
    %v1899 = vmax.f32 %v1482, 0.0
    %v1900 = vmax.f32 %v1484, 0.0
    %v1901 = vmax.f32 %v1595, 0.0
    %v1902 = vmax.f32 %v1597, 0.0
    %v1903 = vmax.f32 %v1708, 0.0
    %v1904 = vmax.f32 %v1710, 0.0
    %v1905 = vmax.f32 %v1821, 0.0
    %v1906 = vmax.f32 %v1823, 0.0
    %v1907 = vmax.f32 %v1486, 0.0
    %v1908 = vmax.f32 %v1488, 0.0
    %v1909 = vmax.f32 %v1599, 0.0
    %v1910 = vmax.f32 %v1601, 0.0
    %v1911 = vmax.f32 %v1712, 0.0
    %v1912 = vmax.f32 %v1714, 0.0
    %v1913 = vmax.f32 %v1825, 0.0
    %v1914 = vmax.f32 %v1827, 0.0
    %v1915 = vmax.f32 %v1492, 0.0
    %v1916 = vmax.f32 %v1494, 0.0
    %v1917 = vmax.f32 %v1605, 0.0
    %v1918 = vmax.f32 %v1607, 0.0
    %v1919 = vmax.f32 %v1718, 0.0
    %v1920 = vmax.f32 %v1720, 0.0
    %v1921 = vmax.f32 %v1831, 0.0
    %v1922 = vmax.f32 %v1833, 0.0
    %v1923 = vmax.f32 %v1496, 0.0
    %v1924 = vmax.f32 %v1498, 0.0
    %v1925 = vmax.f32 %v1609, 0.0
    %v1926 = vmax.f32 %v1611, 0.0
    %v1927 = vmax.f32 %v1722, 0.0
    %v1928 = vmax.f32 %v1724, 0.0
    %v1929 = vmax.f32 %v1835, 0.0
    %v1930 = vmax.f32 %v1837, 0.0
    %v1931 = vmax.f32 %v1502, 0.0
    %v1932 = vmax.f32 %v1504, 0.0
    %v1933 = vmax.f32 %v1615, 0.0
    %v1934 = vmax.f32 %v1617, 0.0
    %v1935 = vmax.f32 %v1728, 0.0
    %v1936 = vmax.f32 %v1730, 0.0
    %v1937 = vmax.f32 %v1841, 0.0
    %v1938 = vmax.f32 %v1843, 0.0
    %v1939 = vmax.f32 %v1506, 0.0
    %v1940 = vmax.f32 %v1508, 0.0
    %v1941 = vmax.f32 %v1619, 0.0
    %v1942 = vmax.f32 %v1621, 0.0
    %v1943 = vmax.f32 %v1732, 0.0
    %v1944 = vmax.f32 %v1734, 0.0
    %v1945 = vmax.f32 %v1845, 0.0
    %v1946 = vmax.f32 %v1847, 0.0
    %v1947 = vmax.f32 %v1512, 0.0
    %v1948 = vmax.f32 %v1514, 0.0
    %v1949 = vmax.f32 %v1625, 0.0
    %v1950 = vmax.f32 %v1627, 0.0
    %v1951 = vmax.f32 %v1738, 0.0
    %v1952 = vmax.f32 %v1740, 0.0
    %v1953 = vmax.f32 %v1851, 0.0
    %v1954 = vmax.f32 %v1853, 0.0
    %v1955 = vmax.f32 %v1516, 0.0
    %v1956 = vmax.f32 %v1518, 0.0
    %v1957 = vmax.f32 %v1629, 0.0
    %v1958 = vmax.f32 %v1631, 0.0
    %v1959 = vmax.f32 %v1742, 0.0
    %v1960 = vmax.f32 %v1744, 0.0
    %v1961 = vmax.f32 %v1855, 0.0
    %v1962 = vmax.f32 %v1857, 0.0
    %v1963 = vmax.f32 %v1522, 0.0
    %v1964 = vmax.f32 %v1524, 0.0
    %v1965 = vmax.f32 %v1635, 0.0
    %v1966 = vmax.f32 %v1637, 0.0
    %v1967 = vmax.f32 %v1748, 0.0
    %v1968 = vmax.f32 %v1750, 0.0
    %v1969 = vmax.f32 %v1861, 0.0
    %v1970 = vmax.f32 %v1863, 0.0
    %v1971 = vmax.f32 %v1526, 0.0
    %v1972 = vmax.f32 %v1528, 0.0
    %v1973 = vmax.f32 %v1639, 0.0
    %v1974 = vmax.f32 %v1641, 0.0
    %v1975 = vmax.f32 %v1752, 0.0
    %v1976 = vmax.f32 %v1754, 0.0
    %v1977 = vmax.f32 %v1865, 0.0
    %v1978 = vmax.f32 %v1867, 0.0
    %v1979 = vmax.f32 %v1532, 0.0
    %v1980 = vmax.f32 %v1534, 0.0
    %v1981 = vmax.f32 %v1645, 0.0
    %v1982 = vmax.f32 %v1647, 0.0
    %v1983 = vmax.f32 %v1758, 0.0
    %v1984 = vmax.f32 %v1760, 0.0
    %v1985 = vmax.f32 %v1871, 0.0
    %v1986 = vmax.f32 %v1873, 0.0
    %v1987 = vmax.f32 %v1536, 0.0
    %v1988 = vmax.f32 %v1538, 0.0
    %v1989 = vmax.f32 %v1649, 0.0
    %v1990 = vmax.f32 %v1651, 0.0
    %v1991 = vmax.f32 %v1762, 0.0
    %v1992 = vmax.f32 %v1764, 0.0
    %v1993 = vmax.f32 %v1875, 0.0
    %v1994 = vmax.f32 %v1877, 0.0
    %v1995 = vmax.f32 %v1542, 0.0
    %v1996 = vmax.f32 %v1544, 0.0
    %v1997 = vmax.f32 %v1655, 0.0
    %v1998 = vmax.f32 %v1657, 0.0
    %v1999 = vmax.f32 %v1768, 0.0
    %v2000 = vmax.f32 %v1770, 0.0
    %v2001 = vmax.f32 %v1881, 0.0
    %v2002 = vmax.f32 %v1883, 0.0
    %v2003 = vmax.f32 %v1546, 0.0
    %v2004 = vmax.f32 %v1548, 0.0
    %v2005 = vmax.f32 %v1659, 0.0
    %v2006 = vmax.f32 %v1661, 0.0
    %v2007 = vmax.f32 %v1772, 0.0
    %v2008 = vmax.f32 %v1774, 0.0
    %v2009 = vmax.f32 %v1885, 0.0
    %v2010 = vmax.f32 %v1887, 0.0
    %v2011 = vmax.f32 %v1552, 0.0
    %v2012 = vmax.f32 %v1554, 0.0
    %v2013 = vmax.f32 %v1665, 0.0
    %v2014 = vmax.f32 %v1667, 0.0
    %v2015 = vmax.f32 %v1778, 0.0
    %v2016 = vmax.f32 %v1780, 0.0
    %v2017 = vmax.f32 %v1891, 0.0
    %v2018 = vmax.f32 %v1893, 0.0
    %v2019 = vmax.f32 %v1556, 0.0
    %v2020 = vmax.f32 %v1558, 0.0
    %v2021 = vmax.f32 %v1669, 0.0
    %v2022 = vmax.f32 %v1671, 0.0
    %v2023 = vmax.f32 %v1782, 0.0
    %v2024 = vmax.f32 %v1784, 0.0
    %v2025 = vmax.f32 %v1895, 0.0
    %v2026 = vmax.f32 %v1897, 0.0
    %v2027 = vpack.c.bf16 %v1907, %v1899
    %v2028 = vpack.c.bf16 %v1908, %v1900
    %v2029 = vpack.c.bf16 %v1909, %v1901
    %v2030 = vpack.c.bf16 %v1910, %v1902
    %v2031 = vpack.c.bf16 %v1911, %v1903
    %v2032 = vpack.c.bf16 %v1912, %v1904
    %v2033 = vpack.c.bf16 %v1913, %v1905
    %v2034 = vpack.c.bf16 %v1914, %v1906
    %v2035 = vpack.c.bf16 %v1923, %v1915
    %v2036 = vpack.c.bf16 %v1924, %v1916
    %v2037 = vpack.c.bf16 %v1925, %v1917
    %v2038 = vpack.c.bf16 %v1926, %v1918
    %v2039 = vpack.c.bf16 %v1927, %v1919
    %v2040 = vpack.c.bf16 %v1928, %v1920
    %v2041 = vpack.c.bf16 %v1929, %v1921
    %v2042 = vpack.c.bf16 %v1930, %v1922
    %v2043 = vpack.c.bf16 %v1939, %v1931
    %v2044 = vpack.c.bf16 %v1940, %v1932
    %v2045 = vpack.c.bf16 %v1941, %v1933
    %v2046 = vpack.c.bf16 %v1942, %v1934
    %v2047 = vpack.c.bf16 %v1943, %v1935
    %v2048 = vpack.c.bf16 %v1944, %v1936
    %v2049 = vpack.c.bf16 %v1945, %v1937
    %v2050 = vpack.c.bf16 %v1946, %v1938
    %v2051 = vpack.c.bf16 %v1955, %v1947
    %v2052 = vpack.c.bf16 %v1956, %v1948
    %v2053 = vpack.c.bf16 %v1957, %v1949
    %v2054 = vpack.c.bf16 %v1958, %v1950
    %v2055 = vpack.c.bf16 %v1959, %v1951
    %v2056 = vpack.c.bf16 %v1960, %v1952
    %v2057 = vpack.c.bf16 %v1961, %v1953
    %v2058 = vpack.c.bf16 %v1962, %v1954
    %v2059 = vpack.c.bf16 %v1971, %v1963
    %v2060 = vpack.c.bf16 %v1972, %v1964
    %v2061 = vpack.c.bf16 %v1973, %v1965
    %v2062 = vpack.c.bf16 %v1974, %v1966
    %v2063 = vpack.c.bf16 %v1975, %v1967
    %v2064 = vpack.c.bf16 %v1976, %v1968
    %v2065 = vpack.c.bf16 %v1977, %v1969
    %v2066 = vpack.c.bf16 %v1978, %v1970
    %v2067 = vpack.c.bf16 %v1987, %v1979
    %v2068 = vpack.c.bf16 %v1988, %v1980
    %v2069 = vpack.c.bf16 %v1989, %v1981
    %v2070 = vpack.c.bf16 %v1990, %v1982
    %v2071 = vpack.c.bf16 %v1991, %v1983
    %v2072 = vpack.c.bf16 %v1992, %v1984
    %v2073 = vpack.c.bf16 %v1993, %v1985
    %v2074 = vpack.c.bf16 %v1994, %v1986
    %v2075 = vpack.c.bf16 %v2003, %v1995
    %v2076 = vpack.c.bf16 %v2004, %v1996
    %v2077 = vpack.c.bf16 %v2005, %v1997
    %v2078 = vpack.c.bf16 %v2006, %v1998
    %v2079 = vpack.c.bf16 %v2007, %v1999
    %v2080 = vpack.c.bf16 %v2008, %v2000
    %v2081 = vpack.c.bf16 %v2009, %v2001
    %v2082 = vpack.c.bf16 %v2010, %v2002
    %v2083 = vpack.c.bf16 %v2019, %v2011
    %v2084 = vpack.c.bf16 %v2020, %v2012
    %v2085 = vpack.c.bf16 %v2021, %v2013
    %v2086 = vpack.c.bf16 %v2022, %v2014
    %v2087 = vpack.c.bf16 %v2023, %v2015
    %v2088 = vpack.c.bf16 %v2024, %v2016
    %v2089 = vpack.c.bf16 %v2025, %v2017
    %v2090 = vpack.c.bf16 %v2026, %v2018
    %v2091 = vld [vmem:[#allocation10] sm:$0xff]
    %v2092 = vld [vmem:[#allocation10 + $0x8] sm:$0xff]
    %v2093 = vld [vmem:[#allocation10 + $0x10] sm:$0xff]
    %v2094 = vld [vmem:[#allocation10 + $0x18] sm:$0xff]
    %v2095 = vld [vmem:[#allocation10 + $0x20] sm:$0xff]
    %v2096 = vld [vmem:[#allocation10 + $0x28] sm:$0xff]
    %v2097 = vld [vmem:[#allocation10 + $0x30] sm:$0xff]
    %v2098 = vld [vmem:[#allocation10 + $0x38] sm:$0xff]
    %v2099 = vld [vmem:[#allocation10 + $0x40] sm:$0xff]
    %v2100 = vld [vmem:[#allocation10 + $0x48] sm:$0xff]
    %v2101 = vld [vmem:[#allocation10 + $0x50] sm:$0xff]
    %v2102 = vld [vmem:[#allocation10 + $0x58] sm:$0xff]
    %v2103 = vld [vmem:[#allocation10 + $0x60] sm:$0xff]
    %v2104 = vld [vmem:[#allocation10 + $0x68] sm:$0xff]
    %v2105 = vld [vmem:[#allocation10 + $0x70] sm:$0xff]
    %v2106 = vld [vmem:[#allocation10 + $0x78] sm:$0xff]
    %v2107 = vld [vmem:[#allocation10 + $0x80] sm:$0xff]
    %v2108 = vld [vmem:[#allocation10 + $0x88] sm:$0xff]
    %v2109 = vld [vmem:[#allocation10 + $0x90] sm:$0xff]
    %v2110 = vld [vmem:[#allocation10 + $0x98] sm:$0xff]
    %v2111 = vld [vmem:[#allocation10 + $0xa0] sm:$0xff]
    %v2112 = vld [vmem:[#allocation10 + $0xa8] sm:$0xff]
    %v2113 = vld [vmem:[#allocation10 + $0xb0] sm:$0xff]
    %v2114 = vld [vmem:[#allocation10 + $0xb8] sm:$0xff]
    %v2115 = vld [vmem:[#allocation10 + $0xc0] sm:$0xff]
    %v2116 = vld [vmem:[#allocation10 + $0xc8] sm:$0xff]
    %v2117 = vld [vmem:[#allocation10 + $0xd0] sm:$0xff]
    %v2118 = vld [vmem:[#allocation10 + $0xd8] sm:$0xff]
    %v2119 = vld [vmem:[#allocation10 + $0xe0] sm:$0xff]
    %v2120 = vld [vmem:[#allocation10 + $0xe8] sm:$0xff]
    %v2121 = vld [vmem:[#allocation10 + $0xf0] sm:$0xff]
    %v2122 = vld [vmem:[#allocation10 + $0xf8] sm:$0xff]
    %v2123 = vld [vmem:[#allocation10 + $0x100] sm:$0xff]
    %v2124 = vld [vmem:[#allocation10 + $0x108] sm:$0xff]
    %v2125 = vld [vmem:[#allocation10 + $0x110] sm:$0xff]
    %v2126 = vld [vmem:[#allocation10 + $0x118] sm:$0xff]
    %v2127 = vld [vmem:[#allocation10 + $0x120] sm:$0xff]
    %v2128 = vld [vmem:[#allocation10 + $0x128] sm:$0xff]
    %v2129 = vld [vmem:[#allocation10 + $0x130] sm:$0xff]
    %v2130 = vld [vmem:[#allocation10 + $0x138] sm:$0xff]
    %v2131 = vld [vmem:[#allocation10 + $0x140] sm:$0xff]
    %v2132 = vld [vmem:[#allocation10 + $0x148] sm:$0xff]
    %v2133 = vld [vmem:[#allocation10 + $0x150] sm:$0xff]
    %v2134 = vld [vmem:[#allocation10 + $0x158] sm:$0xff]
    %v2135 = vld [vmem:[#allocation10 + $0x160] sm:$0xff]
    %v2136 = vld [vmem:[#allocation10 + $0x168] sm:$0xff]
    %v2137 = vld [vmem:[#allocation10 + $0x170] sm:$0xff]
    %v2138 = vld [vmem:[#allocation10 + $0x178] sm:$0xff]
    %v2139 = vld [vmem:[#allocation10 + $0x180] sm:$0xff]
    %v2140 = vld [vmem:[#allocation10 + $0x188] sm:$0xff]
    %v2141 = vld [vmem:[#allocation10 + $0x190] sm:$0xff]
    %v2142 = vld [vmem:[#allocation10 + $0x198] sm:$0xff]
    %v2143 = vld [vmem:[#allocation10 + $0x1a0] sm:$0xff]
    %v2144 = vld [vmem:[#allocation10 + $0x1a8] sm:$0xff]
    %v2145 = vld [vmem:[#allocation10 + $0x1b0] sm:$0xff]
    %v2146 = vld [vmem:[#allocation10 + $0x1b8] sm:$0xff]
    %v2147 = vld [vmem:[#allocation10 + $0x1c0] sm:$0xff]
    %v2148 = vld [vmem:[#allocation10 + $0x1c8] sm:$0xff]
    %v2149 = vld [vmem:[#allocation10 + $0x1d0] sm:$0xff]
    %v2150 = vld [vmem:[#allocation10 + $0x1d8] sm:$0xff]
    %v2151 = vld [vmem:[#allocation10 + $0x1e0] sm:$0xff]
    %v2152 = vld [vmem:[#allocation10 + $0x1e8] sm:$0xff]
    %v2153 = vld [vmem:[#allocation10 + $0x1f0] sm:$0xff]
    %v2154 = vld [vmem:[#allocation10 + $0x1f8] sm:$0xff]
    %v2155 = vld [vmem:[#allocation10 + $0x200] sm:$0xff]
    %v2156 = vld [vmem:[#allocation10 + $0x208] sm:$0xff]
    %v2157 = vld [vmem:[#allocation10 + $0x210] sm:$0xff]
    %v2158 = vld [vmem:[#allocation10 + $0x218] sm:$0xff]
    %v2159 = vld [vmem:[#allocation10 + $0x220] sm:$0xff]
    %v2160 = vld [vmem:[#allocation10 + $0x228] sm:$0xff]
    %v2161 = vld [vmem:[#allocation10 + $0x230] sm:$0xff]
    %v2162 = vld [vmem:[#allocation10 + $0x238] sm:$0xff]
    %v2163 = vld [vmem:[#allocation10 + $0x240] sm:$0xff]
    %v2164 = vld [vmem:[#allocation10 + $0x248] sm:$0xff]
    %v2165 = vld [vmem:[#allocation10 + $0x250] sm:$0xff]
    %v2166 = vld [vmem:[#allocation10 + $0x258] sm:$0xff]
    %v2167 = vld [vmem:[#allocation10 + $0x260] sm:$0xff]
    %v2168 = vld [vmem:[#allocation10 + $0x268] sm:$0xff]
    %v2169 = vld [vmem:[#allocation10 + $0x270] sm:$0xff]
    %v2170 = vld [vmem:[#allocation10 + $0x278] sm:$0xff]
    %v2171 = vld [vmem:[#allocation10 + $0x280] sm:$0xff]
    %v2172 = vld [vmem:[#allocation10 + $0x288] sm:$0xff]
    %v2173 = vld [vmem:[#allocation10 + $0x290] sm:$0xff]
    %v2174 = vld [vmem:[#allocation10 + $0x298] sm:$0xff]
    %v2175 = vld [vmem:[#allocation10 + $0x2a0] sm:$0xff]
    %v2176 = vld [vmem:[#allocation10 + $0x2a8] sm:$0xff]
    %v2177 = vld [vmem:[#allocation10 + $0x2b0] sm:$0xff]
    %v2178 = vld [vmem:[#allocation10 + $0x2b8] sm:$0xff]
    %v2179 = vld [vmem:[#allocation10 + $0x2c0] sm:$0xff]
    %v2180 = vld [vmem:[#allocation10 + $0x2c8] sm:$0xff]
    %v2181 = vld [vmem:[#allocation10 + $0x2d0] sm:$0xff]
    %v2182 = vld [vmem:[#allocation10 + $0x2d8] sm:$0xff]
    %v2183 = vld [vmem:[#allocation10 + $0x2e0] sm:$0xff]
    %v2184 = vld [vmem:[#allocation10 + $0x2e8] sm:$0xff]
    %v2185 = vld [vmem:[#allocation10 + $0x2f0] sm:$0xff]
    %v2186 = vld [vmem:[#allocation10 + $0x2f8] sm:$0xff]
    %v2187 = vld [vmem:[#allocation10 + $0x300] sm:$0xff]
    %v2188 = vld [vmem:[#allocation10 + $0x308] sm:$0xff]
    %v2189 = vld [vmem:[#allocation10 + $0x310] sm:$0xff]
    %v2190 = vld [vmem:[#allocation10 + $0x318] sm:$0xff]
    %v2191 = vld [vmem:[#allocation10 + $0x320] sm:$0xff]
    %v2192 = vld [vmem:[#allocation10 + $0x328] sm:$0xff]
    %v2193 = vld [vmem:[#allocation10 + $0x330] sm:$0xff]
    %v2194 = vld [vmem:[#allocation10 + $0x338] sm:$0xff]
    %v2195 = vld [vmem:[#allocation10 + $0x340] sm:$0xff]
    %v2196 = vld [vmem:[#allocation10 + $0x348] sm:$0xff]
    %v2197 = vld [vmem:[#allocation10 + $0x350] sm:$0xff]
    %v2198 = vld [vmem:[#allocation10 + $0x358] sm:$0xff]
    %v2199 = vld [vmem:[#allocation10 + $0x360] sm:$0xff]
    %v2200 = vld [vmem:[#allocation10 + $0x368] sm:$0xff]
    %v2201 = vld [vmem:[#allocation10 + $0x370] sm:$0xff]
    %v2202 = vld [vmem:[#allocation10 + $0x378] sm:$0xff]
    %v2203 = vld [vmem:[#allocation10 + $0x380] sm:$0xff]
    %v2204 = vld [vmem:[#allocation10 + $0x388] sm:$0xff]
    %v2205 = vld [vmem:[#allocation10 + $0x390] sm:$0xff]
    %v2206 = vld [vmem:[#allocation10 + $0x398] sm:$0xff]
    %v2207 = vld [vmem:[#allocation10 + $0x3a0] sm:$0xff]
    %v2208 = vld [vmem:[#allocation10 + $0x3a8] sm:$0xff]
    %v2209 = vld [vmem:[#allocation10 + $0x3b0] sm:$0xff]
    %v2210 = vld [vmem:[#allocation10 + $0x3b8] sm:$0xff]
    %v2211 = vld [vmem:[#allocation10 + $0x3c0] sm:$0xff]
    %v2212 = vld [vmem:[#allocation10 + $0x3c8] sm:$0xff]
    %v2213 = vld [vmem:[#allocation10 + $0x3d0] sm:$0xff]
    %v2214 = vld [vmem:[#allocation10 + $0x3d8] sm:$0xff]
    %v2215 = vld [vmem:[#allocation10 + $0x3e0] sm:$0xff]
    %v2216 = vld [vmem:[#allocation10 + $0x3e8] sm:$0xff]
    %v2217 = vld [vmem:[#allocation10 + $0x3f0] sm:$0xff]
    %v2218 = vld [vmem:[#allocation10 + $0x3f8] sm:$0xff]
    %v2219 = vld [vmem:[#allocation10 + $0x400] sm:$0xff]
    %v2220 = vld [vmem:[#allocation10 + $0x408] sm:$0xff]
    %v2221 = vld [vmem:[#allocation10 + $0x410] sm:$0xff]
    %v2222 = vld [vmem:[#allocation10 + $0x418] sm:$0xff]
    %v2223 = vld [vmem:[#allocation10 + $0x420] sm:$0xff]
    %v2224 = vld [vmem:[#allocation10 + $0x428] sm:$0xff]
    %v2225 = vld [vmem:[#allocation10 + $0x430] sm:$0xff]
    %v2226 = vld [vmem:[#allocation10 + $0x438] sm:$0xff]
    %v2227 = vld [vmem:[#allocation10 + $0x440] sm:$0xff]
    %v2228 = vld [vmem:[#allocation10 + $0x448] sm:$0xff]
    %v2229 = vld [vmem:[#allocation10 + $0x450] sm:$0xff]
    %v2230 = vld [vmem:[#allocation10 + $0x458] sm:$0xff]
    %v2231 = vld [vmem:[#allocation10 + $0x460] sm:$0xff]
    %v2232 = vld [vmem:[#allocation10 + $0x468] sm:$0xff]
    %v2233 = vld [vmem:[#allocation10 + $0x470] sm:$0xff]
    %v2234 = vld [vmem:[#allocation10 + $0x478] sm:$0xff]
    %v2235 = vld [vmem:[#allocation10 + $0x480] sm:$0xff]
    %v2236 = vld [vmem:[#allocation10 + $0x488] sm:$0xff]
    %v2237 = vld [vmem:[#allocation10 + $0x490] sm:$0xff]
    %v2238 = vld [vmem:[#allocation10 + $0x498] sm:$0xff]
    %v2239 = vld [vmem:[#allocation10 + $0x4a0] sm:$0xff]
    %v2240 = vld [vmem:[#allocation10 + $0x4a8] sm:$0xff]
    %v2241 = vld [vmem:[#allocation10 + $0x4b0] sm:$0xff]
    %v2242 = vld [vmem:[#allocation10 + $0x4b8] sm:$0xff]
    %v2243 = vld [vmem:[#allocation10 + $0x4c0] sm:$0xff]
    %v2244 = vld [vmem:[#allocation10 + $0x4c8] sm:$0xff]
    %v2245 = vld [vmem:[#allocation10 + $0x4d0] sm:$0xff]
    %v2246 = vld [vmem:[#allocation10 + $0x4d8] sm:$0xff]
    %v2247 = vld [vmem:[#allocation10 + $0x4e0] sm:$0xff]
    %v2248 = vld [vmem:[#allocation10 + $0x4e8] sm:$0xff]
    %v2249 = vld [vmem:[#allocation10 + $0x4f0] sm:$0xff]
    %v2250 = vld [vmem:[#allocation10 + $0x4f8] sm:$0xff]
    %v2251 = vld [vmem:[#allocation10 + $0x500] sm:$0xff]
    %v2252 = vld [vmem:[#allocation10 + $0x508] sm:$0xff]
    %v2253 = vld [vmem:[#allocation10 + $0x510] sm:$0xff]
    %v2254 = vld [vmem:[#allocation10 + $0x518] sm:$0xff]
    %v2255 = vld [vmem:[#allocation10 + $0x520] sm:$0xff]
    %v2256 = vld [vmem:[#allocation10 + $0x528] sm:$0xff]
    %v2257 = vld [vmem:[#allocation10 + $0x530] sm:$0xff]
    %v2258 = vld [vmem:[#allocation10 + $0x538] sm:$0xff]
    %v2259 = vld [vmem:[#allocation10 + $0x540] sm:$0xff]
    %v2260 = vld [vmem:[#allocation10 + $0x548] sm:$0xff]
    %v2261 = vld [vmem:[#allocation10 + $0x550] sm:$0xff]
    %v2262 = vld [vmem:[#allocation10 + $0x558] sm:$0xff]
    %v2263 = vld [vmem:[#allocation10 + $0x560] sm:$0xff]
    %v2264 = vld [vmem:[#allocation10 + $0x568] sm:$0xff]
    %v2265 = vld [vmem:[#allocation10 + $0x570] sm:$0xff]
    %v2266 = vld [vmem:[#allocation10 + $0x578] sm:$0xff]
    %v2267 = vld [vmem:[#allocation10 + $0x580] sm:$0xff]
    %v2268 = vld [vmem:[#allocation10 + $0x588] sm:$0xff]
    %v2269 = vld [vmem:[#allocation10 + $0x590] sm:$0xff]
    %v2270 = vld [vmem:[#allocation10 + $0x598] sm:$0xff]
    %v2271 = vld [vmem:[#allocation10 + $0x5a0] sm:$0xff]
    %v2272 = vld [vmem:[#allocation10 + $0x5a8] sm:$0xff]
    %v2273 = vld [vmem:[#allocation10 + $0x5b0] sm:$0xff]
    %v2274 = vld [vmem:[#allocation10 + $0x5b8] sm:$0xff]
    %v2275 = vld [vmem:[#allocation10 + $0x5c0] sm:$0xff]
    %v2276 = vld [vmem:[#allocation10 + $0x5c8] sm:$0xff]
    %v2277 = vld [vmem:[#allocation10 + $0x5d0] sm:$0xff]
    %v2278 = vld [vmem:[#allocation10 + $0x5d8] sm:$0xff]
    %v2279 = vld [vmem:[#allocation10 + $0x5e0] sm:$0xff]
    %v2280 = vld [vmem:[#allocation10 + $0x5e8] sm:$0xff]
    %v2281 = vld [vmem:[#allocation10 + $0x5f0] sm:$0xff]
    %v2282 = vld [vmem:[#allocation10 + $0x5f8] sm:$0xff]
    %v2283 = vld [vmem:[#allocation10 + $0x600] sm:$0xff]
    %v2284 = vld [vmem:[#allocation10 + $0x608] sm:$0xff]
    %v2285 = vld [vmem:[#allocation10 + $0x610] sm:$0xff]
    %v2286 = vld [vmem:[#allocation10 + $0x618] sm:$0xff]
    %v2287 = vld [vmem:[#allocation10 + $0x620] sm:$0xff]
    %v2288 = vld [vmem:[#allocation10 + $0x628] sm:$0xff]
    %v2289 = vld [vmem:[#allocation10 + $0x630] sm:$0xff]
    %v2290 = vld [vmem:[#allocation10 + $0x638] sm:$0xff]
    %v2291 = vld [vmem:[#allocation10 + $0x640] sm:$0xff]
    %v2292 = vld [vmem:[#allocation10 + $0x648] sm:$0xff]
    %v2293 = vld [vmem:[#allocation10 + $0x650] sm:$0xff]
    %v2294 = vld [vmem:[#allocation10 + $0x658] sm:$0xff]
    %v2295 = vld [vmem:[#allocation10 + $0x660] sm:$0xff]
    %v2296 = vld [vmem:[#allocation10 + $0x668] sm:$0xff]
    %v2297 = vld [vmem:[#allocation10 + $0x670] sm:$0xff]
    %v2298 = vld [vmem:[#allocation10 + $0x678] sm:$0xff]
    %v2299 = vld [vmem:[#allocation10 + $0x680] sm:$0xff]
    %v2300 = vld [vmem:[#allocation10 + $0x688] sm:$0xff]
    %v2301 = vld [vmem:[#allocation10 + $0x690] sm:$0xff]
    %v2302 = vld [vmem:[#allocation10 + $0x698] sm:$0xff]
    %v2303 = vld [vmem:[#allocation10 + $0x6a0] sm:$0xff]
    %v2304 = vld [vmem:[#allocation10 + $0x6a8] sm:$0xff]
    %v2305 = vld [vmem:[#allocation10 + $0x6b0] sm:$0xff]
    %v2306 = vld [vmem:[#allocation10 + $0x6b8] sm:$0xff]
    %v2307 = vld [vmem:[#allocation10 + $0x6c0] sm:$0xff]
    %v2308 = vld [vmem:[#allocation10 + $0x6c8] sm:$0xff]
    %v2309 = vld [vmem:[#allocation10 + $0x6d0] sm:$0xff]
    %v2310 = vld [vmem:[#allocation10 + $0x6d8] sm:$0xff]
    %v2311 = vld [vmem:[#allocation10 + $0x6e0] sm:$0xff]
    %v2312 = vld [vmem:[#allocation10 + $0x6e8] sm:$0xff]
    %v2313 = vld [vmem:[#allocation10 + $0x6f0] sm:$0xff]
    %v2314 = vld [vmem:[#allocation10 + $0x6f8] sm:$0xff]
    %v2315 = vld [vmem:[#allocation10 + $0x700] sm:$0xff]
    %v2316 = vld [vmem:[#allocation10 + $0x708] sm:$0xff]
    %v2317 = vld [vmem:[#allocation10 + $0x710] sm:$0xff]
    %v2318 = vld [vmem:[#allocation10 + $0x718] sm:$0xff]
    %v2319 = vld [vmem:[#allocation10 + $0x720] sm:$0xff]
    %v2320 = vld [vmem:[#allocation10 + $0x728] sm:$0xff]
    %v2321 = vld [vmem:[#allocation10 + $0x730] sm:$0xff]
    %v2322 = vld [vmem:[#allocation10 + $0x738] sm:$0xff]
    %v2323 = vld [vmem:[#allocation10 + $0x740] sm:$0xff]
    %v2324 = vld [vmem:[#allocation10 + $0x748] sm:$0xff]
    %v2325 = vld [vmem:[#allocation10 + $0x750] sm:$0xff]
    %v2326 = vld [vmem:[#allocation10 + $0x758] sm:$0xff]
    %v2327 = vld [vmem:[#allocation10 + $0x760] sm:$0xff]
    %v2328 = vld [vmem:[#allocation10 + $0x768] sm:$0xff]
    %v2329 = vld [vmem:[#allocation10 + $0x770] sm:$0xff]
    %v2330 = vld [vmem:[#allocation10 + $0x778] sm:$0xff]
    %v2331 = vld [vmem:[#allocation10 + $0x780] sm:$0xff]
    %v2332 = vld [vmem:[#allocation10 + $0x788] sm:$0xff]
    %v2333 = vld [vmem:[#allocation10 + $0x790] sm:$0xff]
    %v2334 = vld [vmem:[#allocation10 + $0x798] sm:$0xff]
    %v2335 = vld [vmem:[#allocation10 + $0x7a0] sm:$0xff]
    %v2336 = vld [vmem:[#allocation10 + $0x7a8] sm:$0xff]
    %v2337 = vld [vmem:[#allocation10 + $0x7b0] sm:$0xff]
    %v2338 = vld [vmem:[#allocation10 + $0x7b8] sm:$0xff]
    %v2339 = vld [vmem:[#allocation10 + $0x7c0] sm:$0xff]
    %v2340 = vld [vmem:[#allocation10 + $0x7c8] sm:$0xff]
    %v2341 = vld [vmem:[#allocation10 + $0x7d0] sm:$0xff]
    %v2342 = vld [vmem:[#allocation10 + $0x7d8] sm:$0xff]
    %v2343 = vld [vmem:[#allocation10 + $0x7e0] sm:$0xff]
    %v2344 = vld [vmem:[#allocation10 + $0x7e8] sm:$0xff]
    %v2345 = vld [vmem:[#allocation10 + $0x7f0] sm:$0xff]
    %v2346 = vld [vmem:[#allocation10 + $0x7f8] sm:$0xff]
    %v2347 = vld [vmem:[#allocation10 + $0x800] sm:$0xff]
    %v2348 = vld [vmem:[#allocation10 + $0x808] sm:$0xff]
    %v2349 = vld [vmem:[#allocation10 + $0x810] sm:$0xff]
    %v2350 = vld [vmem:[#allocation10 + $0x818] sm:$0xff]
    %v2351 = vld [vmem:[#allocation10 + $0x820] sm:$0xff]
    %v2352 = vld [vmem:[#allocation10 + $0x828] sm:$0xff]
    %v2353 = vld [vmem:[#allocation10 + $0x830] sm:$0xff]
    %v2354 = vld [vmem:[#allocation10 + $0x838] sm:$0xff]
    %v2355 = vld [vmem:[#allocation10 + $0x840] sm:$0xff]
    %v2356 = vld [vmem:[#allocation10 + $0x848] sm:$0xff]
    %v2357 = vld [vmem:[#allocation10 + $0x850] sm:$0xff]
    %v2358 = vld [vmem:[#allocation10 + $0x858] sm:$0xff]
    %v2359 = vld [vmem:[#allocation10 + $0x860] sm:$0xff]
    %v2360 = vld [vmem:[#allocation10 + $0x868] sm:$0xff]
    %v2361 = vld [vmem:[#allocation10 + $0x870] sm:$0xff]
    %v2362 = vld [vmem:[#allocation10 + $0x878] sm:$0xff]
    %v2363 = vld [vmem:[#allocation10 + $0x880] sm:$0xff]
    %v2364 = vld [vmem:[#allocation10 + $0x888] sm:$0xff]
    %v2365 = vld [vmem:[#allocation10 + $0x890] sm:$0xff]
    %v2366 = vld [vmem:[#allocation10 + $0x898] sm:$0xff]
    %v2367 = vld [vmem:[#allocation10 + $0x8a0] sm:$0xff]
    %v2368 = vld [vmem:[#allocation10 + $0x8a8] sm:$0xff]
    %v2369 = vld [vmem:[#allocation10 + $0x8b0] sm:$0xff]
    %v2370 = vld [vmem:[#allocation10 + $0x8b8] sm:$0xff]
    %v2371 = vld [vmem:[#allocation10 + $0x8c0] sm:$0xff]
    %v2372 = vld [vmem:[#allocation10 + $0x8c8] sm:$0xff]
    %v2373 = vld [vmem:[#allocation10 + $0x8d0] sm:$0xff]
    %v2374 = vld [vmem:[#allocation10 + $0x8d8] sm:$0xff]
    %v2375 = vld [vmem:[#allocation10 + $0x8e0] sm:$0xff]
    %v2376 = vld [vmem:[#allocation10 + $0x8e8] sm:$0xff]
    %v2377 = vld [vmem:[#allocation10 + $0x8f0] sm:$0xff]
    %v2378 = vld [vmem:[#allocation10 + $0x8f8] sm:$0xff]
    %v2379 = vld [vmem:[#allocation10 + $0x900] sm:$0xff]
    %v2380 = vld [vmem:[#allocation10 + $0x908] sm:$0xff]
    %v2381 = vld [vmem:[#allocation10 + $0x910] sm:$0xff]
    %v2382 = vld [vmem:[#allocation10 + $0x918] sm:$0xff]
    %v2383 = vld [vmem:[#allocation10 + $0x920] sm:$0xff]
    %v2384 = vld [vmem:[#allocation10 + $0x928] sm:$0xff]
    %v2385 = vld [vmem:[#allocation10 + $0x930] sm:$0xff]
    %v2386 = vld [vmem:[#allocation10 + $0x938] sm:$0xff]
    %v2387 = vld [vmem:[#allocation10 + $0x940] sm:$0xff]
    %v2388 = vld [vmem:[#allocation10 + $0x948] sm:$0xff]
    %v2389 = vld [vmem:[#allocation10 + $0x950] sm:$0xff]
    %v2390 = vld [vmem:[#allocation10 + $0x958] sm:$0xff]
    %v2391 = vld [vmem:[#allocation10 + $0x960] sm:$0xff]
    %v2392 = vld [vmem:[#allocation10 + $0x968] sm:$0xff]
    %v2393 = vld [vmem:[#allocation10 + $0x970] sm:$0xff]
    %v2394 = vld [vmem:[#allocation10 + $0x978] sm:$0xff]
    %v2395 = vld [vmem:[#allocation10 + $0x980] sm:$0xff]
    %v2396 = vld [vmem:[#allocation10 + $0x988] sm:$0xff]
    %v2397 = vld [vmem:[#allocation10 + $0x990] sm:$0xff]
    %v2398 = vld [vmem:[#allocation10 + $0x998] sm:$0xff]
    %v2399 = vld [vmem:[#allocation10 + $0x9a0] sm:$0xff]
    %v2400 = vld [vmem:[#allocation10 + $0x9a8] sm:$0xff]
    %v2401 = vld [vmem:[#allocation10 + $0x9b0] sm:$0xff]
    %v2402 = vld [vmem:[#allocation10 + $0x9b8] sm:$0xff]
    %v2403 = vld [vmem:[#allocation10 + $0x9c0] sm:$0xff]
    %v2404 = vld [vmem:[#allocation10 + $0x9c8] sm:$0xff]
    %v2405 = vld [vmem:[#allocation10 + $0x9d0] sm:$0xff]
    %v2406 = vld [vmem:[#allocation10 + $0x9d8] sm:$0xff]
    %v2407 = vld [vmem:[#allocation10 + $0x9e0] sm:$0xff]
    %v2408 = vld [vmem:[#allocation10 + $0x9e8] sm:$0xff]
    %v2409 = vld [vmem:[#allocation10 + $0x9f0] sm:$0xff]
    %v2410 = vld [vmem:[#allocation10 + $0x9f8] sm:$0xff]
    %v2411 = vld [vmem:[#allocation10 + $0xa00] sm:$0xff]
    %v2412 = vld [vmem:[#allocation10 + $0xa08] sm:$0xff]
    %v2413 = vld [vmem:[#allocation10 + $0xa10] sm:$0xff]
    %v2414 = vld [vmem:[#allocation10 + $0xa18] sm:$0xff]
    %v2415 = vld [vmem:[#allocation10 + $0xa20] sm:$0xff]
    %v2416 = vld [vmem:[#allocation10 + $0xa28] sm:$0xff]
    %v2417 = vld [vmem:[#allocation10 + $0xa30] sm:$0xff]
    %v2418 = vld [vmem:[#allocation10 + $0xa38] sm:$0xff]
    %v2419 = vld [vmem:[#allocation10 + $0xa40] sm:$0xff]
    %v2420 = vld [vmem:[#allocation10 + $0xa48] sm:$0xff]
    %v2421 = vld [vmem:[#allocation10 + $0xa50] sm:$0xff]
    %v2422 = vld [vmem:[#allocation10 + $0xa58] sm:$0xff]
    %v2423 = vld [vmem:[#allocation10 + $0xa60] sm:$0xff]
    %v2424 = vld [vmem:[#allocation10 + $0xa68] sm:$0xff]
    %v2425 = vld [vmem:[#allocation10 + $0xa70] sm:$0xff]
    %v2426 = vld [vmem:[#allocation10 + $0xa78] sm:$0xff]
    %v2427 = vld [vmem:[#allocation10 + $0xa80] sm:$0xff]
    %v2428 = vld [vmem:[#allocation10 + $0xa88] sm:$0xff]
    %v2429 = vld [vmem:[#allocation10 + $0xa90] sm:$0xff]
    %v2430 = vld [vmem:[#allocation10 + $0xa98] sm:$0xff]
    %v2431 = vld [vmem:[#allocation10 + $0xaa0] sm:$0xff]
    %v2432 = vld [vmem:[#allocation10 + $0xaa8] sm:$0xff]
    %v2433 = vld [vmem:[#allocation10 + $0xab0] sm:$0xff]
    %v2434 = vld [vmem:[#allocation10 + $0xab8] sm:$0xff]
    %v2435 = vld [vmem:[#allocation10 + $0xac0] sm:$0xff]
    %v2436 = vld [vmem:[#allocation10 + $0xac8] sm:$0xff]
    %v2437 = vld [vmem:[#allocation10 + $0xad0] sm:$0xff]
    %v2438 = vld [vmem:[#allocation10 + $0xad8] sm:$0xff]
    %v2439 = vld [vmem:[#allocation10 + $0xae0] sm:$0xff]
    %v2440 = vld [vmem:[#allocation10 + $0xae8] sm:$0xff]
    %v2441 = vld [vmem:[#allocation10 + $0xaf0] sm:$0xff]
    %v2442 = vld [vmem:[#allocation10 + $0xaf8] sm:$0xff]
    %v2443 = vld [vmem:[#allocation10 + $0xb00] sm:$0xff]
    %v2444 = vld [vmem:[#allocation10 + $0xb08] sm:$0xff]
    %v2445 = vld [vmem:[#allocation10 + $0xb10] sm:$0xff]
    %v2446 = vld [vmem:[#allocation10 + $0xb18] sm:$0xff]
    %v2447 = vld [vmem:[#allocation10 + $0xb20] sm:$0xff]
    %v2448 = vld [vmem:[#allocation10 + $0xb28] sm:$0xff]
    %v2449 = vld [vmem:[#allocation10 + $0xb30] sm:$0xff]
    %v2450 = vld [vmem:[#allocation10 + $0xb38] sm:$0xff]
    %v2451 = vld [vmem:[#allocation10 + $0xb40] sm:$0xff]
    %v2452 = vld [vmem:[#allocation10 + $0xb48] sm:$0xff]
    %v2453 = vld [vmem:[#allocation10 + $0xb50] sm:$0xff]
    %v2454 = vld [vmem:[#allocation10 + $0xb58] sm:$0xff]
    %v2455 = vld [vmem:[#allocation10 + $0xb60] sm:$0xff]
    %v2456 = vld [vmem:[#allocation10 + $0xb68] sm:$0xff]
    %v2457 = vld [vmem:[#allocation10 + $0xb70] sm:$0xff]
    %v2458 = vld [vmem:[#allocation10 + $0xb78] sm:$0xff]
    %v2459 = vld [vmem:[#allocation10 + $0xb80] sm:$0xff]
    %v2460 = vld [vmem:[#allocation10 + $0xb88] sm:$0xff]
    %v2461 = vld [vmem:[#allocation10 + $0xb90] sm:$0xff]
    %v2462 = vld [vmem:[#allocation10 + $0xb98] sm:$0xff]
    %v2463 = vld [vmem:[#allocation10 + $0xba0] sm:$0xff]
    %v2464 = vld [vmem:[#allocation10 + $0xba8] sm:$0xff]
    %v2465 = vld [vmem:[#allocation10 + $0xbb0] sm:$0xff]
    %v2466 = vld [vmem:[#allocation10 + $0xbb8] sm:$0xff]
    %v2467 = vld [vmem:[#allocation10 + $0xbc0] sm:$0xff]
    %v2468 = vld [vmem:[#allocation10 + $0xbc8] sm:$0xff]
    %v2469 = vld [vmem:[#allocation10 + $0xbd0] sm:$0xff]
    %v2470 = vld [vmem:[#allocation10 + $0xbd8] sm:$0xff]
    %v2471 = vld [vmem:[#allocation10 + $0xbe0] sm:$0xff]
    %v2472 = vld [vmem:[#allocation10 + $0xbe8] sm:$0xff]
    %v2473 = vld [vmem:[#allocation10 + $0xbf0] sm:$0xff]
    %v2474 = vld [vmem:[#allocation10 + $0xbf8] sm:$0xff]
    %v2475 = vld [vmem:[#allocation10 + $0xc00] sm:$0xff]
    %v2476 = vld [vmem:[#allocation10 + $0xc08] sm:$0xff]
    %v2477 = vld [vmem:[#allocation10 + $0xc10] sm:$0xff]
    %v2478 = vld [vmem:[#allocation10 + $0xc18] sm:$0xff]
    %v2479 = vld [vmem:[#allocation10 + $0xc20] sm:$0xff]
    %v2480 = vld [vmem:[#allocation10 + $0xc28] sm:$0xff]
    %v2481 = vld [vmem:[#allocation10 + $0xc30] sm:$0xff]
    %v2482 = vld [vmem:[#allocation10 + $0xc38] sm:$0xff]
    %v2483 = vld [vmem:[#allocation10 + $0xc40] sm:$0xff]
    %v2484 = vld [vmem:[#allocation10 + $0xc48] sm:$0xff]
    %v2485 = vld [vmem:[#allocation10 + $0xc50] sm:$0xff]
    %v2486 = vld [vmem:[#allocation10 + $0xc58] sm:$0xff]
    %v2487 = vld [vmem:[#allocation10 + $0xc60] sm:$0xff]
    %v2488 = vld [vmem:[#allocation10 + $0xc68] sm:$0xff]
    %v2489 = vld [vmem:[#allocation10 + $0xc70] sm:$0xff]
    %v2490 = vld [vmem:[#allocation10 + $0xc78] sm:$0xff]
    %v2491 = vld [vmem:[#allocation10 + $0xc80] sm:$0xff]
    %v2492 = vld [vmem:[#allocation10 + $0xc88] sm:$0xff]
    %v2493 = vld [vmem:[#allocation10 + $0xc90] sm:$0xff]
    %v2494 = vld [vmem:[#allocation10 + $0xc98] sm:$0xff]
    %v2495 = vld [vmem:[#allocation10 + $0xca0] sm:$0xff]
    %v2496 = vld [vmem:[#allocation10 + $0xca8] sm:$0xff]
    %v2497 = vld [vmem:[#allocation10 + $0xcb0] sm:$0xff]
    %v2498 = vld [vmem:[#allocation10 + $0xcb8] sm:$0xff]
    %v2499 = vld [vmem:[#allocation10 + $0xcc0] sm:$0xff]
    %v2500 = vld [vmem:[#allocation10 + $0xcc8] sm:$0xff]
    %v2501 = vld [vmem:[#allocation10 + $0xcd0] sm:$0xff]
    %v2502 = vld [vmem:[#allocation10 + $0xcd8] sm:$0xff]
    %v2503 = vld [vmem:[#allocation10 + $0xce0] sm:$0xff]
    %v2504 = vld [vmem:[#allocation10 + $0xce8] sm:$0xff]
    %v2505 = vld [vmem:[#allocation10 + $0xcf0] sm:$0xff]
    %v2506 = vld [vmem:[#allocation10 + $0xcf8] sm:$0xff]
    %v2507 = vld [vmem:[#allocation10 + $0xd00] sm:$0xff]
    %v2508 = vld [vmem:[#allocation10 + $0xd08] sm:$0xff]
    %v2509 = vld [vmem:[#allocation10 + $0xd10] sm:$0xff]
    %v2510 = vld [vmem:[#allocation10 + $0xd18] sm:$0xff]
    %v2511 = vld [vmem:[#allocation10 + $0xd20] sm:$0xff]
    %v2512 = vld [vmem:[#allocation10 + $0xd28] sm:$0xff]
    %v2513 = vld [vmem:[#allocation10 + $0xd30] sm:$0xff]
    %v2514 = vld [vmem:[#allocation10 + $0xd38] sm:$0xff]
    %v2515 = vld [vmem:[#allocation10 + $0xd40] sm:$0xff]
    %v2516 = vld [vmem:[#allocation10 + $0xd48] sm:$0xff]
    %v2517 = vld [vmem:[#allocation10 + $0xd50] sm:$0xff]
    %v2518 = vld [vmem:[#allocation10 + $0xd58] sm:$0xff]
    %v2519 = vld [vmem:[#allocation10 + $0xd60] sm:$0xff]
    %v2520 = vld [vmem:[#allocation10 + $0xd68] sm:$0xff]
    %v2521 = vld [vmem:[#allocation10 + $0xd70] sm:$0xff]
    %v2522 = vld [vmem:[#allocation10 + $0xd78] sm:$0xff]
    %v2523 = vld [vmem:[#allocation10 + $0xd80] sm:$0xff]
    %v2524 = vld [vmem:[#allocation10 + $0xd88] sm:$0xff]
    %v2525 = vld [vmem:[#allocation10 + $0xd90] sm:$0xff]
    %v2526 = vld [vmem:[#allocation10 + $0xd98] sm:$0xff]
    %v2527 = vld [vmem:[#allocation10 + $0xda0] sm:$0xff]
    %v2528 = vld [vmem:[#allocation10 + $0xda8] sm:$0xff]
    %v2529 = vld [vmem:[#allocation10 + $0xdb0] sm:$0xff]
    %v2530 = vld [vmem:[#allocation10 + $0xdb8] sm:$0xff]
    %v2531 = vld [vmem:[#allocation10 + $0xdc0] sm:$0xff]
    %v2532 = vld [vmem:[#allocation10 + $0xdc8] sm:$0xff]
    %v2533 = vld [vmem:[#allocation10 + $0xdd0] sm:$0xff]
    %v2534 = vld [vmem:[#allocation10 + $0xdd8] sm:$0xff]
    %v2535 = vld [vmem:[#allocation10 + $0xde0] sm:$0xff]
    %v2536 = vld [vmem:[#allocation10 + $0xde8] sm:$0xff]
    %v2537 = vld [vmem:[#allocation10 + $0xdf0] sm:$0xff]
    %v2538 = vld [vmem:[#allocation10 + $0xdf8] sm:$0xff]
    %v2539 = vld [vmem:[#allocation10 + $0xe00] sm:$0xff]
    %v2540 = vld [vmem:[#allocation10 + $0xe08] sm:$0xff]
    %v2541 = vld [vmem:[#allocation10 + $0xe10] sm:$0xff]
    %v2542 = vld [vmem:[#allocation10 + $0xe18] sm:$0xff]
    %v2543 = vld [vmem:[#allocation10 + $0xe20] sm:$0xff]
    %v2544 = vld [vmem:[#allocation10 + $0xe28] sm:$0xff]
    %v2545 = vld [vmem:[#allocation10 + $0xe30] sm:$0xff]
    %v2546 = vld [vmem:[#allocation10 + $0xe38] sm:$0xff]
    %v2547 = vld [vmem:[#allocation10 + $0xe40] sm:$0xff]
    %v2548 = vld [vmem:[#allocation10 + $0xe48] sm:$0xff]
    %v2549 = vld [vmem:[#allocation10 + $0xe50] sm:$0xff]
    %v2550 = vld [vmem:[#allocation10 + $0xe58] sm:$0xff]
    %v2551 = vld [vmem:[#allocation10 + $0xe60] sm:$0xff]
    %v2552 = vld [vmem:[#allocation10 + $0xe68] sm:$0xff]
    %v2553 = vld [vmem:[#allocation10 + $0xe70] sm:$0xff]
    %v2554 = vld [vmem:[#allocation10 + $0xe78] sm:$0xff]
    %v2555 = vld [vmem:[#allocation10 + $0xe80] sm:$0xff]
    %v2556 = vld [vmem:[#allocation10 + $0xe88] sm:$0xff]
    %v2557 = vld [vmem:[#allocation10 + $0xe90] sm:$0xff]
    %v2558 = vld [vmem:[#allocation10 + $0xe98] sm:$0xff]
    %v2559 = vld [vmem:[#allocation10 + $0xea0] sm:$0xff]
    %v2560 = vld [vmem:[#allocation10 + $0xea8] sm:$0xff]
    %v2561 = vld [vmem:[#allocation10 + $0xeb0] sm:$0xff]
    %v2562 = vld [vmem:[#allocation10 + $0xeb8] sm:$0xff]
    %v2563 = vld [vmem:[#allocation10 + $0xec0] sm:$0xff]
    %v2564 = vld [vmem:[#allocation10 + $0xec8] sm:$0xff]
    %v2565 = vld [vmem:[#allocation10 + $0xed0] sm:$0xff]
    %v2566 = vld [vmem:[#allocation10 + $0xed8] sm:$0xff]
    %v2567 = vld [vmem:[#allocation10 + $0xee0] sm:$0xff]
    %v2568 = vld [vmem:[#allocation10 + $0xee8] sm:$0xff]
    %v2569 = vld [vmem:[#allocation10 + $0xef0] sm:$0xff]
    %v2570 = vld [vmem:[#allocation10 + $0xef8] sm:$0xff]
    %v2571 = vld [vmem:[#allocation10 + $0xf00] sm:$0xff]
    %v2572 = vld [vmem:[#allocation10 + $0xf08] sm:$0xff]
    %v2573 = vld [vmem:[#allocation10 + $0xf10] sm:$0xff]
    %v2574 = vld [vmem:[#allocation10 + $0xf18] sm:$0xff]
    %v2575 = vld [vmem:[#allocation10 + $0xf20] sm:$0xff]
    %v2576 = vld [vmem:[#allocation10 + $0xf28] sm:$0xff]
    %v2577 = vld [vmem:[#allocation10 + $0xf30] sm:$0xff]
    %v2578 = vld [vmem:[#allocation10 + $0xf38] sm:$0xff]
    %v2579 = vld [vmem:[#allocation10 + $0xf40] sm:$0xff]
    %v2580 = vld [vmem:[#allocation10 + $0xf48] sm:$0xff]
    %v2581 = vld [vmem:[#allocation10 + $0xf50] sm:$0xff]
    %v2582 = vld [vmem:[#allocation10 + $0xf58] sm:$0xff]
    %v2583 = vld [vmem:[#allocation10 + $0xf60] sm:$0xff]
    %v2584 = vld [vmem:[#allocation10 + $0xf68] sm:$0xff]
    %v2585 = vld [vmem:[#allocation10 + $0xf70] sm:$0xff]
    %v2586 = vld [vmem:[#allocation10 + $0xf78] sm:$0xff]
    %v2587 = vld [vmem:[#allocation10 + $0xf80] sm:$0xff]
    %v2588 = vld [vmem:[#allocation10 + $0xf88] sm:$0xff]
    %v2589 = vld [vmem:[#allocation10 + $0xf90] sm:$0xff]
    %v2590 = vld [vmem:[#allocation10 + $0xf98] sm:$0xff]
    %v2591 = vld [vmem:[#allocation10 + $0xfa0] sm:$0xff]
    %v2592 = vld [vmem:[#allocation10 + $0xfa8] sm:$0xff]
    %v2593 = vld [vmem:[#allocation10 + $0xfb0] sm:$0xff]
    %v2594 = vld [vmem:[#allocation10 + $0xfb8] sm:$0xff]
    %v2595 = vld [vmem:[#allocation10 + $0xfc0] sm:$0xff]
    %v2596 = vld [vmem:[#allocation10 + $0xfc8] sm:$0xff]
    %v2597 = vld [vmem:[#allocation10 + $0xfd0] sm:$0xff]
    %v2598 = vld [vmem:[#allocation10 + $0xfd8] sm:$0xff]
    %v2599 = vld [vmem:[#allocation10 + $0xfe0] sm:$0xff]
    %v2600 = vld [vmem:[#allocation10 + $0xfe8] sm:$0xff]
    %v2601 = vld [vmem:[#allocation10 + $0xff0] sm:$0xff]
    %v2602 = vld [vmem:[#allocation10 + $0xff8] sm:$0xff]
    %s2603 = scalar_lea.vmem [#allocation16], 3
    %v2604 = vld [vmem:[%s2603] ss:$8 sm:$0xf]
    %v2605 = vld [vmem:[%s2603] ss:$8 sm:$0xf0]
    %v2606 = vor.u32 %v2604, %v2605
    %v2608 = vlaneseq
    %v2609 = vshrl.u32 %v2608, 7
    %v2610 = vsub.s32 0, %v2609
    %v2611 = vrot.slane %v2606, %v2610
    %v2612 = vlaneseq
    %v2613 = vshrl.u32 %v2612, 7
    %v2614 = vsub.s32 1, %v2613
    %v2615 = vrot.slane %v2606, %v2614
    %v2616 = vlaneseq
    %v2617 = vshrl.u32 %v2616, 7
    %v2618 = vsub.s32 2, %v2617
    %v2619 = vrot.slane %v2606, %v2618
    %v2620 = vlaneseq
    %v2621 = vshrl.u32 %v2620, 7
    %v2622 = vsub.s32 3, %v2621
    %v2623 = vrot.slane %v2606, %v2622
    %v2624 = vlaneseq
    %v2625 = vshrl.u32 %v2624, 7
    %v2626 = vsub.s32 4, %v2625
    %v2627 = vrot.slane %v2606, %v2626
    %v2628 = vlaneseq
    %v2629 = vshrl.u32 %v2628, 7
    %v2630 = vsub.s32 5, %v2629
    %v2631 = vrot.slane %v2606, %v2630
    %v2632 = vlaneseq
    %v2633 = vshrl.u32 %v2632, 7
    %v2634 = vsub.s32 6, %v2633
    %v2635 = vrot.slane %v2606, %v2634
    %v2636 = vlaneseq
    %v2637 = vshrl.u32 %v2636, 7
    %v2638 = vsub.s32 7, %v2637
    %v2639 = vrot.slane %v2606, %v2638
    %v3160 = vunpack.c.l.b16 %v2091
    %v3161 = vunpack.c.h.b16 %v2091
    %v3162 = vunpack.c.l.b16 %v2092
    %v3163 = vunpack.c.h.b16 %v2092
    %v3164 = vunpack.c.l.b16 %v2093
    %v3165 = vunpack.c.h.b16 %v2093
    %v3166 = vunpack.c.l.b16 %v2094
    %v3167 = vunpack.c.h.b16 %v2094
    %v3168 = vunpack.c.l.b16 %v2095
    %v3169 = vunpack.c.h.b16 %v2095
    %v3170 = vunpack.c.l.b16 %v2096
    %v3171 = vunpack.c.h.b16 %v2096
    %v3172 = vunpack.c.l.b16 %v2097
    %v3173 = vunpack.c.h.b16 %v2097
    %v3174 = vunpack.c.l.b16 %v2098
    %v3175 = vunpack.c.h.b16 %v2098
    %v3176 = vunpack.c.l.b16 %v2099
    %v3177 = vunpack.c.h.b16 %v2099
    %v3178 = vunpack.c.l.b16 %v2100
    %v3179 = vunpack.c.h.b16 %v2100
    %v3180 = vunpack.c.l.b16 %v2101
    %v3181 = vunpack.c.h.b16 %v2101
    %v3182 = vunpack.c.l.b16 %v2102
    %v3183 = vunpack.c.h.b16 %v2102
    %v3184 = vunpack.c.l.b16 %v2103
    %v3185 = vunpack.c.h.b16 %v2103
    %v3186 = vunpack.c.l.b16 %v2104
    %v3187 = vunpack.c.h.b16 %v2104
    %v3188 = vunpack.c.l.b16 %v2105
    %v3189 = vunpack.c.h.b16 %v2105
    %v3190 = vunpack.c.l.b16 %v2106
    %v3191 = vunpack.c.h.b16 %v2106
    %v3192 = vunpack.c.l.b16 %v2107
    %v3193 = vunpack.c.h.b16 %v2107
    %v3194 = vunpack.c.l.b16 %v2108
    %v3195 = vunpack.c.h.b16 %v2108
    %v3196 = vunpack.c.l.b16 %v2109
    %v3197 = vunpack.c.h.b16 %v2109
    %v3198 = vunpack.c.l.b16 %v2110
    %v3199 = vunpack.c.h.b16 %v2110
    %v3200 = vunpack.c.l.b16 %v2111
    %v3201 = vunpack.c.h.b16 %v2111
    %v3202 = vunpack.c.l.b16 %v2112
    %v3203 = vunpack.c.h.b16 %v2112
    %v3204 = vunpack.c.l.b16 %v2113
    %v3205 = vunpack.c.h.b16 %v2113
    %v3206 = vunpack.c.l.b16 %v2114
    %v3207 = vunpack.c.h.b16 %v2114
    %v3208 = vunpack.c.l.b16 %v2115
    %v3209 = vunpack.c.h.b16 %v2115
    %v3210 = vunpack.c.l.b16 %v2116
    %v3211 = vunpack.c.h.b16 %v2116
    %v3212 = vunpack.c.l.b16 %v2117
    %v3213 = vunpack.c.h.b16 %v2117
    %v3214 = vunpack.c.l.b16 %v2118
    %v3215 = vunpack.c.h.b16 %v2118
    %v3216 = vunpack.c.l.b16 %v2119
    %v3217 = vunpack.c.h.b16 %v2119
    %v3218 = vunpack.c.l.b16 %v2120
    %v3219 = vunpack.c.h.b16 %v2120
    %v3220 = vunpack.c.l.b16 %v2121
    %v3221 = vunpack.c.h.b16 %v2121
    %v3222 = vunpack.c.l.b16 %v2122
    %v3223 = vunpack.c.h.b16 %v2122
    %v3224 = vunpack.c.l.b16 %v2123
    %v3225 = vunpack.c.h.b16 %v2123
    %v3226 = vunpack.c.l.b16 %v2124
    %v3227 = vunpack.c.h.b16 %v2124
    %v3228 = vunpack.c.l.b16 %v2125
    %v3229 = vunpack.c.h.b16 %v2125
    %v3230 = vunpack.c.l.b16 %v2126
    %v3231 = vunpack.c.h.b16 %v2126
    %v3232 = vunpack.c.l.b16 %v2127
    %v3233 = vunpack.c.h.b16 %v2127
    %v3234 = vunpack.c.l.b16 %v2128
    %v3235 = vunpack.c.h.b16 %v2128
    %v3236 = vunpack.c.l.b16 %v2129
    %v3237 = vunpack.c.h.b16 %v2129
    %v3238 = vunpack.c.l.b16 %v2130
    %v3239 = vunpack.c.h.b16 %v2130
    %v3240 = vunpack.c.l.b16 %v2131
    %v3241 = vunpack.c.h.b16 %v2131
    %v3242 = vunpack.c.l.b16 %v2132
    %v3243 = vunpack.c.h.b16 %v2132
    %v3244 = vunpack.c.l.b16 %v2133
    %v3245 = vunpack.c.h.b16 %v2133
    %v3246 = vunpack.c.l.b16 %v2134
    %v3247 = vunpack.c.h.b16 %v2134
    %v3248 = vunpack.c.l.b16 %v2135
    %v3249 = vunpack.c.h.b16 %v2135
    %v3250 = vunpack.c.l.b16 %v2136
    %v3251 = vunpack.c.h.b16 %v2136
    %v3252 = vunpack.c.l.b16 %v2137
    %v3253 = vunpack.c.h.b16 %v2137
    %v3254 = vunpack.c.l.b16 %v2138
    %v3255 = vunpack.c.h.b16 %v2138
    %v3256 = vunpack.c.l.b16 %v2139
    %v3257 = vunpack.c.h.b16 %v2139
    %v3258 = vunpack.c.l.b16 %v2140
    %v3259 = vunpack.c.h.b16 %v2140
    %v3260 = vunpack.c.l.b16 %v2141
    %v3261 = vunpack.c.h.b16 %v2141
    %v3262 = vunpack.c.l.b16 %v2142
    %v3263 = vunpack.c.h.b16 %v2142
    %v3264 = vunpack.c.l.b16 %v2143
    %v3265 = vunpack.c.h.b16 %v2143
    %v3266 = vunpack.c.l.b16 %v2144
    %v3267 = vunpack.c.h.b16 %v2144
    %v3268 = vunpack.c.l.b16 %v2145
    %v3269 = vunpack.c.h.b16 %v2145
    %v3270 = vunpack.c.l.b16 %v2146
    %v3271 = vunpack.c.h.b16 %v2146
    %v3272 = vunpack.c.l.b16 %v2147
    %v3273 = vunpack.c.h.b16 %v2147
    %v3274 = vunpack.c.l.b16 %v2148
    %v3275 = vunpack.c.h.b16 %v2148
    %v3276 = vunpack.c.l.b16 %v2149
    %v3277 = vunpack.c.h.b16 %v2149
    %v3278 = vunpack.c.l.b16 %v2150
    %v3279 = vunpack.c.h.b16 %v2150
    %v3280 = vunpack.c.l.b16 %v2151
    %v3281 = vunpack.c.h.b16 %v2151
    %v3282 = vunpack.c.l.b16 %v2152
    %v3283 = vunpack.c.h.b16 %v2152
    %v3284 = vunpack.c.l.b16 %v2153
    %v3285 = vunpack.c.h.b16 %v2153
    %v3286 = vunpack.c.l.b16 %v2154
    %v3287 = vunpack.c.h.b16 %v2154
    %v3288 = vunpack.c.l.b16 %v2155
    %v3289 = vunpack.c.h.b16 %v2155
    %v3290 = vunpack.c.l.b16 %v2156
    %v3291 = vunpack.c.h.b16 %v2156
    %v3292 = vunpack.c.l.b16 %v2157
    %v3293 = vunpack.c.h.b16 %v2157
    %v3294 = vunpack.c.l.b16 %v2158
    %v3295 = vunpack.c.h.b16 %v2158
    %v3296 = vunpack.c.l.b16 %v2159
    %v3297 = vunpack.c.h.b16 %v2159
    %v3298 = vunpack.c.l.b16 %v2160
    %v3299 = vunpack.c.h.b16 %v2160
    %v3300 = vunpack.c.l.b16 %v2161
    %v3301 = vunpack.c.h.b16 %v2161
    %v3302 = vunpack.c.l.b16 %v2162
    %v3303 = vunpack.c.h.b16 %v2162
    %v3304 = vunpack.c.l.b16 %v2163
    %v3305 = vunpack.c.h.b16 %v2163
    %v3306 = vunpack.c.l.b16 %v2164
    %v3307 = vunpack.c.h.b16 %v2164
    %v3308 = vunpack.c.l.b16 %v2165
    %v3309 = vunpack.c.h.b16 %v2165
    %v3310 = vunpack.c.l.b16 %v2166
    %v3311 = vunpack.c.h.b16 %v2166
    %v3312 = vunpack.c.l.b16 %v2167
    %v3313 = vunpack.c.h.b16 %v2167
    %v3314 = vunpack.c.l.b16 %v2168
    %v3315 = vunpack.c.h.b16 %v2168
    %v3316 = vunpack.c.l.b16 %v2169
    %v3317 = vunpack.c.h.b16 %v2169
    %v3318 = vunpack.c.l.b16 %v2170
    %v3319 = vunpack.c.h.b16 %v2170
    %v3320 = vunpack.c.l.b16 %v2171
    %v3321 = vunpack.c.h.b16 %v2171
    %v3322 = vunpack.c.l.b16 %v2172
    %v3323 = vunpack.c.h.b16 %v2172
    %v3324 = vunpack.c.l.b16 %v2173
    %v3325 = vunpack.c.h.b16 %v2173
    %v3326 = vunpack.c.l.b16 %v2174
    %v3327 = vunpack.c.h.b16 %v2174
    %v3328 = vunpack.c.l.b16 %v2175
    %v3329 = vunpack.c.h.b16 %v2175
    %v3330 = vunpack.c.l.b16 %v2176
    %v3331 = vunpack.c.h.b16 %v2176
    %v3332 = vunpack.c.l.b16 %v2177
    %v3333 = vunpack.c.h.b16 %v2177
    %v3334 = vunpack.c.l.b16 %v2178
    %v3335 = vunpack.c.h.b16 %v2178
    %v3336 = vunpack.c.l.b16 %v2179
    %v3337 = vunpack.c.h.b16 %v2179
    %v3338 = vunpack.c.l.b16 %v2180
    %v3339 = vunpack.c.h.b16 %v2180
    %v3340 = vunpack.c.l.b16 %v2181
    %v3341 = vunpack.c.h.b16 %v2181
    %v3342 = vunpack.c.l.b16 %v2182
    %v3343 = vunpack.c.h.b16 %v2182
    %v3344 = vunpack.c.l.b16 %v2183
    %v3345 = vunpack.c.h.b16 %v2183
    %v3346 = vunpack.c.l.b16 %v2184
    %v3347 = vunpack.c.h.b16 %v2184
    %v3348 = vunpack.c.l.b16 %v2185
    %v3349 = vunpack.c.h.b16 %v2185
    %v3350 = vunpack.c.l.b16 %v2186
    %v3351 = vunpack.c.h.b16 %v2186
    %v3352 = vunpack.c.l.b16 %v2187
    %v3353 = vunpack.c.h.b16 %v2187
    %v3354 = vunpack.c.l.b16 %v2188
    %v3355 = vunpack.c.h.b16 %v2188
    %v3356 = vunpack.c.l.b16 %v2189
    %v3357 = vunpack.c.h.b16 %v2189
    %v3358 = vunpack.c.l.b16 %v2190
    %v3359 = vunpack.c.h.b16 %v2190
    %v3360 = vunpack.c.l.b16 %v2191
    %v3361 = vunpack.c.h.b16 %v2191
    %v3362 = vunpack.c.l.b16 %v2192
    %v3363 = vunpack.c.h.b16 %v2192
    %v3364 = vunpack.c.l.b16 %v2193
    %v3365 = vunpack.c.h.b16 %v2193
    %v3366 = vunpack.c.l.b16 %v2194
    %v3367 = vunpack.c.h.b16 %v2194
    %v3368 = vunpack.c.l.b16 %v2195
    %v3369 = vunpack.c.h.b16 %v2195
    %v3370 = vunpack.c.l.b16 %v2196
    %v3371 = vunpack.c.h.b16 %v2196
    %v3372 = vunpack.c.l.b16 %v2197
    %v3373 = vunpack.c.h.b16 %v2197
    %v3374 = vunpack.c.l.b16 %v2198
    %v3375 = vunpack.c.h.b16 %v2198
    %v3376 = vunpack.c.l.b16 %v2199
    %v3377 = vunpack.c.h.b16 %v2199
    %v3378 = vunpack.c.l.b16 %v2200
    %v3379 = vunpack.c.h.b16 %v2200
    %v3380 = vunpack.c.l.b16 %v2201
    %v3381 = vunpack.c.h.b16 %v2201
    %v3382 = vunpack.c.l.b16 %v2202
    %v3383 = vunpack.c.h.b16 %v2202
    %v3384 = vunpack.c.l.b16 %v2203
    %v3385 = vunpack.c.h.b16 %v2203
    %v3386 = vunpack.c.l.b16 %v2204
    %v3387 = vunpack.c.h.b16 %v2204
    %v3388 = vunpack.c.l.b16 %v2205
    %v3389 = vunpack.c.h.b16 %v2205
    %v3390 = vunpack.c.l.b16 %v2206
    %v3391 = vunpack.c.h.b16 %v2206
    %v3392 = vunpack.c.l.b16 %v2207
    %v3393 = vunpack.c.h.b16 %v2207
    %v3394 = vunpack.c.l.b16 %v2208
    %v3395 = vunpack.c.h.b16 %v2208
    %v3396 = vunpack.c.l.b16 %v2209
    %v3397 = vunpack.c.h.b16 %v2209
    %v3398 = vunpack.c.l.b16 %v2210
    %v3399 = vunpack.c.h.b16 %v2210
    %v3400 = vunpack.c.l.b16 %v2211
    %v3401 = vunpack.c.h.b16 %v2211
    %v3402 = vunpack.c.l.b16 %v2212
    %v3403 = vunpack.c.h.b16 %v2212
    %v3404 = vunpack.c.l.b16 %v2213
    %v3405 = vunpack.c.h.b16 %v2213
    %v3406 = vunpack.c.l.b16 %v2214
    %v3407 = vunpack.c.h.b16 %v2214
    %v3408 = vunpack.c.l.b16 %v2215
    %v3409 = vunpack.c.h.b16 %v2215
    %v3410 = vunpack.c.l.b16 %v2216
    %v3411 = vunpack.c.h.b16 %v2216
    %v3412 = vunpack.c.l.b16 %v2217
    %v3413 = vunpack.c.h.b16 %v2217
    %v3414 = vunpack.c.l.b16 %v2218
    %v3415 = vunpack.c.h.b16 %v2218
    %v3416 = vunpack.c.l.b16 %v2219
    %v3417 = vunpack.c.h.b16 %v2219
    %v3418 = vunpack.c.l.b16 %v2220
    %v3419 = vunpack.c.h.b16 %v2220
    %v3420 = vunpack.c.l.b16 %v2221
    %v3421 = vunpack.c.h.b16 %v2221
    %v3422 = vunpack.c.l.b16 %v2222
    %v3423 = vunpack.c.h.b16 %v2222
    %v3424 = vunpack.c.l.b16 %v2223
    %v3425 = vunpack.c.h.b16 %v2223
    %v3426 = vunpack.c.l.b16 %v2224
    %v3427 = vunpack.c.h.b16 %v2224
    %v3428 = vunpack.c.l.b16 %v2225
    %v3429 = vunpack.c.h.b16 %v2225
    %v3430 = vunpack.c.l.b16 %v2226
    %v3431 = vunpack.c.h.b16 %v2226
    %v3432 = vunpack.c.l.b16 %v2227
    %v3433 = vunpack.c.h.b16 %v2227
    %v3434 = vunpack.c.l.b16 %v2228
    %v3435 = vunpack.c.h.b16 %v2228
    %v3436 = vunpack.c.l.b16 %v2229
    %v3437 = vunpack.c.h.b16 %v2229
    %v3438 = vunpack.c.l.b16 %v2230
    %v3439 = vunpack.c.h.b16 %v2230
    %v3440 = vunpack.c.l.b16 %v2231
    %v3441 = vunpack.c.h.b16 %v2231
    %v3442 = vunpack.c.l.b16 %v2232
    %v3443 = vunpack.c.h.b16 %v2232
    %v3444 = vunpack.c.l.b16 %v2233
    %v3445 = vunpack.c.h.b16 %v2233
    %v3446 = vunpack.c.l.b16 %v2234
    %v3447 = vunpack.c.h.b16 %v2234
    %v3448 = vunpack.c.l.b16 %v2235
    %v3449 = vunpack.c.h.b16 %v2235
    %v3450 = vunpack.c.l.b16 %v2236
    %v3451 = vunpack.c.h.b16 %v2236
    %v3452 = vunpack.c.l.b16 %v2237
    %v3453 = vunpack.c.h.b16 %v2237
    %v3454 = vunpack.c.l.b16 %v2238
    %v3455 = vunpack.c.h.b16 %v2238
    %v3456 = vunpack.c.l.b16 %v2239
    %v3457 = vunpack.c.h.b16 %v2239
    %v3458 = vunpack.c.l.b16 %v2240
    %v3459 = vunpack.c.h.b16 %v2240
    %v3460 = vunpack.c.l.b16 %v2241
    %v3461 = vunpack.c.h.b16 %v2241
    %v3462 = vunpack.c.l.b16 %v2242
    %v3463 = vunpack.c.h.b16 %v2242
    %v3464 = vunpack.c.l.b16 %v2243
    %v3465 = vunpack.c.h.b16 %v2243
    %v3466 = vunpack.c.l.b16 %v2244
    %v3467 = vunpack.c.h.b16 %v2244
    %v3468 = vunpack.c.l.b16 %v2245
    %v3469 = vunpack.c.h.b16 %v2245
    %v3470 = vunpack.c.l.b16 %v2246
    %v3471 = vunpack.c.h.b16 %v2246
    %v3472 = vunpack.c.l.b16 %v2247
    %v3473 = vunpack.c.h.b16 %v2247
    %v3474 = vunpack.c.l.b16 %v2248
    %v3475 = vunpack.c.h.b16 %v2248
    %v3476 = vunpack.c.l.b16 %v2249
    %v3477 = vunpack.c.h.b16 %v2249
    %v3478 = vunpack.c.l.b16 %v2250
    %v3479 = vunpack.c.h.b16 %v2250
    %v3480 = vunpack.c.l.b16 %v2251
    %v3481 = vunpack.c.h.b16 %v2251
    %v3482 = vunpack.c.l.b16 %v2252
    %v3483 = vunpack.c.h.b16 %v2252
    %v3484 = vunpack.c.l.b16 %v2253
    %v3485 = vunpack.c.h.b16 %v2253
    %v3486 = vunpack.c.l.b16 %v2254
    %v3487 = vunpack.c.h.b16 %v2254
    %v3488 = vunpack.c.l.b16 %v2255
    %v3489 = vunpack.c.h.b16 %v2255
    %v3490 = vunpack.c.l.b16 %v2256
    %v3491 = vunpack.c.h.b16 %v2256
    %v3492 = vunpack.c.l.b16 %v2257
    %v3493 = vunpack.c.h.b16 %v2257
    %v3494 = vunpack.c.l.b16 %v2258
    %v3495 = vunpack.c.h.b16 %v2258
    %v3496 = vunpack.c.l.b16 %v2259
    %v3497 = vunpack.c.h.b16 %v2259
    %v3498 = vunpack.c.l.b16 %v2260
    %v3499 = vunpack.c.h.b16 %v2260
    %v3500 = vunpack.c.l.b16 %v2261
    %v3501 = vunpack.c.h.b16 %v2261
    %v3502 = vunpack.c.l.b16 %v2262
    %v3503 = vunpack.c.h.b16 %v2262
    %v3504 = vunpack.c.l.b16 %v2263
    %v3505 = vunpack.c.h.b16 %v2263
    %v3506 = vunpack.c.l.b16 %v2264
    %v3507 = vunpack.c.h.b16 %v2264
    %v3508 = vunpack.c.l.b16 %v2265
    %v3509 = vunpack.c.h.b16 %v2265
    %v3510 = vunpack.c.l.b16 %v2266
    %v3511 = vunpack.c.h.b16 %v2266
    %v3512 = vunpack.c.l.b16 %v2267
    %v3513 = vunpack.c.h.b16 %v2267
    %v3514 = vunpack.c.l.b16 %v2268
    %v3515 = vunpack.c.h.b16 %v2268
    %v3516 = vunpack.c.l.b16 %v2269
    %v3517 = vunpack.c.h.b16 %v2269
    %v3518 = vunpack.c.l.b16 %v2270
    %v3519 = vunpack.c.h.b16 %v2270
    %v3520 = vunpack.c.l.b16 %v2271
    %v3521 = vunpack.c.h.b16 %v2271
    %v3522 = vunpack.c.l.b16 %v2272
    %v3523 = vunpack.c.h.b16 %v2272
    %v3524 = vunpack.c.l.b16 %v2273
    %v3525 = vunpack.c.h.b16 %v2273
    %v3526 = vunpack.c.l.b16 %v2274
    %v3527 = vunpack.c.h.b16 %v2274
    %v3528 = vunpack.c.l.b16 %v2275
    %v3529 = vunpack.c.h.b16 %v2275
    %v3530 = vunpack.c.l.b16 %v2276
    %v3531 = vunpack.c.h.b16 %v2276
    %v3532 = vunpack.c.l.b16 %v2277
    %v3533 = vunpack.c.h.b16 %v2277
    %v3534 = vunpack.c.l.b16 %v2278
    %v3535 = vunpack.c.h.b16 %v2278
    %v3536 = vunpack.c.l.b16 %v2279
    %v3537 = vunpack.c.h.b16 %v2279
    %v3538 = vunpack.c.l.b16 %v2280
    %v3539 = vunpack.c.h.b16 %v2280
    %v3540 = vunpack.c.l.b16 %v2281
    %v3541 = vunpack.c.h.b16 %v2281
    %v3542 = vunpack.c.l.b16 %v2282
    %v3543 = vunpack.c.h.b16 %v2282
    %v3544 = vunpack.c.l.b16 %v2283
    %v3545 = vunpack.c.h.b16 %v2283
    %v3546 = vunpack.c.l.b16 %v2284
    %v3547 = vunpack.c.h.b16 %v2284
    %v3548 = vunpack.c.l.b16 %v2285
    %v3549 = vunpack.c.h.b16 %v2285
    %v3550 = vunpack.c.l.b16 %v2286
    %v3551 = vunpack.c.h.b16 %v2286
    %v3552 = vunpack.c.l.b16 %v2287
    %v3553 = vunpack.c.h.b16 %v2287
    %v3554 = vunpack.c.l.b16 %v2288
    %v3555 = vunpack.c.h.b16 %v2288
    %v3556 = vunpack.c.l.b16 %v2289
    %v3557 = vunpack.c.h.b16 %v2289
    %v3558 = vunpack.c.l.b16 %v2290
    %v3559 = vunpack.c.h.b16 %v2290
    %v3560 = vunpack.c.l.b16 %v2291
    %v3561 = vunpack.c.h.b16 %v2291
    %v3562 = vunpack.c.l.b16 %v2292
    %v3563 = vunpack.c.h.b16 %v2292
    %v3564 = vunpack.c.l.b16 %v2293
    %v3565 = vunpack.c.h.b16 %v2293
    %v3566 = vunpack.c.l.b16 %v2294
    %v3567 = vunpack.c.h.b16 %v2294
    %v3568 = vunpack.c.l.b16 %v2295
    %v3569 = vunpack.c.h.b16 %v2295
    %v3570 = vunpack.c.l.b16 %v2296
    %v3571 = vunpack.c.h.b16 %v2296
    %v3572 = vunpack.c.l.b16 %v2297
    %v3573 = vunpack.c.h.b16 %v2297
    %v3574 = vunpack.c.l.b16 %v2298
    %v3575 = vunpack.c.h.b16 %v2298
    %v3576 = vunpack.c.l.b16 %v2299
    %v3577 = vunpack.c.h.b16 %v2299
    %v3578 = vunpack.c.l.b16 %v2300
    %v3579 = vunpack.c.h.b16 %v2300
    %v3580 = vunpack.c.l.b16 %v2301
    %v3581 = vunpack.c.h.b16 %v2301
    %v3582 = vunpack.c.l.b16 %v2302
    %v3583 = vunpack.c.h.b16 %v2302
    %v3584 = vunpack.c.l.b16 %v2303
    %v3585 = vunpack.c.h.b16 %v2303
    %v3586 = vunpack.c.l.b16 %v2304
    %v3587 = vunpack.c.h.b16 %v2304
    %v3588 = vunpack.c.l.b16 %v2305
    %v3589 = vunpack.c.h.b16 %v2305
    %v3590 = vunpack.c.l.b16 %v2306
    %v3591 = vunpack.c.h.b16 %v2306
    %v3592 = vunpack.c.l.b16 %v2307
    %v3593 = vunpack.c.h.b16 %v2307
    %v3594 = vunpack.c.l.b16 %v2308
    %v3595 = vunpack.c.h.b16 %v2308
    %v3596 = vunpack.c.l.b16 %v2309
    %v3597 = vunpack.c.h.b16 %v2309
    %v3598 = vunpack.c.l.b16 %v2310
    %v3599 = vunpack.c.h.b16 %v2310
    %v3600 = vunpack.c.l.b16 %v2311
    %v3601 = vunpack.c.h.b16 %v2311
    %v3602 = vunpack.c.l.b16 %v2312
    %v3603 = vunpack.c.h.b16 %v2312
    %v3604 = vunpack.c.l.b16 %v2313
    %v3605 = vunpack.c.h.b16 %v2313
    %v3606 = vunpack.c.l.b16 %v2314
    %v3607 = vunpack.c.h.b16 %v2314
    %v3608 = vunpack.c.l.b16 %v2315
    %v3609 = vunpack.c.h.b16 %v2315
    %v3610 = vunpack.c.l.b16 %v2316
    %v3611 = vunpack.c.h.b16 %v2316
    %v3612 = vunpack.c.l.b16 %v2317
    %v3613 = vunpack.c.h.b16 %v2317
    %v3614 = vunpack.c.l.b16 %v2318
    %v3615 = vunpack.c.h.b16 %v2318
    %v3616 = vunpack.c.l.b16 %v2319
    %v3617 = vunpack.c.h.b16 %v2319
    %v3618 = vunpack.c.l.b16 %v2320
    %v3619 = vunpack.c.h.b16 %v2320
    %v3620 = vunpack.c.l.b16 %v2321
    %v3621 = vunpack.c.h.b16 %v2321
    %v3622 = vunpack.c.l.b16 %v2322
    %v3623 = vunpack.c.h.b16 %v2322
    %v3624 = vunpack.c.l.b16 %v2323
    %v3625 = vunpack.c.h.b16 %v2323
    %v3626 = vunpack.c.l.b16 %v2324
    %v3627 = vunpack.c.h.b16 %v2324
    %v3628 = vunpack.c.l.b16 %v2325
    %v3629 = vunpack.c.h.b16 %v2325
    %v3630 = vunpack.c.l.b16 %v2326
    %v3631 = vunpack.c.h.b16 %v2326
    %v3632 = vunpack.c.l.b16 %v2327
    %v3633 = vunpack.c.h.b16 %v2327
    %v3634 = vunpack.c.l.b16 %v2328
    %v3635 = vunpack.c.h.b16 %v2328
    %v3636 = vunpack.c.l.b16 %v2329
    %v3637 = vunpack.c.h.b16 %v2329
    %v3638 = vunpack.c.l.b16 %v2330
    %v3639 = vunpack.c.h.b16 %v2330
    %v3640 = vunpack.c.l.b16 %v2331
    %v3641 = vunpack.c.h.b16 %v2331
    %v3642 = vunpack.c.l.b16 %v2332
    %v3643 = vunpack.c.h.b16 %v2332
    %v3644 = vunpack.c.l.b16 %v2333
    %v3645 = vunpack.c.h.b16 %v2333
    %v3646 = vunpack.c.l.b16 %v2334
    %v3647 = vunpack.c.h.b16 %v2334
    %v3648 = vunpack.c.l.b16 %v2335
    %v3649 = vunpack.c.h.b16 %v2335
    %v3650 = vunpack.c.l.b16 %v2336
    %v3651 = vunpack.c.h.b16 %v2336
    %v3652 = vunpack.c.l.b16 %v2337
    %v3653 = vunpack.c.h.b16 %v2337
    %v3654 = vunpack.c.l.b16 %v2338
    %v3655 = vunpack.c.h.b16 %v2338
    %v3656 = vunpack.c.l.b16 %v2339
    %v3657 = vunpack.c.h.b16 %v2339
    %v3658 = vunpack.c.l.b16 %v2340
    %v3659 = vunpack.c.h.b16 %v2340
    %v3660 = vunpack.c.l.b16 %v2341
    %v3661 = vunpack.c.h.b16 %v2341
    %v3662 = vunpack.c.l.b16 %v2342
    %v3663 = vunpack.c.h.b16 %v2342
    %v3664 = vunpack.c.l.b16 %v2343
    %v3665 = vunpack.c.h.b16 %v2343
    %v3666 = vunpack.c.l.b16 %v2344
    %v3667 = vunpack.c.h.b16 %v2344
    %v3668 = vunpack.c.l.b16 %v2345
    %v3669 = vunpack.c.h.b16 %v2345
    %v3670 = vunpack.c.l.b16 %v2346
    %v3671 = vunpack.c.h.b16 %v2346
    %v3672 = vunpack.c.l.b16 %v2347
    %v3673 = vunpack.c.h.b16 %v2347
    %v3674 = vunpack.c.l.b16 %v2348
    %v3675 = vunpack.c.h.b16 %v2348
    %v3676 = vunpack.c.l.b16 %v2349
    %v3677 = vunpack.c.h.b16 %v2349
    %v3678 = vunpack.c.l.b16 %v2350
    %v3679 = vunpack.c.h.b16 %v2350
    %v3680 = vunpack.c.l.b16 %v2351
    %v3681 = vunpack.c.h.b16 %v2351
    %v3682 = vunpack.c.l.b16 %v2352
    %v3683 = vunpack.c.h.b16 %v2352
    %v3684 = vunpack.c.l.b16 %v2353
    %v3685 = vunpack.c.h.b16 %v2353
    %v3686 = vunpack.c.l.b16 %v2354
    %v3687 = vunpack.c.h.b16 %v2354
    %v3688 = vunpack.c.l.b16 %v2355
    %v3689 = vunpack.c.h.b16 %v2355
    %v3690 = vunpack.c.l.b16 %v2356
    %v3691 = vunpack.c.h.b16 %v2356
    %v3692 = vunpack.c.l.b16 %v2357
    %v3693 = vunpack.c.h.b16 %v2357
    %v3694 = vunpack.c.l.b16 %v2358
    %v3695 = vunpack.c.h.b16 %v2358
    %v3696 = vunpack.c.l.b16 %v2359
    %v3697 = vunpack.c.h.b16 %v2359
    %v3698 = vunpack.c.l.b16 %v2360
    %v3699 = vunpack.c.h.b16 %v2360
    %v3700 = vunpack.c.l.b16 %v2361
    %v3701 = vunpack.c.h.b16 %v2361
    %v3702 = vunpack.c.l.b16 %v2362
    %v3703 = vunpack.c.h.b16 %v2362
    %v3704 = vunpack.c.l.b16 %v2363
    %v3705 = vunpack.c.h.b16 %v2363
    %v3706 = vunpack.c.l.b16 %v2364
    %v3707 = vunpack.c.h.b16 %v2364
    %v3708 = vunpack.c.l.b16 %v2365
    %v3709 = vunpack.c.h.b16 %v2365
    %v3710 = vunpack.c.l.b16 %v2366
    %v3711 = vunpack.c.h.b16 %v2366
    %v3712 = vunpack.c.l.b16 %v2367
    %v3713 = vunpack.c.h.b16 %v2367
    %v3714 = vunpack.c.l.b16 %v2368
    %v3715 = vunpack.c.h.b16 %v2368
    %v3716 = vunpack.c.l.b16 %v2369
    %v3717 = vunpack.c.h.b16 %v2369
    %v3718 = vunpack.c.l.b16 %v2370
    %v3719 = vunpack.c.h.b16 %v2370
    %v3720 = vunpack.c.l.b16 %v2371
    %v3721 = vunpack.c.h.b16 %v2371
    %v3722 = vunpack.c.l.b16 %v2372
    %v3723 = vunpack.c.h.b16 %v2372
    %v3724 = vunpack.c.l.b16 %v2373
    %v3725 = vunpack.c.h.b16 %v2373
    %v3726 = vunpack.c.l.b16 %v2374
    %v3727 = vunpack.c.h.b16 %v2374
    %v3728 = vunpack.c.l.b16 %v2375
    %v3729 = vunpack.c.h.b16 %v2375
    %v3730 = vunpack.c.l.b16 %v2376
    %v3731 = vunpack.c.h.b16 %v2376
    %v3732 = vunpack.c.l.b16 %v2377
    %v3733 = vunpack.c.h.b16 %v2377
    %v3734 = vunpack.c.l.b16 %v2378
    %v3735 = vunpack.c.h.b16 %v2378
    %v3736 = vunpack.c.l.b16 %v2379
    %v3737 = vunpack.c.h.b16 %v2379
    %v3738 = vunpack.c.l.b16 %v2380
    %v3739 = vunpack.c.h.b16 %v2380
    %v3740 = vunpack.c.l.b16 %v2381
    %v3741 = vunpack.c.h.b16 %v2381
    %v3742 = vunpack.c.l.b16 %v2382
    %v3743 = vunpack.c.h.b16 %v2382
    %v3744 = vunpack.c.l.b16 %v2383
    %v3745 = vunpack.c.h.b16 %v2383
    %v3746 = vunpack.c.l.b16 %v2384
    %v3747 = vunpack.c.h.b16 %v2384
    %v3748 = vunpack.c.l.b16 %v2385
    %v3749 = vunpack.c.h.b16 %v2385
    %v3750 = vunpack.c.l.b16 %v2386
    %v3751 = vunpack.c.h.b16 %v2386
    %v3752 = vunpack.c.l.b16 %v2387
    %v3753 = vunpack.c.h.b16 %v2387
    %v3754 = vunpack.c.l.b16 %v2388
    %v3755 = vunpack.c.h.b16 %v2388
    %v3756 = vunpack.c.l.b16 %v2389
    %v3757 = vunpack.c.h.b16 %v2389
    %v3758 = vunpack.c.l.b16 %v2390
    %v3759 = vunpack.c.h.b16 %v2390
    %v3760 = vunpack.c.l.b16 %v2391
    %v3761 = vunpack.c.h.b16 %v2391
    %v3762 = vunpack.c.l.b16 %v2392
    %v3763 = vunpack.c.h.b16 %v2392
    %v3764 = vunpack.c.l.b16 %v2393
    %v3765 = vunpack.c.h.b16 %v2393
    %v3766 = vunpack.c.l.b16 %v2394
    %v3767 = vunpack.c.h.b16 %v2394
    %v3768 = vunpack.c.l.b16 %v2395
    %v3769 = vunpack.c.h.b16 %v2395
    %v3770 = vunpack.c.l.b16 %v2396
    %v3771 = vunpack.c.h.b16 %v2396
    %v3772 = vunpack.c.l.b16 %v2397
    %v3773 = vunpack.c.h.b16 %v2397
    %v3774 = vunpack.c.l.b16 %v2398
    %v3775 = vunpack.c.h.b16 %v2398
    %v3776 = vunpack.c.l.b16 %v2399
    %v3777 = vunpack.c.h.b16 %v2399
    %v3778 = vunpack.c.l.b16 %v2400
    %v3779 = vunpack.c.h.b16 %v2400
    %v3780 = vunpack.c.l.b16 %v2401
    %v3781 = vunpack.c.h.b16 %v2401
    %v3782 = vunpack.c.l.b16 %v2402
    %v3783 = vunpack.c.h.b16 %v2402
    %v3784 = vunpack.c.l.b16 %v2403
    %v3785 = vunpack.c.h.b16 %v2403
    %v3786 = vunpack.c.l.b16 %v2404
    %v3787 = vunpack.c.h.b16 %v2404
    %v3788 = vunpack.c.l.b16 %v2405
    %v3789 = vunpack.c.h.b16 %v2405
    %v3790 = vunpack.c.l.b16 %v2406
    %v3791 = vunpack.c.h.b16 %v2406
    %v3792 = vunpack.c.l.b16 %v2407
    %v3793 = vunpack.c.h.b16 %v2407
    %v3794 = vunpack.c.l.b16 %v2408
    %v3795 = vunpack.c.h.b16 %v2408
    %v3796 = vunpack.c.l.b16 %v2409
    %v3797 = vunpack.c.h.b16 %v2409
    %v3798 = vunpack.c.l.b16 %v2410
    %v3799 = vunpack.c.h.b16 %v2410
    %v3800 = vunpack.c.l.b16 %v2411
    %v3801 = vunpack.c.h.b16 %v2411
    %v3802 = vunpack.c.l.b16 %v2412
    %v3803 = vunpack.c.h.b16 %v2412
    %v3804 = vunpack.c.l.b16 %v2413
    %v3805 = vunpack.c.h.b16 %v2413
    %v3806 = vunpack.c.l.b16 %v2414
    %v3807 = vunpack.c.h.b16 %v2414
    %v3808 = vunpack.c.l.b16 %v2415
    %v3809 = vunpack.c.h.b16 %v2415
    %v3810 = vunpack.c.l.b16 %v2416
    %v3811 = vunpack.c.h.b16 %v2416
    %v3812 = vunpack.c.l.b16 %v2417
    %v3813 = vunpack.c.h.b16 %v2417
    %v3814 = vunpack.c.l.b16 %v2418
    %v3815 = vunpack.c.h.b16 %v2418
    %v3816 = vunpack.c.l.b16 %v2419
    %v3817 = vunpack.c.h.b16 %v2419
    %v3818 = vunpack.c.l.b16 %v2420
    %v3819 = vunpack.c.h.b16 %v2420
    %v3820 = vunpack.c.l.b16 %v2421
    %v3821 = vunpack.c.h.b16 %v2421
    %v3822 = vunpack.c.l.b16 %v2422
    %v3823 = vunpack.c.h.b16 %v2422
    %v3824 = vunpack.c.l.b16 %v2423
    %v3825 = vunpack.c.h.b16 %v2423
    %v3826 = vunpack.c.l.b16 %v2424
    %v3827 = vunpack.c.h.b16 %v2424
    %v3828 = vunpack.c.l.b16 %v2425
    %v3829 = vunpack.c.h.b16 %v2425
    %v3830 = vunpack.c.l.b16 %v2426
    %v3831 = vunpack.c.h.b16 %v2426
    %v3832 = vunpack.c.l.b16 %v2427
    %v3833 = vunpack.c.h.b16 %v2427
    %v3834 = vunpack.c.l.b16 %v2428
    %v3835 = vunpack.c.h.b16 %v2428
    %v3836 = vunpack.c.l.b16 %v2429
    %v3837 = vunpack.c.h.b16 %v2429
    %v3838 = vunpack.c.l.b16 %v2430
    %v3839 = vunpack.c.h.b16 %v2430
    %v3840 = vunpack.c.l.b16 %v2431
    %v3841 = vunpack.c.h.b16 %v2431
    %v3842 = vunpack.c.l.b16 %v2432
    %v3843 = vunpack.c.h.b16 %v2432
    %v3844 = vunpack.c.l.b16 %v2433
    %v3845 = vunpack.c.h.b16 %v2433
    %v3846 = vunpack.c.l.b16 %v2434
    %v3847 = vunpack.c.h.b16 %v2434
    %v3848 = vunpack.c.l.b16 %v2435
    %v3849 = vunpack.c.h.b16 %v2435
    %v3850 = vunpack.c.l.b16 %v2436
    %v3851 = vunpack.c.h.b16 %v2436
    %v3852 = vunpack.c.l.b16 %v2437
    %v3853 = vunpack.c.h.b16 %v2437
    %v3854 = vunpack.c.l.b16 %v2438
    %v3855 = vunpack.c.h.b16 %v2438
    %v3856 = vunpack.c.l.b16 %v2439
    %v3857 = vunpack.c.h.b16 %v2439
    %v3858 = vunpack.c.l.b16 %v2440
    %v3859 = vunpack.c.h.b16 %v2440
    %v3860 = vunpack.c.l.b16 %v2441
    %v3861 = vunpack.c.h.b16 %v2441
    %v3862 = vunpack.c.l.b16 %v2442
    %v3863 = vunpack.c.h.b16 %v2442
    %v3864 = vunpack.c.l.b16 %v2443
    %v3865 = vunpack.c.h.b16 %v2443
    %v3866 = vunpack.c.l.b16 %v2444
    %v3867 = vunpack.c.h.b16 %v2444
    %v3868 = vunpack.c.l.b16 %v2445
    %v3869 = vunpack.c.h.b16 %v2445
    %v3870 = vunpack.c.l.b16 %v2446
    %v3871 = vunpack.c.h.b16 %v2446
    %v3872 = vunpack.c.l.b16 %v2447
    %v3873 = vunpack.c.h.b16 %v2447
    %v3874 = vunpack.c.l.b16 %v2448
    %v3875 = vunpack.c.h.b16 %v2448
    %v3876 = vunpack.c.l.b16 %v2449
    %v3877 = vunpack.c.h.b16 %v2449
    %v3878 = vunpack.c.l.b16 %v2450
    %v3879 = vunpack.c.h.b16 %v2450
    %v3880 = vunpack.c.l.b16 %v2451
    %v3881 = vunpack.c.h.b16 %v2451
    %v3882 = vunpack.c.l.b16 %v2452
    %v3883 = vunpack.c.h.b16 %v2452
    %v3884 = vunpack.c.l.b16 %v2453
    %v3885 = vunpack.c.h.b16 %v2453
    %v3886 = vunpack.c.l.b16 %v2454
    %v3887 = vunpack.c.h.b16 %v2454
    %v3888 = vunpack.c.l.b16 %v2455
    %v3889 = vunpack.c.h.b16 %v2455
    %v3890 = vunpack.c.l.b16 %v2456
    %v3891 = vunpack.c.h.b16 %v2456
    %v3892 = vunpack.c.l.b16 %v2457
    %v3893 = vunpack.c.h.b16 %v2457
    %v3894 = vunpack.c.l.b16 %v2458
    %v3895 = vunpack.c.h.b16 %v2458
    %v3896 = vunpack.c.l.b16 %v2459
    %v3897 = vunpack.c.h.b16 %v2459
    %v3898 = vunpack.c.l.b16 %v2460
    %v3899 = vunpack.c.h.b16 %v2460
    %v3900 = vunpack.c.l.b16 %v2461
    %v3901 = vunpack.c.h.b16 %v2461
    %v3902 = vunpack.c.l.b16 %v2462
    %v3903 = vunpack.c.h.b16 %v2462
    %v3904 = vunpack.c.l.b16 %v2463
    %v3905 = vunpack.c.h.b16 %v2463
    %v3906 = vunpack.c.l.b16 %v2464
    %v3907 = vunpack.c.h.b16 %v2464
    %v3908 = vunpack.c.l.b16 %v2465
    %v3909 = vunpack.c.h.b16 %v2465
    %v3910 = vunpack.c.l.b16 %v2466
    %v3911 = vunpack.c.h.b16 %v2466
    %v3912 = vunpack.c.l.b16 %v2467
    %v3913 = vunpack.c.h.b16 %v2467
    %v3914 = vunpack.c.l.b16 %v2468
    %v3915 = vunpack.c.h.b16 %v2468
    %v3916 = vunpack.c.l.b16 %v2469
    %v3917 = vunpack.c.h.b16 %v2469
    %v3918 = vunpack.c.l.b16 %v2470
    %v3919 = vunpack.c.h.b16 %v2470
    %v3920 = vunpack.c.l.b16 %v2471
    %v3921 = vunpack.c.h.b16 %v2471
    %v3922 = vunpack.c.l.b16 %v2472
    %v3923 = vunpack.c.h.b16 %v2472
    %v3924 = vunpack.c.l.b16 %v2473
    %v3925 = vunpack.c.h.b16 %v2473
    %v3926 = vunpack.c.l.b16 %v2474
    %v3927 = vunpack.c.h.b16 %v2474
    %v3928 = vunpack.c.l.b16 %v2475
    %v3929 = vunpack.c.h.b16 %v2475
    %v3930 = vunpack.c.l.b16 %v2476
    %v3931 = vunpack.c.h.b16 %v2476
    %v3932 = vunpack.c.l.b16 %v2477
    %v3933 = vunpack.c.h.b16 %v2477
    %v3934 = vunpack.c.l.b16 %v2478
    %v3935 = vunpack.c.h.b16 %v2478
    %v3936 = vunpack.c.l.b16 %v2479
    %v3937 = vunpack.c.h.b16 %v2479
    %v3938 = vunpack.c.l.b16 %v2480
    %v3939 = vunpack.c.h.b16 %v2480
    %v3940 = vunpack.c.l.b16 %v2481
    %v3941 = vunpack.c.h.b16 %v2481
    %v3942 = vunpack.c.l.b16 %v2482
    %v3943 = vunpack.c.h.b16 %v2482
    %v3944 = vunpack.c.l.b16 %v2483
    %v3945 = vunpack.c.h.b16 %v2483
    %v3946 = vunpack.c.l.b16 %v2484
    %v3947 = vunpack.c.h.b16 %v2484
    %v3948 = vunpack.c.l.b16 %v2485
    %v3949 = vunpack.c.h.b16 %v2485
    %v3950 = vunpack.c.l.b16 %v2486
    %v3951 = vunpack.c.h.b16 %v2486
    %v3952 = vunpack.c.l.b16 %v2487
    %v3953 = vunpack.c.h.b16 %v2487
    %v3954 = vunpack.c.l.b16 %v2488
    %v3955 = vunpack.c.h.b16 %v2488
    %v3956 = vunpack.c.l.b16 %v2489
    %v3957 = vunpack.c.h.b16 %v2489
    %v3958 = vunpack.c.l.b16 %v2490
    %v3959 = vunpack.c.h.b16 %v2490
    %v3960 = vunpack.c.l.b16 %v2491
    %v3961 = vunpack.c.h.b16 %v2491
    %v3962 = vunpack.c.l.b16 %v2492
    %v3963 = vunpack.c.h.b16 %v2492
    %v3964 = vunpack.c.l.b16 %v2493
    %v3965 = vunpack.c.h.b16 %v2493
    %v3966 = vunpack.c.l.b16 %v2494
    %v3967 = vunpack.c.h.b16 %v2494
    %v3968 = vunpack.c.l.b16 %v2495
    %v3969 = vunpack.c.h.b16 %v2495
    %v3970 = vunpack.c.l.b16 %v2496
    %v3971 = vunpack.c.h.b16 %v2496
    %v3972 = vunpack.c.l.b16 %v2497
    %v3973 = vunpack.c.h.b16 %v2497
    %v3974 = vunpack.c.l.b16 %v2498
    %v3975 = vunpack.c.h.b16 %v2498
    %v3976 = vunpack.c.l.b16 %v2499
    %v3977 = vunpack.c.h.b16 %v2499
    %v3978 = vunpack.c.l.b16 %v2500
    %v3979 = vunpack.c.h.b16 %v2500
    %v3980 = vunpack.c.l.b16 %v2501
    %v3981 = vunpack.c.h.b16 %v2501
    %v3982 = vunpack.c.l.b16 %v2502
    %v3983 = vunpack.c.h.b16 %v2502
    %v3984 = vunpack.c.l.b16 %v2503
    %v3985 = vunpack.c.h.b16 %v2503
    %v3986 = vunpack.c.l.b16 %v2504
    %v3987 = vunpack.c.h.b16 %v2504
    %v3988 = vunpack.c.l.b16 %v2505
    %v3989 = vunpack.c.h.b16 %v2505
    %v3990 = vunpack.c.l.b16 %v2506
    %v3991 = vunpack.c.h.b16 %v2506
    %v3992 = vunpack.c.l.b16 %v2507
    %v3993 = vunpack.c.h.b16 %v2507
    %v3994 = vunpack.c.l.b16 %v2508
    %v3995 = vunpack.c.h.b16 %v2508
    %v3996 = vunpack.c.l.b16 %v2509
    %v3997 = vunpack.c.h.b16 %v2509
    %v3998 = vunpack.c.l.b16 %v2510
    %v3999 = vunpack.c.h.b16 %v2510
    %v4000 = vunpack.c.l.b16 %v2511
    %v4001 = vunpack.c.h.b16 %v2511
    %v4002 = vunpack.c.l.b16 %v2512
    %v4003 = vunpack.c.h.b16 %v2512
    %v4004 = vunpack.c.l.b16 %v2513
    %v4005 = vunpack.c.h.b16 %v2513
    %v4006 = vunpack.c.l.b16 %v2514
    %v4007 = vunpack.c.h.b16 %v2514
    %v4008 = vunpack.c.l.b16 %v2515
    %v4009 = vunpack.c.h.b16 %v2515
    %v4010 = vunpack.c.l.b16 %v2516
    %v4011 = vunpack.c.h.b16 %v2516
    %v4012 = vunpack.c.l.b16 %v2517
    %v4013 = vunpack.c.h.b16 %v2517
    %v4014 = vunpack.c.l.b16 %v2518
    %v4015 = vunpack.c.h.b16 %v2518
    %v4016 = vunpack.c.l.b16 %v2519
    %v4017 = vunpack.c.h.b16 %v2519
    %v4018 = vunpack.c.l.b16 %v2520
    %v4019 = vunpack.c.h.b16 %v2520
    %v4020 = vunpack.c.l.b16 %v2521
    %v4021 = vunpack.c.h.b16 %v2521
    %v4022 = vunpack.c.l.b16 %v2522
    %v4023 = vunpack.c.h.b16 %v2522
    %v4024 = vunpack.c.l.b16 %v2523
    %v4025 = vunpack.c.h.b16 %v2523
    %v4026 = vunpack.c.l.b16 %v2524
    %v4027 = vunpack.c.h.b16 %v2524
    %v4028 = vunpack.c.l.b16 %v2525
    %v4029 = vunpack.c.h.b16 %v2525
    %v4030 = vunpack.c.l.b16 %v2526
    %v4031 = vunpack.c.h.b16 %v2526
    %v4032 = vunpack.c.l.b16 %v2527
    %v4033 = vunpack.c.h.b16 %v2527
    %v4034 = vunpack.c.l.b16 %v2528
    %v4035 = vunpack.c.h.b16 %v2528
    %v4036 = vunpack.c.l.b16 %v2529
    %v4037 = vunpack.c.h.b16 %v2529
    %v4038 = vunpack.c.l.b16 %v2530
    %v4039 = vunpack.c.h.b16 %v2530
    %v4040 = vunpack.c.l.b16 %v2531
    %v4041 = vunpack.c.h.b16 %v2531
    %v4042 = vunpack.c.l.b16 %v2532
    %v4043 = vunpack.c.h.b16 %v2532
    %v4044 = vunpack.c.l.b16 %v2533
    %v4045 = vunpack.c.h.b16 %v2533
    %v4046 = vunpack.c.l.b16 %v2534
    %v4047 = vunpack.c.h.b16 %v2534
    %v4048 = vunpack.c.l.b16 %v2535
    %v4049 = vunpack.c.h.b16 %v2535
    %v4050 = vunpack.c.l.b16 %v2536
    %v4051 = vunpack.c.h.b16 %v2536
    %v4052 = vunpack.c.l.b16 %v2537
    %v4053 = vunpack.c.h.b16 %v2537
    %v4054 = vunpack.c.l.b16 %v2538
    %v4055 = vunpack.c.h.b16 %v2538
    %v4056 = vunpack.c.l.b16 %v2539
    %v4057 = vunpack.c.h.b16 %v2539
    %v4058 = vunpack.c.l.b16 %v2540
    %v4059 = vunpack.c.h.b16 %v2540
    %v4060 = vunpack.c.l.b16 %v2541
    %v4061 = vunpack.c.h.b16 %v2541
    %v4062 = vunpack.c.l.b16 %v2542
    %v4063 = vunpack.c.h.b16 %v2542
    %v4064 = vunpack.c.l.b16 %v2543
    %v4065 = vunpack.c.h.b16 %v2543
    %v4066 = vunpack.c.l.b16 %v2544
    %v4067 = vunpack.c.h.b16 %v2544
    %v4068 = vunpack.c.l.b16 %v2545
    %v4069 = vunpack.c.h.b16 %v2545
    %v4070 = vunpack.c.l.b16 %v2546
    %v4071 = vunpack.c.h.b16 %v2546
    %v4072 = vunpack.c.l.b16 %v2547
    %v4073 = vunpack.c.h.b16 %v2547
    %v4074 = vunpack.c.l.b16 %v2548
    %v4075 = vunpack.c.h.b16 %v2548
    %v4076 = vunpack.c.l.b16 %v2549
    %v4077 = vunpack.c.h.b16 %v2549
    %v4078 = vunpack.c.l.b16 %v2550
    %v4079 = vunpack.c.h.b16 %v2550
    %v4080 = vunpack.c.l.b16 %v2551
    %v4081 = vunpack.c.h.b16 %v2551
    %v4082 = vunpack.c.l.b16 %v2552
    %v4083 = vunpack.c.h.b16 %v2552
    %v4084 = vunpack.c.l.b16 %v2553
    %v4085 = vunpack.c.h.b16 %v2553
    %v4086 = vunpack.c.l.b16 %v2554
    %v4087 = vunpack.c.h.b16 %v2554
    %v4088 = vunpack.c.l.b16 %v2555
    %v4089 = vunpack.c.h.b16 %v2555
    %v4090 = vunpack.c.l.b16 %v2556
    %v4091 = vunpack.c.h.b16 %v2556
    %v4092 = vunpack.c.l.b16 %v2557
    %v4093 = vunpack.c.h.b16 %v2557
    %v4094 = vunpack.c.l.b16 %v2558
    %v4095 = vunpack.c.h.b16 %v2558
    %v4096 = vunpack.c.l.b16 %v2559
    %v4097 = vunpack.c.h.b16 %v2559
    %v4098 = vunpack.c.l.b16 %v2560
    %v4099 = vunpack.c.h.b16 %v2560
    %v4100 = vunpack.c.l.b16 %v2561
    %v4101 = vunpack.c.h.b16 %v2561
    %v4102 = vunpack.c.l.b16 %v2562
    %v4103 = vunpack.c.h.b16 %v2562
    %v4104 = vunpack.c.l.b16 %v2563
    %v4105 = vunpack.c.h.b16 %v2563
    %v4106 = vunpack.c.l.b16 %v2564
    %v4107 = vunpack.c.h.b16 %v2564
    %v4108 = vunpack.c.l.b16 %v2565
    %v4109 = vunpack.c.h.b16 %v2565
    %v4110 = vunpack.c.l.b16 %v2566
    %v4111 = vunpack.c.h.b16 %v2566
    %v4112 = vunpack.c.l.b16 %v2567
    %v4113 = vunpack.c.h.b16 %v2567
    %v4114 = vunpack.c.l.b16 %v2568
    %v4115 = vunpack.c.h.b16 %v2568
    %v4116 = vunpack.c.l.b16 %v2569
    %v4117 = vunpack.c.h.b16 %v2569
    %v4118 = vunpack.c.l.b16 %v2570
    %v4119 = vunpack.c.h.b16 %v2570
    %v4120 = vunpack.c.l.b16 %v2571
    %v4121 = vunpack.c.h.b16 %v2571
    %v4122 = vunpack.c.l.b16 %v2572
    %v4123 = vunpack.c.h.b16 %v2572
    %v4124 = vunpack.c.l.b16 %v2573
    %v4125 = vunpack.c.h.b16 %v2573
    %v4126 = vunpack.c.l.b16 %v2574
    %v4127 = vunpack.c.h.b16 %v2574
    %v4128 = vunpack.c.l.b16 %v2575
    %v4129 = vunpack.c.h.b16 %v2575
    %v4130 = vunpack.c.l.b16 %v2576
    %v4131 = vunpack.c.h.b16 %v2576
    %v4132 = vunpack.c.l.b16 %v2577
    %v4133 = vunpack.c.h.b16 %v2577
    %v4134 = vunpack.c.l.b16 %v2578
    %v4135 = vunpack.c.h.b16 %v2578
    %v4136 = vunpack.c.l.b16 %v2579
    %v4137 = vunpack.c.h.b16 %v2579
    %v4138 = vunpack.c.l.b16 %v2580
    %v4139 = vunpack.c.h.b16 %v2580
    %v4140 = vunpack.c.l.b16 %v2581
    %v4141 = vunpack.c.h.b16 %v2581
    %v4142 = vunpack.c.l.b16 %v2582
    %v4143 = vunpack.c.h.b16 %v2582
    %v4144 = vunpack.c.l.b16 %v2583
    %v4145 = vunpack.c.h.b16 %v2583
    %v4146 = vunpack.c.l.b16 %v2584
    %v4147 = vunpack.c.h.b16 %v2584
    %v4148 = vunpack.c.l.b16 %v2585
    %v4149 = vunpack.c.h.b16 %v2585
    %v4150 = vunpack.c.l.b16 %v2586
    %v4151 = vunpack.c.h.b16 %v2586
    %v4152 = vunpack.c.l.b16 %v2587
    %v4153 = vunpack.c.h.b16 %v2587
    %v4154 = vunpack.c.l.b16 %v2588
    %v4155 = vunpack.c.h.b16 %v2588
    %v4156 = vunpack.c.l.b16 %v2589
    %v4157 = vunpack.c.h.b16 %v2589
    %v4158 = vunpack.c.l.b16 %v2590
    %v4159 = vunpack.c.h.b16 %v2590
    %v4160 = vunpack.c.l.b16 %v2591
    %v4161 = vunpack.c.h.b16 %v2591
    %v4162 = vunpack.c.l.b16 %v2592
    %v4163 = vunpack.c.h.b16 %v2592
    %v4164 = vunpack.c.l.b16 %v2593
    %v4165 = vunpack.c.h.b16 %v2593
    %v4166 = vunpack.c.l.b16 %v2594
    %v4167 = vunpack.c.h.b16 %v2594
    %v4168 = vunpack.c.l.b16 %v2595
    %v4169 = vunpack.c.h.b16 %v2595
    %v4170 = vunpack.c.l.b16 %v2596
    %v4171 = vunpack.c.h.b16 %v2596
    %v4172 = vunpack.c.l.b16 %v2597
    %v4173 = vunpack.c.h.b16 %v2597
    %v4174 = vunpack.c.l.b16 %v2598
    %v4175 = vunpack.c.h.b16 %v2598
    %v4176 = vunpack.c.l.b16 %v2599
    %v4177 = vunpack.c.h.b16 %v2599
    %v4178 = vunpack.c.l.b16 %v2600
    %v4179 = vunpack.c.h.b16 %v2600
    %v4180 = vunpack.c.l.b16 %v2601
    %v4181 = vunpack.c.h.b16 %v2601
    %v4182 = vunpack.c.l.b16 %v2602
    %v4183 = vunpack.c.h.b16 %v2602
    %v4184 = vpack.c.b16 %v3168, %v3160
    %v4185 = vpack.c.b16 %v3169, %v3161
    %v4186 = vpack.c.b16 %v3170, %v3162
    %v4187 = vpack.c.b16 %v3171, %v3163
    %v4188 = vpack.c.b16 %v3172, %v3164
    %v4189 = vpack.c.b16 %v3173, %v3165
    %v4190 = vpack.c.b16 %v3174, %v3166
    %v4191 = vpack.c.b16 %v3175, %v3167
    %v4192 = vpack.c.b16 %v3184, %v3176
    %v4193 = vpack.c.b16 %v3185, %v3177
    %v4194 = vpack.c.b16 %v3186, %v3178
    %v4195 = vpack.c.b16 %v3187, %v3179
    %v4196 = vpack.c.b16 %v3188, %v3180
    %v4197 = vpack.c.b16 %v3189, %v3181
    %v4198 = vpack.c.b16 %v3190, %v3182
    %v4199 = vpack.c.b16 %v3191, %v3183
    %v4200 = vpack.c.b16 %v3200, %v3192
    %v4201 = vpack.c.b16 %v3201, %v3193
    %v4202 = vpack.c.b16 %v3202, %v3194
    %v4203 = vpack.c.b16 %v3203, %v3195
    %v4204 = vpack.c.b16 %v3204, %v3196
    %v4205 = vpack.c.b16 %v3205, %v3197
    %v4206 = vpack.c.b16 %v3206, %v3198
    %v4207 = vpack.c.b16 %v3207, %v3199
    %v4208 = vpack.c.b16 %v3216, %v3208
    %v4209 = vpack.c.b16 %v3217, %v3209
    %v4210 = vpack.c.b16 %v3218, %v3210
    %v4211 = vpack.c.b16 %v3219, %v3211
    %v4212 = vpack.c.b16 %v3220, %v3212
    %v4213 = vpack.c.b16 %v3221, %v3213
    %v4214 = vpack.c.b16 %v3222, %v3214
    %v4215 = vpack.c.b16 %v3223, %v3215
    %v4216 = vpack.c.b16 %v3232, %v3224
    %v4217 = vpack.c.b16 %v3233, %v3225
    %v4218 = vpack.c.b16 %v3234, %v3226
    %v4219 = vpack.c.b16 %v3235, %v3227
    %v4220 = vpack.c.b16 %v3236, %v3228
    %v4221 = vpack.c.b16 %v3237, %v3229
    %v4222 = vpack.c.b16 %v3238, %v3230
    %v4223 = vpack.c.b16 %v3239, %v3231
    %v4224 = vpack.c.b16 %v3248, %v3240
    %v4225 = vpack.c.b16 %v3249, %v3241
    %v4226 = vpack.c.b16 %v3250, %v3242
    %v4227 = vpack.c.b16 %v3251, %v3243
    %v4228 = vpack.c.b16 %v3252, %v3244
    %v4229 = vpack.c.b16 %v3253, %v3245
    %v4230 = vpack.c.b16 %v3254, %v3246
    %v4231 = vpack.c.b16 %v3255, %v3247
    %v4232 = vpack.c.b16 %v3264, %v3256
    %v4233 = vpack.c.b16 %v3265, %v3257
    %v4234 = vpack.c.b16 %v3266, %v3258
    %v4235 = vpack.c.b16 %v3267, %v3259
    %v4236 = vpack.c.b16 %v3268, %v3260
    %v4237 = vpack.c.b16 %v3269, %v3261
    %v4238 = vpack.c.b16 %v3270, %v3262
    %v4239 = vpack.c.b16 %v3271, %v3263
    %v4240 = vpack.c.b16 %v3280, %v3272
    %v4241 = vpack.c.b16 %v3281, %v3273
    %v4242 = vpack.c.b16 %v3282, %v3274
    %v4243 = vpack.c.b16 %v3283, %v3275
    %v4244 = vpack.c.b16 %v3284, %v3276
    %v4245 = vpack.c.b16 %v3285, %v3277
    %v4246 = vpack.c.b16 %v3286, %v3278
    %v4247 = vpack.c.b16 %v3287, %v3279
    %v4248 = vpack.c.b16 %v3296, %v3288
    %v4249 = vpack.c.b16 %v3297, %v3289
    %v4250 = vpack.c.b16 %v3298, %v3290
    %v4251 = vpack.c.b16 %v3299, %v3291
    %v4252 = vpack.c.b16 %v3300, %v3292
    %v4253 = vpack.c.b16 %v3301, %v3293
    %v4254 = vpack.c.b16 %v3302, %v3294
    %v4255 = vpack.c.b16 %v3303, %v3295
    %v4256 = vpack.c.b16 %v3312, %v3304
    %v4257 = vpack.c.b16 %v3313, %v3305
    %v4258 = vpack.c.b16 %v3314, %v3306
    %v4259 = vpack.c.b16 %v3315, %v3307
    %v4260 = vpack.c.b16 %v3316, %v3308
    %v4261 = vpack.c.b16 %v3317, %v3309
    %v4262 = vpack.c.b16 %v3318, %v3310
    %v4263 = vpack.c.b16 %v3319, %v3311
    %v4264 = vpack.c.b16 %v3328, %v3320
    %v4265 = vpack.c.b16 %v3329, %v3321
    %v4266 = vpack.c.b16 %v3330, %v3322
    %v4267 = vpack.c.b16 %v3331, %v3323
    %v4268 = vpack.c.b16 %v3332, %v3324
    %v4269 = vpack.c.b16 %v3333, %v3325
    %v4270 = vpack.c.b16 %v3334, %v3326
    %v4271 = vpack.c.b16 %v3335, %v3327
    %v4272 = vpack.c.b16 %v3344, %v3336
    %v4273 = vpack.c.b16 %v3345, %v3337
    %v4274 = vpack.c.b16 %v3346, %v3338
    %v4275 = vpack.c.b16 %v3347, %v3339
    %v4276 = vpack.c.b16 %v3348, %v3340
    %v4277 = vpack.c.b16 %v3349, %v3341
    %v4278 = vpack.c.b16 %v3350, %v3342
    %v4279 = vpack.c.b16 %v3351, %v3343
    %v4280 = vpack.c.b16 %v3360, %v3352
    %v4281 = vpack.c.b16 %v3361, %v3353
    %v4282 = vpack.c.b16 %v3362, %v3354
    %v4283 = vpack.c.b16 %v3363, %v3355
    %v4284 = vpack.c.b16 %v3364, %v3356
    %v4285 = vpack.c.b16 %v3365, %v3357
    %v4286 = vpack.c.b16 %v3366, %v3358
    %v4287 = vpack.c.b16 %v3367, %v3359
    %v4288 = vpack.c.b16 %v3376, %v3368
    %v4289 = vpack.c.b16 %v3377, %v3369
    %v4290 = vpack.c.b16 %v3378, %v3370
    %v4291 = vpack.c.b16 %v3379, %v3371
    %v4292 = vpack.c.b16 %v3380, %v3372
    %v4293 = vpack.c.b16 %v3381, %v3373
    %v4294 = vpack.c.b16 %v3382, %v3374
    %v4295 = vpack.c.b16 %v3383, %v3375
    %v4296 = vpack.c.b16 %v3392, %v3384
    %v4297 = vpack.c.b16 %v3393, %v3385
    %v4298 = vpack.c.b16 %v3394, %v3386
    %v4299 = vpack.c.b16 %v3395, %v3387
    %v4300 = vpack.c.b16 %v3396, %v3388
    %v4301 = vpack.c.b16 %v3397, %v3389
    %v4302 = vpack.c.b16 %v3398, %v3390
    %v4303 = vpack.c.b16 %v3399, %v3391
    %v4304 = vpack.c.b16 %v3408, %v3400
    %v4305 = vpack.c.b16 %v3409, %v3401
    %v4306 = vpack.c.b16 %v3410, %v3402
    %v4307 = vpack.c.b16 %v3411, %v3403
    %v4308 = vpack.c.b16 %v3412, %v3404
    %v4309 = vpack.c.b16 %v3413, %v3405
    %v4310 = vpack.c.b16 %v3414, %v3406
    %v4311 = vpack.c.b16 %v3415, %v3407
    %v4312 = vpack.c.b16 %v3424, %v3416
    %v4313 = vpack.c.b16 %v3425, %v3417
    %v4314 = vpack.c.b16 %v3426, %v3418
    %v4315 = vpack.c.b16 %v3427, %v3419
    %v4316 = vpack.c.b16 %v3428, %v3420
    %v4317 = vpack.c.b16 %v3429, %v3421
    %v4318 = vpack.c.b16 %v3430, %v3422
    %v4319 = vpack.c.b16 %v3431, %v3423
    %v4320 = vpack.c.b16 %v3440, %v3432
    %v4321 = vpack.c.b16 %v3441, %v3433
    %v4322 = vpack.c.b16 %v3442, %v3434
    %v4323 = vpack.c.b16 %v3443, %v3435
    %v4324 = vpack.c.b16 %v3444, %v3436
    %v4325 = vpack.c.b16 %v3445, %v3437
    %v4326 = vpack.c.b16 %v3446, %v3438
    %v4327 = vpack.c.b16 %v3447, %v3439
    %v4328 = vpack.c.b16 %v3456, %v3448
    %v4329 = vpack.c.b16 %v3457, %v3449
    %v4330 = vpack.c.b16 %v3458, %v3450
    %v4331 = vpack.c.b16 %v3459, %v3451
    %v4332 = vpack.c.b16 %v3460, %v3452
    %v4333 = vpack.c.b16 %v3461, %v3453
    %v4334 = vpack.c.b16 %v3462, %v3454
    %v4335 = vpack.c.b16 %v3463, %v3455
    %v4336 = vpack.c.b16 %v3472, %v3464
    %v4337 = vpack.c.b16 %v3473, %v3465
    %v4338 = vpack.c.b16 %v3474, %v3466
    %v4339 = vpack.c.b16 %v3475, %v3467
    %v4340 = vpack.c.b16 %v3476, %v3468
    %v4341 = vpack.c.b16 %v3477, %v3469
    %v4342 = vpack.c.b16 %v3478, %v3470
    %v4343 = vpack.c.b16 %v3479, %v3471
    %v4344 = vpack.c.b16 %v3488, %v3480
    %v4345 = vpack.c.b16 %v3489, %v3481
    %v4346 = vpack.c.b16 %v3490, %v3482
    %v4347 = vpack.c.b16 %v3491, %v3483
    %v4348 = vpack.c.b16 %v3492, %v3484
    %v4349 = vpack.c.b16 %v3493, %v3485
    %v4350 = vpack.c.b16 %v3494, %v3486
    %v4351 = vpack.c.b16 %v3495, %v3487
    %v4352 = vpack.c.b16 %v3504, %v3496
    %v4353 = vpack.c.b16 %v3505, %v3497
    %v4354 = vpack.c.b16 %v3506, %v3498
    %v4355 = vpack.c.b16 %v3507, %v3499
    %v4356 = vpack.c.b16 %v3508, %v3500
    %v4357 = vpack.c.b16 %v3509, %v3501
    %v4358 = vpack.c.b16 %v3510, %v3502
    %v4359 = vpack.c.b16 %v3511, %v3503
    %v4360 = vpack.c.b16 %v3520, %v3512
    %v4361 = vpack.c.b16 %v3521, %v3513
    %v4362 = vpack.c.b16 %v3522, %v3514
    %v4363 = vpack.c.b16 %v3523, %v3515
    %v4364 = vpack.c.b16 %v3524, %v3516
    %v4365 = vpack.c.b16 %v3525, %v3517
    %v4366 = vpack.c.b16 %v3526, %v3518
    %v4367 = vpack.c.b16 %v3527, %v3519
    %v4368 = vpack.c.b16 %v3536, %v3528
    %v4369 = vpack.c.b16 %v3537, %v3529
    %v4370 = vpack.c.b16 %v3538, %v3530
    %v4371 = vpack.c.b16 %v3539, %v3531
    %v4372 = vpack.c.b16 %v3540, %v3532
    %v4373 = vpack.c.b16 %v3541, %v3533
    %v4374 = vpack.c.b16 %v3542, %v3534
    %v4375 = vpack.c.b16 %v3543, %v3535
    %v4376 = vpack.c.b16 %v3552, %v3544
    %v4377 = vpack.c.b16 %v3553, %v3545
    %v4378 = vpack.c.b16 %v3554, %v3546
    %v4379 = vpack.c.b16 %v3555, %v3547
    %v4380 = vpack.c.b16 %v3556, %v3548
    %v4381 = vpack.c.b16 %v3557, %v3549
    %v4382 = vpack.c.b16 %v3558, %v3550
    %v4383 = vpack.c.b16 %v3559, %v3551
    %v4384 = vpack.c.b16 %v3568, %v3560
    %v4385 = vpack.c.b16 %v3569, %v3561
    %v4386 = vpack.c.b16 %v3570, %v3562
    %v4387 = vpack.c.b16 %v3571, %v3563
    %v4388 = vpack.c.b16 %v3572, %v3564
    %v4389 = vpack.c.b16 %v3573, %v3565
    %v4390 = vpack.c.b16 %v3574, %v3566
    %v4391 = vpack.c.b16 %v3575, %v3567
    %v4392 = vpack.c.b16 %v3584, %v3576
    %v4393 = vpack.c.b16 %v3585, %v3577
    %v4394 = vpack.c.b16 %v3586, %v3578
    %v4395 = vpack.c.b16 %v3587, %v3579
    %v4396 = vpack.c.b16 %v3588, %v3580
    %v4397 = vpack.c.b16 %v3589, %v3581
    %v4398 = vpack.c.b16 %v3590, %v3582
    %v4399 = vpack.c.b16 %v3591, %v3583
    %v4400 = vpack.c.b16 %v3600, %v3592
    %v4401 = vpack.c.b16 %v3601, %v3593
    %v4402 = vpack.c.b16 %v3602, %v3594
    %v4403 = vpack.c.b16 %v3603, %v3595
    %v4404 = vpack.c.b16 %v3604, %v3596
    %v4405 = vpack.c.b16 %v3605, %v3597
    %v4406 = vpack.c.b16 %v3606, %v3598
    %v4407 = vpack.c.b16 %v3607, %v3599
    %v4408 = vpack.c.b16 %v3616, %v3608
    %v4409 = vpack.c.b16 %v3617, %v3609
    %v4410 = vpack.c.b16 %v3618, %v3610
    %v4411 = vpack.c.b16 %v3619, %v3611
    %v4412 = vpack.c.b16 %v3620, %v3612
    %v4413 = vpack.c.b16 %v3621, %v3613
    %v4414 = vpack.c.b16 %v3622, %v3614
    %v4415 = vpack.c.b16 %v3623, %v3615
    %v4416 = vpack.c.b16 %v3632, %v3624
    %v4417 = vpack.c.b16 %v3633, %v3625
    %v4418 = vpack.c.b16 %v3634, %v3626
    %v4419 = vpack.c.b16 %v3635, %v3627
    %v4420 = vpack.c.b16 %v3636, %v3628
    %v4421 = vpack.c.b16 %v3637, %v3629
    %v4422 = vpack.c.b16 %v3638, %v3630
    %v4423 = vpack.c.b16 %v3639, %v3631
    %v4424 = vpack.c.b16 %v3648, %v3640
    %v4425 = vpack.c.b16 %v3649, %v3641
    %v4426 = vpack.c.b16 %v3650, %v3642
    %v4427 = vpack.c.b16 %v3651, %v3643
    %v4428 = vpack.c.b16 %v3652, %v3644
    %v4429 = vpack.c.b16 %v3653, %v3645
    %v4430 = vpack.c.b16 %v3654, %v3646
    %v4431 = vpack.c.b16 %v3655, %v3647
    %v4432 = vpack.c.b16 %v3664, %v3656
    %v4433 = vpack.c.b16 %v3665, %v3657
    %v4434 = vpack.c.b16 %v3666, %v3658
    %v4435 = vpack.c.b16 %v3667, %v3659
    %v4436 = vpack.c.b16 %v3668, %v3660
    %v4437 = vpack.c.b16 %v3669, %v3661
    %v4438 = vpack.c.b16 %v3670, %v3662
    %v4439 = vpack.c.b16 %v3671, %v3663
    %v4440 = vpack.c.b16 %v3680, %v3672
    %v4441 = vpack.c.b16 %v3681, %v3673
    %v4442 = vpack.c.b16 %v3682, %v3674
    %v4443 = vpack.c.b16 %v3683, %v3675
    %v4444 = vpack.c.b16 %v3684, %v3676
    %v4445 = vpack.c.b16 %v3685, %v3677
    %v4446 = vpack.c.b16 %v3686, %v3678
    %v4447 = vpack.c.b16 %v3687, %v3679
    %v4448 = vpack.c.b16 %v3696, %v3688
    %v4449 = vpack.c.b16 %v3697, %v3689
    %v4450 = vpack.c.b16 %v3698, %v3690
    %v4451 = vpack.c.b16 %v3699, %v3691
    %v4452 = vpack.c.b16 %v3700, %v3692
    %v4453 = vpack.c.b16 %v3701, %v3693
    %v4454 = vpack.c.b16 %v3702, %v3694
    %v4455 = vpack.c.b16 %v3703, %v3695
    %v4456 = vpack.c.b16 %v3712, %v3704
    %v4457 = vpack.c.b16 %v3713, %v3705
    %v4458 = vpack.c.b16 %v3714, %v3706
    %v4459 = vpack.c.b16 %v3715, %v3707
    %v4460 = vpack.c.b16 %v3716, %v3708
    %v4461 = vpack.c.b16 %v3717, %v3709
    %v4462 = vpack.c.b16 %v3718, %v3710
    %v4463 = vpack.c.b16 %v3719, %v3711
    %v4464 = vpack.c.b16 %v3728, %v3720
    %v4465 = vpack.c.b16 %v3729, %v3721
    %v4466 = vpack.c.b16 %v3730, %v3722
    %v4467 = vpack.c.b16 %v3731, %v3723
    %v4468 = vpack.c.b16 %v3732, %v3724
    %v4469 = vpack.c.b16 %v3733, %v3725
    %v4470 = vpack.c.b16 %v3734, %v3726
    %v4471 = vpack.c.b16 %v3735, %v3727
    %v4472 = vpack.c.b16 %v3744, %v3736
    %v4473 = vpack.c.b16 %v3745, %v3737
    %v4474 = vpack.c.b16 %v3746, %v3738
    %v4475 = vpack.c.b16 %v3747, %v3739
    %v4476 = vpack.c.b16 %v3748, %v3740
    %v4477 = vpack.c.b16 %v3749, %v3741
    %v4478 = vpack.c.b16 %v3750, %v3742
    %v4479 = vpack.c.b16 %v3751, %v3743
    %v4480 = vpack.c.b16 %v3760, %v3752
    %v4481 = vpack.c.b16 %v3761, %v3753
    %v4482 = vpack.c.b16 %v3762, %v3754
    %v4483 = vpack.c.b16 %v3763, %v3755
    %v4484 = vpack.c.b16 %v3764, %v3756
    %v4485 = vpack.c.b16 %v3765, %v3757
    %v4486 = vpack.c.b16 %v3766, %v3758
    %v4487 = vpack.c.b16 %v3767, %v3759
    %v4488 = vpack.c.b16 %v3776, %v3768
    %v4489 = vpack.c.b16 %v3777, %v3769
    %v4490 = vpack.c.b16 %v3778, %v3770
    %v4491 = vpack.c.b16 %v3779, %v3771
    %v4492 = vpack.c.b16 %v3780, %v3772
    %v4493 = vpack.c.b16 %v3781, %v3773
    %v4494 = vpack.c.b16 %v3782, %v3774
    %v4495 = vpack.c.b16 %v3783, %v3775
    %v4496 = vpack.c.b16 %v3792, %v3784
    %v4497 = vpack.c.b16 %v3793, %v3785
    %v4498 = vpack.c.b16 %v3794, %v3786
    %v4499 = vpack.c.b16 %v3795, %v3787
    %v4500 = vpack.c.b16 %v3796, %v3788
    %v4501 = vpack.c.b16 %v3797, %v3789
    %v4502 = vpack.c.b16 %v3798, %v3790
    %v4503 = vpack.c.b16 %v3799, %v3791
    %v4504 = vpack.c.b16 %v3808, %v3800
    %v4505 = vpack.c.b16 %v3809, %v3801
    %v4506 = vpack.c.b16 %v3810, %v3802
    %v4507 = vpack.c.b16 %v3811, %v3803
    %v4508 = vpack.c.b16 %v3812, %v3804
    %v4509 = vpack.c.b16 %v3813, %v3805
    %v4510 = vpack.c.b16 %v3814, %v3806
    %v4511 = vpack.c.b16 %v3815, %v3807
    %v4512 = vpack.c.b16 %v3824, %v3816
    %v4513 = vpack.c.b16 %v3825, %v3817
    %v4514 = vpack.c.b16 %v3826, %v3818
    %v4515 = vpack.c.b16 %v3827, %v3819
    %v4516 = vpack.c.b16 %v3828, %v3820
    %v4517 = vpack.c.b16 %v3829, %v3821
    %v4518 = vpack.c.b16 %v3830, %v3822
    %v4519 = vpack.c.b16 %v3831, %v3823
    %v4520 = vpack.c.b16 %v3840, %v3832
    %v4521 = vpack.c.b16 %v3841, %v3833
    %v4522 = vpack.c.b16 %v3842, %v3834
    %v4523 = vpack.c.b16 %v3843, %v3835
    %v4524 = vpack.c.b16 %v3844, %v3836
    %v4525 = vpack.c.b16 %v3845, %v3837
    %v4526 = vpack.c.b16 %v3846, %v3838
    %v4527 = vpack.c.b16 %v3847, %v3839
    %v4528 = vpack.c.b16 %v3856, %v3848
    %v4529 = vpack.c.b16 %v3857, %v3849
    %v4530 = vpack.c.b16 %v3858, %v3850
    %v4531 = vpack.c.b16 %v3859, %v3851
    %v4532 = vpack.c.b16 %v3860, %v3852
    %v4533 = vpack.c.b16 %v3861, %v3853
    %v4534 = vpack.c.b16 %v3862, %v3854
    %v4535 = vpack.c.b16 %v3863, %v3855
    %v4536 = vpack.c.b16 %v3872, %v3864
    %v4537 = vpack.c.b16 %v3873, %v3865
    %v4538 = vpack.c.b16 %v3874, %v3866
    %v4539 = vpack.c.b16 %v3875, %v3867
    %v4540 = vpack.c.b16 %v3876, %v3868
    %v4541 = vpack.c.b16 %v3877, %v3869
    %v4542 = vpack.c.b16 %v3878, %v3870
    %v4543 = vpack.c.b16 %v3879, %v3871
    %v4544 = vpack.c.b16 %v3888, %v3880
    %v4545 = vpack.c.b16 %v3889, %v3881
    %v4546 = vpack.c.b16 %v3890, %v3882
    %v4547 = vpack.c.b16 %v3891, %v3883
    %v4548 = vpack.c.b16 %v3892, %v3884
    %v4549 = vpack.c.b16 %v3893, %v3885
    %v4550 = vpack.c.b16 %v3894, %v3886
    %v4551 = vpack.c.b16 %v3895, %v3887
    %v4552 = vpack.c.b16 %v3904, %v3896
    %v4553 = vpack.c.b16 %v3905, %v3897
    %v4554 = vpack.c.b16 %v3906, %v3898
    %v4555 = vpack.c.b16 %v3907, %v3899
    %v4556 = vpack.c.b16 %v3908, %v3900
    %v4557 = vpack.c.b16 %v3909, %v3901
    %v4558 = vpack.c.b16 %v3910, %v3902
    %v4559 = vpack.c.b16 %v3911, %v3903
    %v4560 = vpack.c.b16 %v3920, %v3912
    %v4561 = vpack.c.b16 %v3921, %v3913
    %v4562 = vpack.c.b16 %v3922, %v3914
    %v4563 = vpack.c.b16 %v3923, %v3915
    %v4564 = vpack.c.b16 %v3924, %v3916
    %v4565 = vpack.c.b16 %v3925, %v3917
    %v4566 = vpack.c.b16 %v3926, %v3918
    %v4567 = vpack.c.b16 %v3927, %v3919
    %v4568 = vpack.c.b16 %v3936, %v3928
    %v4569 = vpack.c.b16 %v3937, %v3929
    %v4570 = vpack.c.b16 %v3938, %v3930
    %v4571 = vpack.c.b16 %v3939, %v3931
    %v4572 = vpack.c.b16 %v3940, %v3932
    %v4573 = vpack.c.b16 %v3941, %v3933
    %v4574 = vpack.c.b16 %v3942, %v3934
    %v4575 = vpack.c.b16 %v3943, %v3935
    %v4576 = vpack.c.b16 %v3952, %v3944
    %v4577 = vpack.c.b16 %v3953, %v3945
    %v4578 = vpack.c.b16 %v3954, %v3946
    %v4579 = vpack.c.b16 %v3955, %v3947
    %v4580 = vpack.c.b16 %v3956, %v3948
    %v4581 = vpack.c.b16 %v3957, %v3949
    %v4582 = vpack.c.b16 %v3958, %v3950
    %v4583 = vpack.c.b16 %v3959, %v3951
    %v4584 = vpack.c.b16 %v3968, %v3960
    %v4585 = vpack.c.b16 %v3969, %v3961
    %v4586 = vpack.c.b16 %v3970, %v3962
    %v4587 = vpack.c.b16 %v3971, %v3963
    %v4588 = vpack.c.b16 %v3972, %v3964
    %v4589 = vpack.c.b16 %v3973, %v3965
    %v4590 = vpack.c.b16 %v3974, %v3966
    %v4591 = vpack.c.b16 %v3975, %v3967
    %v4592 = vpack.c.b16 %v3984, %v3976
    %v4593 = vpack.c.b16 %v3985, %v3977
    %v4594 = vpack.c.b16 %v3986, %v3978
    %v4595 = vpack.c.b16 %v3987, %v3979
    %v4596 = vpack.c.b16 %v3988, %v3980
    %v4597 = vpack.c.b16 %v3989, %v3981
    %v4598 = vpack.c.b16 %v3990, %v3982
    %v4599 = vpack.c.b16 %v3991, %v3983
    %v4600 = vpack.c.b16 %v4000, %v3992
    %v4601 = vpack.c.b16 %v4001, %v3993
    %v4602 = vpack.c.b16 %v4002, %v3994
    %v4603 = vpack.c.b16 %v4003, %v3995
    %v4604 = vpack.c.b16 %v4004, %v3996
    %v4605 = vpack.c.b16 %v4005, %v3997
    %v4606 = vpack.c.b16 %v4006, %v3998
    %v4607 = vpack.c.b16 %v4007, %v3999
    %v4608 = vpack.c.b16 %v4016, %v4008
    %v4609 = vpack.c.b16 %v4017, %v4009
    %v4610 = vpack.c.b16 %v4018, %v4010
    %v4611 = vpack.c.b16 %v4019, %v4011
    %v4612 = vpack.c.b16 %v4020, %v4012
    %v4613 = vpack.c.b16 %v4021, %v4013
    %v4614 = vpack.c.b16 %v4022, %v4014
    %v4615 = vpack.c.b16 %v4023, %v4015
    %v4616 = vpack.c.b16 %v4032, %v4024
    %v4617 = vpack.c.b16 %v4033, %v4025
    %v4618 = vpack.c.b16 %v4034, %v4026
    %v4619 = vpack.c.b16 %v4035, %v4027
    %v4620 = vpack.c.b16 %v4036, %v4028
    %v4621 = vpack.c.b16 %v4037, %v4029
    %v4622 = vpack.c.b16 %v4038, %v4030
    %v4623 = vpack.c.b16 %v4039, %v4031
    %v4624 = vpack.c.b16 %v4048, %v4040
    %v4625 = vpack.c.b16 %v4049, %v4041
    %v4626 = vpack.c.b16 %v4050, %v4042
    %v4627 = vpack.c.b16 %v4051, %v4043
    %v4628 = vpack.c.b16 %v4052, %v4044
    %v4629 = vpack.c.b16 %v4053, %v4045
    %v4630 = vpack.c.b16 %v4054, %v4046
    %v4631 = vpack.c.b16 %v4055, %v4047
    %v4632 = vpack.c.b16 %v4064, %v4056
    %v4633 = vpack.c.b16 %v4065, %v4057
    %v4634 = vpack.c.b16 %v4066, %v4058
    %v4635 = vpack.c.b16 %v4067, %v4059
    %v4636 = vpack.c.b16 %v4068, %v4060
    %v4637 = vpack.c.b16 %v4069, %v4061
    %v4638 = vpack.c.b16 %v4070, %v4062
    %v4639 = vpack.c.b16 %v4071, %v4063
    %v4640 = vpack.c.b16 %v4080, %v4072
    %v4641 = vpack.c.b16 %v4081, %v4073
    %v4642 = vpack.c.b16 %v4082, %v4074
    %v4643 = vpack.c.b16 %v4083, %v4075
    %v4644 = vpack.c.b16 %v4084, %v4076
    %v4645 = vpack.c.b16 %v4085, %v4077
    %v4646 = vpack.c.b16 %v4086, %v4078
    %v4647 = vpack.c.b16 %v4087, %v4079
    %v4648 = vpack.c.b16 %v4096, %v4088
    %v4649 = vpack.c.b16 %v4097, %v4089
    %v4650 = vpack.c.b16 %v4098, %v4090
    %v4651 = vpack.c.b16 %v4099, %v4091
    %v4652 = vpack.c.b16 %v4100, %v4092
    %v4653 = vpack.c.b16 %v4101, %v4093
    %v4654 = vpack.c.b16 %v4102, %v4094
    %v4655 = vpack.c.b16 %v4103, %v4095
    %v4656 = vpack.c.b16 %v4112, %v4104
    %v4657 = vpack.c.b16 %v4113, %v4105
    %v4658 = vpack.c.b16 %v4114, %v4106
    %v4659 = vpack.c.b16 %v4115, %v4107
    %v4660 = vpack.c.b16 %v4116, %v4108
    %v4661 = vpack.c.b16 %v4117, %v4109
    %v4662 = vpack.c.b16 %v4118, %v4110
    %v4663 = vpack.c.b16 %v4119, %v4111
    %v4664 = vpack.c.b16 %v4128, %v4120
    %v4665 = vpack.c.b16 %v4129, %v4121
    %v4666 = vpack.c.b16 %v4130, %v4122
    %v4667 = vpack.c.b16 %v4131, %v4123
    %v4668 = vpack.c.b16 %v4132, %v4124
    %v4669 = vpack.c.b16 %v4133, %v4125
    %v4670 = vpack.c.b16 %v4134, %v4126
    %v4671 = vpack.c.b16 %v4135, %v4127
    %v4672 = vpack.c.b16 %v4144, %v4136
    %v4673 = vpack.c.b16 %v4145, %v4137
    %v4674 = vpack.c.b16 %v4146, %v4138
    %v4675 = vpack.c.b16 %v4147, %v4139
    %v4676 = vpack.c.b16 %v4148, %v4140
    %v4677 = vpack.c.b16 %v4149, %v4141
    %v4678 = vpack.c.b16 %v4150, %v4142
    %v4679 = vpack.c.b16 %v4151, %v4143
    %v4680 = vpack.c.b16 %v4160, %v4152
    %v4681 = vpack.c.b16 %v4161, %v4153
    %v4682 = vpack.c.b16 %v4162, %v4154
    %v4683 = vpack.c.b16 %v4163, %v4155
    %v4684 = vpack.c.b16 %v4164, %v4156
    %v4685 = vpack.c.b16 %v4165, %v4157
    %v4686 = vpack.c.b16 %v4166, %v4158
    %v4687 = vpack.c.b16 %v4167, %v4159
    %v4688 = vpack.c.b16 %v4176, %v4168
    %v4689 = vpack.c.b16 %v4177, %v4169
    %v4690 = vpack.c.b16 %v4178, %v4170
    %v4691 = vpack.c.b16 %v4179, %v4171
    %v4692 = vpack.c.b16 %v4180, %v4172
    %v4693 = vpack.c.b16 %v4181, %v4173
    %v4694 = vpack.c.b16 %v4182, %v4174
    %v4695 = vpack.c.b16 %v4183, %v4175
    %5208 = vmatprep.subr.bf16.mxu0 %v4185
    %5209 = vmatpush1.bf16.msra.mxu0 %v4184
    %5210 = vmatprep.subr.bf16.mxu0 %v4193
    %5211 = vmatpush1.bf16.msra.mxu0 %v4192
    %5212 = vmatprep.subr.bf16.mxu0 %v4201
    %5213 = vmatpush1.bf16.msra.mxu0 %v4200
    %5214 = vmatprep.subr.bf16.mxu0 %v4209
    %5215 = vmatpush1.bf16.msra.mxu0 %v4208
    %5216 = vmatprep.subr.bf16.mxu0 %v4217
    %5217 = vmatpush1.bf16.msra.mxu0 %v4216
    %5218 = vmatprep.subr.bf16.mxu0 %v4225
    %5219 = vmatpush1.bf16.msra.mxu0 %v4224
    %5220 = vmatprep.subr.bf16.mxu0 %v4233
    %5221 = vmatpush1.bf16.msra.mxu0 %v4232
    %5222 = vmatprep.subr.bf16.mxu0 %v4241
    %5223 = vmatpush1.bf16.msra.mxu0 %v4240
    %5224 = vmatprep.subr.bf16.mxu0 %v4249
    %5225 = vmatpush1.bf16.msra.mxu0 %v4248
    %5226 = vmatprep.subr.bf16.mxu0 %v4257
    %5227 = vmatpush1.bf16.msra.mxu0 %v4256
    %5228 = vmatprep.subr.bf16.mxu0 %v4265
    %5229 = vmatpush1.bf16.msra.mxu0 %v4264
    %5230 = vmatprep.subr.bf16.mxu0 %v4273
    %5231 = vmatpush1.bf16.msra.mxu0 %v4272
    %5232 = vmatprep.subr.bf16.mxu0 %v4281
    %5233 = vmatpush1.bf16.msra.mxu0 %v4280
    %5234 = vmatprep.subr.bf16.mxu0 %v4289
    %5235 = vmatpush1.bf16.msra.mxu0 %v4288
    %5236 = vmatprep.subr.bf16.mxu0 %v4297
    %5237 = vmatpush1.bf16.msra.mxu0 %v4296
    %5238 = vmatprep.subr.bf16.mxu0 %v4305
    %5239 = vmatpush1.bf16.msra.mxu0 %v4304
    %5240 = vmatprep.mubr.bf16.mxu0 %v2028
    %5241 = vmatmul.mubr.bf16.gmra.mrb[0].mxu0 %v2027
    %v5242 = vpop.f32.mrb[0].mxu0
    %v5243 = vadd.f32 %v2611, %v5242
    %v5244 = vpop.f32.mrb[0].mxu0
    %v5245 = vadd.f32 %v2615, %v5244
    %v5246 = vpop.f32.mrb[0].mxu0
    %v5247 = vadd.f32 %v2611, %v5246
    %v5248 = vpop.f32.mrb[0].mxu0
    %v5249 = vadd.f32 %v2615, %v5248
    %5250 = vmatprep.mubr.bf16.mxu0 %v2036
    %5251 = vmatmul.mubr.bf16.gmra.mrb[0].mxu0 %v2035
    %v5252 = vpop.f32.mrb[0].mxu0
    %v5253 = vadd.f32 %v2611, %v5252
    %v5254 = vpop.f32.mrb[0].mxu0
    %v5255 = vadd.f32 %v2615, %v5254
    %v5256 = vpop.f32.mrb[0].mxu0
    %v5257 = vadd.f32 %v2611, %v5256
    %v5258 = vpop.f32.mrb[0].mxu0
    %v5259 = vadd.f32 %v2615, %v5258
    %5260 = vmatprep.mubr.bf16.mxu0 %v2044
    %5261 = vmatmul.mubr.bf16.gmra.mrb[0].mxu0 %v2043
    %v5262 = vpop.f32.mrb[0].mxu0
    %v5263 = vadd.f32 %v2611, %v5262
    %v5264 = vpop.f32.mrb[0].mxu0
    %v5265 = vadd.f32 %v2615, %v5264
    %v5266 = vpop.f32.mrb[0].mxu0
    %v5267 = vadd.f32 %v2611, %v5266
    %v5268 = vpop.f32.mrb[0].mxu0
    %v5269 = vadd.f32 %v2615, %v5268
    %5270 = vmatprep.mubr.bf16.mxu0 %v2052
    %5271 = vmatmul.mubr.bf16.gmra.mrb[0].mxu0 %v2051
    %v5272 = vpop.f32.mrb[0].mxu0
    %v5273 = vadd.f32 %v2611, %v5272
    %v5274 = vpop.f32.mrb[0].mxu0
    %v5275 = vadd.f32 %v2615, %v5274
    %v5276 = vpop.f32.mrb[0].mxu0
    %v5277 = vadd.f32 %v2611, %v5276
    %v5278 = vpop.f32.mrb[0].mxu0
    %v5279 = vadd.f32 %v2615, %v5278
    %5280 = vmatprep.mubr.bf16.mxu0 %v2060
    %5281 = vmatmul.mubr.bf16.gmra.mrb[0].mxu0 %v2059
    %v5282 = vpop.f32.mrb[0].mxu0
    %v5283 = vadd.f32 %v2611, %v5282
    %v5284 = vpop.f32.mrb[0].mxu0
    %v5285 = vadd.f32 %v2615, %v5284
    %v5286 = vpop.f32.mrb[0].mxu0
    %v5287 = vadd.f32 %v2611, %v5286
    %v5288 = vpop.f32.mrb[0].mxu0
    %v5289 = vadd.f32 %v2615, %v5288
    %5290 = vmatprep.mubr.bf16.mxu0 %v2068
    %5291 = vmatmul.mubr.bf16.gmra.mrb[0].mxu0 %v2067
    %v5292 = vpop.f32.mrb[0].mxu0
    %v5293 = vadd.f32 %v2611, %v5292
    %v5294 = vpop.f32.mrb[0].mxu0
    %v5295 = vadd.f32 %v2615, %v5294
    %v5296 = vpop.f32.mrb[0].mxu0
    %v5297 = vadd.f32 %v2611, %v5296
    %v5298 = vpop.f32.mrb[0].mxu0
    %v5299 = vadd.f32 %v2615, %v5298
    %5300 = vmatprep.mubr.bf16.mxu0 %v2076
    %5301 = vmatmul.mubr.bf16.gmra.mrb[0].mxu0 %v2075
    %v5302 = vpop.f32.mrb[0].mxu0
    %v5303 = vadd.f32 %v2611, %v5302
    %v5304 = vpop.f32.mrb[0].mxu0
    %v5305 = vadd.f32 %v2615, %v5304
    %v5306 = vpop.f32.mrb[0].mxu0
    %v5307 = vadd.f32 %v2611, %v5306
    %v5308 = vpop.f32.mrb[0].mxu0
    %v5309 = vadd.f32 %v2615, %v5308
    %5310 = vmatprep.mubr.bf16.mxu0 %v2084
    %5311 = vmatmul.mubr.bf16.gmra.mrb[0].mxu0 %v2083
    %v5312 = vpop.f32.mrb[0].mxu0
    %v5313 = vadd.f32 %v2611, %v5312
    %v5314 = vpop.f32.mrb[0].mxu0
    %v5315 = vadd.f32 %v2615, %v5314
    %v5316 = vpop.f32.mrb[0].mxu0
    %v5317 = vadd.f32 %v2611, %v5316
    %v5318 = vpop.f32.mrb[0].mxu0
    %v5319 = vadd.f32 %v2615, %v5318
    %5320 = vdwg.mxu0
    %5321 = vmatprep.subr.bf16.mxu0 %v4313
    %5322 = vmatpush1.bf16.msra.mxu0 %v4312
    %5323 = vmatprep.subr.bf16.mxu0 %v4321
    %5324 = vmatpush1.bf16.msra.mxu0 %v4320
    %5325 = vmatprep.subr.bf16.mxu0 %v4329
    %5326 = vmatpush1.bf16.msra.mxu0 %v4328
    %5327 = vmatprep.subr.bf16.mxu0 %v4337
    %5328 = vmatpush1.bf16.msra.mxu0 %v4336
    %5329 = vmatprep.subr.bf16.mxu0 %v4345
    %5330 = vmatpush1.bf16.msra.mxu0 %v4344
    %5331 = vmatprep.subr.bf16.mxu0 %v4353
    %5332 = vmatpush1.bf16.msra.mxu0 %v4352
    %5333 = vmatprep.subr.bf16.mxu0 %v4361
    %5334 = vmatpush1.bf16.msra.mxu0 %v4360
    %5335 = vmatprep.subr.bf16.mxu0 %v4369
    %5336 = vmatpush1.bf16.msra.mxu0 %v4368
    %5337 = vmatprep.subr.bf16.mxu0 %v4377
    %5338 = vmatpush1.bf16.msra.mxu0 %v4376
    %5339 = vmatprep.subr.bf16.mxu0 %v4385
    %5340 = vmatpush1.bf16.msra.mxu0 %v4384
    %5341 = vmatprep.subr.bf16.mxu0 %v4393
    %5342 = vmatpush1.bf16.msra.mxu0 %v4392
    %5343 = vmatprep.subr.bf16.mxu0 %v4401
    %5344 = vmatpush1.bf16.msra.mxu0 %v4400
    %5345 = vmatprep.subr.bf16.mxu0 %v4409
    %5346 = vmatpush1.bf16.msra.mxu0 %v4408
    %5347 = vmatprep.subr.bf16.mxu0 %v4417
    %5348 = vmatpush1.bf16.msra.mxu0 %v4416
    %5349 = vmatprep.subr.bf16.mxu0 %v4425
    %5350 = vmatpush1.bf16.msra.mxu0 %v4424
    %5351 = vmatprep.subr.bf16.mxu0 %v4433
    %5352 = vmatpush1.bf16.msra.mxu0 %v4432
    %5353 = vmatprep.mubr.bf16.mxu0 %v2030
    %5354 = vmatmul.mubr.bf16.gmra.mrb[0].mxu0 %v2029
    %v5355 = vpop.f32.mrb[0].mxu0
    %v5356 = vadd.f32 %v5243, %v5355
    %v5357 = vpop.f32.mrb[0].mxu0
    %v5358 = vadd.f32 %v5245, %v5357
    %v5359 = vpop.f32.mrb[0].mxu0
    %v5360 = vadd.f32 %v5247, %v5359
    %v5361 = vpop.f32.mrb[0].mxu0
    %v5362 = vadd.f32 %v5249, %v5361
    %5363 = vmatprep.mubr.bf16.mxu0 %v2038
    %5364 = vmatmul.mubr.bf16.gmra.mrb[0].mxu0 %v2037
    %v5365 = vpop.f32.mrb[0].mxu0
    %v5366 = vadd.f32 %v5253, %v5365
    %v5367 = vpop.f32.mrb[0].mxu0
    %v5368 = vadd.f32 %v5255, %v5367
    %v5369 = vpop.f32.mrb[0].mxu0
    %v5370 = vadd.f32 %v5257, %v5369
    %v5371 = vpop.f32.mrb[0].mxu0
    %v5372 = vadd.f32 %v5259, %v5371
    %5373 = vmatprep.mubr.bf16.mxu0 %v2046
    %5374 = vmatmul.mubr.bf16.gmra.mrb[0].mxu0 %v2045
    %v5375 = vpop.f32.mrb[0].mxu0
    %v5376 = vadd.f32 %v5263, %v5375
    %v5377 = vpop.f32.mrb[0].mxu0
    %v5378 = vadd.f32 %v5265, %v5377
    %v5379 = vpop.f32.mrb[0].mxu0
    %v5380 = vadd.f32 %v5267, %v5379
    %v5381 = vpop.f32.mrb[0].mxu0
    %v5382 = vadd.f32 %v5269, %v5381
    %5383 = vmatprep.mubr.bf16.mxu0 %v2054
    %5384 = vmatmul.mubr.bf16.gmra.mrb[0].mxu0 %v2053
    %v5385 = vpop.f32.mrb[0].mxu0
    %v5386 = vadd.f32 %v5273, %v5385
    %v5387 = vpop.f32.mrb[0].mxu0
    %v5388 = vadd.f32 %v5275, %v5387
    %v5389 = vpop.f32.mrb[0].mxu0
    %v5390 = vadd.f32 %v5277, %v5389
    %v5391 = vpop.f32.mrb[0].mxu0
    %v5392 = vadd.f32 %v5279, %v5391
    %5393 = vmatprep.mubr.bf16.mxu0 %v2062
    %5394 = vmatmul.mubr.bf16.gmra.mrb[0].mxu0 %v2061
    %v5395 = vpop.f32.mrb[0].mxu0
    %v5396 = vadd.f32 %v5283, %v5395
    %v5397 = vpop.f32.mrb[0].mxu0
    %v5398 = vadd.f32 %v5285, %v5397
    %v5399 = vpop.f32.mrb[0].mxu0
    %v5400 = vadd.f32 %v5287, %v5399
    %v5401 = vpop.f32.mrb[0].mxu0
    %v5402 = vadd.f32 %v5289, %v5401
    %5403 = vmatprep.mubr.bf16.mxu0 %v2070
    %5404 = vmatmul.mubr.bf16.gmra.mrb[0].mxu0 %v2069
    %v5405 = vpop.f32.mrb[0].mxu0
    %v5406 = vadd.f32 %v5293, %v5405
    %v5407 = vpop.f32.mrb[0].mxu0
    %v5408 = vadd.f32 %v5295, %v5407
    %v5409 = vpop.f32.mrb[0].mxu0
    %v5410 = vadd.f32 %v5297, %v5409
    %v5411 = vpop.f32.mrb[0].mxu0
    %v5412 = vadd.f32 %v5299, %v5411
    %5413 = vmatprep.mubr.bf16.mxu0 %v2078
    %5414 = vmatmul.mubr.bf16.gmra.mrb[0].mxu0 %v2077
    %v5415 = vpop.f32.mrb[0].mxu0
    %v5416 = vadd.f32 %v5303, %v5415
    %v5417 = vpop.f32.mrb[0].mxu0
    %v5418 = vadd.f32 %v5305, %v5417
    %v5419 = vpop.f32.mrb[0].mxu0
    %v5420 = vadd.f32 %v5307, %v5419
    %v5421 = vpop.f32.mrb[0].mxu0
    %v5422 = vadd.f32 %v5309, %v5421
    %5423 = vmatprep.mubr.bf16.mxu0 %v2086
    %5424 = vmatmul.mubr.bf16.gmra.mrb[0].mxu0 %v2085
    %v5425 = vpop.f32.mrb[0].mxu0
    %v5426 = vadd.f32 %v5313, %v5425
    %v5427 = vpop.f32.mrb[0].mxu0
    %v5428 = vadd.f32 %v5315, %v5427
    %v5429 = vpop.f32.mrb[0].mxu0
    %v5430 = vadd.f32 %v5317, %v5429
    %v5431 = vpop.f32.mrb[0].mxu0
    %v5432 = vadd.f32 %v5319, %v5431
    %5433 = vdwg.mxu0
    %5434 = vmatprep.subr.bf16.mxu0 %v4441
    %5435 = vmatpush1.bf16.msra.mxu0 %v4440
    %5436 = vmatprep.subr.bf16.mxu0 %v4449
    %5437 = vmatpush1.bf16.msra.mxu0 %v4448
    %5438 = vmatprep.subr.bf16.mxu0 %v4457
    %5439 = vmatpush1.bf16.msra.mxu0 %v4456
    %5440 = vmatprep.subr.bf16.mxu0 %v4465
    %5441 = vmatpush1.bf16.msra.mxu0 %v4464
    %5442 = vmatprep.subr.bf16.mxu0 %v4473
    %5443 = vmatpush1.bf16.msra.mxu0 %v4472
    %5444 = vmatprep.subr.bf16.mxu0 %v4481
    %5445 = vmatpush1.bf16.msra.mxu0 %v4480
    %5446 = vmatprep.subr.bf16.mxu0 %v4489
    %5447 = vmatpush1.bf16.msra.mxu0 %v4488
    %5448 = vmatprep.subr.bf16.mxu0 %v4497
    %5449 = vmatpush1.bf16.msra.mxu0 %v4496
    %5450 = vmatprep.subr.bf16.mxu0 %v4505
    %5451 = vmatpush1.bf16.msra.mxu0 %v4504
    %5452 = vmatprep.subr.bf16.mxu0 %v4513
    %5453 = vmatpush1.bf16.msra.mxu0 %v4512
    %5454 = vmatprep.subr.bf16.mxu0 %v4521
    %5455 = vmatpush1.bf16.msra.mxu0 %v4520
    %5456 = vmatprep.subr.bf16.mxu0 %v4529
    %5457 = vmatpush1.bf16.msra.mxu0 %v4528
    %5458 = vmatprep.subr.bf16.mxu0 %v4537
    %5459 = vmatpush1.bf16.msra.mxu0 %v4536
    %5460 = vmatprep.subr.bf16.mxu0 %v4545
    %5461 = vmatpush1.bf16.msra.mxu0 %v4544
    %5462 = vmatprep.subr.bf16.mxu0 %v4553
    %5463 = vmatpush1.bf16.msra.mxu0 %v4552
    %5464 = vmatprep.subr.bf16.mxu0 %v4561
    %5465 = vmatpush1.bf16.msra.mxu0 %v4560
    %5466 = vmatprep.mubr.bf16.mxu0 %v2032
    %5467 = vmatmul.mubr.bf16.gmra.mrb[0].mxu0 %v2031
    %v5468 = vpop.f32.mrb[0].mxu0
    %v5469 = vadd.f32 %v5356, %v5468
    %v5470 = vpop.f32.mrb[0].mxu0
    %v5471 = vadd.f32 %v5358, %v5470
    %v5472 = vpop.f32.mrb[0].mxu0
    %v5473 = vadd.f32 %v5360, %v5472
    %v5474 = vpop.f32.mrb[0].mxu0
    %v5475 = vadd.f32 %v5362, %v5474
    %5476 = vmatprep.mubr.bf16.mxu0 %v2040
    %5477 = vmatmul.mubr.bf16.gmra.mrb[0].mxu0 %v2039
    %v5478 = vpop.f32.mrb[0].mxu0
    %v5479 = vadd.f32 %v5366, %v5478
    %v5480 = vpop.f32.mrb[0].mxu0
    %v5481 = vadd.f32 %v5368, %v5480
    %v5482 = vpop.f32.mrb[0].mxu0
    %v5483 = vadd.f32 %v5370, %v5482
    %v5484 = vpop.f32.mrb[0].mxu0
    %v5485 = vadd.f32 %v5372, %v5484
    %5486 = vmatprep.mubr.bf16.mxu0 %v2048
    %5487 = vmatmul.mubr.bf16.gmra.mrb[0].mxu0 %v2047
    %v5488 = vpop.f32.mrb[0].mxu0
    %v5489 = vadd.f32 %v5376, %v5488
    %v5490 = vpop.f32.mrb[0].mxu0
    %v5491 = vadd.f32 %v5378, %v5490
    %v5492 = vpop.f32.mrb[0].mxu0
    %v5493 = vadd.f32 %v5380, %v5492
    %v5494 = vpop.f32.mrb[0].mxu0
    %v5495 = vadd.f32 %v5382, %v5494
    %5496 = vmatprep.mubr.bf16.mxu0 %v2056
    %5497 = vmatmul.mubr.bf16.gmra.mrb[0].mxu0 %v2055
    %v5498 = vpop.f32.mrb[0].mxu0
    %v5499 = vadd.f32 %v5386, %v5498
    %v5500 = vpop.f32.mrb[0].mxu0
    %v5501 = vadd.f32 %v5388, %v5500
    %v5502 = vpop.f32.mrb[0].mxu0
    %v5503 = vadd.f32 %v5390, %v5502
    %v5504 = vpop.f32.mrb[0].mxu0
    %v5505 = vadd.f32 %v5392, %v5504
    %5506 = vmatprep.mubr.bf16.mxu0 %v2064
    %5507 = vmatmul.mubr.bf16.gmra.mrb[0].mxu0 %v2063
    %v5508 = vpop.f32.mrb[0].mxu0
    %v5509 = vadd.f32 %v5396, %v5508
    %v5510 = vpop.f32.mrb[0].mxu0
    %v5511 = vadd.f32 %v5398, %v5510
    %v5512 = vpop.f32.mrb[0].mxu0
    %v5513 = vadd.f32 %v5400, %v5512
    %v5514 = vpop.f32.mrb[0].mxu0
    %v5515 = vadd.f32 %v5402, %v5514
    %5516 = vmatprep.mubr.bf16.mxu0 %v2072
    %5517 = vmatmul.mubr.bf16.gmra.mrb[0].mxu0 %v2071
    %v5518 = vpop.f32.mrb[0].mxu0
    %v5519 = vadd.f32 %v5406, %v5518
    %v5520 = vpop.f32.mrb[0].mxu0
    %v5521 = vadd.f32 %v5408, %v5520
    %v5522 = vpop.f32.mrb[0].mxu0
    %v5523 = vadd.f32 %v5410, %v5522
    %v5524 = vpop.f32.mrb[0].mxu0
    %v5525 = vadd.f32 %v5412, %v5524
    %5526 = vmatprep.mubr.bf16.mxu0 %v2080
    %5527 = vmatmul.mubr.bf16.gmra.mrb[0].mxu0 %v2079
    %v5528 = vpop.f32.mrb[0].mxu0
    %v5529 = vadd.f32 %v5416, %v5528
    %v5530 = vpop.f32.mrb[0].mxu0
    %v5531 = vadd.f32 %v5418, %v5530
    %v5532 = vpop.f32.mrb[0].mxu0
    %v5533 = vadd.f32 %v5420, %v5532
    %v5534 = vpop.f32.mrb[0].mxu0
    %v5535 = vadd.f32 %v5422, %v5534
    %5536 = vmatprep.mubr.bf16.mxu0 %v2088
    %5537 = vmatmul.mubr.bf16.gmra.mrb[0].mxu0 %v2087
    %v5538 = vpop.f32.mrb[0].mxu0
    %v5539 = vadd.f32 %v5426, %v5538
    %v5540 = vpop.f32.mrb[0].mxu0
    %v5541 = vadd.f32 %v5428, %v5540
    %v5542 = vpop.f32.mrb[0].mxu0
    %v5543 = vadd.f32 %v5430, %v5542
    %v5544 = vpop.f32.mrb[0].mxu0
    %v5545 = vadd.f32 %v5432, %v5544
    %5546 = vdwg.mxu0
    %5547 = vmatprep.subr.bf16.mxu0 %v4569
    %5548 = vmatpush1.bf16.msra.mxu0 %v4568
    %5549 = vmatprep.subr.bf16.mxu0 %v4577
    %5550 = vmatpush1.bf16.msra.mxu0 %v4576
    %5551 = vmatprep.subr.bf16.mxu0 %v4585
    %5552 = vmatpush1.bf16.msra.mxu0 %v4584
    %5553 = vmatprep.subr.bf16.mxu0 %v4593
    %5554 = vmatpush1.bf16.msra.mxu0 %v4592
    %5555 = vmatprep.subr.bf16.mxu0 %v4601
    %5556 = vmatpush1.bf16.msra.mxu0 %v4600
    %5557 = vmatprep.subr.bf16.mxu0 %v4609
    %5558 = vmatpush1.bf16.msra.mxu0 %v4608
    %5559 = vmatprep.subr.bf16.mxu0 %v4617
    %5560 = vmatpush1.bf16.msra.mxu0 %v4616
    %5561 = vmatprep.subr.bf16.mxu0 %v4625
    %5562 = vmatpush1.bf16.msra.mxu0 %v4624
    %5563 = vmatprep.subr.bf16.mxu0 %v4633
    %5564 = vmatpush1.bf16.msra.mxu0 %v4632
    %5565 = vmatprep.subr.bf16.mxu0 %v4641
    %5566 = vmatpush1.bf16.msra.mxu0 %v4640
    %5567 = vmatprep.subr.bf16.mxu0 %v4649
    %5568 = vmatpush1.bf16.msra.mxu0 %v4648
    %5569 = vmatprep.subr.bf16.mxu0 %v4657
    %5570 = vmatpush1.bf16.msra.mxu0 %v4656
    %5571 = vmatprep.subr.bf16.mxu0 %v4665
    %5572 = vmatpush1.bf16.msra.mxu0 %v4664
    %5573 = vmatprep.subr.bf16.mxu0 %v4673
    %5574 = vmatpush1.bf16.msra.mxu0 %v4672
    %5575 = vmatprep.subr.bf16.mxu0 %v4681
    %5576 = vmatpush1.bf16.msra.mxu0 %v4680
    %5577 = vmatprep.subr.bf16.mxu0 %v4689
    %5578 = vmatpush1.bf16.msra.mxu0 %v4688
    %5579 = vmatprep.mubr.bf16.mxu0 %v2034
    %5580 = vmatmul.mubr.bf16.gmra.mrb[0].mxu0 %v2033
    %v5581 = vpop.f32.mrb[0].mxu0
    %v5582 = vadd.f32 %v5469, %v5581
    %v5583 = vpop.f32.mrb[0].mxu0
    %v5584 = vadd.f32 %v5471, %v5583
    %v5585 = vpop.f32.mrb[0].mxu0
    %v5586 = vadd.f32 %v5473, %v5585
    %v5587 = vpop.f32.mrb[0].mxu0
    %v5588 = vadd.f32 %v5475, %v5587
    %5589 = vmatprep.mubr.bf16.mxu0 %v2042
    %5590 = vmatmul.mubr.bf16.gmra.mrb[0].mxu0 %v2041
    %v5591 = vpop.f32.mrb[0].mxu0
    %v5592 = vadd.f32 %v5479, %v5591
    %v5593 = vpop.f32.mrb[0].mxu0
    %v5594 = vadd.f32 %v5481, %v5593
    %v5595 = vpop.f32.mrb[0].mxu0
    %v5596 = vadd.f32 %v5483, %v5595
    %v5597 = vpop.f32.mrb[0].mxu0
    %v5598 = vadd.f32 %v5485, %v5597
    %5599 = vmatprep.mubr.bf16.mxu0 %v2050
    %5600 = vmatmul.mubr.bf16.gmra.mrb[0].mxu0 %v2049
    %v5601 = vpop.f32.mrb[0].mxu0
    %v5602 = vadd.f32 %v5489, %v5601
    %v5603 = vpop.f32.mrb[0].mxu0
    %v5604 = vadd.f32 %v5491, %v5603
    %v5605 = vpop.f32.mrb[0].mxu0
    %v5606 = vadd.f32 %v5493, %v5605
    %v5607 = vpop.f32.mrb[0].mxu0
    %v5608 = vadd.f32 %v5495, %v5607
    %5609 = vmatprep.mubr.bf16.mxu0 %v2058
    %5610 = vmatmul.mubr.bf16.gmra.mrb[0].mxu0 %v2057
    %v5611 = vpop.f32.mrb[0].mxu0
    %v5612 = vadd.f32 %v5499, %v5611
    %v5613 = vpop.f32.mrb[0].mxu0
    %v5614 = vadd.f32 %v5501, %v5613
    %v5615 = vpop.f32.mrb[0].mxu0
    %v5616 = vadd.f32 %v5503, %v5615
    %v5617 = vpop.f32.mrb[0].mxu0
    %v5618 = vadd.f32 %v5505, %v5617
    %5619 = vmatprep.mubr.bf16.mxu0 %v2066
    %5620 = vmatmul.mubr.bf16.gmra.mrb[0].mxu0 %v2065
    %v5621 = vpop.f32.mrb[0].mxu0
    %v5622 = vadd.f32 %v5509, %v5621
    %v5623 = vpop.f32.mrb[0].mxu0
    %v5624 = vadd.f32 %v5511, %v5623
    %v5625 = vpop.f32.mrb[0].mxu0
    %v5626 = vadd.f32 %v5513, %v5625
    %v5627 = vpop.f32.mrb[0].mxu0
    %v5628 = vadd.f32 %v5515, %v5627
    %5629 = vmatprep.mubr.bf16.mxu0 %v2074
    %5630 = vmatmul.mubr.bf16.gmra.mrb[0].mxu0 %v2073
    %v5631 = vpop.f32.mrb[0].mxu0
    %v5632 = vadd.f32 %v5519, %v5631
    %v5633 = vpop.f32.mrb[0].mxu0
    %v5634 = vadd.f32 %v5521, %v5633
    %v5635 = vpop.f32.mrb[0].mxu0
    %v5636 = vadd.f32 %v5523, %v5635
    %v5637 = vpop.f32.mrb[0].mxu0
    %v5638 = vadd.f32 %v5525, %v5637
    %5639 = vmatprep.mubr.bf16.mxu0 %v2082
    %5640 = vmatmul.mubr.bf16.gmra.mrb[0].mxu0 %v2081
    %v5641 = vpop.f32.mrb[0].mxu0
    %v5642 = vadd.f32 %v5529, %v5641
    %v5643 = vpop.f32.mrb[0].mxu0
    %v5644 = vadd.f32 %v5531, %v5643
    %v5645 = vpop.f32.mrb[0].mxu0
    %v5646 = vadd.f32 %v5533, %v5645
    %v5647 = vpop.f32.mrb[0].mxu0
    %v5648 = vadd.f32 %v5535, %v5647
    %5649 = vmatprep.mubr.bf16.mxu0 %v2090
    %5650 = vmatmul.mubr.bf16.gmra.mrb[0].mxu0 %v2089
    %v5651 = vpop.f32.mrb[0].mxu0
    %v5652 = vadd.f32 %v5539, %v5651
    %v5653 = vpop.f32.mrb[0].mxu0
    %v5654 = vadd.f32 %v5541, %v5653
    %v5655 = vpop.f32.mrb[0].mxu0
    %v5656 = vadd.f32 %v5543, %v5655
    %v5657 = vpop.f32.mrb[0].mxu0
    %v5658 = vadd.f32 %v5545, %v5657
    %5659 = vdwg.mxu0
    %5660 = vmatprep.subr.bf16.mxu0 %v4187
    %5661 = vmatpush1.bf16.msra.mxu0 %v4186
    %5662 = vmatprep.subr.bf16.mxu0 %v4195
    %5663 = vmatpush1.bf16.msra.mxu0 %v4194
    %5664 = vmatprep.subr.bf16.mxu0 %v4203
    %5665 = vmatpush1.bf16.msra.mxu0 %v4202
    %5666 = vmatprep.subr.bf16.mxu0 %v4211
    %5667 = vmatpush1.bf16.msra.mxu0 %v4210
    %5668 = vmatprep.subr.bf16.mxu0 %v4219
    %5669 = vmatpush1.bf16.msra.mxu0 %v4218
    %5670 = vmatprep.subr.bf16.mxu0 %v4227
    %5671 = vmatpush1.bf16.msra.mxu0 %v4226
    %5672 = vmatprep.subr.bf16.mxu0 %v4235
    %5673 = vmatpush1.bf16.msra.mxu0 %v4234
    %5674 = vmatprep.subr.bf16.mxu0 %v4243
    %5675 = vmatpush1.bf16.msra.mxu0 %v4242
    %5676 = vmatprep.subr.bf16.mxu0 %v4251
    %5677 = vmatpush1.bf16.msra.mxu0 %v4250
    %5678 = vmatprep.subr.bf16.mxu0 %v4259
    %5679 = vmatpush1.bf16.msra.mxu0 %v4258
    %5680 = vmatprep.subr.bf16.mxu0 %v4267
    %5681 = vmatpush1.bf16.msra.mxu0 %v4266
    %5682 = vmatprep.subr.bf16.mxu0 %v4275
    %5683 = vmatpush1.bf16.msra.mxu0 %v4274
    %5684 = vmatprep.subr.bf16.mxu0 %v4283
    %5685 = vmatpush1.bf16.msra.mxu0 %v4282
    %5686 = vmatprep.subr.bf16.mxu0 %v4291
    %5687 = vmatpush1.bf16.msra.mxu0 %v4290
    %5688 = vmatprep.subr.bf16.mxu0 %v4299
    %5689 = vmatpush1.bf16.msra.mxu0 %v4298
    %5690 = vmatprep.subr.bf16.mxu0 %v4307
    %5691 = vmatpush1.bf16.msra.mxu0 %v4306
    %5692 = vmatprep.mubr.bf16.mxu0 %v2028
    %5693 = vmatmul.mubr.bf16.gmra.mrb[0].mxu0 %v2027
    %v5694 = vpop.f32.mrb[0].mxu0
    %v5695 = vadd.f32 %v2619, %v5694
    %v5696 = vpop.f32.mrb[0].mxu0
    %v5697 = vadd.f32 %v2623, %v5696
    %v5698 = vpop.f32.mrb[0].mxu0
    %v5699 = vadd.f32 %v2619, %v5698
    %v5700 = vpop.f32.mrb[0].mxu0
    %v5701 = vadd.f32 %v2623, %v5700
    %5702 = vmatprep.mubr.bf16.mxu0 %v2036
    %5703 = vmatmul.mubr.bf16.gmra.mrb[0].mxu0 %v2035
    %v5704 = vpop.f32.mrb[0].mxu0
    %v5705 = vadd.f32 %v2619, %v5704
    %v5706 = vpop.f32.mrb[0].mxu0
    %v5707 = vadd.f32 %v2623, %v5706
    %v5708 = vpop.f32.mrb[0].mxu0
    %v5709 = vadd.f32 %v2619, %v5708
    %v5710 = vpop.f32.mrb[0].mxu0
    %v5711 = vadd.f32 %v2623, %v5710
    %5712 = vmatprep.mubr.bf16.mxu0 %v2044
    %5713 = vmatmul.mubr.bf16.gmra.mrb[0].mxu0 %v2043
    %v5714 = vpop.f32.mrb[0].mxu0
    %v5715 = vadd.f32 %v2619, %v5714
    %v5716 = vpop.f32.mrb[0].mxu0
    %v5717 = vadd.f32 %v2623, %v5716
    %v5718 = vpop.f32.mrb[0].mxu0
    %v5719 = vadd.f32 %v2619, %v5718
    %v5720 = vpop.f32.mrb[0].mxu0
    %v5721 = vadd.f32 %v2623, %v5720
    %5722 = vmatprep.mubr.bf16.mxu0 %v2052
    %5723 = vmatmul.mubr.bf16.gmra.mrb[0].mxu0 %v2051
    %v5724 = vpop.f32.mrb[0].mxu0
    %v5725 = vadd.f32 %v2619, %v5724
    %v5726 = vpop.f32.mrb[0].mxu0
    %v5727 = vadd.f32 %v2623, %v5726
    %v5728 = vpop.f32.mrb[0].mxu0
    %v5729 = vadd.f32 %v2619, %v5728
    %v5730 = vpop.f32.mrb[0].mxu0
    %v5731 = vadd.f32 %v2623, %v5730
    %5732 = vmatprep.mubr.bf16.mxu0 %v2060
    %5733 = vmatmul.mubr.bf16.gmra.mrb[0].mxu0 %v2059
    %v5734 = vpop.f32.mrb[0].mxu0
    %v5735 = vadd.f32 %v2619, %v5734
    %v5736 = vpop.f32.mrb[0].mxu0
    %v5737 = vadd.f32 %v2623, %v5736
    %v5738 = vpop.f32.mrb[0].mxu0
    %v5739 = vadd.f32 %v2619, %v5738
    %v5740 = vpop.f32.mrb[0].mxu0
    %v5741 = vadd.f32 %v2623, %v5740
    %5742 = vmatprep.mubr.bf16.mxu0 %v2068
    %5743 = vmatmul.mubr.bf16.gmra.mrb[0].mxu0 %v2067
    %v5744 = vpop.f32.mrb[0].mxu0
    %v5745 = vadd.f32 %v2619, %v5744
    %v5746 = vpop.f32.mrb[0].mxu0
    %v5747 = vadd.f32 %v2623, %v5746
    %v5748 = vpop.f32.mrb[0].mxu0
    %v5749 = vadd.f32 %v2619, %v5748
    %v5750 = vpop.f32.mrb[0].mxu0
    %v5751 = vadd.f32 %v2623, %v5750
    %5752 = vmatprep.mubr.bf16.mxu0 %v2076
    %5753 = vmatmul.mubr.bf16.gmra.mrb[0].mxu0 %v2075
    %v5754 = vpop.f32.mrb[0].mxu0
    %v5755 = vadd.f32 %v2619, %v5754
    %v5756 = vpop.f32.mrb[0].mxu0
    %v5757 = vadd.f32 %v2623, %v5756
    %v5758 = vpop.f32.mrb[0].mxu0
    %v5759 = vadd.f32 %v2619, %v5758
    %v5760 = vpop.f32.mrb[0].mxu0
    %v5761 = vadd.f32 %v2623, %v5760
    %5762 = vmatprep.mubr.bf16.mxu0 %v2084
    %5763 = vmatmul.mubr.bf16.gmra.mrb[0].mxu0 %v2083
    %v5764 = vpop.f32.mrb[0].mxu0
    %v5765 = vadd.f32 %v2619, %v5764
    %v5766 = vpop.f32.mrb[0].mxu0
    %v5767 = vadd.f32 %v2623, %v5766
    %v5768 = vpop.f32.mrb[0].mxu0
    %v5769 = vadd.f32 %v2619, %v5768
    %v5770 = vpop.f32.mrb[0].mxu0
    %v5771 = vadd.f32 %v2623, %v5770
    %5772 = vdwg.mxu0
    %5773 = vmatprep.subr.bf16.mxu0 %v4315
    %5774 = vmatpush1.bf16.msra.mxu0 %v4314
    %5775 = vmatprep.subr.bf16.mxu0 %v4323
    %5776 = vmatpush1.bf16.msra.mxu0 %v4322
    %5777 = vmatprep.subr.bf16.mxu0 %v4331
    %5778 = vmatpush1.bf16.msra.mxu0 %v4330
    %5779 = vmatprep.subr.bf16.mxu0 %v4339
    %5780 = vmatpush1.bf16.msra.mxu0 %v4338
    %5781 = vmatprep.subr.bf16.mxu0 %v4347
    %5782 = vmatpush1.bf16.msra.mxu0 %v4346
    %5783 = vmatprep.subr.bf16.mxu0 %v4355
    %5784 = vmatpush1.bf16.msra.mxu0 %v4354
    %5785 = vmatprep.subr.bf16.mxu0 %v4363
    %5786 = vmatpush1.bf16.msra.mxu0 %v4362
    %5787 = vmatprep.subr.bf16.mxu0 %v4371
    %5788 = vmatpush1.bf16.msra.mxu0 %v4370
    %5789 = vmatprep.subr.bf16.mxu0 %v4379
    %5790 = vmatpush1.bf16.msra.mxu0 %v4378
    %5791 = vmatprep.subr.bf16.mxu0 %v4387
    %5792 = vmatpush1.bf16.msra.mxu0 %v4386
    %5793 = vmatprep.subr.bf16.mxu0 %v4395
    %5794 = vmatpush1.bf16.msra.mxu0 %v4394
    %5795 = vmatprep.subr.bf16.mxu0 %v4403
    %5796 = vmatpush1.bf16.msra.mxu0 %v4402
    %5797 = vmatprep.subr.bf16.mxu0 %v4411
    %5798 = vmatpush1.bf16.msra.mxu0 %v4410
    %5799 = vmatprep.subr.bf16.mxu0 %v4419
    %5800 = vmatpush1.bf16.msra.mxu0 %v4418
    %5801 = vmatprep.subr.bf16.mxu0 %v4427
    %5802 = vmatpush1.bf16.msra.mxu0 %v4426
    %5803 = vmatprep.subr.bf16.mxu0 %v4435
    %5804 = vmatpush1.bf16.msra.mxu0 %v4434
    %5805 = vmatprep.mubr.bf16.mxu0 %v2030
    %5806 = vmatmul.mubr.bf16.gmra.mrb[0].mxu0 %v2029
    %v5807 = vpop.f32.mrb[0].mxu0
    %v5808 = vadd.f32 %v5695, %v5807
    %v5809 = vpop.f32.mrb[0].mxu0
    %v5810 = vadd.f32 %v5697, %v5809
    %v5811 = vpop.f32.mrb[0].mxu0
    %v5812 = vadd.f32 %v5699, %v5811
    %v5813 = vpop.f32.mrb[0].mxu0
    %v5814 = vadd.f32 %v5701, %v5813
    %5815 = vmatprep.mubr.bf16.mxu0 %v2038
    %5816 = vmatmul.mubr.bf16.gmra.mrb[0].mxu0 %v2037
    %v5817 = vpop.f32.mrb[0].mxu0
    %v5818 = vadd.f32 %v5705, %v5817
    %v5819 = vpop.f32.mrb[0].mxu0
    %v5820 = vadd.f32 %v5707, %v5819
    %v5821 = vpop.f32.mrb[0].mxu0
    %v5822 = vadd.f32 %v5709, %v5821
    %v5823 = vpop.f32.mrb[0].mxu0
    %v5824 = vadd.f32 %v5711, %v5823
    %5825 = vmatprep.mubr.bf16.mxu0 %v2046
    %5826 = vmatmul.mubr.bf16.gmra.mrb[0].mxu0 %v2045
    %v5827 = vpop.f32.mrb[0].mxu0
    %v5828 = vadd.f32 %v5715, %v5827
    %v5829 = vpop.f32.mrb[0].mxu0
    %v5830 = vadd.f32 %v5717, %v5829
    %v5831 = vpop.f32.mrb[0].mxu0
    %v5832 = vadd.f32 %v5719, %v5831
    %v5833 = vpop.f32.mrb[0].mxu0
    %v5834 = vadd.f32 %v5721, %v5833
    %5835 = vmatprep.mubr.bf16.mxu0 %v2054
    %5836 = vmatmul.mubr.bf16.gmra.mrb[0].mxu0 %v2053
    %v5837 = vpop.f32.mrb[0].mxu0
    %v5838 = vadd.f32 %v5725, %v5837
    %v5839 = vpop.f32.mrb[0].mxu0
    %v5840 = vadd.f32 %v5727, %v5839
    %v5841 = vpop.f32.mrb[0].mxu0
    %v5842 = vadd.f32 %v5729, %v5841
    %v5843 = vpop.f32.mrb[0].mxu0
    %v5844 = vadd.f32 %v5731, %v5843
    %5845 = vmatprep.mubr.bf16.mxu0 %v2062
    %5846 = vmatmul.mubr.bf16.gmra.mrb[0].mxu0 %v2061
    %v5847 = vpop.f32.mrb[0].mxu0
    %v5848 = vadd.f32 %v5735, %v5847
    %v5849 = vpop.f32.mrb[0].mxu0
    %v5850 = vadd.f32 %v5737, %v5849
    %v5851 = vpop.f32.mrb[0].mxu0
    %v5852 = vadd.f32 %v5739, %v5851
    %v5853 = vpop.f32.mrb[0].mxu0
    %v5854 = vadd.f32 %v5741, %v5853
    %5855 = vmatprep.mubr.bf16.mxu0 %v2070
    %5856 = vmatmul.mubr.bf16.gmra.mrb[0].mxu0 %v2069
    %v5857 = vpop.f32.mrb[0].mxu0
    %v5858 = vadd.f32 %v5745, %v5857
    %v5859 = vpop.f32.mrb[0].mxu0
    %v5860 = vadd.f32 %v5747, %v5859
    %v5861 = vpop.f32.mrb[0].mxu0
    %v5862 = vadd.f32 %v5749, %v5861
    %v5863 = vpop.f32.mrb[0].mxu0
    %v5864 = vadd.f32 %v5751, %v5863
    %5865 = vmatprep.mubr.bf16.mxu0 %v2078
    %5866 = vmatmul.mubr.bf16.gmra.mrb[0].mxu0 %v2077
    %v5867 = vpop.f32.mrb[0].mxu0
    %v5868 = vadd.f32 %v5755, %v5867
    %v5869 = vpop.f32.mrb[0].mxu0
    %v5870 = vadd.f32 %v5757, %v5869
    %v5871 = vpop.f32.mrb[0].mxu0
    %v5872 = vadd.f32 %v5759, %v5871
    %v5873 = vpop.f32.mrb[0].mxu0
    %v5874 = vadd.f32 %v5761, %v5873
    %5875 = vmatprep.mubr.bf16.mxu0 %v2086
    %5876 = vmatmul.mubr.bf16.gmra.mrb[0].mxu0 %v2085
    %v5877 = vpop.f32.mrb[0].mxu0
    %v5878 = vadd.f32 %v5765, %v5877
    %v5879 = vpop.f32.mrb[0].mxu0
    %v5880 = vadd.f32 %v5767, %v5879
    %v5881 = vpop.f32.mrb[0].mxu0
    %v5882 = vadd.f32 %v5769, %v5881
    %v5883 = vpop.f32.mrb[0].mxu0
    %v5884 = vadd.f32 %v5771, %v5883
    %5885 = vdwg.mxu0
    %5886 = vmatprep.subr.bf16.mxu0 %v4443
    %5887 = vmatpush1.bf16.msra.mxu0 %v4442
    %5888 = vmatprep.subr.bf16.mxu0 %v4451
    %5889 = vmatpush1.bf16.msra.mxu0 %v4450
    %5890 = vmatprep.subr.bf16.mxu0 %v4459
    %5891 = vmatpush1.bf16.msra.mxu0 %v4458
    %5892 = vmatprep.subr.bf16.mxu0 %v4467
    %5893 = vmatpush1.bf16.msra.mxu0 %v4466
    %5894 = vmatprep.subr.bf16.mxu0 %v4475
    %5895 = vmatpush1.bf16.msra.mxu0 %v4474
    %5896 = vmatprep.subr.bf16.mxu0 %v4483
    %5897 = vmatpush1.bf16.msra.mxu0 %v4482
    %5898 = vmatprep.subr.bf16.mxu0 %v4491
    %5899 = vmatpush1.bf16.msra.mxu0 %v4490
    %5900 = vmatprep.subr.bf16.mxu0 %v4499
    %5901 = vmatpush1.bf16.msra.mxu0 %v4498
    %5902 = vmatprep.subr.bf16.mxu0 %v4507
    %5903 = vmatpush1.bf16.msra.mxu0 %v4506
    %5904 = vmatprep.subr.bf16.mxu0 %v4515
    %5905 = vmatpush1.bf16.msra.mxu0 %v4514
    %5906 = vmatprep.subr.bf16.mxu0 %v4523
    %5907 = vmatpush1.bf16.msra.mxu0 %v4522
    %5908 = vmatprep.subr.bf16.mxu0 %v4531
    %5909 = vmatpush1.bf16.msra.mxu0 %v4530
    %5910 = vmatprep.subr.bf16.mxu0 %v4539
    %5911 = vmatpush1.bf16.msra.mxu0 %v4538
    %5912 = vmatprep.subr.bf16.mxu0 %v4547
    %5913 = vmatpush1.bf16.msra.mxu0 %v4546
    %5914 = vmatprep.subr.bf16.mxu0 %v4555
    %5915 = vmatpush1.bf16.msra.mxu0 %v4554
    %5916 = vmatprep.subr.bf16.mxu0 %v4563
    %5917 = vmatpush1.bf16.msra.mxu0 %v4562
    %5918 = vmatprep.mubr.bf16.mxu0 %v2032
    %5919 = vmatmul.mubr.bf16.gmra.mrb[0].mxu0 %v2031
    %v5920 = vpop.f32.mrb[0].mxu0
    %v5921 = vadd.f32 %v5808, %v5920
    %v5922 = vpop.f32.mrb[0].mxu0
    %v5923 = vadd.f32 %v5810, %v5922
    %v5924 = vpop.f32.mrb[0].mxu0
    %v5925 = vadd.f32 %v5812, %v5924
    %v5926 = vpop.f32.mrb[0].mxu0
    %v5927 = vadd.f32 %v5814, %v5926
    %5928 = vmatprep.mubr.bf16.mxu0 %v2040
    %5929 = vmatmul.mubr.bf16.gmra.mrb[0].mxu0 %v2039
    %v5930 = vpop.f32.mrb[0].mxu0
    %v5931 = vadd.f32 %v5818, %v5930
    %v5932 = vpop.f32.mrb[0].mxu0
    %v5933 = vadd.f32 %v5820, %v5932
    %v5934 = vpop.f32.mrb[0].mxu0
    %v5935 = vadd.f32 %v5822, %v5934
    %v5936 = vpop.f32.mrb[0].mxu0
    %v5937 = vadd.f32 %v5824, %v5936
    %5938 = vmatprep.mubr.bf16.mxu0 %v2048
    %5939 = vmatmul.mubr.bf16.gmra.mrb[0].mxu0 %v2047
    %v5940 = vpop.f32.mrb[0].mxu0
    %v5941 = vadd.f32 %v5828, %v5940
    %v5942 = vpop.f32.mrb[0].mxu0
    %v5943 = vadd.f32 %v5830, %v5942
    %v5944 = vpop.f32.mrb[0].mxu0
    %v5945 = vadd.f32 %v5832, %v5944
    %v5946 = vpop.f32.mrb[0].mxu0
    %v5947 = vadd.f32 %v5834, %v5946
    %5948 = vmatprep.mubr.bf16.mxu0 %v2056
    %5949 = vmatmul.mubr.bf16.gmra.mrb[0].mxu0 %v2055
    %v5950 = vpop.f32.mrb[0].mxu0
    %v5951 = vadd.f32 %v5838, %v5950
    %v5952 = vpop.f32.mrb[0].mxu0
    %v5953 = vadd.f32 %v5840, %v5952
    %v5954 = vpop.f32.mrb[0].mxu0
    %v5955 = vadd.f32 %v5842, %v5954
    %v5956 = vpop.f32.mrb[0].mxu0
    %v5957 = vadd.f32 %v5844, %v5956
    %5958 = vmatprep.mubr.bf16.mxu0 %v2064
    %5959 = vmatmul.mubr.bf16.gmra.mrb[0].mxu0 %v2063
    %v5960 = vpop.f32.mrb[0].mxu0
    %v5961 = vadd.f32 %v5848, %v5960
    %v5962 = vpop.f32.mrb[0].mxu0
    %v5963 = vadd.f32 %v5850, %v5962
    %v5964 = vpop.f32.mrb[0].mxu0
    %v5965 = vadd.f32 %v5852, %v5964
    %v5966 = vpop.f32.mrb[0].mxu0
    %v5967 = vadd.f32 %v5854, %v5966
    %5968 = vmatprep.mubr.bf16.mxu0 %v2072
    %5969 = vmatmul.mubr.bf16.gmra.mrb[0].mxu0 %v2071
    %v5970 = vpop.f32.mrb[0].mxu0
    %v5971 = vadd.f32 %v5858, %v5970
    %v5972 = vpop.f32.mrb[0].mxu0
    %v5973 = vadd.f32 %v5860, %v5972
    %v5974 = vpop.f32.mrb[0].mxu0
    %v5975 = vadd.f32 %v5862, %v5974
    %v5976 = vpop.f32.mrb[0].mxu0
    %v5977 = vadd.f32 %v5864, %v5976
    %5978 = vmatprep.mubr.bf16.mxu0 %v2080
    %5979 = vmatmul.mubr.bf16.gmra.mrb[0].mxu0 %v2079
    %v5980 = vpop.f32.mrb[0].mxu0
    %v5981 = vadd.f32 %v5868, %v5980
    %v5982 = vpop.f32.mrb[0].mxu0
    %v5983 = vadd.f32 %v5870, %v5982
    %v5984 = vpop.f32.mrb[0].mxu0
    %v5985 = vadd.f32 %v5872, %v5984
    %v5986 = vpop.f32.mrb[0].mxu0
    %v5987 = vadd.f32 %v5874, %v5986
    %5988 = vmatprep.mubr.bf16.mxu0 %v2088
    %5989 = vmatmul.mubr.bf16.gmra.mrb[0].mxu0 %v2087
    %v5990 = vpop.f32.mrb[0].mxu0
    %v5991 = vadd.f32 %v5878, %v5990
    %v5992 = vpop.f32.mrb[0].mxu0
    %v5993 = vadd.f32 %v5880, %v5992
    %v5994 = vpop.f32.mrb[0].mxu0
    %v5995 = vadd.f32 %v5882, %v5994
    %v5996 = vpop.f32.mrb[0].mxu0
    %v5997 = vadd.f32 %v5884, %v5996
    %5998 = vdwg.mxu0
    %5999 = vmatprep.subr.bf16.mxu0 %v4571
    %6000 = vmatpush1.bf16.msra.mxu0 %v4570
    %6001 = vmatprep.subr.bf16.mxu0 %v4579
    %6002 = vmatpush1.bf16.msra.mxu0 %v4578
    %6003 = vmatprep.subr.bf16.mxu0 %v4587
    %6004 = vmatpush1.bf16.msra.mxu0 %v4586
    %6005 = vmatprep.subr.bf16.mxu0 %v4595
    %6006 = vmatpush1.bf16.msra.mxu0 %v4594
    %6007 = vmatprep.subr.bf16.mxu0 %v4603
    %6008 = vmatpush1.bf16.msra.mxu0 %v4602
    %6009 = vmatprep.subr.bf16.mxu0 %v4611
    %6010 = vmatpush1.bf16.msra.mxu0 %v4610
    %6011 = vmatprep.subr.bf16.mxu0 %v4619
    %6012 = vmatpush1.bf16.msra.mxu0 %v4618
    %6013 = vmatprep.subr.bf16.mxu0 %v4627
    %6014 = vmatpush1.bf16.msra.mxu0 %v4626
    %6015 = vmatprep.subr.bf16.mxu0 %v4635
    %6016 = vmatpush1.bf16.msra.mxu0 %v4634
    %6017 = vmatprep.subr.bf16.mxu0 %v4643
    %6018 = vmatpush1.bf16.msra.mxu0 %v4642
    %6019 = vmatprep.subr.bf16.mxu0 %v4651
    %6020 = vmatpush1.bf16.msra.mxu0 %v4650
    %6021 = vmatprep.subr.bf16.mxu0 %v4659
    %6022 = vmatpush1.bf16.msra.mxu0 %v4658
    %6023 = vmatprep.subr.bf16.mxu0 %v4667
    %6024 = vmatpush1.bf16.msra.mxu0 %v4666
    %6025 = vmatprep.subr.bf16.mxu0 %v4675
    %6026 = vmatpush1.bf16.msra.mxu0 %v4674
    %6027 = vmatprep.subr.bf16.mxu0 %v4683
    %6028 = vmatpush1.bf16.msra.mxu0 %v4682
    %6029 = vmatprep.subr.bf16.mxu0 %v4691
    %6030 = vmatpush1.bf16.msra.mxu0 %v4690
    %6031 = vmatprep.mubr.bf16.mxu0 %v2034
    %6032 = vmatmul.mubr.bf16.gmra.mrb[0].mxu0 %v2033
    %v6033 = vpop.f32.mrb[0].mxu0
    %v6034 = vadd.f32 %v5921, %v6033
    %v6035 = vpop.f32.mrb[0].mxu0
    %v6036 = vadd.f32 %v5923, %v6035
    %v6037 = vpop.f32.mrb[0].mxu0
    %v6038 = vadd.f32 %v5925, %v6037
    %v6039 = vpop.f32.mrb[0].mxu0
    %v6040 = vadd.f32 %v5927, %v6039
    %6041 = vmatprep.mubr.bf16.mxu0 %v2042
    %6042 = vmatmul.mubr.bf16.gmra.mrb[0].mxu0 %v2041
    %v6043 = vpop.f32.mrb[0].mxu0
    %v6044 = vadd.f32 %v5931, %v6043
    %v6045 = vpop.f32.mrb[0].mxu0
    %v6046 = vadd.f32 %v5933, %v6045
    %v6047 = vpop.f32.mrb[0].mxu0
    %v6048 = vadd.f32 %v5935, %v6047
    %v6049 = vpop.f32.mrb[0].mxu0
    %v6050 = vadd.f32 %v5937, %v6049
    %6051 = vmatprep.mubr.bf16.mxu0 %v2050
    %6052 = vmatmul.mubr.bf16.gmra.mrb[0].mxu0 %v2049
    %v6053 = vpop.f32.mrb[0].mxu0
    %v6054 = vadd.f32 %v5941, %v6053
    %v6055 = vpop.f32.mrb[0].mxu0
    %v6056 = vadd.f32 %v5943, %v6055
    %v6057 = vpop.f32.mrb[0].mxu0
    %v6058 = vadd.f32 %v5945, %v6057
    %v6059 = vpop.f32.mrb[0].mxu0
    %v6060 = vadd.f32 %v5947, %v6059
    %6061 = vmatprep.mubr.bf16.mxu0 %v2058
    %6062 = vmatmul.mubr.bf16.gmra.mrb[0].mxu0 %v2057
    %v6063 = vpop.f32.mrb[0].mxu0
    %v6064 = vadd.f32 %v5951, %v6063
    %v6065 = vpop.f32.mrb[0].mxu0
    %v6066 = vadd.f32 %v5953, %v6065
    %v6067 = vpop.f32.mrb[0].mxu0
    %v6068 = vadd.f32 %v5955, %v6067
    %v6069 = vpop.f32.mrb[0].mxu0
    %v6070 = vadd.f32 %v5957, %v6069
    %6071 = vmatprep.mubr.bf16.mxu0 %v2066
    %6072 = vmatmul.mubr.bf16.gmra.mrb[0].mxu0 %v2065
    %v6073 = vpop.f32.mrb[0].mxu0
    %v6074 = vadd.f32 %v5961, %v6073
    %v6075 = vpop.f32.mrb[0].mxu0
    %v6076 = vadd.f32 %v5963, %v6075
    %v6077 = vpop.f32.mrb[0].mxu0
    %v6078 = vadd.f32 %v5965, %v6077
    %v6079 = vpop.f32.mrb[0].mxu0
    %v6080 = vadd.f32 %v5967, %v6079
    %6081 = vmatprep.mubr.bf16.mxu0 %v2074
    %6082 = vmatmul.mubr.bf16.gmra.mrb[0].mxu0 %v2073
    %v6083 = vpop.f32.mrb[0].mxu0
    %v6084 = vadd.f32 %v5971, %v6083
    %v6085 = vpop.f32.mrb[0].mxu0
    %v6086 = vadd.f32 %v5973, %v6085
    %v6087 = vpop.f32.mrb[0].mxu0
    %v6088 = vadd.f32 %v5975, %v6087
    %v6089 = vpop.f32.mrb[0].mxu0
    %v6090 = vadd.f32 %v5977, %v6089
    %6091 = vmatprep.mubr.bf16.mxu0 %v2082
    %6092 = vmatmul.mubr.bf16.gmra.mrb[0].mxu0 %v2081
    %v6093 = vpop.f32.mrb[0].mxu0
    %v6094 = vadd.f32 %v5981, %v6093
    %v6095 = vpop.f32.mrb[0].mxu0
    %v6096 = vadd.f32 %v5983, %v6095
    %v6097 = vpop.f32.mrb[0].mxu0
    %v6098 = vadd.f32 %v5985, %v6097
    %v6099 = vpop.f32.mrb[0].mxu0
    %v6100 = vadd.f32 %v5987, %v6099
    %6101 = vmatprep.mubr.bf16.mxu0 %v2090
    %6102 = vmatmul.mubr.bf16.gmra.mrb[0].mxu0 %v2089
    %v6103 = vpop.f32.mrb[0].mxu0
    %v6104 = vadd.f32 %v5991, %v6103
    %v6105 = vpop.f32.mrb[0].mxu0
    %v6106 = vadd.f32 %v5993, %v6105
    %v6107 = vpop.f32.mrb[0].mxu0
    %v6108 = vadd.f32 %v5995, %v6107
    %v6109 = vpop.f32.mrb[0].mxu0
    %v6110 = vadd.f32 %v5997, %v6109
    %6111 = vdwg.mxu0
    %6112 = vmatprep.subr.bf16.mxu0 %v4189
    %6113 = vmatpush1.bf16.msra.mxu0 %v4188
    %6114 = vmatprep.subr.bf16.mxu0 %v4197
    %6115 = vmatpush1.bf16.msra.mxu0 %v4196
    %6116 = vmatprep.subr.bf16.mxu0 %v4205
    %6117 = vmatpush1.bf16.msra.mxu0 %v4204
    %6118 = vmatprep.subr.bf16.mxu0 %v4213
    %6119 = vmatpush1.bf16.msra.mxu0 %v4212
    %6120 = vmatprep.subr.bf16.mxu0 %v4221
    %6121 = vmatpush1.bf16.msra.mxu0 %v4220
    %6122 = vmatprep.subr.bf16.mxu0 %v4229
    %6123 = vmatpush1.bf16.msra.mxu0 %v4228
    %6124 = vmatprep.subr.bf16.mxu0 %v4237
    %6125 = vmatpush1.bf16.msra.mxu0 %v4236
    %6126 = vmatprep.subr.bf16.mxu0 %v4245
    %6127 = vmatpush1.bf16.msra.mxu0 %v4244
    %6128 = vmatprep.subr.bf16.mxu0 %v4253
    %6129 = vmatpush1.bf16.msra.mxu0 %v4252
    %6130 = vmatprep.subr.bf16.mxu0 %v4261
    %6131 = vmatpush1.bf16.msra.mxu0 %v4260
    %6132 = vmatprep.subr.bf16.mxu0 %v4269
    %6133 = vmatpush1.bf16.msra.mxu0 %v4268
    %6134 = vmatprep.subr.bf16.mxu0 %v4277
    %6135 = vmatpush1.bf16.msra.mxu0 %v4276
    %6136 = vmatprep.subr.bf16.mxu0 %v4285
    %6137 = vmatpush1.bf16.msra.mxu0 %v4284
    %6138 = vmatprep.subr.bf16.mxu0 %v4293
    %6139 = vmatpush1.bf16.msra.mxu0 %v4292
    %6140 = vmatprep.subr.bf16.mxu0 %v4301
    %6141 = vmatpush1.bf16.msra.mxu0 %v4300
    %6142 = vmatprep.subr.bf16.mxu0 %v4309
    %6143 = vmatpush1.bf16.msra.mxu0 %v4308
    %6144 = vmatprep.mubr.bf16.mxu0 %v2028
    %6145 = vmatmul.mubr.bf16.gmra.mrb[0].mxu0 %v2027
    %v6146 = vpop.f32.mrb[0].mxu0
    %v6147 = vadd.f32 %v2627, %v6146
    %v6148 = vpop.f32.mrb[0].mxu0
    %v6149 = vadd.f32 %v2631, %v6148
    %v6150 = vpop.f32.mrb[0].mxu0
    %v6151 = vadd.f32 %v2627, %v6150
    %v6152 = vpop.f32.mrb[0].mxu0
    %v6153 = vadd.f32 %v2631, %v6152
    %6154 = vmatprep.mubr.bf16.mxu0 %v2036
    %6155 = vmatmul.mubr.bf16.gmra.mrb[0].mxu0 %v2035
    %v6156 = vpop.f32.mrb[0].mxu0
    %v6157 = vadd.f32 %v2627, %v6156
    %v6158 = vpop.f32.mrb[0].mxu0
    %v6159 = vadd.f32 %v2631, %v6158
    %v6160 = vpop.f32.mrb[0].mxu0
    %v6161 = vadd.f32 %v2627, %v6160
    %v6162 = vpop.f32.mrb[0].mxu0
    %v6163 = vadd.f32 %v2631, %v6162
    %6164 = vmatprep.mubr.bf16.mxu0 %v2044
    %6165 = vmatmul.mubr.bf16.gmra.mrb[0].mxu0 %v2043
    %v6166 = vpop.f32.mrb[0].mxu0
    %v6167 = vadd.f32 %v2627, %v6166
    %v6168 = vpop.f32.mrb[0].mxu0
    %v6169 = vadd.f32 %v2631, %v6168
    %v6170 = vpop.f32.mrb[0].mxu0
    %v6171 = vadd.f32 %v2627, %v6170
    %v6172 = vpop.f32.mrb[0].mxu0
    %v6173 = vadd.f32 %v2631, %v6172
    %6174 = vmatprep.mubr.bf16.mxu0 %v2052
    %6175 = vmatmul.mubr.bf16.gmra.mrb[0].mxu0 %v2051
    %v6176 = vpop.f32.mrb[0].mxu0
    %v6177 = vadd.f32 %v2627, %v6176
    %v6178 = vpop.f32.mrb[0].mxu0
    %v6179 = vadd.f32 %v2631, %v6178
    %v6180 = vpop.f32.mrb[0].mxu0
    %v6181 = vadd.f32 %v2627, %v6180
    %v6182 = vpop.f32.mrb[0].mxu0
    %v6183 = vadd.f32 %v2631, %v6182
    %6184 = vmatprep.mubr.bf16.mxu0 %v2060
    %6185 = vmatmul.mubr.bf16.gmra.mrb[0].mxu0 %v2059
    %v6186 = vpop.f32.mrb[0].mxu0
    %v6187 = vadd.f32 %v2627, %v6186
    %v6188 = vpop.f32.mrb[0].mxu0
    %v6189 = vadd.f32 %v2631, %v6188
    %v6190 = vpop.f32.mrb[0].mxu0
    %v6191 = vadd.f32 %v2627, %v6190
    %v6192 = vpop.f32.mrb[0].mxu0
    %v6193 = vadd.f32 %v2631, %v6192
    %6194 = vmatprep.mubr.bf16.mxu0 %v2068
    %6195 = vmatmul.mubr.bf16.gmra.mrb[0].mxu0 %v2067
    %v6196 = vpop.f32.mrb[0].mxu0
    %v6197 = vadd.f32 %v2627, %v6196
    %v6198 = vpop.f32.mrb[0].mxu0
    %v6199 = vadd.f32 %v2631, %v6198
    %v6200 = vpop.f32.mrb[0].mxu0
    %v6201 = vadd.f32 %v2627, %v6200
    %v6202 = vpop.f32.mrb[0].mxu0
    %v6203 = vadd.f32 %v2631, %v6202
    %6204 = vmatprep.mubr.bf16.mxu0 %v2076
    %6205 = vmatmul.mubr.bf16.gmra.mrb[0].mxu0 %v2075
    %v6206 = vpop.f32.mrb[0].mxu0
    %v6207 = vadd.f32 %v2627, %v6206
    %v6208 = vpop.f32.mrb[0].mxu0
    %v6209 = vadd.f32 %v2631, %v6208
    %v6210 = vpop.f32.mrb[0].mxu0
    %v6211 = vadd.f32 %v2627, %v6210
    %v6212 = vpop.f32.mrb[0].mxu0
    %v6213 = vadd.f32 %v2631, %v6212
    %6214 = vmatprep.mubr.bf16.mxu0 %v2084
    %6215 = vmatmul.mubr.bf16.gmra.mrb[0].mxu0 %v2083
    %v6216 = vpop.f32.mrb[0].mxu0
    %v6217 = vadd.f32 %v2627, %v6216
    %v6218 = vpop.f32.mrb[0].mxu0
    %v6219 = vadd.f32 %v2631, %v6218
    %v6220 = vpop.f32.mrb[0].mxu0
    %v6221 = vadd.f32 %v2627, %v6220
    %v6222 = vpop.f32.mrb[0].mxu0
    %v6223 = vadd.f32 %v2631, %v6222
    %6224 = vdwg.mxu0
    %6225 = vmatprep.subr.bf16.mxu0 %v4317
    %6226 = vmatpush1.bf16.msra.mxu0 %v4316
    %6227 = vmatprep.subr.bf16.mxu0 %v4325
    %6228 = vmatpush1.bf16.msra.mxu0 %v4324
    %6229 = vmatprep.subr.bf16.mxu0 %v4333
    %6230 = vmatpush1.bf16.msra.mxu0 %v4332
    %6231 = vmatprep.subr.bf16.mxu0 %v4341
    %6232 = vmatpush1.bf16.msra.mxu0 %v4340
    %6233 = vmatprep.subr.bf16.mxu0 %v4349
    %6234 = vmatpush1.bf16.msra.mxu0 %v4348
    %6235 = vmatprep.subr.bf16.mxu0 %v4357
    %6236 = vmatpush1.bf16.msra.mxu0 %v4356
    %6237 = vmatprep.subr.bf16.mxu0 %v4365
    %6238 = vmatpush1.bf16.msra.mxu0 %v4364
    %6239 = vmatprep.subr.bf16.mxu0 %v4373
    %6240 = vmatpush1.bf16.msra.mxu0 %v4372
    %6241 = vmatprep.subr.bf16.mxu0 %v4381
    %6242 = vmatpush1.bf16.msra.mxu0 %v4380
    %6243 = vmatprep.subr.bf16.mxu0 %v4389
    %6244 = vmatpush1.bf16.msra.mxu0 %v4388
    %6245 = vmatprep.subr.bf16.mxu0 %v4397
    %6246 = vmatpush1.bf16.msra.mxu0 %v4396
    %6247 = vmatprep.subr.bf16.mxu0 %v4405
    %6248 = vmatpush1.bf16.msra.mxu0 %v4404
    %6249 = vmatprep.subr.bf16.mxu0 %v4413
    %6250 = vmatpush1.bf16.msra.mxu0 %v4412
    %6251 = vmatprep.subr.bf16.mxu0 %v4421
    %6252 = vmatpush1.bf16.msra.mxu0 %v4420
    %6253 = vmatprep.subr.bf16.mxu0 %v4429
    %6254 = vmatpush1.bf16.msra.mxu0 %v4428
    %6255 = vmatprep.subr.bf16.mxu0 %v4437
    %6256 = vmatpush1.bf16.msra.mxu0 %v4436
    %6257 = vmatprep.mubr.bf16.mxu0 %v2030
    %6258 = vmatmul.mubr.bf16.gmra.mrb[0].mxu0 %v2029
    %v6259 = vpop.f32.mrb[0].mxu0
    %v6260 = vadd.f32 %v6147, %v6259
    %v6261 = vpop.f32.mrb[0].mxu0
    %v6262 = vadd.f32 %v6149, %v6261
    %v6263 = vpop.f32.mrb[0].mxu0
    %v6264 = vadd.f32 %v6151, %v6263
    %v6265 = vpop.f32.mrb[0].mxu0
    %v6266 = vadd.f32 %v6153, %v6265
    %6267 = vmatprep.mubr.bf16.mxu0 %v2038
    %6268 = vmatmul.mubr.bf16.gmra.mrb[0].mxu0 %v2037
    %v6269 = vpop.f32.mrb[0].mxu0
    %v6270 = vadd.f32 %v6157, %v6269
    %v6271 = vpop.f32.mrb[0].mxu0
    %v6272 = vadd.f32 %v6159, %v6271
    %v6273 = vpop.f32.mrb[0].mxu0
    %v6274 = vadd.f32 %v6161, %v6273
    %v6275 = vpop.f32.mrb[0].mxu0
    %v6276 = vadd.f32 %v6163, %v6275
    %6277 = vmatprep.mubr.bf16.mxu0 %v2046
    %6278 = vmatmul.mubr.bf16.gmra.mrb[0].mxu0 %v2045
    %v6279 = vpop.f32.mrb[0].mxu0
    %v6280 = vadd.f32 %v6167, %v6279
    %v6281 = vpop.f32.mrb[0].mxu0
    %v6282 = vadd.f32 %v6169, %v6281
    %v6283 = vpop.f32.mrb[0].mxu0
    %v6284 = vadd.f32 %v6171, %v6283
    %v6285 = vpop.f32.mrb[0].mxu0
    %v6286 = vadd.f32 %v6173, %v6285
    %6287 = vmatprep.mubr.bf16.mxu0 %v2054
    %6288 = vmatmul.mubr.bf16.gmra.mrb[0].mxu0 %v2053
    %v6289 = vpop.f32.mrb[0].mxu0
    %v6290 = vadd.f32 %v6177, %v6289
    %v6291 = vpop.f32.mrb[0].mxu0
    %v6292 = vadd.f32 %v6179, %v6291
    %v6293 = vpop.f32.mrb[0].mxu0
    %v6294 = vadd.f32 %v6181, %v6293
    %v6295 = vpop.f32.mrb[0].mxu0
    %v6296 = vadd.f32 %v6183, %v6295
    %6297 = vmatprep.mubr.bf16.mxu0 %v2062
    %6298 = vmatmul.mubr.bf16.gmra.mrb[0].mxu0 %v2061
    %v6299 = vpop.f32.mrb[0].mxu0
    %v6300 = vadd.f32 %v6187, %v6299
    %v6301 = vpop.f32.mrb[0].mxu0
    %v6302 = vadd.f32 %v6189, %v6301
    %v6303 = vpop.f32.mrb[0].mxu0
    %v6304 = vadd.f32 %v6191, %v6303
    %v6305 = vpop.f32.mrb[0].mxu0
    %v6306 = vadd.f32 %v6193, %v6305
    %6307 = vmatprep.mubr.bf16.mxu0 %v2070
    %6308 = vmatmul.mubr.bf16.gmra.mrb[0].mxu0 %v2069
    %v6309 = vpop.f32.mrb[0].mxu0
    %v6310 = vadd.f32 %v6197, %v6309
    %v6311 = vpop.f32.mrb[0].mxu0
    %v6312 = vadd.f32 %v6199, %v6311
    %v6313 = vpop.f32.mrb[0].mxu0
    %v6314 = vadd.f32 %v6201, %v6313
    %v6315 = vpop.f32.mrb[0].mxu0
    %v6316 = vadd.f32 %v6203, %v6315
    %6317 = vmatprep.mubr.bf16.mxu0 %v2078
    %6318 = vmatmul.mubr.bf16.gmra.mrb[0].mxu0 %v2077
    %v6319 = vpop.f32.mrb[0].mxu0
    %v6320 = vadd.f32 %v6207, %v6319
    %v6321 = vpop.f32.mrb[0].mxu0
    %v6322 = vadd.f32 %v6209, %v6321
    %v6323 = vpop.f32.mrb[0].mxu0
    %v6324 = vadd.f32 %v6211, %v6323
    %v6325 = vpop.f32.mrb[0].mxu0
    %v6326 = vadd.f32 %v6213, %v6325
    %6327 = vmatprep.mubr.bf16.mxu0 %v2086
    %6328 = vmatmul.mubr.bf16.gmra.mrb[0].mxu0 %v2085
    %v6329 = vpop.f32.mrb[0].mxu0
    %v6330 = vadd.f32 %v6217, %v6329
    %v6331 = vpop.f32.mrb[0].mxu0
    %v6332 = vadd.f32 %v6219, %v6331
    %v6333 = vpop.f32.mrb[0].mxu0
    %v6334 = vadd.f32 %v6221, %v6333
    %v6335 = vpop.f32.mrb[0].mxu0
    %v6336 = vadd.f32 %v6223, %v6335
    %6337 = vdwg.mxu0
    %6338 = vmatprep.subr.bf16.mxu0 %v4445
    %6339 = vmatpush1.bf16.msra.mxu0 %v4444
    %6340 = vmatprep.subr.bf16.mxu0 %v4453
    %6341 = vmatpush1.bf16.msra.mxu0 %v4452
    %6342 = vmatprep.subr.bf16.mxu0 %v4461
    %6343 = vmatpush1.bf16.msra.mxu0 %v4460
    %6344 = vmatprep.subr.bf16.mxu0 %v4469
    %6345 = vmatpush1.bf16.msra.mxu0 %v4468
    %6346 = vmatprep.subr.bf16.mxu0 %v4477
    %6347 = vmatpush1.bf16.msra.mxu0 %v4476
    %6348 = vmatprep.subr.bf16.mxu0 %v4485
    %6349 = vmatpush1.bf16.msra.mxu0 %v4484
    %6350 = vmatprep.subr.bf16.mxu0 %v4493
    %6351 = vmatpush1.bf16.msra.mxu0 %v4492
    %6352 = vmatprep.subr.bf16.mxu0 %v4501
    %6353 = vmatpush1.bf16.msra.mxu0 %v4500
    %6354 = vmatprep.subr.bf16.mxu0 %v4509
    %6355 = vmatpush1.bf16.msra.mxu0 %v4508
    %6356 = vmatprep.subr.bf16.mxu0 %v4517
    %6357 = vmatpush1.bf16.msra.mxu0 %v4516
    %6358 = vmatprep.subr.bf16.mxu0 %v4525
    %6359 = vmatpush1.bf16.msra.mxu0 %v4524
    %6360 = vmatprep.subr.bf16.mxu0 %v4533
    %6361 = vmatpush1.bf16.msra.mxu0 %v4532
    %6362 = vmatprep.subr.bf16.mxu0 %v4541
    %6363 = vmatpush1.bf16.msra.mxu0 %v4540
    %6364 = vmatprep.subr.bf16.mxu0 %v4549
    %6365 = vmatpush1.bf16.msra.mxu0 %v4548
    %6366 = vmatprep.subr.bf16.mxu0 %v4557
    %6367 = vmatpush1.bf16.msra.mxu0 %v4556
    %6368 = vmatprep.subr.bf16.mxu0 %v4565
    %6369 = vmatpush1.bf16.msra.mxu0 %v4564
    %6370 = vmatprep.mubr.bf16.mxu0 %v2032
    %6371 = vmatmul.mubr.bf16.gmra.mrb[0].mxu0 %v2031
    %v6372 = vpop.f32.mrb[0].mxu0
    %v6373 = vadd.f32 %v6260, %v6372
    %v6374 = vpop.f32.mrb[0].mxu0
    %v6375 = vadd.f32 %v6262, %v6374
    %v6376 = vpop.f32.mrb[0].mxu0
    %v6377 = vadd.f32 %v6264, %v6376
    %v6378 = vpop.f32.mrb[0].mxu0
    %v6379 = vadd.f32 %v6266, %v6378
    %6380 = vmatprep.mubr.bf16.mxu0 %v2040
    %6381 = vmatmul.mubr.bf16.gmra.mrb[0].mxu0 %v2039
    %v6382 = vpop.f32.mrb[0].mxu0
    %v6383 = vadd.f32 %v6270, %v6382
    %v6384 = vpop.f32.mrb[0].mxu0
    %v6385 = vadd.f32 %v6272, %v6384
    %v6386 = vpop.f32.mrb[0].mxu0
    %v6387 = vadd.f32 %v6274, %v6386
    %v6388 = vpop.f32.mrb[0].mxu0
    %v6389 = vadd.f32 %v6276, %v6388
    %6390 = vmatprep.mubr.bf16.mxu0 %v2048
    %6391 = vmatmul.mubr.bf16.gmra.mrb[0].mxu0 %v2047
    %v6392 = vpop.f32.mrb[0].mxu0
    %v6393 = vadd.f32 %v6280, %v6392
    %v6394 = vpop.f32.mrb[0].mxu0
    %v6395 = vadd.f32 %v6282, %v6394
    %v6396 = vpop.f32.mrb[0].mxu0
    %v6397 = vadd.f32 %v6284, %v6396
    %v6398 = vpop.f32.mrb[0].mxu0
    %v6399 = vadd.f32 %v6286, %v6398
    %6400 = vmatprep.mubr.bf16.mxu0 %v2056
    %6401 = vmatmul.mubr.bf16.gmra.mrb[0].mxu0 %v2055
    %v6402 = vpop.f32.mrb[0].mxu0
    %v6403 = vadd.f32 %v6290, %v6402
    %v6404 = vpop.f32.mrb[0].mxu0
    %v6405 = vadd.f32 %v6292, %v6404
    %v6406 = vpop.f32.mrb[0].mxu0
    %v6407 = vadd.f32 %v6294, %v6406
    %v6408 = vpop.f32.mrb[0].mxu0
    %v6409 = vadd.f32 %v6296, %v6408
    %6410 = vmatprep.mubr.bf16.mxu0 %v2064
    %6411 = vmatmul.mubr.bf16.gmra.mrb[0].mxu0 %v2063
    %v6412 = vpop.f32.mrb[0].mxu0
    %v6413 = vadd.f32 %v6300, %v6412
    %v6414 = vpop.f32.mrb[0].mxu0
    %v6415 = vadd.f32 %v6302, %v6414
    %v6416 = vpop.f32.mrb[0].mxu0
    %v6417 = vadd.f32 %v6304, %v6416
    %v6418 = vpop.f32.mrb[0].mxu0
    %v6419 = vadd.f32 %v6306, %v6418
    %6420 = vmatprep.mubr.bf16.mxu0 %v2072
    %6421 = vmatmul.mubr.bf16.gmra.mrb[0].mxu0 %v2071
    %v6422 = vpop.f32.mrb[0].mxu0
    %v6423 = vadd.f32 %v6310, %v6422
    %v6424 = vpop.f32.mrb[0].mxu0
    %v6425 = vadd.f32 %v6312, %v6424
    %v6426 = vpop.f32.mrb[0].mxu0
    %v6427 = vadd.f32 %v6314, %v6426
    %v6428 = vpop.f32.mrb[0].mxu0
    %v6429 = vadd.f32 %v6316, %v6428
    %6430 = vmatprep.mubr.bf16.mxu0 %v2080
    %6431 = vmatmul.mubr.bf16.gmra.mrb[0].mxu0 %v2079
    %v6432 = vpop.f32.mrb[0].mxu0
    %v6433 = vadd.f32 %v6320, %v6432
    %v6434 = vpop.f32.mrb[0].mxu0
    %v6435 = vadd.f32 %v6322, %v6434
    %v6436 = vpop.f32.mrb[0].mxu0
    %v6437 = vadd.f32 %v6324, %v6436
    %v6438 = vpop.f32.mrb[0].mxu0
    %v6439 = vadd.f32 %v6326, %v6438
    %6440 = vmatprep.mubr.bf16.mxu0 %v2088
    %6441 = vmatmul.mubr.bf16.gmra.mrb[0].mxu0 %v2087
    %v6442 = vpop.f32.mrb[0].mxu0
    %v6443 = vadd.f32 %v6330, %v6442
    %v6444 = vpop.f32.mrb[0].mxu0
    %v6445 = vadd.f32 %v6332, %v6444
    %v6446 = vpop.f32.mrb[0].mxu0
    %v6447 = vadd.f32 %v6334, %v6446
    %v6448 = vpop.f32.mrb[0].mxu0
    %v6449 = vadd.f32 %v6336, %v6448
    %6450 = vdwg.mxu0
    %6451 = vmatprep.subr.bf16.mxu0 %v4573
    %6452 = vmatpush1.bf16.msra.mxu0 %v4572
    %6453 = vmatprep.subr.bf16.mxu0 %v4581
    %6454 = vmatpush1.bf16.msra.mxu0 %v4580
    %6455 = vmatprep.subr.bf16.mxu0 %v4589
    %6456 = vmatpush1.bf16.msra.mxu0 %v4588
    %6457 = vmatprep.subr.bf16.mxu0 %v4597
    %6458 = vmatpush1.bf16.msra.mxu0 %v4596
    %6459 = vmatprep.subr.bf16.mxu0 %v4605
    %6460 = vmatpush1.bf16.msra.mxu0 %v4604
    %6461 = vmatprep.subr.bf16.mxu0 %v4613
    %6462 = vmatpush1.bf16.msra.mxu0 %v4612
    %6463 = vmatprep.subr.bf16.mxu0 %v4621
    %6464 = vmatpush1.bf16.msra.mxu0 %v4620
    %6465 = vmatprep.subr.bf16.mxu0 %v4629
    %6466 = vmatpush1.bf16.msra.mxu0 %v4628
    %6467 = vmatprep.subr.bf16.mxu0 %v4637
    %6468 = vmatpush1.bf16.msra.mxu0 %v4636
    %6469 = vmatprep.subr.bf16.mxu0 %v4645
    %6470 = vmatpush1.bf16.msra.mxu0 %v4644
    %6471 = vmatprep.subr.bf16.mxu0 %v4653
    %6472 = vmatpush1.bf16.msra.mxu0 %v4652
    %6473 = vmatprep.subr.bf16.mxu0 %v4661
    %6474 = vmatpush1.bf16.msra.mxu0 %v4660
    %6475 = vmatprep.subr.bf16.mxu0 %v4669
    %6476 = vmatpush1.bf16.msra.mxu0 %v4668
    %6477 = vmatprep.subr.bf16.mxu0 %v4677
    %6478 = vmatpush1.bf16.msra.mxu0 %v4676
    %6479 = vmatprep.subr.bf16.mxu0 %v4685
    %6480 = vmatpush1.bf16.msra.mxu0 %v4684
    %6481 = vmatprep.subr.bf16.mxu0 %v4693
    %6482 = vmatpush1.bf16.msra.mxu0 %v4692
    %6483 = vmatprep.mubr.bf16.mxu0 %v2034
    %6484 = vmatmul.mubr.bf16.gmra.mrb[0].mxu0 %v2033
    %v6485 = vpop.f32.mrb[0].mxu0
    %v6486 = vadd.f32 %v6373, %v6485
    %v6487 = vpop.f32.mrb[0].mxu0
    %v6488 = vadd.f32 %v6375, %v6487
    %v6489 = vpop.f32.mrb[0].mxu0
    %v6490 = vadd.f32 %v6377, %v6489
    %v6491 = vpop.f32.mrb[0].mxu0
    %v6492 = vadd.f32 %v6379, %v6491
    %6493 = vmatprep.mubr.bf16.mxu0 %v2042
    %6494 = vmatmul.mubr.bf16.gmra.mrb[0].mxu0 %v2041
    %v6495 = vpop.f32.mrb[0].mxu0
    %v6496 = vadd.f32 %v6383, %v6495
    %v6497 = vpop.f32.mrb[0].mxu0
    %v6498 = vadd.f32 %v6385, %v6497
    %v6499 = vpop.f32.mrb[0].mxu0
    %v6500 = vadd.f32 %v6387, %v6499
    %v6501 = vpop.f32.mrb[0].mxu0
    %v6502 = vadd.f32 %v6389, %v6501
    %6503 = vmatprep.mubr.bf16.mxu0 %v2050
    %6504 = vmatmul.mubr.bf16.gmra.mrb[0].mxu0 %v2049
    %v6505 = vpop.f32.mrb[0].mxu0
    %v6506 = vadd.f32 %v6393, %v6505
    %v6507 = vpop.f32.mrb[0].mxu0
    %v6508 = vadd.f32 %v6395, %v6507
    %v6509 = vpop.f32.mrb[0].mxu0
    %v6510 = vadd.f32 %v6397, %v6509
    %v6511 = vpop.f32.mrb[0].mxu0
    %v6512 = vadd.f32 %v6399, %v6511
    %6513 = vmatprep.mubr.bf16.mxu0 %v2058
    %6514 = vmatmul.mubr.bf16.gmra.mrb[0].mxu0 %v2057
    %v6515 = vpop.f32.mrb[0].mxu0
    %v6516 = vadd.f32 %v6403, %v6515
    %v6517 = vpop.f32.mrb[0].mxu0
    %v6518 = vadd.f32 %v6405, %v6517
    %v6519 = vpop.f32.mrb[0].mxu0
    %v6520 = vadd.f32 %v6407, %v6519
    %v6521 = vpop.f32.mrb[0].mxu0
    %v6522 = vadd.f32 %v6409, %v6521
    %6523 = vmatprep.mubr.bf16.mxu0 %v2066
    %6524 = vmatmul.mubr.bf16.gmra.mrb[0].mxu0 %v2065
    %v6525 = vpop.f32.mrb[0].mxu0
    %v6526 = vadd.f32 %v6413, %v6525
    %v6527 = vpop.f32.mrb[0].mxu0
    %v6528 = vadd.f32 %v6415, %v6527
    %v6529 = vpop.f32.mrb[0].mxu0
    %v6530 = vadd.f32 %v6417, %v6529
    %v6531 = vpop.f32.mrb[0].mxu0
    %v6532 = vadd.f32 %v6419, %v6531
    %6533 = vmatprep.mubr.bf16.mxu0 %v2074
    %6534 = vmatmul.mubr.bf16.gmra.mrb[0].mxu0 %v2073
    %v6535 = vpop.f32.mrb[0].mxu0
    %v6536 = vadd.f32 %v6423, %v6535
    %v6537 = vpop.f32.mrb[0].mxu0
    %v6538 = vadd.f32 %v6425, %v6537
    %v6539 = vpop.f32.mrb[0].mxu0
    %v6540 = vadd.f32 %v6427, %v6539
    %v6541 = vpop.f32.mrb[0].mxu0
    %v6542 = vadd.f32 %v6429, %v6541
    %6543 = vmatprep.mubr.bf16.mxu0 %v2082
    %6544 = vmatmul.mubr.bf16.gmra.mrb[0].mxu0 %v2081
    %v6545 = vpop.f32.mrb[0].mxu0
    %v6546 = vadd.f32 %v6433, %v6545
    %v6547 = vpop.f32.mrb[0].mxu0
    %v6548 = vadd.f32 %v6435, %v6547
    %v6549 = vpop.f32.mrb[0].mxu0
    %v6550 = vadd.f32 %v6437, %v6549
    %v6551 = vpop.f32.mrb[0].mxu0
    %v6552 = vadd.f32 %v6439, %v6551
    %6553 = vmatprep.mubr.bf16.mxu0 %v2090
    %6554 = vmatmul.mubr.bf16.gmra.mrb[0].mxu0 %v2089
    %v6555 = vpop.f32.mrb[0].mxu0
    %v6556 = vadd.f32 %v6443, %v6555
    %v6557 = vpop.f32.mrb[0].mxu0
    %v6558 = vadd.f32 %v6445, %v6557
    %v6559 = vpop.f32.mrb[0].mxu0
    %v6560 = vadd.f32 %v6447, %v6559
    %v6561 = vpop.f32.mrb[0].mxu0
    %v6562 = vadd.f32 %v6449, %v6561
    %6563 = vdwg.mxu0
    %6564 = vmatprep.subr.bf16.mxu0 %v4191
    %6565 = vmatpush1.bf16.msra.mxu0 %v4190
    %6566 = vmatprep.subr.bf16.mxu0 %v4199
    %6567 = vmatpush1.bf16.msra.mxu0 %v4198
    %6568 = vmatprep.subr.bf16.mxu0 %v4207
    %6569 = vmatpush1.bf16.msra.mxu0 %v4206
    %6570 = vmatprep.subr.bf16.mxu0 %v4215
    %6571 = vmatpush1.bf16.msra.mxu0 %v4214
    %6572 = vmatprep.subr.bf16.mxu0 %v4223
    %6573 = vmatpush1.bf16.msra.mxu0 %v4222
    %6574 = vmatprep.subr.bf16.mxu0 %v4231
    %6575 = vmatpush1.bf16.msra.mxu0 %v4230
    %6576 = vmatprep.subr.bf16.mxu0 %v4239
    %6577 = vmatpush1.bf16.msra.mxu0 %v4238
    %6578 = vmatprep.subr.bf16.mxu0 %v4247
    %6579 = vmatpush1.bf16.msra.mxu0 %v4246
    %6580 = vmatprep.subr.bf16.mxu0 %v4255
    %6581 = vmatpush1.bf16.msra.mxu0 %v4254
    %6582 = vmatprep.subr.bf16.mxu0 %v4263
    %6583 = vmatpush1.bf16.msra.mxu0 %v4262
    %6584 = vmatprep.subr.bf16.mxu0 %v4271
    %6585 = vmatpush1.bf16.msra.mxu0 %v4270
    %6586 = vmatprep.subr.bf16.mxu0 %v4279
    %6587 = vmatpush1.bf16.msra.mxu0 %v4278
    %6588 = vmatprep.subr.bf16.mxu0 %v4287
    %6589 = vmatpush1.bf16.msra.mxu0 %v4286
    %6590 = vmatprep.subr.bf16.mxu0 %v4295
    %6591 = vmatpush1.bf16.msra.mxu0 %v4294
    %6592 = vmatprep.subr.bf16.mxu0 %v4303
    %6593 = vmatpush1.bf16.msra.mxu0 %v4302
    %6594 = vmatprep.subr.bf16.mxu0 %v4311
    %6595 = vmatpush1.bf16.msra.mxu0 %v4310
    %6596 = vmatprep.mubr.bf16.mxu0 %v2028
    %6597 = vmatmul.mubr.bf16.gmra.mrb[0].mxu0 %v2027
    %v6598 = vpop.f32.mrb[0].mxu0
    %v6599 = vadd.f32 %v2635, %v6598
    %v6600 = vpop.f32.mrb[0].mxu0
    %v6601 = vadd.f32 %v2639, %v6600
    %v6602 = vpop.f32.mrb[0].mxu0
    %v6603 = vadd.f32 %v2635, %v6602
    %v6604 = vpop.f32.mrb[0].mxu0
    %v6605 = vadd.f32 %v2639, %v6604
    %6606 = vmatprep.mubr.bf16.mxu0 %v2036
    %6607 = vmatmul.mubr.bf16.gmra.mrb[0].mxu0 %v2035
    %v6608 = vpop.f32.mrb[0].mxu0
    %v6609 = vadd.f32 %v2635, %v6608
    %v6610 = vpop.f32.mrb[0].mxu0
    %v6611 = vadd.f32 %v2639, %v6610
    %v6612 = vpop.f32.mrb[0].mxu0
    %v6613 = vadd.f32 %v2635, %v6612
    %v6614 = vpop.f32.mrb[0].mxu0
    %v6615 = vadd.f32 %v2639, %v6614
    %6616 = vmatprep.mubr.bf16.mxu0 %v2044
    %6617 = vmatmul.mubr.bf16.gmra.mrb[0].mxu0 %v2043
    %v6618 = vpop.f32.mrb[0].mxu0
    %v6619 = vadd.f32 %v2635, %v6618
    %v6620 = vpop.f32.mrb[0].mxu0
    %v6621 = vadd.f32 %v2639, %v6620
    %v6622 = vpop.f32.mrb[0].mxu0
    %v6623 = vadd.f32 %v2635, %v6622
    %v6624 = vpop.f32.mrb[0].mxu0
    %v6625 = vadd.f32 %v2639, %v6624
    %6626 = vmatprep.mubr.bf16.mxu0 %v2052
    %6627 = vmatmul.mubr.bf16.gmra.mrb[0].mxu0 %v2051
    %v6628 = vpop.f32.mrb[0].mxu0
    %v6629 = vadd.f32 %v2635, %v6628
    %v6630 = vpop.f32.mrb[0].mxu0
    %v6631 = vadd.f32 %v2639, %v6630
    %v6632 = vpop.f32.mrb[0].mxu0
    %v6633 = vadd.f32 %v2635, %v6632
    %v6634 = vpop.f32.mrb[0].mxu0
    %v6635 = vadd.f32 %v2639, %v6634
    %6636 = vmatprep.mubr.bf16.mxu0 %v2060
    %6637 = vmatmul.mubr.bf16.gmra.mrb[0].mxu0 %v2059
    %v6638 = vpop.f32.mrb[0].mxu0
    %v6639 = vadd.f32 %v2635, %v6638
    %v6640 = vpop.f32.mrb[0].mxu0
    %v6641 = vadd.f32 %v2639, %v6640
    %v6642 = vpop.f32.mrb[0].mxu0
    %v6643 = vadd.f32 %v2635, %v6642
    %v6644 = vpop.f32.mrb[0].mxu0
    %v6645 = vadd.f32 %v2639, %v6644
    %6646 = vmatprep.mubr.bf16.mxu0 %v2068
    %6647 = vmatmul.mubr.bf16.gmra.mrb[0].mxu0 %v2067
    %v6648 = vpop.f32.mrb[0].mxu0
    %v6649 = vadd.f32 %v2635, %v6648
    %v6650 = vpop.f32.mrb[0].mxu0
    %v6651 = vadd.f32 %v2639, %v6650
    %v6652 = vpop.f32.mrb[0].mxu0
    %v6653 = vadd.f32 %v2635, %v6652
    %v6654 = vpop.f32.mrb[0].mxu0
    %v6655 = vadd.f32 %v2639, %v6654
    %6656 = vmatprep.mubr.bf16.mxu0 %v2076
    %6657 = vmatmul.mubr.bf16.gmra.mrb[0].mxu0 %v2075
    %v6658 = vpop.f32.mrb[0].mxu0
    %v6659 = vadd.f32 %v2635, %v6658
    %v6660 = vpop.f32.mrb[0].mxu0
    %v6661 = vadd.f32 %v2639, %v6660
    %v6662 = vpop.f32.mrb[0].mxu0
    %v6663 = vadd.f32 %v2635, %v6662
    %v6664 = vpop.f32.mrb[0].mxu0
    %v6665 = vadd.f32 %v2639, %v6664
    %6666 = vmatprep.mubr.bf16.mxu0 %v2084
    %6667 = vmatmul.mubr.bf16.gmra.mrb[0].mxu0 %v2083
    %v6668 = vpop.f32.mrb[0].mxu0
    %v6669 = vadd.f32 %v2635, %v6668
    %v6670 = vpop.f32.mrb[0].mxu0
    %v6671 = vadd.f32 %v2639, %v6670
    %v6672 = vpop.f32.mrb[0].mxu0
    %v6673 = vadd.f32 %v2635, %v6672
    %v6674 = vpop.f32.mrb[0].mxu0
    %v6675 = vadd.f32 %v2639, %v6674
    %6676 = vdwg.mxu0
    %6677 = vmatprep.subr.bf16.mxu0 %v4319
    %6678 = vmatpush1.bf16.msra.mxu0 %v4318
    %6679 = vmatprep.subr.bf16.mxu0 %v4327
    %6680 = vmatpush1.bf16.msra.mxu0 %v4326
    %6681 = vmatprep.subr.bf16.mxu0 %v4335
    %6682 = vmatpush1.bf16.msra.mxu0 %v4334
    %6683 = vmatprep.subr.bf16.mxu0 %v4343
    %6684 = vmatpush1.bf16.msra.mxu0 %v4342
    %6685 = vmatprep.subr.bf16.mxu0 %v4351
    %6686 = vmatpush1.bf16.msra.mxu0 %v4350
    %6687 = vmatprep.subr.bf16.mxu0 %v4359
    %6688 = vmatpush1.bf16.msra.mxu0 %v4358
    %6689 = vmatprep.subr.bf16.mxu0 %v4367
    %6690 = vmatpush1.bf16.msra.mxu0 %v4366
    %6691 = vmatprep.subr.bf16.mxu0 %v4375
    %6692 = vmatpush1.bf16.msra.mxu0 %v4374
    %6693 = vmatprep.subr.bf16.mxu0 %v4383
    %6694 = vmatpush1.bf16.msra.mxu0 %v4382
    %6695 = vmatprep.subr.bf16.mxu0 %v4391
    %6696 = vmatpush1.bf16.msra.mxu0 %v4390
    %6697 = vmatprep.subr.bf16.mxu0 %v4399
    %6698 = vmatpush1.bf16.msra.mxu0 %v4398
    %6699 = vmatprep.subr.bf16.mxu0 %v4407
    %6700 = vmatpush1.bf16.msra.mxu0 %v4406
    %6701 = vmatprep.subr.bf16.mxu0 %v4415
    %6702 = vmatpush1.bf16.msra.mxu0 %v4414
    %6703 = vmatprep.subr.bf16.mxu0 %v4423
    %6704 = vmatpush1.bf16.msra.mxu0 %v4422
    %6705 = vmatprep.subr.bf16.mxu0 %v4431
    %6706 = vmatpush1.bf16.msra.mxu0 %v4430
    %6707 = vmatprep.subr.bf16.mxu0 %v4439
    %6708 = vmatpush1.bf16.msra.mxu0 %v4438
    %6709 = vmatprep.mubr.bf16.mxu0 %v2030
    %6710 = vmatmul.mubr.bf16.gmra.mrb[0].mxu0 %v2029
    %v6711 = vpop.f32.mrb[0].mxu0
    %v6712 = vadd.f32 %v6599, %v6711
    %v6713 = vpop.f32.mrb[0].mxu0
    %v6714 = vadd.f32 %v6601, %v6713
    %v6715 = vpop.f32.mrb[0].mxu0
    %v6716 = vadd.f32 %v6603, %v6715
    %v6717 = vpop.f32.mrb[0].mxu0
    %v6718 = vadd.f32 %v6605, %v6717
    %6719 = vmatprep.mubr.bf16.mxu0 %v2038
    %6720 = vmatmul.mubr.bf16.gmra.mrb[0].mxu0 %v2037
    %v6721 = vpop.f32.mrb[0].mxu0
    %v6722 = vadd.f32 %v6609, %v6721
    %v6723 = vpop.f32.mrb[0].mxu0
    %v6724 = vadd.f32 %v6611, %v6723
    %v6725 = vpop.f32.mrb[0].mxu0
    %v6726 = vadd.f32 %v6613, %v6725
    %v6727 = vpop.f32.mrb[0].mxu0
    %v6728 = vadd.f32 %v6615, %v6727
    %6729 = vmatprep.mubr.bf16.mxu0 %v2046
    %6730 = vmatmul.mubr.bf16.gmra.mrb[0].mxu0 %v2045
    %v6731 = vpop.f32.mrb[0].mxu0
    %v6732 = vadd.f32 %v6619, %v6731
    %v6733 = vpop.f32.mrb[0].mxu0
    %v6734 = vadd.f32 %v6621, %v6733
    %v6735 = vpop.f32.mrb[0].mxu0
    %v6736 = vadd.f32 %v6623, %v6735
    %v6737 = vpop.f32.mrb[0].mxu0
    %v6738 = vadd.f32 %v6625, %v6737
    %6739 = vmatprep.mubr.bf16.mxu0 %v2054
    %6740 = vmatmul.mubr.bf16.gmra.mrb[0].mxu0 %v2053
    %v6741 = vpop.f32.mrb[0].mxu0
    %v6742 = vadd.f32 %v6629, %v6741
    %v6743 = vpop.f32.mrb[0].mxu0
    %v6744 = vadd.f32 %v6631, %v6743
    %v6745 = vpop.f32.mrb[0].mxu0
    %v6746 = vadd.f32 %v6633, %v6745
    %v6747 = vpop.f32.mrb[0].mxu0
    %v6748 = vadd.f32 %v6635, %v6747
    %6749 = vmatprep.mubr.bf16.mxu0 %v2062
    %6750 = vmatmul.mubr.bf16.gmra.mrb[0].mxu0 %v2061
    %v6751 = vpop.f32.mrb[0].mxu0
    %v6752 = vadd.f32 %v6639, %v6751
    %v6753 = vpop.f32.mrb[0].mxu0
    %v6754 = vadd.f32 %v6641, %v6753
    %v6755 = vpop.f32.mrb[0].mxu0
    %v6756 = vadd.f32 %v6643, %v6755
    %v6757 = vpop.f32.mrb[0].mxu0
    %v6758 = vadd.f32 %v6645, %v6757
    %6759 = vmatprep.mubr.bf16.mxu0 %v2070
    %6760 = vmatmul.mubr.bf16.gmra.mrb[0].mxu0 %v2069
    %v6761 = vpop.f32.mrb[0].mxu0
    %v6762 = vadd.f32 %v6649, %v6761
    %v6763 = vpop.f32.mrb[0].mxu0
    %v6764 = vadd.f32 %v6651, %v6763
    %v6765 = vpop.f32.mrb[0].mxu0
    %v6766 = vadd.f32 %v6653, %v6765
    %v6767 = vpop.f32.mrb[0].mxu0
    %v6768 = vadd.f32 %v6655, %v6767
    %6769 = vmatprep.mubr.bf16.mxu0 %v2078
    %6770 = vmatmul.mubr.bf16.gmra.mrb[0].mxu0 %v2077
    %v6771 = vpop.f32.mrb[0].mxu0
    %v6772 = vadd.f32 %v6659, %v6771
    %v6773 = vpop.f32.mrb[0].mxu0
    %v6774 = vadd.f32 %v6661, %v6773
    %v6775 = vpop.f32.mrb[0].mxu0
    %v6776 = vadd.f32 %v6663, %v6775
    %v6777 = vpop.f32.mrb[0].mxu0
    %v6778 = vadd.f32 %v6665, %v6777
    %6779 = vmatprep.mubr.bf16.mxu0 %v2086
    %6780 = vmatmul.mubr.bf16.gmra.mrb[0].mxu0 %v2085
    %v6781 = vpop.f32.mrb[0].mxu0
    %v6782 = vadd.f32 %v6669, %v6781
    %v6783 = vpop.f32.mrb[0].mxu0
    %v6784 = vadd.f32 %v6671, %v6783
    %v6785 = vpop.f32.mrb[0].mxu0
    %v6786 = vadd.f32 %v6673, %v6785
    %v6787 = vpop.f32.mrb[0].mxu0
    %v6788 = vadd.f32 %v6675, %v6787
    %6789 = vdwg.mxu0
    %6790 = vmatprep.subr.bf16.mxu0 %v4447
    %6791 = vmatpush1.bf16.msra.mxu0 %v4446
    %6792 = vmatprep.subr.bf16.mxu0 %v4455
    %6793 = vmatpush1.bf16.msra.mxu0 %v4454
    %6794 = vmatprep.subr.bf16.mxu0 %v4463
    %6795 = vmatpush1.bf16.msra.mxu0 %v4462
    %6796 = vmatprep.subr.bf16.mxu0 %v4471
    %6797 = vmatpush1.bf16.msra.mxu0 %v4470
    %6798 = vmatprep.subr.bf16.mxu0 %v4479
    %6799 = vmatpush1.bf16.msra.mxu0 %v4478
    %6800 = vmatprep.subr.bf16.mxu0 %v4487
    %6801 = vmatpush1.bf16.msra.mxu0 %v4486
    %6802 = vmatprep.subr.bf16.mxu0 %v4495
    %6803 = vmatpush1.bf16.msra.mxu0 %v4494
    %6804 = vmatprep.subr.bf16.mxu0 %v4503
    %6805 = vmatpush1.bf16.msra.mxu0 %v4502
    %6806 = vmatprep.subr.bf16.mxu0 %v4511
    %6807 = vmatpush1.bf16.msra.mxu0 %v4510
    %6808 = vmatprep.subr.bf16.mxu0 %v4519
    %6809 = vmatpush1.bf16.msra.mxu0 %v4518
    %6810 = vmatprep.subr.bf16.mxu0 %v4527
    %6811 = vmatpush1.bf16.msra.mxu0 %v4526
    %6812 = vmatprep.subr.bf16.mxu0 %v4535
    %6813 = vmatpush1.bf16.msra.mxu0 %v4534
    %6814 = vmatprep.subr.bf16.mxu0 %v4543
    %6815 = vmatpush1.bf16.msra.mxu0 %v4542
    %6816 = vmatprep.subr.bf16.mxu0 %v4551
    %6817 = vmatpush1.bf16.msra.mxu0 %v4550
    %6818 = vmatprep.subr.bf16.mxu0 %v4559
    %6819 = vmatpush1.bf16.msra.mxu0 %v4558
    %6820 = vmatprep.subr.bf16.mxu0 %v4567
    %6821 = vmatpush1.bf16.msra.mxu0 %v4566
    %6822 = vmatprep.mubr.bf16.mxu0 %v2032
    %6823 = vmatmul.mubr.bf16.gmra.mrb[0].mxu0 %v2031
    %v6824 = vpop.f32.mrb[0].mxu0
    %v6825 = vadd.f32 %v6712, %v6824
    %v6826 = vpop.f32.mrb[0].mxu0
    %v6827 = vadd.f32 %v6714, %v6826
    %v6828 = vpop.f32.mrb[0].mxu0
    %v6829 = vadd.f32 %v6716, %v6828
    %v6830 = vpop.f32.mrb[0].mxu0
    %v6831 = vadd.f32 %v6718, %v6830
    %6832 = vmatprep.mubr.bf16.mxu0 %v2040
    %6833 = vmatmul.mubr.bf16.gmra.mrb[0].mxu0 %v2039
    %v6834 = vpop.f32.mrb[0].mxu0
    %v6835 = vadd.f32 %v6722, %v6834
    %v6836 = vpop.f32.mrb[0].mxu0
    %v6837 = vadd.f32 %v6724, %v6836
    %v6838 = vpop.f32.mrb[0].mxu0
    %v6839 = vadd.f32 %v6726, %v6838
    %v6840 = vpop.f32.mrb[0].mxu0
    %v6841 = vadd.f32 %v6728, %v6840
    %6842 = vmatprep.mubr.bf16.mxu0 %v2048
    %6843 = vmatmul.mubr.bf16.gmra.mrb[0].mxu0 %v2047
    %v6844 = vpop.f32.mrb[0].mxu0
    %v6845 = vadd.f32 %v6732, %v6844
    %v6846 = vpop.f32.mrb[0].mxu0
    %v6847 = vadd.f32 %v6734, %v6846
    %v6848 = vpop.f32.mrb[0].mxu0
    %v6849 = vadd.f32 %v6736, %v6848
    %v6850 = vpop.f32.mrb[0].mxu0
    %v6851 = vadd.f32 %v6738, %v6850
    %6852 = vmatprep.mubr.bf16.mxu0 %v2056
    %6853 = vmatmul.mubr.bf16.gmra.mrb[0].mxu0 %v2055
    %v6854 = vpop.f32.mrb[0].mxu0
    %v6855 = vadd.f32 %v6742, %v6854
    %v6856 = vpop.f32.mrb[0].mxu0
    %v6857 = vadd.f32 %v6744, %v6856
    %v6858 = vpop.f32.mrb[0].mxu0
    %v6859 = vadd.f32 %v6746, %v6858
    %v6860 = vpop.f32.mrb[0].mxu0
    %v6861 = vadd.f32 %v6748, %v6860
    %6862 = vmatprep.mubr.bf16.mxu0 %v2064
    %6863 = vmatmul.mubr.bf16.gmra.mrb[0].mxu0 %v2063
    %v6864 = vpop.f32.mrb[0].mxu0
    %v6865 = vadd.f32 %v6752, %v6864
    %v6866 = vpop.f32.mrb[0].mxu0
    %v6867 = vadd.f32 %v6754, %v6866
    %v6868 = vpop.f32.mrb[0].mxu0
    %v6869 = vadd.f32 %v6756, %v6868
    %v6870 = vpop.f32.mrb[0].mxu0
    %v6871 = vadd.f32 %v6758, %v6870
    %6872 = vmatprep.mubr.bf16.mxu0 %v2072
    %6873 = vmatmul.mubr.bf16.gmra.mrb[0].mxu0 %v2071
    %v6874 = vpop.f32.mrb[0].mxu0
    %v6875 = vadd.f32 %v6762, %v6874
    %v6876 = vpop.f32.mrb[0].mxu0
    %v6877 = vadd.f32 %v6764, %v6876
    %v6878 = vpop.f32.mrb[0].mxu0
    %v6879 = vadd.f32 %v6766, %v6878
    %v6880 = vpop.f32.mrb[0].mxu0
    %v6881 = vadd.f32 %v6768, %v6880
    %6882 = vmatprep.mubr.bf16.mxu0 %v2080
    %6883 = vmatmul.mubr.bf16.gmra.mrb[0].mxu0 %v2079
    %v6884 = vpop.f32.mrb[0].mxu0
    %v6885 = vadd.f32 %v6772, %v6884
    %v6886 = vpop.f32.mrb[0].mxu0
    %v6887 = vadd.f32 %v6774, %v6886
    %v6888 = vpop.f32.mrb[0].mxu0
    %v6889 = vadd.f32 %v6776, %v6888
    %v6890 = vpop.f32.mrb[0].mxu0
    %v6891 = vadd.f32 %v6778, %v6890
    %6892 = vmatprep.mubr.bf16.mxu0 %v2088
    %6893 = vmatmul.mubr.bf16.gmra.mrb[0].mxu0 %v2087
    %v6894 = vpop.f32.mrb[0].mxu0
    %v6895 = vadd.f32 %v6782, %v6894
    %v6896 = vpop.f32.mrb[0].mxu0
    %v6897 = vadd.f32 %v6784, %v6896
    %v6898 = vpop.f32.mrb[0].mxu0
    %v6899 = vadd.f32 %v6786, %v6898
    %v6900 = vpop.f32.mrb[0].mxu0
    %v6901 = vadd.f32 %v6788, %v6900
    %6902 = vdwg.mxu0
    %6903 = vmatprep.subr.bf16.mxu0 %v4575
    %6904 = vmatpush1.bf16.msra.mxu0 %v4574
    %6905 = vmatprep.subr.bf16.mxu0 %v4583
    %6906 = vmatpush1.bf16.msra.mxu0 %v4582
    %6907 = vmatprep.subr.bf16.mxu0 %v4591
    %6908 = vmatpush1.bf16.msra.mxu0 %v4590
    %6909 = vmatprep.subr.bf16.mxu0 %v4599
    %6910 = vmatpush1.bf16.msra.mxu0 %v4598
    %6911 = vmatprep.subr.bf16.mxu0 %v4607
    %6912 = vmatpush1.bf16.msra.mxu0 %v4606
    %6913 = vmatprep.subr.bf16.mxu0 %v4615
    %6914 = vmatpush1.bf16.msra.mxu0 %v4614
    %6915 = vmatprep.subr.bf16.mxu0 %v4623
    %6916 = vmatpush1.bf16.msra.mxu0 %v4622
    %6917 = vmatprep.subr.bf16.mxu0 %v4631
    %6918 = vmatpush1.bf16.msra.mxu0 %v4630
    %6919 = vmatprep.subr.bf16.mxu0 %v4639
    %6920 = vmatpush1.bf16.msra.mxu0 %v4638
    %6921 = vmatprep.subr.bf16.mxu0 %v4647
    %6922 = vmatpush1.bf16.msra.mxu0 %v4646
    %6923 = vmatprep.subr.bf16.mxu0 %v4655
    %6924 = vmatpush1.bf16.msra.mxu0 %v4654
    %6925 = vmatprep.subr.bf16.mxu0 %v4663
    %6926 = vmatpush1.bf16.msra.mxu0 %v4662
    %6927 = vmatprep.subr.bf16.mxu0 %v4671
    %6928 = vmatpush1.bf16.msra.mxu0 %v4670
    %6929 = vmatprep.subr.bf16.mxu0 %v4679
    %6930 = vmatpush1.bf16.msra.mxu0 %v4678
    %6931 = vmatprep.subr.bf16.mxu0 %v4687
    %6932 = vmatpush1.bf16.msra.mxu0 %v4686
    %6933 = vmatprep.subr.bf16.mxu0 %v4695
    %6934 = vmatpush1.bf16.msra.mxu0 %v4694
    %6935 = vmatprep.mubr.bf16.mxu0 %v2034
    %6936 = vmatmul.mubr.bf16.gmra.mrb[0].mxu0 %v2033
    %v6937 = vpop.f32.mrb[0].mxu0
    %v6938 = vadd.f32 %v6825, %v6937
    %v6939 = vpop.f32.mrb[0].mxu0
    %v6940 = vadd.f32 %v6827, %v6939
    %v6941 = vpop.f32.mrb[0].mxu0
    %v6942 = vadd.f32 %v6829, %v6941
    %v6943 = vpop.f32.mrb[0].mxu0
    %v6944 = vadd.f32 %v6831, %v6943
    %6945 = vmatprep.mubr.bf16.mxu0 %v2042
    %6946 = vmatmul.mubr.bf16.gmra.mrb[0].mxu0 %v2041
    %v6947 = vpop.f32.mrb[0].mxu0
    %v6948 = vadd.f32 %v6835, %v6947
    %v6949 = vpop.f32.mrb[0].mxu0
    %v6950 = vadd.f32 %v6837, %v6949
    %v6951 = vpop.f32.mrb[0].mxu0
    %v6952 = vadd.f32 %v6839, %v6951
    %v6953 = vpop.f32.mrb[0].mxu0
    %v6954 = vadd.f32 %v6841, %v6953
    %6955 = vmatprep.mubr.bf16.mxu0 %v2050
    %6956 = vmatmul.mubr.bf16.gmra.mrb[0].mxu0 %v2049
    %v6957 = vpop.f32.mrb[0].mxu0
    %v6958 = vadd.f32 %v6845, %v6957
    %v6959 = vpop.f32.mrb[0].mxu0
    %v6960 = vadd.f32 %v6847, %v6959
    %v6961 = vpop.f32.mrb[0].mxu0
    %v6962 = vadd.f32 %v6849, %v6961
    %v6963 = vpop.f32.mrb[0].mxu0
    %v6964 = vadd.f32 %v6851, %v6963
    %6965 = vmatprep.mubr.bf16.mxu0 %v2058
    %6966 = vmatmul.mubr.bf16.gmra.mrb[0].mxu0 %v2057
    %v6967 = vpop.f32.mrb[0].mxu0
    %v6968 = vadd.f32 %v6855, %v6967
    %v6969 = vpop.f32.mrb[0].mxu0
    %v6970 = vadd.f32 %v6857, %v6969
    %v6971 = vpop.f32.mrb[0].mxu0
    %v6972 = vadd.f32 %v6859, %v6971
    %v6973 = vpop.f32.mrb[0].mxu0
    %v6974 = vadd.f32 %v6861, %v6973
    %6975 = vmatprep.mubr.bf16.mxu0 %v2066
    %6976 = vmatmul.mubr.bf16.gmra.mrb[0].mxu0 %v2065
    %v6977 = vpop.f32.mrb[0].mxu0
    %v6978 = vadd.f32 %v6865, %v6977
    %v6979 = vpop.f32.mrb[0].mxu0
    %v6980 = vadd.f32 %v6867, %v6979
    %v6981 = vpop.f32.mrb[0].mxu0
    %v6982 = vadd.f32 %v6869, %v6981
    %v6983 = vpop.f32.mrb[0].mxu0
    %v6984 = vadd.f32 %v6871, %v6983
    %6985 = vmatprep.mubr.bf16.mxu0 %v2074
    %6986 = vmatmul.mubr.bf16.gmra.mrb[0].mxu0 %v2073
    %v6987 = vpop.f32.mrb[0].mxu0
    %v6988 = vadd.f32 %v6875, %v6987
    %v6989 = vpop.f32.mrb[0].mxu0
    %v6990 = vadd.f32 %v6877, %v6989
    %v6991 = vpop.f32.mrb[0].mxu0
    %v6992 = vadd.f32 %v6879, %v6991
    %v6993 = vpop.f32.mrb[0].mxu0
    %v6994 = vadd.f32 %v6881, %v6993
    %6995 = vmatprep.mubr.bf16.mxu0 %v2082
    %6996 = vmatmul.mubr.bf16.gmra.mrb[0].mxu0 %v2081
    %v6997 = vpop.f32.mrb[0].mxu0
    %v6998 = vadd.f32 %v6885, %v6997
    %v6999 = vpop.f32.mrb[0].mxu0
    %v7000 = vadd.f32 %v6887, %v6999
    %v7001 = vpop.f32.mrb[0].mxu0
    %v7002 = vadd.f32 %v6889, %v7001
    %v7003 = vpop.f32.mrb[0].mxu0
    %v7004 = vadd.f32 %v6891, %v7003
    %7005 = vmatprep.mubr.bf16.mxu0 %v2090
    %7006 = vmatmul.mubr.bf16.gmra.mrb[0].mxu0 %v2089
    %v7007 = vpop.f32.mrb[0].mxu0
    %v7008 = vadd.f32 %v6895, %v7007
    %v7009 = vpop.f32.mrb[0].mxu0
    %v7010 = vadd.f32 %v6897, %v7009
    %v7011 = vpop.f32.mrb[0].mxu0
    %v7012 = vadd.f32 %v6899, %v7011
    %v7013 = vpop.f32.mrb[0].mxu0
    %v7014 = vadd.f32 %v6901, %v7013
    %7015 = vdwg.mxu0
    %v7016 = vmax.f32 %v5582, 0.0
    %v7017 = vmax.f32 %v5584, 0.0
    %v7018 = vmax.f32 %v6034, 0.0
    %v7019 = vmax.f32 %v6036, 0.0
    %v7020 = vmax.f32 %v6486, 0.0
    %v7021 = vmax.f32 %v6488, 0.0
    %v7022 = vmax.f32 %v6938, 0.0
    %v7023 = vmax.f32 %v6940, 0.0
    %v7024 = vmax.f32 %v5586, 0.0
    %v7025 = vmax.f32 %v5588, 0.0
    %v7026 = vmax.f32 %v6038, 0.0
    %v7027 = vmax.f32 %v6040, 0.0
    %v7028 = vmax.f32 %v6490, 0.0
    %v7029 = vmax.f32 %v6492, 0.0
    %v7030 = vmax.f32 %v6942, 0.0
    %v7031 = vmax.f32 %v6944, 0.0
    %v7032 = vmax.f32 %v5592, 0.0
    %v7033 = vmax.f32 %v5594, 0.0
    %v7034 = vmax.f32 %v6044, 0.0
    %v7035 = vmax.f32 %v6046, 0.0
    %v7036 = vmax.f32 %v6496, 0.0
    %v7037 = vmax.f32 %v6498, 0.0
    %v7038 = vmax.f32 %v6948, 0.0
    %v7039 = vmax.f32 %v6950, 0.0
    %v7040 = vmax.f32 %v5596, 0.0
    %v7041 = vmax.f32 %v5598, 0.0
    %v7042 = vmax.f32 %v6048, 0.0
    %v7043 = vmax.f32 %v6050, 0.0
    %v7044 = vmax.f32 %v6500, 0.0
    %v7045 = vmax.f32 %v6502, 0.0
    %v7046 = vmax.f32 %v6952, 0.0
    %v7047 = vmax.f32 %v6954, 0.0
    %v7048 = vmax.f32 %v5602, 0.0
    %v7049 = vmax.f32 %v5604, 0.0
    %v7050 = vmax.f32 %v6054, 0.0
    %v7051 = vmax.f32 %v6056, 0.0
    %v7052 = vmax.f32 %v6506, 0.0
    %v7053 = vmax.f32 %v6508, 0.0
    %v7054 = vmax.f32 %v6958, 0.0
    %v7055 = vmax.f32 %v6960, 0.0
    %v7056 = vmax.f32 %v5606, 0.0
    %v7057 = vmax.f32 %v5608, 0.0
    %v7058 = vmax.f32 %v6058, 0.0
    %v7059 = vmax.f32 %v6060, 0.0
    %v7060 = vmax.f32 %v6510, 0.0
    %v7061 = vmax.f32 %v6512, 0.0
    %v7062 = vmax.f32 %v6962, 0.0
    %v7063 = vmax.f32 %v6964, 0.0
    %v7064 = vmax.f32 %v5612, 0.0
    %v7065 = vmax.f32 %v5614, 0.0
    %v7066 = vmax.f32 %v6064, 0.0
    %v7067 = vmax.f32 %v6066, 0.0
    %v7068 = vmax.f32 %v6516, 0.0
    %v7069 = vmax.f32 %v6518, 0.0
    %v7070 = vmax.f32 %v6968, 0.0
    %v7071 = vmax.f32 %v6970, 0.0
    %v7072 = vmax.f32 %v5616, 0.0
    %v7073 = vmax.f32 %v5618, 0.0
    %v7074 = vmax.f32 %v6068, 0.0
    %v7075 = vmax.f32 %v6070, 0.0
    %v7076 = vmax.f32 %v6520, 0.0
    %v7077 = vmax.f32 %v6522, 0.0
    %v7078 = vmax.f32 %v6972, 0.0
    %v7079 = vmax.f32 %v6974, 0.0
    %v7080 = vmax.f32 %v5622, 0.0
    %v7081 = vmax.f32 %v5624, 0.0
    %v7082 = vmax.f32 %v6074, 0.0
    %v7083 = vmax.f32 %v6076, 0.0
    %v7084 = vmax.f32 %v6526, 0.0
    %v7085 = vmax.f32 %v6528, 0.0
    %v7086 = vmax.f32 %v6978, 0.0
    %v7087 = vmax.f32 %v6980, 0.0
    %v7088 = vmax.f32 %v5626, 0.0
    %v7089 = vmax.f32 %v5628, 0.0
    %v7090 = vmax.f32 %v6078, 0.0
    %v7091 = vmax.f32 %v6080, 0.0
    %v7092 = vmax.f32 %v6530, 0.0
    %v7093 = vmax.f32 %v6532, 0.0
    %v7094 = vmax.f32 %v6982, 0.0
    %v7095 = vmax.f32 %v6984, 0.0
    %v7096 = vmax.f32 %v5632, 0.0
    %v7097 = vmax.f32 %v5634, 0.0
    %v7098 = vmax.f32 %v6084, 0.0
    %v7099 = vmax.f32 %v6086, 0.0
    %v7100 = vmax.f32 %v6536, 0.0
    %v7101 = vmax.f32 %v6538, 0.0
    %v7102 = vmax.f32 %v6988, 0.0
    %v7103 = vmax.f32 %v6990, 0.0
    %v7104 = vmax.f32 %v5636, 0.0
    %v7105 = vmax.f32 %v5638, 0.0
    %v7106 = vmax.f32 %v6088, 0.0
    %v7107 = vmax.f32 %v6090, 0.0
    %v7108 = vmax.f32 %v6540, 0.0
    %v7109 = vmax.f32 %v6542, 0.0
    %v7110 = vmax.f32 %v6992, 0.0
    %v7111 = vmax.f32 %v6994, 0.0
    %v7112 = vmax.f32 %v5642, 0.0
    %v7113 = vmax.f32 %v5644, 0.0
    %v7114 = vmax.f32 %v6094, 0.0
    %v7115 = vmax.f32 %v6096, 0.0
    %v7116 = vmax.f32 %v6546, 0.0
    %v7117 = vmax.f32 %v6548, 0.0
    %v7118 = vmax.f32 %v6998, 0.0
    %v7119 = vmax.f32 %v7000, 0.0
    %v7120 = vmax.f32 %v5646, 0.0
    %v7121 = vmax.f32 %v5648, 0.0
    %v7122 = vmax.f32 %v6098, 0.0
    %v7123 = vmax.f32 %v6100, 0.0
    %v7124 = vmax.f32 %v6550, 0.0
    %v7125 = vmax.f32 %v6552, 0.0
    %v7126 = vmax.f32 %v7002, 0.0
    %v7127 = vmax.f32 %v7004, 0.0
    %v7128 = vmax.f32 %v5652, 0.0
    %v7129 = vmax.f32 %v5654, 0.0
    %v7130 = vmax.f32 %v6104, 0.0
    %v7131 = vmax.f32 %v6106, 0.0
    %v7132 = vmax.f32 %v6556, 0.0
    %v7133 = vmax.f32 %v6558, 0.0
    %v7134 = vmax.f32 %v7008, 0.0
    %v7135 = vmax.f32 %v7010, 0.0
    %v7136 = vmax.f32 %v5656, 0.0
    %v7137 = vmax.f32 %v5658, 0.0
    %v7138 = vmax.f32 %v6108, 0.0
    %v7139 = vmax.f32 %v6110, 0.0
    %v7140 = vmax.f32 %v6560, 0.0
    %v7141 = vmax.f32 %v6562, 0.0
    %v7142 = vmax.f32 %v7012, 0.0
    %v7143 = vmax.f32 %v7014, 0.0
    %v7144 = vpack.c.bf16 %v7024, %v7016
    %v7145 = vpack.c.bf16 %v7025, %v7017
    %v7146 = vpack.c.bf16 %v7026, %v7018
    %v7147 = vpack.c.bf16 %v7027, %v7019
    %v7148 = vpack.c.bf16 %v7028, %v7020
    %v7149 = vpack.c.bf16 %v7029, %v7021
    %v7150 = vpack.c.bf16 %v7030, %v7022
    %v7151 = vpack.c.bf16 %v7031, %v7023
    %v7152 = vpack.c.bf16 %v7040, %v7032
    %v7153 = vpack.c.bf16 %v7041, %v7033
    %v7154 = vpack.c.bf16 %v7042, %v7034
    %v7155 = vpack.c.bf16 %v7043, %v7035
    %v7156 = vpack.c.bf16 %v7044, %v7036
    %v7157 = vpack.c.bf16 %v7045, %v7037
    %v7158 = vpack.c.bf16 %v7046, %v7038
    %v7159 = vpack.c.bf16 %v7047, %v7039
    %v7160 = vpack.c.bf16 %v7056, %v7048
    %v7161 = vpack.c.bf16 %v7057, %v7049
    %v7162 = vpack.c.bf16 %v7058, %v7050
    %v7163 = vpack.c.bf16 %v7059, %v7051
    %v7164 = vpack.c.bf16 %v7060, %v7052
    %v7165 = vpack.c.bf16 %v7061, %v7053
    %v7166 = vpack.c.bf16 %v7062, %v7054
    %v7167 = vpack.c.bf16 %v7063, %v7055
    %v7168 = vpack.c.bf16 %v7072, %v7064
    %v7169 = vpack.c.bf16 %v7073, %v7065
    %v7170 = vpack.c.bf16 %v7074, %v7066
    %v7171 = vpack.c.bf16 %v7075, %v7067
    %v7172 = vpack.c.bf16 %v7076, %v7068
    %v7173 = vpack.c.bf16 %v7077, %v7069
    %v7174 = vpack.c.bf16 %v7078, %v7070
    %v7175 = vpack.c.bf16 %v7079, %v7071
    %v7176 = vpack.c.bf16 %v7088, %v7080
    %v7177 = vpack.c.bf16 %v7089, %v7081
    %v7178 = vpack.c.bf16 %v7090, %v7082
    %v7179 = vpack.c.bf16 %v7091, %v7083
    %v7180 = vpack.c.bf16 %v7092, %v7084
    %v7181 = vpack.c.bf16 %v7093, %v7085
    %v7182 = vpack.c.bf16 %v7094, %v7086
    %v7183 = vpack.c.bf16 %v7095, %v7087
    %v7184 = vpack.c.bf16 %v7104, %v7096
    %v7185 = vpack.c.bf16 %v7105, %v7097
    %v7186 = vpack.c.bf16 %v7106, %v7098
    %v7187 = vpack.c.bf16 %v7107, %v7099
    %v7188 = vpack.c.bf16 %v7108, %v7100
    %v7189 = vpack.c.bf16 %v7109, %v7101
    %v7190 = vpack.c.bf16 %v7110, %v7102
    %v7191 = vpack.c.bf16 %v7111, %v7103
    %v7192 = vpack.c.bf16 %v7120, %v7112
    %v7193 = vpack.c.bf16 %v7121, %v7113
    %v7194 = vpack.c.bf16 %v7122, %v7114
    %v7195 = vpack.c.bf16 %v7123, %v7115
    %v7196 = vpack.c.bf16 %v7124, %v7116
    %v7197 = vpack.c.bf16 %v7125, %v7117
    %v7198 = vpack.c.bf16 %v7126, %v7118
    %v7199 = vpack.c.bf16 %v7127, %v7119
    %v7200 = vpack.c.bf16 %v7136, %v7128
    %v7201 = vpack.c.bf16 %v7137, %v7129
    %v7202 = vpack.c.bf16 %v7138, %v7130
    %v7203 = vpack.c.bf16 %v7139, %v7131
    %v7204 = vpack.c.bf16 %v7140, %v7132
    %v7205 = vpack.c.bf16 %v7141, %v7133
    %v7206 = vpack.c.bf16 %v7142, %v7134
    %v7207 = vpack.c.bf16 %v7143, %v7135
    %v7208 = vld [vmem:[#allocation11] sm:$0xff]
    %v7209 = vld [vmem:[#allocation11 + $0x8] sm:$0xff]
    %v7210 = vld [vmem:[#allocation11 + $0x10] sm:$0xff]
    %v7211 = vld [vmem:[#allocation11 + $0x18] sm:$0xff]
    %v7212 = vld [vmem:[#allocation11 + $0x20] sm:$0xff]
    %v7213 = vld [vmem:[#allocation11 + $0x28] sm:$0xff]
    %v7214 = vld [vmem:[#allocation11 + $0x30] sm:$0xff]
    %v7215 = vld [vmem:[#allocation11 + $0x38] sm:$0xff]
    %v7216 = vld [vmem:[#allocation11 + $0x40] sm:$0xff]
    %v7217 = vld [vmem:[#allocation11 + $0x48] sm:$0xff]
    %v7218 = vld [vmem:[#allocation11 + $0x50] sm:$0xff]
    %v7219 = vld [vmem:[#allocation11 + $0x58] sm:$0xff]
    %v7220 = vld [vmem:[#allocation11 + $0x60] sm:$0xff]
    %v7221 = vld [vmem:[#allocation11 + $0x68] sm:$0xff]
    %v7222 = vld [vmem:[#allocation11 + $0x70] sm:$0xff]
    %v7223 = vld [vmem:[#allocation11 + $0x78] sm:$0xff]
    %v7224 = vld [vmem:[#allocation11 + $0x80] sm:$0xff]
    %v7225 = vld [vmem:[#allocation11 + $0x88] sm:$0xff]
    %v7226 = vld [vmem:[#allocation11 + $0x90] sm:$0xff]
    %v7227 = vld [vmem:[#allocation11 + $0x98] sm:$0xff]
    %v7228 = vld [vmem:[#allocation11 + $0xa0] sm:$0xff]
    %v7229 = vld [vmem:[#allocation11 + $0xa8] sm:$0xff]
    %v7230 = vld [vmem:[#allocation11 + $0xb0] sm:$0xff]
    %v7231 = vld [vmem:[#allocation11 + $0xb8] sm:$0xff]
    %v7232 = vld [vmem:[#allocation11 + $0xc0] sm:$0xff]
    %v7233 = vld [vmem:[#allocation11 + $0xc8] sm:$0xff]
    %v7234 = vld [vmem:[#allocation11 + $0xd0] sm:$0xff]
    %v7235 = vld [vmem:[#allocation11 + $0xd8] sm:$0xff]
    %v7236 = vld [vmem:[#allocation11 + $0xe0] sm:$0xff]
    %v7237 = vld [vmem:[#allocation11 + $0xe8] sm:$0xff]
    %v7238 = vld [vmem:[#allocation11 + $0xf0] sm:$0xff]
    %v7239 = vld [vmem:[#allocation11 + $0xf8] sm:$0xff]
    %v7240 = vld [vmem:[#allocation11 + $0x100] sm:$0xff]
    %v7241 = vld [vmem:[#allocation11 + $0x108] sm:$0xff]
    %v7242 = vld [vmem:[#allocation11 + $0x110] sm:$0xff]
    %v7243 = vld [vmem:[#allocation11 + $0x118] sm:$0xff]
    %v7244 = vld [vmem:[#allocation11 + $0x120] sm:$0xff]
    %v7245 = vld [vmem:[#allocation11 + $0x128] sm:$0xff]
    %v7246 = vld [vmem:[#allocation11 + $0x130] sm:$0xff]
    %v7247 = vld [vmem:[#allocation11 + $0x138] sm:$0xff]
    %v7248 = vld [vmem:[#allocation11 + $0x140] sm:$0xff]
    %v7249 = vld [vmem:[#allocation11 + $0x148] sm:$0xff]
    %v7250 = vld [vmem:[#allocation11 + $0x150] sm:$0xff]
    %v7251 = vld [vmem:[#allocation11 + $0x158] sm:$0xff]
    %v7252 = vld [vmem:[#allocation11 + $0x160] sm:$0xff]
    %v7253 = vld [vmem:[#allocation11 + $0x168] sm:$0xff]
    %v7254 = vld [vmem:[#allocation11 + $0x170] sm:$0xff]
    %v7255 = vld [vmem:[#allocation11 + $0x178] sm:$0xff]
    %v7256 = vld [vmem:[#allocation11 + $0x180] sm:$0xff]
    %v7257 = vld [vmem:[#allocation11 + $0x188] sm:$0xff]
    %v7258 = vld [vmem:[#allocation11 + $0x190] sm:$0xff]
    %v7259 = vld [vmem:[#allocation11 + $0x198] sm:$0xff]
    %v7260 = vld [vmem:[#allocation11 + $0x1a0] sm:$0xff]
    %v7261 = vld [vmem:[#allocation11 + $0x1a8] sm:$0xff]
    %v7262 = vld [vmem:[#allocation11 + $0x1b0] sm:$0xff]
    %v7263 = vld [vmem:[#allocation11 + $0x1b8] sm:$0xff]
    %v7264 = vld [vmem:[#allocation11 + $0x1c0] sm:$0xff]
    %v7265 = vld [vmem:[#allocation11 + $0x1c8] sm:$0xff]
    %v7266 = vld [vmem:[#allocation11 + $0x1d0] sm:$0xff]
    %v7267 = vld [vmem:[#allocation11 + $0x1d8] sm:$0xff]
    %v7268 = vld [vmem:[#allocation11 + $0x1e0] sm:$0xff]
    %v7269 = vld [vmem:[#allocation11 + $0x1e8] sm:$0xff]
    %v7270 = vld [vmem:[#allocation11 + $0x1f0] sm:$0xff]
    %v7271 = vld [vmem:[#allocation11 + $0x1f8] sm:$0xff]
    %v7272 = vld [vmem:[#allocation11 + $0x200] sm:$0xff]
    %v7273 = vld [vmem:[#allocation11 + $0x208] sm:$0xff]
    %v7274 = vld [vmem:[#allocation11 + $0x210] sm:$0xff]
    %v7275 = vld [vmem:[#allocation11 + $0x218] sm:$0xff]
    %v7276 = vld [vmem:[#allocation11 + $0x220] sm:$0xff]
    %v7277 = vld [vmem:[#allocation11 + $0x228] sm:$0xff]
    %v7278 = vld [vmem:[#allocation11 + $0x230] sm:$0xff]
    %v7279 = vld [vmem:[#allocation11 + $0x238] sm:$0xff]
    %v7280 = vld [vmem:[#allocation11 + $0x240] sm:$0xff]
    %v7281 = vld [vmem:[#allocation11 + $0x248] sm:$0xff]
    %v7282 = vld [vmem:[#allocation11 + $0x250] sm:$0xff]
    %v7283 = vld [vmem:[#allocation11 + $0x258] sm:$0xff]
    %v7284 = vld [vmem:[#allocation11 + $0x260] sm:$0xff]
    %v7285 = vld [vmem:[#allocation11 + $0x268] sm:$0xff]
    %v7286 = vld [vmem:[#allocation11 + $0x270] sm:$0xff]
    %v7287 = vld [vmem:[#allocation11 + $0x278] sm:$0xff]
    %v7288 = vld [vmem:[#allocation11 + $0x280] sm:$0xff]
    %v7289 = vld [vmem:[#allocation11 + $0x288] sm:$0xff]
    %v7290 = vld [vmem:[#allocation11 + $0x290] sm:$0xff]
    %v7291 = vld [vmem:[#allocation11 + $0x298] sm:$0xff]
    %v7292 = vld [vmem:[#allocation11 + $0x2a0] sm:$0xff]
    %v7293 = vld [vmem:[#allocation11 + $0x2a8] sm:$0xff]
    %v7294 = vld [vmem:[#allocation11 + $0x2b0] sm:$0xff]
    %v7295 = vld [vmem:[#allocation11 + $0x2b8] sm:$0xff]
    %v7296 = vld [vmem:[#allocation11 + $0x2c0] sm:$0xff]
    %v7297 = vld [vmem:[#allocation11 + $0x2c8] sm:$0xff]
    %v7298 = vld [vmem:[#allocation11 + $0x2d0] sm:$0xff]
    %v7299 = vld [vmem:[#allocation11 + $0x2d8] sm:$0xff]
    %v7300 = vld [vmem:[#allocation11 + $0x2e0] sm:$0xff]
    %v7301 = vld [vmem:[#allocation11 + $0x2e8] sm:$0xff]
    %v7302 = vld [vmem:[#allocation11 + $0x2f0] sm:$0xff]
    %v7303 = vld [vmem:[#allocation11 + $0x2f8] sm:$0xff]
    %v7304 = vld [vmem:[#allocation11 + $0x300] sm:$0xff]
    %v7305 = vld [vmem:[#allocation11 + $0x308] sm:$0xff]
    %v7306 = vld [vmem:[#allocation11 + $0x310] sm:$0xff]
    %v7307 = vld [vmem:[#allocation11 + $0x318] sm:$0xff]
    %v7308 = vld [vmem:[#allocation11 + $0x320] sm:$0xff]
    %v7309 = vld [vmem:[#allocation11 + $0x328] sm:$0xff]
    %v7310 = vld [vmem:[#allocation11 + $0x330] sm:$0xff]
    %v7311 = vld [vmem:[#allocation11 + $0x338] sm:$0xff]
    %v7312 = vld [vmem:[#allocation11 + $0x340] sm:$0xff]
    %v7313 = vld [vmem:[#allocation11 + $0x348] sm:$0xff]
    %v7314 = vld [vmem:[#allocation11 + $0x350] sm:$0xff]
    %v7315 = vld [vmem:[#allocation11 + $0x358] sm:$0xff]
    %v7316 = vld [vmem:[#allocation11 + $0x360] sm:$0xff]
    %v7317 = vld [vmem:[#allocation11 + $0x368] sm:$0xff]
    %v7318 = vld [vmem:[#allocation11 + $0x370] sm:$0xff]
    %v7319 = vld [vmem:[#allocation11 + $0x378] sm:$0xff]
    %v7320 = vld [vmem:[#allocation11 + $0x380] sm:$0xff]
    %v7321 = vld [vmem:[#allocation11 + $0x388] sm:$0xff]
    %v7322 = vld [vmem:[#allocation11 + $0x390] sm:$0xff]
    %v7323 = vld [vmem:[#allocation11 + $0x398] sm:$0xff]
    %v7324 = vld [vmem:[#allocation11 + $0x3a0] sm:$0xff]
    %v7325 = vld [vmem:[#allocation11 + $0x3a8] sm:$0xff]
    %v7326 = vld [vmem:[#allocation11 + $0x3b0] sm:$0xff]
    %v7327 = vld [vmem:[#allocation11 + $0x3b8] sm:$0xff]
    %v7328 = vld [vmem:[#allocation11 + $0x3c0] sm:$0xff]
    %v7329 = vld [vmem:[#allocation11 + $0x3c8] sm:$0xff]
    %v7330 = vld [vmem:[#allocation11 + $0x3d0] sm:$0xff]
    %v7331 = vld [vmem:[#allocation11 + $0x3d8] sm:$0xff]
    %v7332 = vld [vmem:[#allocation11 + $0x3e0] sm:$0xff]
    %v7333 = vld [vmem:[#allocation11 + $0x3e8] sm:$0xff]
    %v7334 = vld [vmem:[#allocation11 + $0x3f0] sm:$0xff]
    %v7335 = vld [vmem:[#allocation11 + $0x3f8] sm:$0xff]
    %s7336 = scalar_lea.vmem [#allocation16], 4
    %v7337 = vld [vmem:[%s7336] ss:$8 sm:$0x3]
    %v7339 = vlaneseq
    %v7340 = vshrl.u32 %v7339, 7
    %v7341 = vsub.s32 0, %v7340
    %v7342 = vrot.slane %v7337, %v7341
    %v7343 = vlaneseq
    %v7344 = vshrl.u32 %v7343, 7
    %v7345 = vsub.s32 1, %v7344
    %v7346 = vrot.slane %v7337, %v7345
    %v7477 = vunpack.c.l.b16 %v7208
    %v7478 = vunpack.c.h.b16 %v7208
    %v7479 = vunpack.c.l.b16 %v7209
    %v7480 = vunpack.c.h.b16 %v7209
    %v7481 = vunpack.c.l.b16 %v7210
    %v7482 = vunpack.c.h.b16 %v7210
    %v7483 = vunpack.c.l.b16 %v7211
    %v7484 = vunpack.c.h.b16 %v7211
    %v7485 = vunpack.c.l.b16 %v7212
    %v7486 = vunpack.c.h.b16 %v7212
    %v7487 = vunpack.c.l.b16 %v7213
    %v7488 = vunpack.c.h.b16 %v7213
    %v7489 = vunpack.c.l.b16 %v7214
    %v7490 = vunpack.c.h.b16 %v7214
    %v7491 = vunpack.c.l.b16 %v7215
    %v7492 = vunpack.c.h.b16 %v7215
    %v7493 = vunpack.c.l.b16 %v7216
    %v7494 = vunpack.c.h.b16 %v7216
    %v7495 = vunpack.c.l.b16 %v7217
    %v7496 = vunpack.c.h.b16 %v7217
    %v7497 = vunpack.c.l.b16 %v7218
    %v7498 = vunpack.c.h.b16 %v7218
    %v7499 = vunpack.c.l.b16 %v7219
    %v7500 = vunpack.c.h.b16 %v7219
    %v7501 = vunpack.c.l.b16 %v7220
    %v7502 = vunpack.c.h.b16 %v7220
    %v7503 = vunpack.c.l.b16 %v7221
    %v7504 = vunpack.c.h.b16 %v7221
    %v7505 = vunpack.c.l.b16 %v7222
    %v7506 = vunpack.c.h.b16 %v7222
    %v7507 = vunpack.c.l.b16 %v7223
    %v7508 = vunpack.c.h.b16 %v7223
    %v7509 = vunpack.c.l.b16 %v7224
    %v7510 = vunpack.c.h.b16 %v7224
    %v7511 = vunpack.c.l.b16 %v7225
    %v7512 = vunpack.c.h.b16 %v7225
    %v7513 = vunpack.c.l.b16 %v7226
    %v7514 = vunpack.c.h.b16 %v7226
    %v7515 = vunpack.c.l.b16 %v7227
    %v7516 = vunpack.c.h.b16 %v7227
    %v7517 = vunpack.c.l.b16 %v7228
    %v7518 = vunpack.c.h.b16 %v7228
    %v7519 = vunpack.c.l.b16 %v7229
    %v7520 = vunpack.c.h.b16 %v7229
    %v7521 = vunpack.c.l.b16 %v7230
    %v7522 = vunpack.c.h.b16 %v7230
    %v7523 = vunpack.c.l.b16 %v7231
    %v7524 = vunpack.c.h.b16 %v7231
    %v7525 = vunpack.c.l.b16 %v7232
    %v7526 = vunpack.c.h.b16 %v7232
    %v7527 = vunpack.c.l.b16 %v7233
    %v7528 = vunpack.c.h.b16 %v7233
    %v7529 = vunpack.c.l.b16 %v7234
    %v7530 = vunpack.c.h.b16 %v7234
    %v7531 = vunpack.c.l.b16 %v7235
    %v7532 = vunpack.c.h.b16 %v7235
    %v7533 = vunpack.c.l.b16 %v7236
    %v7534 = vunpack.c.h.b16 %v7236
    %v7535 = vunpack.c.l.b16 %v7237
    %v7536 = vunpack.c.h.b16 %v7237
    %v7537 = vunpack.c.l.b16 %v7238
    %v7538 = vunpack.c.h.b16 %v7238
    %v7539 = vunpack.c.l.b16 %v7239
    %v7540 = vunpack.c.h.b16 %v7239
    %v7541 = vunpack.c.l.b16 %v7240
    %v7542 = vunpack.c.h.b16 %v7240
    %v7543 = vunpack.c.l.b16 %v7241
    %v7544 = vunpack.c.h.b16 %v7241
    %v7545 = vunpack.c.l.b16 %v7242
    %v7546 = vunpack.c.h.b16 %v7242
    %v7547 = vunpack.c.l.b16 %v7243
    %v7548 = vunpack.c.h.b16 %v7243
    %v7549 = vunpack.c.l.b16 %v7244
    %v7550 = vunpack.c.h.b16 %v7244
    %v7551 = vunpack.c.l.b16 %v7245
    %v7552 = vunpack.c.h.b16 %v7245
    %v7553 = vunpack.c.l.b16 %v7246
    %v7554 = vunpack.c.h.b16 %v7246
    %v7555 = vunpack.c.l.b16 %v7247
    %v7556 = vunpack.c.h.b16 %v7247
    %v7557 = vunpack.c.l.b16 %v7248
    %v7558 = vunpack.c.h.b16 %v7248
    %v7559 = vunpack.c.l.b16 %v7249
    %v7560 = vunpack.c.h.b16 %v7249
    %v7561 = vunpack.c.l.b16 %v7250
    %v7562 = vunpack.c.h.b16 %v7250
    %v7563 = vunpack.c.l.b16 %v7251
    %v7564 = vunpack.c.h.b16 %v7251
    %v7565 = vunpack.c.l.b16 %v7252
    %v7566 = vunpack.c.h.b16 %v7252
    %v7567 = vunpack.c.l.b16 %v7253
    %v7568 = vunpack.c.h.b16 %v7253
    %v7569 = vunpack.c.l.b16 %v7254
    %v7570 = vunpack.c.h.b16 %v7254
    %v7571 = vunpack.c.l.b16 %v7255
    %v7572 = vunpack.c.h.b16 %v7255
    %v7573 = vunpack.c.l.b16 %v7256
    %v7574 = vunpack.c.h.b16 %v7256
    %v7575 = vunpack.c.l.b16 %v7257
    %v7576 = vunpack.c.h.b16 %v7257
    %v7577 = vunpack.c.l.b16 %v7258
    %v7578 = vunpack.c.h.b16 %v7258
    %v7579 = vunpack.c.l.b16 %v7259
    %v7580 = vunpack.c.h.b16 %v7259
    %v7581 = vunpack.c.l.b16 %v7260
    %v7582 = vunpack.c.h.b16 %v7260
    %v7583 = vunpack.c.l.b16 %v7261
    %v7584 = vunpack.c.h.b16 %v7261
    %v7585 = vunpack.c.l.b16 %v7262
    %v7586 = vunpack.c.h.b16 %v7262
    %v7587 = vunpack.c.l.b16 %v7263
    %v7588 = vunpack.c.h.b16 %v7263
    %v7589 = vunpack.c.l.b16 %v7264
    %v7590 = vunpack.c.h.b16 %v7264
    %v7591 = vunpack.c.l.b16 %v7265
    %v7592 = vunpack.c.h.b16 %v7265
    %v7593 = vunpack.c.l.b16 %v7266
    %v7594 = vunpack.c.h.b16 %v7266
    %v7595 = vunpack.c.l.b16 %v7267
    %v7596 = vunpack.c.h.b16 %v7267
    %v7597 = vunpack.c.l.b16 %v7268
    %v7598 = vunpack.c.h.b16 %v7268
    %v7599 = vunpack.c.l.b16 %v7269
    %v7600 = vunpack.c.h.b16 %v7269
    %v7601 = vunpack.c.l.b16 %v7270
    %v7602 = vunpack.c.h.b16 %v7270
    %v7603 = vunpack.c.l.b16 %v7271
    %v7604 = vunpack.c.h.b16 %v7271
    %v7605 = vunpack.c.l.b16 %v7272
    %v7606 = vunpack.c.h.b16 %v7272
    %v7607 = vunpack.c.l.b16 %v7273
    %v7608 = vunpack.c.h.b16 %v7273
    %v7609 = vunpack.c.l.b16 %v7274
    %v7610 = vunpack.c.h.b16 %v7274
    %v7611 = vunpack.c.l.b16 %v7275
    %v7612 = vunpack.c.h.b16 %v7275
    %v7613 = vunpack.c.l.b16 %v7276
    %v7614 = vunpack.c.h.b16 %v7276
    %v7615 = vunpack.c.l.b16 %v7277
    %v7616 = vunpack.c.h.b16 %v7277
    %v7617 = vunpack.c.l.b16 %v7278
    %v7618 = vunpack.c.h.b16 %v7278
    %v7619 = vunpack.c.l.b16 %v7279
    %v7620 = vunpack.c.h.b16 %v7279
    %v7621 = vunpack.c.l.b16 %v7280
    %v7622 = vunpack.c.h.b16 %v7280
    %v7623 = vunpack.c.l.b16 %v7281
    %v7624 = vunpack.c.h.b16 %v7281
    %v7625 = vunpack.c.l.b16 %v7282
    %v7626 = vunpack.c.h.b16 %v7282
    %v7627 = vunpack.c.l.b16 %v7283
    %v7628 = vunpack.c.h.b16 %v7283
    %v7629 = vunpack.c.l.b16 %v7284
    %v7630 = vunpack.c.h.b16 %v7284
    %v7631 = vunpack.c.l.b16 %v7285
    %v7632 = vunpack.c.h.b16 %v7285
    %v7633 = vunpack.c.l.b16 %v7286
    %v7634 = vunpack.c.h.b16 %v7286
    %v7635 = vunpack.c.l.b16 %v7287
    %v7636 = vunpack.c.h.b16 %v7287
    %v7637 = vunpack.c.l.b16 %v7288
    %v7638 = vunpack.c.h.b16 %v7288
    %v7639 = vunpack.c.l.b16 %v7289
    %v7640 = vunpack.c.h.b16 %v7289
    %v7641 = vunpack.c.l.b16 %v7290
    %v7642 = vunpack.c.h.b16 %v7290
    %v7643 = vunpack.c.l.b16 %v7291
    %v7644 = vunpack.c.h.b16 %v7291
    %v7645 = vunpack.c.l.b16 %v7292
    %v7646 = vunpack.c.h.b16 %v7292
    %v7647 = vunpack.c.l.b16 %v7293
    %v7648 = vunpack.c.h.b16 %v7293
    %v7649 = vunpack.c.l.b16 %v7294
    %v7650 = vunpack.c.h.b16 %v7294
    %v7651 = vunpack.c.l.b16 %v7295
    %v7652 = vunpack.c.h.b16 %v7295
    %v7653 = vunpack.c.l.b16 %v7296
    %v7654 = vunpack.c.h.b16 %v7296
    %v7655 = vunpack.c.l.b16 %v7297
    %v7656 = vunpack.c.h.b16 %v7297
    %v7657 = vunpack.c.l.b16 %v7298
    %v7658 = vunpack.c.h.b16 %v7298
    %v7659 = vunpack.c.l.b16 %v7299
    %v7660 = vunpack.c.h.b16 %v7299
    %v7661 = vunpack.c.l.b16 %v7300
    %v7662 = vunpack.c.h.b16 %v7300
    %v7663 = vunpack.c.l.b16 %v7301
    %v7664 = vunpack.c.h.b16 %v7301
    %v7665 = vunpack.c.l.b16 %v7302
    %v7666 = vunpack.c.h.b16 %v7302
    %v7667 = vunpack.c.l.b16 %v7303
    %v7668 = vunpack.c.h.b16 %v7303
    %v7669 = vunpack.c.l.b16 %v7304
    %v7670 = vunpack.c.h.b16 %v7304
    %v7671 = vunpack.c.l.b16 %v7305
    %v7672 = vunpack.c.h.b16 %v7305
    %v7673 = vunpack.c.l.b16 %v7306
    %v7674 = vunpack.c.h.b16 %v7306
    %v7675 = vunpack.c.l.b16 %v7307
    %v7676 = vunpack.c.h.b16 %v7307
    %v7677 = vunpack.c.l.b16 %v7308
    %v7678 = vunpack.c.h.b16 %v7308
    %v7679 = vunpack.c.l.b16 %v7309
    %v7680 = vunpack.c.h.b16 %v7309
    %v7681 = vunpack.c.l.b16 %v7310
    %v7682 = vunpack.c.h.b16 %v7310
    %v7683 = vunpack.c.l.b16 %v7311
    %v7684 = vunpack.c.h.b16 %v7311
    %v7685 = vunpack.c.l.b16 %v7312
    %v7686 = vunpack.c.h.b16 %v7312
    %v7687 = vunpack.c.l.b16 %v7313
    %v7688 = vunpack.c.h.b16 %v7313
    %v7689 = vunpack.c.l.b16 %v7314
    %v7690 = vunpack.c.h.b16 %v7314
    %v7691 = vunpack.c.l.b16 %v7315
    %v7692 = vunpack.c.h.b16 %v7315
    %v7693 = vunpack.c.l.b16 %v7316
    %v7694 = vunpack.c.h.b16 %v7316
    %v7695 = vunpack.c.l.b16 %v7317
    %v7696 = vunpack.c.h.b16 %v7317
    %v7697 = vunpack.c.l.b16 %v7318
    %v7698 = vunpack.c.h.b16 %v7318
    %v7699 = vunpack.c.l.b16 %v7319
    %v7700 = vunpack.c.h.b16 %v7319
    %v7701 = vunpack.c.l.b16 %v7320
    %v7702 = vunpack.c.h.b16 %v7320
    %v7703 = vunpack.c.l.b16 %v7321
    %v7704 = vunpack.c.h.b16 %v7321
    %v7705 = vunpack.c.l.b16 %v7322
    %v7706 = vunpack.c.h.b16 %v7322
    %v7707 = vunpack.c.l.b16 %v7323
    %v7708 = vunpack.c.h.b16 %v7323
    %v7709 = vunpack.c.l.b16 %v7324
    %v7710 = vunpack.c.h.b16 %v7324
    %v7711 = vunpack.c.l.b16 %v7325
    %v7712 = vunpack.c.h.b16 %v7325
    %v7713 = vunpack.c.l.b16 %v7326
    %v7714 = vunpack.c.h.b16 %v7326
    %v7715 = vunpack.c.l.b16 %v7327
    %v7716 = vunpack.c.h.b16 %v7327
    %v7717 = vunpack.c.l.b16 %v7328
    %v7718 = vunpack.c.h.b16 %v7328
    %v7719 = vunpack.c.l.b16 %v7329
    %v7720 = vunpack.c.h.b16 %v7329
    %v7721 = vunpack.c.l.b16 %v7330
    %v7722 = vunpack.c.h.b16 %v7330
    %v7723 = vunpack.c.l.b16 %v7331
    %v7724 = vunpack.c.h.b16 %v7331
    %v7725 = vunpack.c.l.b16 %v7332
    %v7726 = vunpack.c.h.b16 %v7332
    %v7727 = vunpack.c.l.b16 %v7333
    %v7728 = vunpack.c.h.b16 %v7333
    %v7729 = vunpack.c.l.b16 %v7334
    %v7730 = vunpack.c.h.b16 %v7334
    %v7731 = vunpack.c.l.b16 %v7335
    %v7732 = vunpack.c.h.b16 %v7335
    %v7733 = vpack.c.b16 %v7479, %v7477
    %v7734 = vpack.c.b16 %v7480, %v7478
    %v7735 = vpack.c.b16 %v7483, %v7481
    %v7736 = vpack.c.b16 %v7484, %v7482
    %v7737 = vpack.c.b16 %v7487, %v7485
    %v7738 = vpack.c.b16 %v7488, %v7486
    %v7739 = vpack.c.b16 %v7491, %v7489
    %v7740 = vpack.c.b16 %v7492, %v7490
    %v7741 = vpack.c.b16 %v7495, %v7493
    %v7742 = vpack.c.b16 %v7496, %v7494
    %v7743 = vpack.c.b16 %v7499, %v7497
    %v7744 = vpack.c.b16 %v7500, %v7498
    %v7745 = vpack.c.b16 %v7503, %v7501
    %v7746 = vpack.c.b16 %v7504, %v7502
    %v7747 = vpack.c.b16 %v7507, %v7505
    %v7748 = vpack.c.b16 %v7508, %v7506
    %v7749 = vpack.c.b16 %v7511, %v7509
    %v7750 = vpack.c.b16 %v7512, %v7510
    %v7751 = vpack.c.b16 %v7515, %v7513
    %v7752 = vpack.c.b16 %v7516, %v7514
    %v7753 = vpack.c.b16 %v7519, %v7517
    %v7754 = vpack.c.b16 %v7520, %v7518
    %v7755 = vpack.c.b16 %v7523, %v7521
    %v7756 = vpack.c.b16 %v7524, %v7522
    %v7757 = vpack.c.b16 %v7527, %v7525
    %v7758 = vpack.c.b16 %v7528, %v7526
    %v7759 = vpack.c.b16 %v7531, %v7529
    %v7760 = vpack.c.b16 %v7532, %v7530
    %v7761 = vpack.c.b16 %v7535, %v7533
    %v7762 = vpack.c.b16 %v7536, %v7534
    %v7763 = vpack.c.b16 %v7539, %v7537
    %v7764 = vpack.c.b16 %v7540, %v7538
    %v7765 = vpack.c.b16 %v7543, %v7541
    %v7766 = vpack.c.b16 %v7544, %v7542
    %v7767 = vpack.c.b16 %v7547, %v7545
    %v7768 = vpack.c.b16 %v7548, %v7546
    %v7769 = vpack.c.b16 %v7551, %v7549
    %v7770 = vpack.c.b16 %v7552, %v7550
    %v7771 = vpack.c.b16 %v7555, %v7553
    %v7772 = vpack.c.b16 %v7556, %v7554
    %v7773 = vpack.c.b16 %v7559, %v7557
    %v7774 = vpack.c.b16 %v7560, %v7558
    %v7775 = vpack.c.b16 %v7563, %v7561
    %v7776 = vpack.c.b16 %v7564, %v7562
    %v7777 = vpack.c.b16 %v7567, %v7565
    %v7778 = vpack.c.b16 %v7568, %v7566
    %v7779 = vpack.c.b16 %v7571, %v7569
    %v7780 = vpack.c.b16 %v7572, %v7570
    %v7781 = vpack.c.b16 %v7575, %v7573
    %v7782 = vpack.c.b16 %v7576, %v7574
    %v7783 = vpack.c.b16 %v7579, %v7577
    %v7784 = vpack.c.b16 %v7580, %v7578
    %v7785 = vpack.c.b16 %v7583, %v7581
    %v7786 = vpack.c.b16 %v7584, %v7582
    %v7787 = vpack.c.b16 %v7587, %v7585
    %v7788 = vpack.c.b16 %v7588, %v7586
    %v7789 = vpack.c.b16 %v7591, %v7589
    %v7790 = vpack.c.b16 %v7592, %v7590
    %v7791 = vpack.c.b16 %v7595, %v7593
    %v7792 = vpack.c.b16 %v7596, %v7594
    %v7793 = vpack.c.b16 %v7599, %v7597
    %v7794 = vpack.c.b16 %v7600, %v7598
    %v7795 = vpack.c.b16 %v7603, %v7601
    %v7796 = vpack.c.b16 %v7604, %v7602
    %v7797 = vpack.c.b16 %v7607, %v7605
    %v7798 = vpack.c.b16 %v7608, %v7606
    %v7799 = vpack.c.b16 %v7611, %v7609
    %v7800 = vpack.c.b16 %v7612, %v7610
    %v7801 = vpack.c.b16 %v7615, %v7613
    %v7802 = vpack.c.b16 %v7616, %v7614
    %v7803 = vpack.c.b16 %v7619, %v7617
    %v7804 = vpack.c.b16 %v7620, %v7618
    %v7805 = vpack.c.b16 %v7623, %v7621
    %v7806 = vpack.c.b16 %v7624, %v7622
    %v7807 = vpack.c.b16 %v7627, %v7625
    %v7808 = vpack.c.b16 %v7628, %v7626
    %v7809 = vpack.c.b16 %v7631, %v7629
    %v7810 = vpack.c.b16 %v7632, %v7630
    %v7811 = vpack.c.b16 %v7635, %v7633
    %v7812 = vpack.c.b16 %v7636, %v7634
    %v7813 = vpack.c.b16 %v7639, %v7637
    %v7814 = vpack.c.b16 %v7640, %v7638
    %v7815 = vpack.c.b16 %v7643, %v7641
    %v7816 = vpack.c.b16 %v7644, %v7642
    %v7817 = vpack.c.b16 %v7647, %v7645
    %v7818 = vpack.c.b16 %v7648, %v7646
    %v7819 = vpack.c.b16 %v7651, %v7649
    %v7820 = vpack.c.b16 %v7652, %v7650
    %v7821 = vpack.c.b16 %v7655, %v7653
    %v7822 = vpack.c.b16 %v7656, %v7654
    %v7823 = vpack.c.b16 %v7659, %v7657
    %v7824 = vpack.c.b16 %v7660, %v7658
    %v7825 = vpack.c.b16 %v7663, %v7661
    %v7826 = vpack.c.b16 %v7664, %v7662
    %v7827 = vpack.c.b16 %v7667, %v7665
    %v7828 = vpack.c.b16 %v7668, %v7666
    %v7829 = vpack.c.b16 %v7671, %v7669
    %v7830 = vpack.c.b16 %v7672, %v7670
    %v7831 = vpack.c.b16 %v7675, %v7673
    %v7832 = vpack.c.b16 %v7676, %v7674
    %v7833 = vpack.c.b16 %v7679, %v7677
    %v7834 = vpack.c.b16 %v7680, %v7678
    %v7835 = vpack.c.b16 %v7683, %v7681
    %v7836 = vpack.c.b16 %v7684, %v7682
    %v7837 = vpack.c.b16 %v7687, %v7685
    %v7838 = vpack.c.b16 %v7688, %v7686
    %v7839 = vpack.c.b16 %v7691, %v7689
    %v7840 = vpack.c.b16 %v7692, %v7690
    %v7841 = vpack.c.b16 %v7695, %v7693
    %v7842 = vpack.c.b16 %v7696, %v7694
    %v7843 = vpack.c.b16 %v7699, %v7697
    %v7844 = vpack.c.b16 %v7700, %v7698
    %v7845 = vpack.c.b16 %v7703, %v7701
    %v7846 = vpack.c.b16 %v7704, %v7702
    %v7847 = vpack.c.b16 %v7707, %v7705
    %v7848 = vpack.c.b16 %v7708, %v7706
    %v7849 = vpack.c.b16 %v7711, %v7709
    %v7850 = vpack.c.b16 %v7712, %v7710
    %v7851 = vpack.c.b16 %v7715, %v7713
    %v7852 = vpack.c.b16 %v7716, %v7714
    %v7853 = vpack.c.b16 %v7719, %v7717
    %v7854 = vpack.c.b16 %v7720, %v7718
    %v7855 = vpack.c.b16 %v7723, %v7721
    %v7856 = vpack.c.b16 %v7724, %v7722
    %v7857 = vpack.c.b16 %v7727, %v7725
    %v7858 = vpack.c.b16 %v7728, %v7726
    %v7859 = vpack.c.b16 %v7731, %v7729
    %v7860 = vpack.c.b16 %v7732, %v7730
    %7989 = vmatprep.subr.bf16.mxu0 %v7734
    %7990 = vmatpush1.bf16.msra.mxu0 %v7733
    %7991 = vmatprep.subr.bf16.mxu0 %v7736
    %7992 = vmatpush1.bf16.msra.mxu0 %v7735
    %7993 = vmatprep.subr.bf16.mxu0 %v7738
    %7994 = vmatpush1.bf16.msra.mxu0 %v7737
    %7995 = vmatprep.subr.bf16.mxu0 %v7740
    %7996 = vmatpush1.bf16.msra.mxu0 %v7739
    %7997 = vmatprep.subr.bf16.mxu0 %v7742
    %7998 = vmatpush1.bf16.msra.mxu0 %v7741
    %7999 = vmatprep.subr.bf16.mxu0 %v7744
    %8000 = vmatpush1.bf16.msra.mxu0 %v7743
    %8001 = vmatprep.subr.bf16.mxu0 %v7746
    %8002 = vmatpush1.bf16.msra.mxu0 %v7745
    %8003 = vmatprep.subr.bf16.mxu0 %v7748
    %8004 = vmatpush1.bf16.msra.mxu0 %v7747
    %8005 = vmatprep.subr.bf16.mxu0 %v7750
    %8006 = vmatpush1.bf16.msra.mxu0 %v7749
    %8007 = vmatprep.subr.bf16.mxu0 %v7752
    %8008 = vmatpush1.bf16.msra.mxu0 %v7751
    %8009 = vmatprep.subr.bf16.mxu0 %v7754
    %8010 = vmatpush1.bf16.msra.mxu0 %v7753
    %8011 = vmatprep.subr.bf16.mxu0 %v7756
    %8012 = vmatpush1.bf16.msra.mxu0 %v7755
    %8013 = vmatprep.subr.bf16.mxu0 %v7758
    %8014 = vmatpush1.bf16.msra.mxu0 %v7757
    %8015 = vmatprep.subr.bf16.mxu0 %v7760
    %8016 = vmatpush1.bf16.msra.mxu0 %v7759
    %8017 = vmatprep.subr.bf16.mxu0 %v7762
    %8018 = vmatpush1.bf16.msra.mxu0 %v7761
    %8019 = vmatprep.subr.bf16.mxu0 %v7764
    %8020 = vmatpush1.bf16.msra.mxu0 %v7763
    %8021 = vmatprep.mubr.bf16.mxu0 %v7145
    %8022 = vmatmul.mubr.bf16.gmra.mrb[0].mxu0 %v7144
    %v8023 = vpop.f32.mrb[0].mxu0
    %v8024 = vadd.f32 %v7342, %v8023
    %v8025 = vpop.f32.mrb[0].mxu0
    %v8026 = vadd.f32 %v7346, %v8025
    %v8027 = vpop.f32.mrb[0].mxu0
    %v8028 = vadd.f32 %v7342, %v8027
    %v8029 = vpop.f32.mrb[0].mxu0
    %v8030 = vadd.f32 %v7346, %v8029
    %8031 = vmatprep.mubr.bf16.mxu0 %v7153
    %8032 = vmatmul.mubr.bf16.gmra.mrb[0].mxu0 %v7152
    %v8033 = vpop.f32.mrb[0].mxu0
    %v8034 = vadd.f32 %v7342, %v8033
    %v8035 = vpop.f32.mrb[0].mxu0
    %v8036 = vadd.f32 %v7346, %v8035
    %v8037 = vpop.f32.mrb[0].mxu0
    %v8038 = vadd.f32 %v7342, %v8037
    %v8039 = vpop.f32.mrb[0].mxu0
    %v8040 = vadd.f32 %v7346, %v8039
    %8041 = vmatprep.mubr.bf16.mxu0 %v7161
    %8042 = vmatmul.mubr.bf16.gmra.mrb[0].mxu0 %v7160
    %v8043 = vpop.f32.mrb[0].mxu0
    %v8044 = vadd.f32 %v7342, %v8043
    %v8045 = vpop.f32.mrb[0].mxu0
    %v8046 = vadd.f32 %v7346, %v8045
    %v8047 = vpop.f32.mrb[0].mxu0
    %v8048 = vadd.f32 %v7342, %v8047
    %v8049 = vpop.f32.mrb[0].mxu0
    %v8050 = vadd.f32 %v7346, %v8049
    %8051 = vmatprep.mubr.bf16.mxu0 %v7169
    %8052 = vmatmul.mubr.bf16.gmra.mrb[0].mxu0 %v7168
    %v8053 = vpop.f32.mrb[0].mxu0
    %v8054 = vadd.f32 %v7342, %v8053
    %v8055 = vpop.f32.mrb[0].mxu0
    %v8056 = vadd.f32 %v7346, %v8055
    %v8057 = vpop.f32.mrb[0].mxu0
    %v8058 = vadd.f32 %v7342, %v8057
    %v8059 = vpop.f32.mrb[0].mxu0
    %v8060 = vadd.f32 %v7346, %v8059
    %8061 = vmatprep.mubr.bf16.mxu0 %v7177
    %8062 = vmatmul.mubr.bf16.gmra.mrb[0].mxu0 %v7176
    %v8063 = vpop.f32.mrb[0].mxu0
    %v8064 = vadd.f32 %v7342, %v8063
    %v8065 = vpop.f32.mrb[0].mxu0
    %v8066 = vadd.f32 %v7346, %v8065
    %v8067 = vpop.f32.mrb[0].mxu0
    %v8068 = vadd.f32 %v7342, %v8067
    %v8069 = vpop.f32.mrb[0].mxu0
    %v8070 = vadd.f32 %v7346, %v8069
    %8071 = vmatprep.mubr.bf16.mxu0 %v7185
    %8072 = vmatmul.mubr.bf16.gmra.mrb[0].mxu0 %v7184
    %v8073 = vpop.f32.mrb[0].mxu0
    %v8074 = vadd.f32 %v7342, %v8073
    %v8075 = vpop.f32.mrb[0].mxu0
    %v8076 = vadd.f32 %v7346, %v8075
    %v8077 = vpop.f32.mrb[0].mxu0
    %v8078 = vadd.f32 %v7342, %v8077
    %v8079 = vpop.f32.mrb[0].mxu0
    %v8080 = vadd.f32 %v7346, %v8079
    %8081 = vmatprep.mubr.bf16.mxu0 %v7193
    %8082 = vmatmul.mubr.bf16.gmra.mrb[0].mxu0 %v7192
    %v8083 = vpop.f32.mrb[0].mxu0
    %v8084 = vadd.f32 %v7342, %v8083
    %v8085 = vpop.f32.mrb[0].mxu0
    %v8086 = vadd.f32 %v7346, %v8085
    %v8087 = vpop.f32.mrb[0].mxu0
    %v8088 = vadd.f32 %v7342, %v8087
    %v8089 = vpop.f32.mrb[0].mxu0
    %v8090 = vadd.f32 %v7346, %v8089
    %8091 = vmatprep.mubr.bf16.mxu0 %v7201
    %8092 = vmatmul.mubr.bf16.gmra.mrb[0].mxu0 %v7200
    %v8093 = vpop.f32.mrb[0].mxu0
    %v8094 = vadd.f32 %v7342, %v8093
    %v8095 = vpop.f32.mrb[0].mxu0
    %v8096 = vadd.f32 %v7346, %v8095
    %v8097 = vpop.f32.mrb[0].mxu0
    %v8098 = vadd.f32 %v7342, %v8097
    %v8099 = vpop.f32.mrb[0].mxu0
    %v8100 = vadd.f32 %v7346, %v8099
    %8101 = vdwg.mxu0
    %8102 = vmatprep.subr.bf16.mxu0 %v7766
    %8103 = vmatpush1.bf16.msra.mxu0 %v7765
    %8104 = vmatprep.subr.bf16.mxu0 %v7768
    %8105 = vmatpush1.bf16.msra.mxu0 %v7767
    %8106 = vmatprep.subr.bf16.mxu0 %v7770
    %8107 = vmatpush1.bf16.msra.mxu0 %v7769
    %8108 = vmatprep.subr.bf16.mxu0 %v7772
    %8109 = vmatpush1.bf16.msra.mxu0 %v7771
    %8110 = vmatprep.subr.bf16.mxu0 %v7774
    %8111 = vmatpush1.bf16.msra.mxu0 %v7773
    %8112 = vmatprep.subr.bf16.mxu0 %v7776
    %8113 = vmatpush1.bf16.msra.mxu0 %v7775
    %8114 = vmatprep.subr.bf16.mxu0 %v7778
    %8115 = vmatpush1.bf16.msra.mxu0 %v7777
    %8116 = vmatprep.subr.bf16.mxu0 %v7780
    %8117 = vmatpush1.bf16.msra.mxu0 %v7779
    %8118 = vmatprep.subr.bf16.mxu0 %v7782
    %8119 = vmatpush1.bf16.msra.mxu0 %v7781
    %8120 = vmatprep.subr.bf16.mxu0 %v7784
    %8121 = vmatpush1.bf16.msra.mxu0 %v7783
    %8122 = vmatprep.subr.bf16.mxu0 %v7786
    %8123 = vmatpush1.bf16.msra.mxu0 %v7785
    %8124 = vmatprep.subr.bf16.mxu0 %v7788
    %8125 = vmatpush1.bf16.msra.mxu0 %v7787
    %8126 = vmatprep.subr.bf16.mxu0 %v7790
    %8127 = vmatpush1.bf16.msra.mxu0 %v7789
    %8128 = vmatprep.subr.bf16.mxu0 %v7792
    %8129 = vmatpush1.bf16.msra.mxu0 %v7791
    %8130 = vmatprep.subr.bf16.mxu0 %v7794
    %8131 = vmatpush1.bf16.msra.mxu0 %v7793
    %8132 = vmatprep.subr.bf16.mxu0 %v7796
    %8133 = vmatpush1.bf16.msra.mxu0 %v7795
    %8134 = vmatprep.mubr.bf16.mxu0 %v7147
    %8135 = vmatmul.mubr.bf16.gmra.mrb[0].mxu0 %v7146
    %v8136 = vpop.f32.mrb[0].mxu0
    %v8137 = vadd.f32 %v8024, %v8136
    %v8138 = vpop.f32.mrb[0].mxu0
    %v8139 = vadd.f32 %v8026, %v8138
    %v8140 = vpop.f32.mrb[0].mxu0
    %v8141 = vadd.f32 %v8028, %v8140
    %v8142 = vpop.f32.mrb[0].mxu0
    %v8143 = vadd.f32 %v8030, %v8142
    %8144 = vmatprep.mubr.bf16.mxu0 %v7155
    %8145 = vmatmul.mubr.bf16.gmra.mrb[0].mxu0 %v7154
    %v8146 = vpop.f32.mrb[0].mxu0
    %v8147 = vadd.f32 %v8034, %v8146
    %v8148 = vpop.f32.mrb[0].mxu0
    %v8149 = vadd.f32 %v8036, %v8148
    %v8150 = vpop.f32.mrb[0].mxu0
    %v8151 = vadd.f32 %v8038, %v8150
    %v8152 = vpop.f32.mrb[0].mxu0
    %v8153 = vadd.f32 %v8040, %v8152
    %8154 = vmatprep.mubr.bf16.mxu0 %v7163
    %8155 = vmatmul.mubr.bf16.gmra.mrb[0].mxu0 %v7162
    %v8156 = vpop.f32.mrb[0].mxu0
    %v8157 = vadd.f32 %v8044, %v8156
    %v8158 = vpop.f32.mrb[0].mxu0
    %v8159 = vadd.f32 %v8046, %v8158
    %v8160 = vpop.f32.mrb[0].mxu0
    %v8161 = vadd.f32 %v8048, %v8160
    %v8162 = vpop.f32.mrb[0].mxu0
    %v8163 = vadd.f32 %v8050, %v8162
    %8164 = vmatprep.mubr.bf16.mxu0 %v7171
    %8165 = vmatmul.mubr.bf16.gmra.mrb[0].mxu0 %v7170
    %v8166 = vpop.f32.mrb[0].mxu0
    %v8167 = vadd.f32 %v8054, %v8166
    %v8168 = vpop.f32.mrb[0].mxu0
    %v8169 = vadd.f32 %v8056, %v8168
    %v8170 = vpop.f32.mrb[0].mxu0
    %v8171 = vadd.f32 %v8058, %v8170
    %v8172 = vpop.f32.mrb[0].mxu0
    %v8173 = vadd.f32 %v8060, %v8172
    %8174 = vmatprep.mubr.bf16.mxu0 %v7179
    %8175 = vmatmul.mubr.bf16.gmra.mrb[0].mxu0 %v7178
    %v8176 = vpop.f32.mrb[0].mxu0
    %v8177 = vadd.f32 %v8064, %v8176
    %v8178 = vpop.f32.mrb[0].mxu0
    %v8179 = vadd.f32 %v8066, %v8178
    %v8180 = vpop.f32.mrb[0].mxu0
    %v8181 = vadd.f32 %v8068, %v8180
    %v8182 = vpop.f32.mrb[0].mxu0
    %v8183 = vadd.f32 %v8070, %v8182
    %8184 = vmatprep.mubr.bf16.mxu0 %v7187
    %8185 = vmatmul.mubr.bf16.gmra.mrb[0].mxu0 %v7186
    %v8186 = vpop.f32.mrb[0].mxu0
    %v8187 = vadd.f32 %v8074, %v8186
    %v8188 = vpop.f32.mrb[0].mxu0
    %v8189 = vadd.f32 %v8076, %v8188
    %v8190 = vpop.f32.mrb[0].mxu0
    %v8191 = vadd.f32 %v8078, %v8190
    %v8192 = vpop.f32.mrb[0].mxu0
    %v8193 = vadd.f32 %v8080, %v8192
    %8194 = vmatprep.mubr.bf16.mxu0 %v7195
    %8195 = vmatmul.mubr.bf16.gmra.mrb[0].mxu0 %v7194
    %v8196 = vpop.f32.mrb[0].mxu0
    %v8197 = vadd.f32 %v8084, %v8196
    %v8198 = vpop.f32.mrb[0].mxu0
    %v8199 = vadd.f32 %v8086, %v8198
    %v8200 = vpop.f32.mrb[0].mxu0
    %v8201 = vadd.f32 %v8088, %v8200
    %v8202 = vpop.f32.mrb[0].mxu0
    %v8203 = vadd.f32 %v8090, %v8202
    %8204 = vmatprep.mubr.bf16.mxu0 %v7203
    %8205 = vmatmul.mubr.bf16.gmra.mrb[0].mxu0 %v7202
    %v8206 = vpop.f32.mrb[0].mxu0
    %v8207 = vadd.f32 %v8094, %v8206
    %v8208 = vpop.f32.mrb[0].mxu0
    %v8209 = vadd.f32 %v8096, %v8208
    %v8210 = vpop.f32.mrb[0].mxu0
    %v8211 = vadd.f32 %v8098, %v8210
    %v8212 = vpop.f32.mrb[0].mxu0
    %v8213 = vadd.f32 %v8100, %v8212
    %8214 = vdwg.mxu0
    %8215 = vmatprep.subr.bf16.mxu0 %v7798
    %8216 = vmatpush1.bf16.msra.mxu0 %v7797
    %8217 = vmatprep.subr.bf16.mxu0 %v7800
    %8218 = vmatpush1.bf16.msra.mxu0 %v7799
    %8219 = vmatprep.subr.bf16.mxu0 %v7802
    %8220 = vmatpush1.bf16.msra.mxu0 %v7801
    %8221 = vmatprep.subr.bf16.mxu0 %v7804
    %8222 = vmatpush1.bf16.msra.mxu0 %v7803
    %8223 = vmatprep.subr.bf16.mxu0 %v7806
    %8224 = vmatpush1.bf16.msra.mxu0 %v7805
    %8225 = vmatprep.subr.bf16.mxu0 %v7808
    %8226 = vmatpush1.bf16.msra.mxu0 %v7807
    %8227 = vmatprep.subr.bf16.mxu0 %v7810
    %8228 = vmatpush1.bf16.msra.mxu0 %v7809
    %8229 = vmatprep.subr.bf16.mxu0 %v7812
    %8230 = vmatpush1.bf16.msra.mxu0 %v7811
    %8231 = vmatprep.subr.bf16.mxu0 %v7814
    %8232 = vmatpush1.bf16.msra.mxu0 %v7813
    %8233 = vmatprep.subr.bf16.mxu0 %v7816
    %8234 = vmatpush1.bf16.msra.mxu0 %v7815
    %8235 = vmatprep.subr.bf16.mxu0 %v7818
    %8236 = vmatpush1.bf16.msra.mxu0 %v7817
    %8237 = vmatprep.subr.bf16.mxu0 %v7820
    %8238 = vmatpush1.bf16.msra.mxu0 %v7819
    %8239 = vmatprep.subr.bf16.mxu0 %v7822
    %8240 = vmatpush1.bf16.msra.mxu0 %v7821
    %8241 = vmatprep.subr.bf16.mxu0 %v7824
    %8242 = vmatpush1.bf16.msra.mxu0 %v7823
    %8243 = vmatprep.subr.bf16.mxu0 %v7826
    %8244 = vmatpush1.bf16.msra.mxu0 %v7825
    %8245 = vmatprep.subr.bf16.mxu0 %v7828
    %8246 = vmatpush1.bf16.msra.mxu0 %v7827
    %8247 = vmatprep.mubr.bf16.mxu0 %v7149
    %8248 = vmatmul.mubr.bf16.gmra.mrb[0].mxu0 %v7148
    %v8249 = vpop.f32.mrb[0].mxu0
    %v8250 = vadd.f32 %v8137, %v8249
    %v8251 = vpop.f32.mrb[0].mxu0
    %v8252 = vadd.f32 %v8139, %v8251
    %v8253 = vpop.f32.mrb[0].mxu0
    %v8254 = vadd.f32 %v8141, %v8253
    %v8255 = vpop.f32.mrb[0].mxu0
    %v8256 = vadd.f32 %v8143, %v8255
    %8257 = vmatprep.mubr.bf16.mxu0 %v7157
    %8258 = vmatmul.mubr.bf16.gmra.mrb[0].mxu0 %v7156
    %v8259 = vpop.f32.mrb[0].mxu0
    %v8260 = vadd.f32 %v8147, %v8259
    %v8261 = vpop.f32.mrb[0].mxu0
    %v8262 = vadd.f32 %v8149, %v8261
    %v8263 = vpop.f32.mrb[0].mxu0
    %v8264 = vadd.f32 %v8151, %v8263
    %v8265 = vpop.f32.mrb[0].mxu0
    %v8266 = vadd.f32 %v8153, %v8265
    %8267 = vmatprep.mubr.bf16.mxu0 %v7165
    %8268 = vmatmul.mubr.bf16.gmra.mrb[0].mxu0 %v7164
    %v8269 = vpop.f32.mrb[0].mxu0
    %v8270 = vadd.f32 %v8157, %v8269
    %v8271 = vpop.f32.mrb[0].mxu0
    %v8272 = vadd.f32 %v8159, %v8271
    %v8273 = vpop.f32.mrb[0].mxu0
    %v8274 = vadd.f32 %v8161, %v8273
    %v8275 = vpop.f32.mrb[0].mxu0
    %v8276 = vadd.f32 %v8163, %v8275
    %8277 = vmatprep.mubr.bf16.mxu0 %v7173
    %8278 = vmatmul.mubr.bf16.gmra.mrb[0].mxu0 %v7172
    %v8279 = vpop.f32.mrb[0].mxu0
    %v8280 = vadd.f32 %v8167, %v8279
    %v8281 = vpop.f32.mrb[0].mxu0
    %v8282 = vadd.f32 %v8169, %v8281
    %v8283 = vpop.f32.mrb[0].mxu0
    %v8284 = vadd.f32 %v8171, %v8283
    %v8285 = vpop.f32.mrb[0].mxu0
    %v8286 = vadd.f32 %v8173, %v8285
    %8287 = vmatprep.mubr.bf16.mxu0 %v7181
    %8288 = vmatmul.mubr.bf16.gmra.mrb[0].mxu0 %v7180
    %v8289 = vpop.f32.mrb[0].mxu0
    %v8290 = vadd.f32 %v8177, %v8289
    %v8291 = vpop.f32.mrb[0].mxu0
    %v8292 = vadd.f32 %v8179, %v8291
    %v8293 = vpop.f32.mrb[0].mxu0
    %v8294 = vadd.f32 %v8181, %v8293
    %v8295 = vpop.f32.mrb[0].mxu0
    %v8296 = vadd.f32 %v8183, %v8295
    %8297 = vmatprep.mubr.bf16.mxu0 %v7189
    %8298 = vmatmul.mubr.bf16.gmra.mrb[0].mxu0 %v7188
    %v8299 = vpop.f32.mrb[0].mxu0
    %v8300 = vadd.f32 %v8187, %v8299
    %v8301 = vpop.f32.mrb[0].mxu0
    %v8302 = vadd.f32 %v8189, %v8301
    %v8303 = vpop.f32.mrb[0].mxu0
    %v8304 = vadd.f32 %v8191, %v8303
    %v8305 = vpop.f32.mrb[0].mxu0
    %v8306 = vadd.f32 %v8193, %v8305
    %8307 = vmatprep.mubr.bf16.mxu0 %v7197
    %8308 = vmatmul.mubr.bf16.gmra.mrb[0].mxu0 %v7196
    %v8309 = vpop.f32.mrb[0].mxu0
    %v8310 = vadd.f32 %v8197, %v8309
    %v8311 = vpop.f32.mrb[0].mxu0
    %v8312 = vadd.f32 %v8199, %v8311
    %v8313 = vpop.f32.mrb[0].mxu0
    %v8314 = vadd.f32 %v8201, %v8313
    %v8315 = vpop.f32.mrb[0].mxu0
    %v8316 = vadd.f32 %v8203, %v8315
    %8317 = vmatprep.mubr.bf16.mxu0 %v7205
    %8318 = vmatmul.mubr.bf16.gmra.mrb[0].mxu0 %v7204
    %v8319 = vpop.f32.mrb[0].mxu0
    %v8320 = vadd.f32 %v8207, %v8319
    %v8321 = vpop.f32.mrb[0].mxu0
    %v8322 = vadd.f32 %v8209, %v8321
    %v8323 = vpop.f32.mrb[0].mxu0
    %v8324 = vadd.f32 %v8211, %v8323
    %v8325 = vpop.f32.mrb[0].mxu0
    %v8326 = vadd.f32 %v8213, %v8325
    %8327 = vdwg.mxu0
    %8328 = vmatprep.subr.bf16.mxu0 %v7830
    %8329 = vmatpush1.bf16.msra.mxu0 %v7829
    %8330 = vmatprep.subr.bf16.mxu0 %v7832
    %8331 = vmatpush1.bf16.msra.mxu0 %v7831
    %8332 = vmatprep.subr.bf16.mxu0 %v7834
    %8333 = vmatpush1.bf16.msra.mxu0 %v7833
    %8334 = vmatprep.subr.bf16.mxu0 %v7836
    %8335 = vmatpush1.bf16.msra.mxu0 %v7835
    %8336 = vmatprep.subr.bf16.mxu0 %v7838
    %8337 = vmatpush1.bf16.msra.mxu0 %v7837
    %8338 = vmatprep.subr.bf16.mxu0 %v7840
    %8339 = vmatpush1.bf16.msra.mxu0 %v7839
    %8340 = vmatprep.subr.bf16.mxu0 %v7842
    %8341 = vmatpush1.bf16.msra.mxu0 %v7841
    %8342 = vmatprep.subr.bf16.mxu0 %v7844
    %8343 = vmatpush1.bf16.msra.mxu0 %v7843
    %8344 = vmatprep.subr.bf16.mxu0 %v7846
    %8345 = vmatpush1.bf16.msra.mxu0 %v7845
    %8346 = vmatprep.subr.bf16.mxu0 %v7848
    %8347 = vmatpush1.bf16.msra.mxu0 %v7847
    %8348 = vmatprep.subr.bf16.mxu0 %v7850
    %8349 = vmatpush1.bf16.msra.mxu0 %v7849
    %8350 = vmatprep.subr.bf16.mxu0 %v7852
    %8351 = vmatpush1.bf16.msra.mxu0 %v7851
    %8352 = vmatprep.subr.bf16.mxu0 %v7854
    %8353 = vmatpush1.bf16.msra.mxu0 %v7853
    %8354 = vmatprep.subr.bf16.mxu0 %v7856
    %8355 = vmatpush1.bf16.msra.mxu0 %v7855
    %8356 = vmatprep.subr.bf16.mxu0 %v7858
    %8357 = vmatpush1.bf16.msra.mxu0 %v7857
    %8358 = vmatprep.subr.bf16.mxu0 %v7860
    %8359 = vmatpush1.bf16.msra.mxu0 %v7859
    %8360 = vmatprep.mubr.bf16.mxu0 %v7151
    %8361 = vmatmul.mubr.bf16.gmra.mrb[0].mxu0 %v7150
    %v8362 = vpop.f32.mrb[0].mxu0
    %v8363 = vadd.f32 %v8250, %v8362
    %v8364 = vpop.f32.mrb[0].mxu0
    %v8365 = vadd.f32 %v8252, %v8364
    %v8366 = vpop.f32.mrb[0].mxu0
    %v8367 = vadd.f32 %v8254, %v8366
    %v8368 = vpop.f32.mrb[0].mxu0
    %v8369 = vadd.f32 %v8256, %v8368
    %8370 = vmatprep.mubr.bf16.mxu0 %v7159
    %8371 = vmatmul.mubr.bf16.gmra.mrb[0].mxu0 %v7158
    %v8372 = vpop.f32.mrb[0].mxu0
    %v8373 = vadd.f32 %v8260, %v8372
    %v8374 = vpop.f32.mrb[0].mxu0
    %v8375 = vadd.f32 %v8262, %v8374
    %v8376 = vpop.f32.mrb[0].mxu0
    %v8377 = vadd.f32 %v8264, %v8376
    %v8378 = vpop.f32.mrb[0].mxu0
    %v8379 = vadd.f32 %v8266, %v8378
    %8380 = vmatprep.mubr.bf16.mxu0 %v7167
    %8381 = vmatmul.mubr.bf16.gmra.mrb[0].mxu0 %v7166
    %v8382 = vpop.f32.mrb[0].mxu0
    %v8383 = vadd.f32 %v8270, %v8382
    %v8384 = vpop.f32.mrb[0].mxu0
    %v8385 = vadd.f32 %v8272, %v8384
    %v8386 = vpop.f32.mrb[0].mxu0
    %v8387 = vadd.f32 %v8274, %v8386
    %v8388 = vpop.f32.mrb[0].mxu0
    %v8389 = vadd.f32 %v8276, %v8388
    %8390 = vmatprep.mubr.bf16.mxu0 %v7175
    %8391 = vmatmul.mubr.bf16.gmra.mrb[0].mxu0 %v7174
    %v8392 = vpop.f32.mrb[0].mxu0
    %v8393 = vadd.f32 %v8280, %v8392
    %v8394 = vpop.f32.mrb[0].mxu0
    %v8395 = vadd.f32 %v8282, %v8394
    %v8396 = vpop.f32.mrb[0].mxu0
    %v8397 = vadd.f32 %v8284, %v8396
    %v8398 = vpop.f32.mrb[0].mxu0
    %v8399 = vadd.f32 %v8286, %v8398
    %8400 = vmatprep.mubr.bf16.mxu0 %v7183
    %8401 = vmatmul.mubr.bf16.gmra.mrb[0].mxu0 %v7182
    %v8402 = vpop.f32.mrb[0].mxu0
    %v8403 = vadd.f32 %v8290, %v8402
    %v8404 = vpop.f32.mrb[0].mxu0
    %v8405 = vadd.f32 %v8292, %v8404
    %v8406 = vpop.f32.mrb[0].mxu0
    %v8407 = vadd.f32 %v8294, %v8406
    %v8408 = vpop.f32.mrb[0].mxu0
    %v8409 = vadd.f32 %v8296, %v8408
    %8410 = vmatprep.mubr.bf16.mxu0 %v7191
    %8411 = vmatmul.mubr.bf16.gmra.mrb[0].mxu0 %v7190
    %v8412 = vpop.f32.mrb[0].mxu0
    %v8413 = vadd.f32 %v8300, %v8412
    %v8414 = vpop.f32.mrb[0].mxu0
    %v8415 = vadd.f32 %v8302, %v8414
    %v8416 = vpop.f32.mrb[0].mxu0
    %v8417 = vadd.f32 %v8304, %v8416
    %v8418 = vpop.f32.mrb[0].mxu0
    %v8419 = vadd.f32 %v8306, %v8418
    %8420 = vmatprep.mubr.bf16.mxu0 %v7199
    %8421 = vmatmul.mubr.bf16.gmra.mrb[0].mxu0 %v7198
    %v8422 = vpop.f32.mrb[0].mxu0
    %v8423 = vadd.f32 %v8310, %v8422
    %v8424 = vpop.f32.mrb[0].mxu0
    %v8425 = vadd.f32 %v8312, %v8424
    %v8426 = vpop.f32.mrb[0].mxu0
    %v8427 = vadd.f32 %v8314, %v8426
    %v8428 = vpop.f32.mrb[0].mxu0
    %v8429 = vadd.f32 %v8316, %v8428
    %8430 = vmatprep.mubr.bf16.mxu0 %v7207
    %8431 = vmatmul.mubr.bf16.gmra.mrb[0].mxu0 %v7206
    %v8432 = vpop.f32.mrb[0].mxu0
    %v8433 = vadd.f32 %v8320, %v8432
    %v8434 = vpop.f32.mrb[0].mxu0
    %v8435 = vadd.f32 %v8322, %v8434
    %v8436 = vpop.f32.mrb[0].mxu0
    %v8437 = vadd.f32 %v8324, %v8436
    %v8438 = vpop.f32.mrb[0].mxu0
    %v8439 = vadd.f32 %v8326, %v8438
    %8440 = vdwg.mxu0
    %v8441 = vmax.f32 %v8363, 0.0
    %v8442 = vmax.f32 %v8365, 0.0
    %v8443 = vmax.f32 %v8367, 0.0
    %v8444 = vmax.f32 %v8369, 0.0
    %v8445 = vmax.f32 %v8373, 0.0
    %v8446 = vmax.f32 %v8375, 0.0
    %v8447 = vmax.f32 %v8377, 0.0
    %v8448 = vmax.f32 %v8379, 0.0
    %v8449 = vmax.f32 %v8383, 0.0
    %v8450 = vmax.f32 %v8385, 0.0
    %v8451 = vmax.f32 %v8387, 0.0
    %v8452 = vmax.f32 %v8389, 0.0
    %v8453 = vmax.f32 %v8393, 0.0
    %v8454 = vmax.f32 %v8395, 0.0
    %v8455 = vmax.f32 %v8397, 0.0
    %v8456 = vmax.f32 %v8399, 0.0
    %v8457 = vmax.f32 %v8403, 0.0
    %v8458 = vmax.f32 %v8405, 0.0
    %v8459 = vmax.f32 %v8407, 0.0
    %v8460 = vmax.f32 %v8409, 0.0
    %v8461 = vmax.f32 %v8413, 0.0
    %v8462 = vmax.f32 %v8415, 0.0
    %v8463 = vmax.f32 %v8417, 0.0
    %v8464 = vmax.f32 %v8419, 0.0
    %v8465 = vmax.f32 %v8423, 0.0
    %v8466 = vmax.f32 %v8425, 0.0
    %v8467 = vmax.f32 %v8427, 0.0
    %v8468 = vmax.f32 %v8429, 0.0
    %v8469 = vmax.f32 %v8433, 0.0
    %v8470 = vmax.f32 %v8435, 0.0
    %v8471 = vmax.f32 %v8437, 0.0
    %v8472 = vmax.f32 %v8439, 0.0
    %v8473 = vpack.c.bf16 %v8443, %v8441
    %v8474 = vpack.c.bf16 %v8444, %v8442
    %v8475 = vpack.c.bf16 %v8447, %v8445
    %v8476 = vpack.c.bf16 %v8448, %v8446
    %v8477 = vpack.c.bf16 %v8451, %v8449
    %v8478 = vpack.c.bf16 %v8452, %v8450
    %v8479 = vpack.c.bf16 %v8455, %v8453
    %v8480 = vpack.c.bf16 %v8456, %v8454
    %v8481 = vpack.c.bf16 %v8459, %v8457
    %v8482 = vpack.c.bf16 %v8460, %v8458
    %v8483 = vpack.c.bf16 %v8463, %v8461
    %v8484 = vpack.c.bf16 %v8464, %v8462
    %v8485 = vpack.c.bf16 %v8467, %v8465
    %v8486 = vpack.c.bf16 %v8468, %v8466
    %v8487 = vpack.c.bf16 %v8471, %v8469
    %v8488 = vpack.c.bf16 %v8472, %v8470
    %v8489 = vld [vmem:[#allocation13] sm:$0xf]
    %v8490 = vld [vmem:[#allocation13 + $0x4] sm:$0xf]
    %v8491 = vld [vmem:[#allocation13 + $0x8] sm:$0xf]
    %v8492 = vld [vmem:[#allocation13 + $0xc] sm:$0xf]
    %v8493 = vld [vmem:[#allocation13 + $0x10] sm:$0xf]
    %v8494 = vld [vmem:[#allocation13 + $0x14] sm:$0xf]
    %v8495 = vld [vmem:[#allocation13 + $0x18] sm:$0xf]
    %v8496 = vld [vmem:[#allocation13 + $0x1c] sm:$0xf]
    %v8497 = vld [vmem:[#allocation13 + $0x20] sm:$0xf]
    %v8498 = vld [vmem:[#allocation13 + $0x24] sm:$0xf]
    %v8499 = vld [vmem:[#allocation13 + $0x28] sm:$0xf]
    %v8500 = vld [vmem:[#allocation13 + $0x2c] sm:$0xf]
    %v8501 = vld [vmem:[#allocation13 + $0x30] sm:$0xf]
    %v8502 = vld [vmem:[#allocation13 + $0x34] sm:$0xf]
    %v8503 = vld [vmem:[#allocation13 + $0x38] sm:$0xf]
    %v8504 = vld [vmem:[#allocation13 + $0x3c] sm:$0xf]
    %v8505 = vld [vmem:[#allocation13 + $0x40] sm:$0xf]
    %v8506 = vld [vmem:[#allocation13 + $0x44] sm:$0xf]
    %v8507 = vld [vmem:[#allocation13 + $0x48] sm:$0xf]
    %v8508 = vld [vmem:[#allocation13 + $0x4c] sm:$0xf]
    %v8509 = vld [vmem:[#allocation13 + $0x50] sm:$0xf]
    %v8510 = vld [vmem:[#allocation13 + $0x54] sm:$0xf]
    %v8511 = vld [vmem:[#allocation13 + $0x58] sm:$0xf]
    %v8512 = vld [vmem:[#allocation13 + $0x5c] sm:$0xf]
    %v8513 = vld [vmem:[#allocation13 + $0x60] sm:$0xf]
    %v8514 = vld [vmem:[#allocation13 + $0x64] sm:$0xf]
    %v8515 = vld [vmem:[#allocation13 + $0x68] sm:$0xf]
    %v8516 = vld [vmem:[#allocation13 + $0x6c] sm:$0xf]
    %v8517 = vld [vmem:[#allocation13 + $0x70] sm:$0xf]
    %v8518 = vld [vmem:[#allocation13 + $0x74] sm:$0xf]
    %v8519 = vld [vmem:[#allocation13 + $0x78] sm:$0xf]
    %v8520 = vld [vmem:[#allocation13 + $0x7c] sm:$0xf]
    %v8521 = vld [vmem:[#allocation16 + $0x5] ss:$0 sm:$0xff]
    %v8554 = vunpack.c.l.b16 %v8489
    %v8555 = vunpack.c.l.b16 %v8490
    %v8556 = vunpack.c.l.b16 %v8491
    %v8557 = vunpack.c.l.b16 %v8492
    %v8558 = vunpack.c.l.b16 %v8493
    %v8559 = vunpack.c.l.b16 %v8494
    %v8560 = vunpack.c.l.b16 %v8495
    %v8561 = vunpack.c.l.b16 %v8496
    %v8562 = vunpack.c.l.b16 %v8497
    %v8563 = vunpack.c.l.b16 %v8498
    %v8564 = vunpack.c.l.b16 %v8499
    %v8565 = vunpack.c.l.b16 %v8500
    %v8566 = vunpack.c.l.b16 %v8501
    %v8567 = vunpack.c.l.b16 %v8502
    %v8568 = vunpack.c.l.b16 %v8503
    %v8569 = vunpack.c.l.b16 %v8504
    %v8570 = vunpack.c.l.b16 %v8505
    %v8571 = vunpack.c.l.b16 %v8506
    %v8572 = vunpack.c.l.b16 %v8507
    %v8573 = vunpack.c.l.b16 %v8508
    %v8574 = vunpack.c.l.b16 %v8509
    %v8575 = vunpack.c.l.b16 %v8510
    %v8576 = vunpack.c.l.b16 %v8511
    %v8577 = vunpack.c.l.b16 %v8512
    %v8578 = vunpack.c.l.b16 %v8513
    %v8579 = vunpack.c.l.b16 %v8514
    %v8580 = vunpack.c.l.b16 %v8515
    %v8581 = vunpack.c.l.b16 %v8516
    %v8582 = vunpack.c.l.b16 %v8517
    %v8583 = vunpack.c.l.b16 %v8518
    %v8584 = vunpack.c.l.b16 %v8519
    %v8585 = vunpack.c.l.b16 %v8520
    %v8586 = vpack.c.b16 %v8555, %v8554
    %v8587 = vpack.c.b16 %v8557, %v8556
    %v8588 = vpack.c.b16 %v8559, %v8558
    %v8589 = vpack.c.b16 %v8561, %v8560
    %v8590 = vpack.c.b16 %v8563, %v8562
    %v8591 = vpack.c.b16 %v8565, %v8564
    %v8592 = vpack.c.b16 %v8567, %v8566
    %v8593 = vpack.c.b16 %v8569, %v8568
    %v8594 = vpack.c.b16 %v8571, %v8570
    %v8595 = vpack.c.b16 %v8573, %v8572
    %v8596 = vpack.c.b16 %v8575, %v8574
    %v8597 = vpack.c.b16 %v8577, %v8576
    %v8598 = vpack.c.b16 %v8579, %v8578
    %v8599 = vpack.c.b16 %v8581, %v8580
    %v8600 = vpack.c.b16 %v8583, %v8582
    %v8601 = vpack.c.b16 %v8585, %v8584
    %8618 = vmatprep.subr.bf16.mxu0 0
    %8619 = vmatpush1.bf16.msra.mxu0 %v8586
    %8620 = vmatprep.subr.bf16.mxu0 0
    %8621 = vmatpush1.bf16.msra.mxu0 %v8587
    %8622 = vmatprep.subr.bf16.mxu0 0
    %8623 = vmatpush1.bf16.msra.mxu0 %v8588
    %8624 = vmatprep.subr.bf16.mxu0 0
    %8625 = vmatpush1.bf16.msra.mxu0 %v8589
    %8626 = vmatprep.subr.bf16.mxu0 0
    %8627 = vmatpush1.bf16.msra.mxu0 %v8590
    %8628 = vmatprep.subr.bf16.mxu0 0
    %8629 = vmatpush1.bf16.msra.mxu0 %v8591
    %8630 = vmatprep.subr.bf16.mxu0 0
    %8631 = vmatpush1.bf16.msra.mxu0 %v8592
    %8632 = vmatprep.subr.bf16.mxu0 0
    %8633 = vmatpush1.bf16.msra.mxu0 %v8593
    %8634 = vmatprep.subr.bf16.mxu0 0
    %8635 = vmatpush1.bf16.msra.mxu0 %v8594
    %8636 = vmatprep.subr.bf16.mxu0 0
    %8637 = vmatpush1.bf16.msra.mxu0 %v8595
    %8638 = vmatprep.subr.bf16.mxu0 0
    %8639 = vmatpush1.bf16.msra.mxu0 %v8596
    %8640 = vmatprep.subr.bf16.mxu0 0
    %8641 = vmatpush1.bf16.msra.mxu0 %v8597
    %8642 = vmatprep.subr.bf16.mxu0 0
    %8643 = vmatpush1.bf16.msra.mxu0 %v8598
    %8644 = vmatprep.subr.bf16.mxu0 0
    %8645 = vmatpush1.bf16.msra.mxu0 %v8599
    %8646 = vmatprep.subr.bf16.mxu0 0
    %8647 = vmatpush1.bf16.msra.mxu0 %v8600
    %8648 = vmatprep.subr.bf16.mxu0 0
    %8649 = vmatpush1.bf16.msra.mxu0 %v8601
    %8650 = vmatprep.mubr.bf16.mxu0 %v8474
    %8651 = vmatmul.mubr.bf16.gmra.mrb[0].mxu0 %v8473
    %v8652 = vpop.f32.mrb[0].mxu0
    %v8653 = vadd.f32 %v8521, %v8652
    %v8654 = vpop.f32.mrb[0].mxu0
    %v8655 = vpop.f32.mrb[0].mxu0
    %v8656 = vadd.f32 %v8521, %v8655
    %v8657 = vpop.f32.mrb[0].mxu0
    %8658 = vmatprep.mubr.bf16.mxu0 %v8476
    %8659 = vmatmul.mubr.bf16.gmra.mrb[0].mxu0 %v8475
    %v8660 = vpop.f32.mrb[0].mxu0
    %v8661 = vadd.f32 %v8521, %v8660
    %v8662 = vpop.f32.mrb[0].mxu0
    %v8663 = vpop.f32.mrb[0].mxu0
    %v8664 = vadd.f32 %v8521, %v8663
    %v8665 = vpop.f32.mrb[0].mxu0
    %8666 = vmatprep.mubr.bf16.mxu0 %v8478
    %8667 = vmatmul.mubr.bf16.gmra.mrb[0].mxu0 %v8477
    %v8668 = vpop.f32.mrb[0].mxu0
    %v8669 = vadd.f32 %v8521, %v8668
    %v8670 = vpop.f32.mrb[0].mxu0
    %v8671 = vpop.f32.mrb[0].mxu0
    %v8672 = vadd.f32 %v8521, %v8671
    %v8673 = vpop.f32.mrb[0].mxu0
    %8674 = vmatprep.mubr.bf16.mxu0 %v8480
    %8675 = vmatmul.mubr.bf16.gmra.mrb[0].mxu0 %v8479
    %v8676 = vpop.f32.mrb[0].mxu0
    %v8677 = vadd.f32 %v8521, %v8676
    %v8678 = vpop.f32.mrb[0].mxu0
    %v8679 = vpop.f32.mrb[0].mxu0
    %v8680 = vadd.f32 %v8521, %v8679
    %v8681 = vpop.f32.mrb[0].mxu0
    %8682 = vmatprep.mubr.bf16.mxu0 %v8482
    %8683 = vmatmul.mubr.bf16.gmra.mrb[0].mxu0 %v8481
    %v8684 = vpop.f32.mrb[0].mxu0
    %v8685 = vadd.f32 %v8521, %v8684
    %v8686 = vpop.f32.mrb[0].mxu0
    %v8687 = vpop.f32.mrb[0].mxu0
    %v8688 = vadd.f32 %v8521, %v8687
    %v8689 = vpop.f32.mrb[0].mxu0
    %8690 = vmatprep.mubr.bf16.mxu0 %v8484
    %8691 = vmatmul.mubr.bf16.gmra.mrb[0].mxu0 %v8483
    %v8692 = vpop.f32.mrb[0].mxu0
    %v8693 = vadd.f32 %v8521, %v8692
    %v8694 = vpop.f32.mrb[0].mxu0
    %v8695 = vpop.f32.mrb[0].mxu0
    %v8696 = vadd.f32 %v8521, %v8695
    %v8697 = vpop.f32.mrb[0].mxu0
    %8698 = vmatprep.mubr.bf16.mxu0 %v8486
    %8699 = vmatmul.mubr.bf16.gmra.mrb[0].mxu0 %v8485
    %v8700 = vpop.f32.mrb[0].mxu0
    %v8701 = vadd.f32 %v8521, %v8700
    %v8702 = vpop.f32.mrb[0].mxu0
    %v8703 = vpop.f32.mrb[0].mxu0
    %v8704 = vadd.f32 %v8521, %v8703
    %v8705 = vpop.f32.mrb[0].mxu0
    %8706 = vmatprep.mubr.bf16.mxu0 %v8488
    %8707 = vmatmul.mubr.bf16.gmra.mrb[0].mxu0 %v8487
    %v8708 = vpop.f32.mrb[0].mxu0
    %v8709 = vadd.f32 %v8521, %v8708
    %v8710 = vpop.f32.mrb[0].mxu0
    %v8711 = vpop.f32.mrb[0].mxu0
    %v8712 = vadd.f32 %v8521, %v8711
    %v8713 = vpop.f32.mrb[0].mxu0
    %8714 = vdwg.mxu0
    %v8715 = vmax.f32 %v8653, 0.0
    %v8716 = vmax.f32 %v8656, 0.0
    %v8717 = vmax.f32 %v8661, 0.0
    %v8718 = vmax.f32 %v8664, 0.0
    %v8719 = vmax.f32 %v8669, 0.0
    %v8720 = vmax.f32 %v8672, 0.0
    %v8721 = vmax.f32 %v8677, 0.0
    %v8722 = vmax.f32 %v8680, 0.0
    %v8723 = vmax.f32 %v8685, 0.0
    %v8724 = vmax.f32 %v8688, 0.0
    %v8725 = vmax.f32 %v8693, 0.0
    %v8726 = vmax.f32 %v8696, 0.0
    %v8727 = vmax.f32 %v8701, 0.0
    %v8728 = vmax.f32 %v8704, 0.0
    %v8729 = vmax.f32 %v8709, 0.0
    %v8730 = vmax.f32 %v8712, 0.0
    %v8731 = vpack.c.bf16 %v8716, %v8715
    %v8732 = vpack.c.bf16 %v8718, %v8717
    %v8733 = vpack.c.bf16 %v8720, %v8719
    %v8734 = vpack.c.bf16 %v8722, %v8721
    %v8735 = vpack.c.bf16 %v8724, %v8723
    %v8736 = vpack.c.bf16 %v8726, %v8725
    %v8737 = vpack.c.bf16 %v8728, %v8727
    %v8738 = vpack.c.bf16 %v8730, %v8729
    %v8739 = vld [vmem:[#allocation14] sm:$0xf]
    %v8740 = vld [vmem:[#allocation14 + $0x4] sm:$0xf]
    %v8741 = vld [vmem:[#allocation14 + $0x8] sm:$0xf]
    %v8742 = vld [vmem:[#allocation14 + $0xc] sm:$0xf]
    %v8743 = vld [vmem:[#allocation14 + $0x10] sm:$0xf]
    %v8744 = vld [vmem:[#allocation14 + $0x14] sm:$0xf]
    %v8745 = vld [vmem:[#allocation14 + $0x18] sm:$0xf]
    %v8746 = vld [vmem:[#allocation14 + $0x1c] sm:$0xf]
    %v8747 = vld [vmem:[#allocation14 + $0x20] sm:$0xf]
    %v8748 = vld [vmem:[#allocation14 + $0x24] sm:$0xf]
    %v8749 = vld [vmem:[#allocation14 + $0x28] sm:$0xf]
    %v8750 = vld [vmem:[#allocation14 + $0x2c] sm:$0xf]
    %v8751 = vld [vmem:[#allocation14 + $0x30] sm:$0xf]
    %v8752 = vld [vmem:[#allocation14 + $0x34] sm:$0xf]
    %v8753 = vld [vmem:[#allocation14 + $0x38] sm:$0xf]
    %v8754 = vld [vmem:[#allocation14 + $0x3c] sm:$0xf]
    %v8755 = vld [vmem:[#allocation16 + $0x6] ss:$0 sm:$0xff]
    %v8772 = vunpack.c.l.b16 %v8739
    %v8773 = vunpack.c.l.b16 %v8740
    %v8774 = vunpack.c.l.b16 %v8741
    %v8775 = vunpack.c.l.b16 %v8742
    %v8776 = vunpack.c.l.b16 %v8743
    %v8777 = vunpack.c.l.b16 %v8744
    %v8778 = vunpack.c.l.b16 %v8745
    %v8779 = vunpack.c.l.b16 %v8746
    %v8780 = vunpack.c.l.b16 %v8747
    %v8781 = vunpack.c.l.b16 %v8748
    %v8782 = vunpack.c.l.b16 %v8749
    %v8783 = vunpack.c.l.b16 %v8750
    %v8784 = vunpack.c.l.b16 %v8751
    %v8785 = vunpack.c.l.b16 %v8752
    %v8786 = vunpack.c.l.b16 %v8753
    %v8787 = vunpack.c.l.b16 %v8754
    %v8788 = vpack.c.b16 %v8773, %v8772
    %v8789 = vpack.c.b16 %v8775, %v8774
    %v8790 = vpack.c.b16 %v8777, %v8776
    %v8791 = vpack.c.b16 %v8779, %v8778
    %v8792 = vpack.c.b16 %v8781, %v8780
    %v8793 = vpack.c.b16 %v8783, %v8782
    %v8794 = vpack.c.b16 %v8785, %v8784
    %v8795 = vpack.c.b16 %v8787, %v8786
    %8804 = vmatprep.subr.bf16.mxu0 0
    %8805 = vmatpush1.bf16.msra.mxu0 %v8788
    %8806 = vmatprep.subr.bf16.mxu0 0
    %8807 = vmatpush1.bf16.msra.mxu0 %v8789
    %8808 = vmatprep.subr.bf16.mxu0 0
    %8809 = vmatpush1.bf16.msra.mxu0 %v8790
    %8810 = vmatprep.subr.bf16.mxu0 0
    %8811 = vmatpush1.bf16.msra.mxu0 %v8791
    %8812 = vmatprep.subr.bf16.mxu0 0
    %8813 = vmatpush1.bf16.msra.mxu0 %v8792
    %8814 = vmatprep.subr.bf16.mxu0 0
    %8815 = vmatpush1.bf16.msra.mxu0 %v8793
    %8816 = vmatprep.subr.bf16.mxu0 0
    %8817 = vmatpush1.bf16.msra.mxu0 %v8794
    %8818 = vmatprep.subr.bf16.mxu0 0
    %8819 = vmatpush1.bf16.msra.mxu0 %v8795
    %8820 = vmatprep.subr.bf16.mxu0 0
    %8821 = vmatpush1.bf16.msra.mxu0 0
    %8822 = vmatprep.subr.bf16.mxu0 0
    %8823 = vmatpush1.bf16.msra.mxu0 0
    %8824 = vmatprep.subr.bf16.mxu0 0
    %8825 = vmatpush1.bf16.msra.mxu0 0
    %8826 = vmatprep.subr.bf16.mxu0 0
    %8827 = vmatpush1.bf16.msra.mxu0 0
    %8828 = vmatprep.subr.bf16.mxu0 0
    %8829 = vmatpush1.bf16.msra.mxu0 0
    %8830 = vmatprep.subr.bf16.mxu0 0
    %8831 = vmatpush1.bf16.msra.mxu0 0
    %8832 = vmatprep.subr.bf16.mxu0 0
    %8833 = vmatpush1.bf16.msra.mxu0 0
    %8834 = vmatprep.subr.bf16.mxu0 0
    %8835 = vmatpush1.bf16.msra.mxu0 0
    %8836 = vmatprep.mubr.bf16.mxu0 0
    %8837 = vmatmul.mubr.bf16.gmra.mrb[0].mxu0 %v8731
    %v8838 = vpop.f32.mrb[0].mxu0
    %v8839 = vadd.f32 %v8755, %v8838
    %v8840 = vpop.f32.mrb[0].mxu0
    %v8841 = vpop.f32.mrb[0].mxu0
    %v8842 = vadd.f32 %v8755, %v8841
    %v8843 = vpop.f32.mrb[0].mxu0
    %8844 = vmatprep.mubr.bf16.mxu0 0
    %8845 = vmatmul.mubr.bf16.gmra.mrb[0].mxu0 %v8732
    %v8846 = vpop.f32.mrb[0].mxu0
    %v8847 = vadd.f32 %v8755, %v8846
    %v8848 = vpop.f32.mrb[0].mxu0
    %v8849 = vpop.f32.mrb[0].mxu0
    %v8850 = vadd.f32 %v8755, %v8849
    %v8851 = vpop.f32.mrb[0].mxu0
    %8852 = vmatprep.mubr.bf16.mxu0 0
    %8853 = vmatmul.mubr.bf16.gmra.mrb[0].mxu0 %v8733
    %v8854 = vpop.f32.mrb[0].mxu0
    %v8855 = vadd.f32 %v8755, %v8854
    %v8856 = vpop.f32.mrb[0].mxu0
    %v8857 = vpop.f32.mrb[0].mxu0
    %v8858 = vadd.f32 %v8755, %v8857
    %v8859 = vpop.f32.mrb[0].mxu0
    %8860 = vmatprep.mubr.bf16.mxu0 0
    %8861 = vmatmul.mubr.bf16.gmra.mrb[0].mxu0 %v8734
    %v8862 = vpop.f32.mrb[0].mxu0
    %v8863 = vadd.f32 %v8755, %v8862
    %v8864 = vpop.f32.mrb[0].mxu0
    %v8865 = vpop.f32.mrb[0].mxu0
    %v8866 = vadd.f32 %v8755, %v8865
    %v8867 = vpop.f32.mrb[0].mxu0
    %8868 = vmatprep.mubr.bf16.mxu0 0
    %8869 = vmatmul.mubr.bf16.gmra.mrb[0].mxu0 %v8735
    %v8870 = vpop.f32.mrb[0].mxu0
    %v8871 = vadd.f32 %v8755, %v8870
    %v8872 = vpop.f32.mrb[0].mxu0
    %v8873 = vpop.f32.mrb[0].mxu0
    %v8874 = vadd.f32 %v8755, %v8873
    %v8875 = vpop.f32.mrb[0].mxu0
    %8876 = vmatprep.mubr.bf16.mxu0 0
    %8877 = vmatmul.mubr.bf16.gmra.mrb[0].mxu0 %v8736
    %v8878 = vpop.f32.mrb[0].mxu0
    %v8879 = vadd.f32 %v8755, %v8878
    %v8880 = vpop.f32.mrb[0].mxu0
    %v8881 = vpop.f32.mrb[0].mxu0
    %v8882 = vadd.f32 %v8755, %v8881
    %v8883 = vpop.f32.mrb[0].mxu0
    %8884 = vmatprep.mubr.bf16.mxu0 0
    %8885 = vmatmul.mubr.bf16.gmra.mrb[0].mxu0 %v8737
    %v8886 = vpop.f32.mrb[0].mxu0
    %v8887 = vadd.f32 %v8755, %v8886
    %v8888 = vpop.f32.mrb[0].mxu0
    %v8889 = vpop.f32.mrb[0].mxu0
    %v8890 = vadd.f32 %v8755, %v8889
    %v8891 = vpop.f32.mrb[0].mxu0
    %8892 = vmatprep.mubr.bf16.mxu0 0
    %8893 = vmatmul.mubr.bf16.gmra.mrb[0].mxu0 %v8738
    %v8894 = vpop.f32.mrb[0].mxu0
    %v8895 = vadd.f32 %v8755, %v8894
    %v8896 = vpop.f32.mrb[0].mxu0
    %v8897 = vpop.f32.mrb[0].mxu0
    %v8898 = vadd.f32 %v8755, %v8897
    %v8899 = vpop.f32.mrb[0].mxu0
    %8900 = vdwg.mxu0
    %8901 = vst [vmem:[#allocation17] sm:$0xff] %v8839
    %8902 = vst [vmem:[#allocation17 + $0x8] sm:$0xff] %v8842
    %8903 = vst [vmem:[#allocation17 + $0x10] sm:$0xff] %v8847
    %8904 = vst [vmem:[#allocation17 + $0x18] sm:$0xff] %v8850
    %8905 = vst [vmem:[#allocation17 + $0x20] sm:$0xff] %v8855
    %8906 = vst [vmem:[#allocation17 + $0x28] sm:$0xff] %v8858
    %8907 = vst [vmem:[#allocation17 + $0x30] sm:$0xff] %v8863
    %8908 = vst [vmem:[#allocation17 + $0x38] sm:$0xff] %v8866
    %8909 = vst [vmem:[#allocation17 + $0x40] sm:$0xff] %v8871
    %8910 = vst [vmem:[#allocation17 + $0x48] sm:$0xff] %v8874
    %8911 = vst [vmem:[#allocation17 + $0x50] sm:$0xff] %v8879
    %8912 = vst [vmem:[#allocation17 + $0x58] sm:$0xff] %v8882
    %8913 = vst [vmem:[#allocation17 + $0x60] sm:$0xff] %v8887
    %8914 = vst [vmem:[#allocation17 + $0x68] sm:$0xff] %v8890
    %8915 = vst [vmem:[#allocation17 + $0x70] sm:$0xff] %v8895
    %8916 = vst [vmem:[#allocation17 + $0x78] sm:$0xff] %v8898
    // Predicated region
    $region74: #{tpu_custom_call.1} parent=1 // pred_check
      _
    $region75: #{tpu_custom_call.1} parent=1 // pred_check_branch
      %8918 = sbr.rel (0) target = $region77
    $region76: #{tpu_custom_call.1} parent=1 // pred_region
      %s8920 = ssub.s32 2048, 2048
      %8921 = vsyncadd [#allocation4], %s8920
      %s8922 = sshll.u32 [#allocation17], 4
      %s8923 = int_to_ptr.vmem [resolvable:$true] %s8922
      %8928 = dma.vmem_to_hbm [thread:$0]  %s8923, 2048, %s9, [#allocation4], 128, 128, 8
    $region77: #{tpu_custom_call.1} parent=1 // pred_fallthru
      _
    // Predicated region
    $region78: #{tpu_custom_call.1} parent=1 // pred_check
      _
    $region79: #{tpu_custom_call.1} parent=1 // pred_check_branch
      %8930 = sbr.rel (0) target = $region81
    $region80: #{tpu_custom_call.1} parent=1 // pred_region
      %8931 = dma.done [#allocation4], 2048
    $region81: #{tpu_custom_call.1} parent=1 // pred_fallthru
      _
    %8932 = vsyncpa [#allocation3], 1
    %8933 = vsyncpa [#allocation6], 1
    %8934 = vsyncpa [#allocation9], 1
    %8935 = vsyncpa [#allocation12], 1
    %8936 = vsyncpa [#allocation15], 1
    %8937 = vsyncpa [#allocation4], 1

</llo_original>
